<compile_context>
chip_gen: v5e
topology: v5e:2x2
jax: 0.10.0
libtpu: 0.0.40
codegen_flags: <defaults>
</compile_context>

<pallas_src>
import jax
import jax.numpy as jnp
from jax import lax
from jax.experimental import pallas as pl
from jax.experimental.pallas import tpu as pltpu

MAX_FEATURES = 50
EMBED = 32
LSTM_H = 120      # real LSTM hidden size per direction
LSTM_HP = 128     # lane-padded per-direction width inside the packed layout
GRU_H = 60        # real GRU hidden size per direction
GRU_HP = 64       # per-direction sub-lane width inside the packed 128-lane layout
BN_EPS = 1e-5


# ----------------------------------------------------------------------------- kernel
def _make_kernel(L, B):
    HPF = 2 * LSTM_HP        # 256  packed LSTM hidden width [fwd | bwd]
    LG = 4 * HPF             # 1024 packed LSTM gate width (i, f, g, o blocks of 256)
    GPF = 2 * GRU_HP         # 128  packed GRU hidden width [fwd | bwd]
    GG = 3 * GPF             # 384  packed GRU gate width (r, z, n blocks of 128)
    f32 = jnp.float32
    # Re-tuned unroll: big batch tiles -> small unroll (avoid vreg/VMEM pressure blowup).
    unroll = 2 if B >= 32 else (True if L <= 16 else 4)

    def kernel(
        x_ref, f_ref,
        lw_ih, lw_hh, lb,
        gw_ih_f, gw_ih_b, gw_hh, gb_ih_f, gb_ih_b, gb_hh,
        w1_h, w1_a, w1_m, w1_f, b1, bn_scale, bn_shift, w2, b2,
        out_ref,
        lstm_out,                                   # region-0 scratch, lives whole kernel
    ):
        # ================= Phase 1: packed bidirectional LSTM =================
        def lstm_phase(gin):
            # Hoisted input projection for BOTH directions in one matmul.
            # x rows are [emb(t) | emb(L-1-t)], so row block i holds the forward gate
            # inputs for t=i and the backward gate inputs for t=L-1-i simultaneously.
            gin[...] = (jnp.dot(x_ref[...], lw_ih[...], preferred_element_type=f32)
                        + lb[...])
            w_hh = lw_hh[...]

            def step(i, carry):
                h, c = carry                                  # (B, 256) packed [fwd|bwd]
                rf = pl.multiple_of(i * B, B)                 # row block for time t = i
                g = gin[pl.ds(rf, B), :] + jnp.dot(h, w_hh, preferred_element_type=f32)
                ig = jax.nn.sigmoid(g[:, 0 * HPF:1 * HPF])
                fg = jax.nn.sigmoid(g[:, 1 * HPF:2 * HPF])
                gg = jnp.tanh(g[:, 2 * HPF:3 * HPF])
                og = jax.nn.sigmoid(g[:, 3 * HPF:4 * HPF])
                c = fg * c + ig * gg
                h = og * jnp.tanh(c)
                rb = pl.multiple_of((L - 1 - i) * B, B)       # bwd result is time L-1-i
                lstm_out[pl.ds(rf, B), 0:LSTM_HP] = h[:, 0:LSTM_HP]       # fwd lanes
                lstm_out[pl.ds(rb, B), LSTM_HP:HPF] = h[:, LSTM_HP:HPF]   # bwd lanes
                return h, c

            z = jnp.zeros((B, HPF), f32)
            lax.fori_loop(0, L, step, (z, z), unroll=unroll)

        pl.run_scoped(lstm_phase, pltpu.VMEM((L * B, LG), f32))

        # ====== Phase 2: packed bidirectional GRU + fused pooling + head ======
        # Sequential run_scoped region: reuses the VMEM just freed by the LSTM phase.
        def gru_phase(gin_f, gin_b):
            h_lstm = lstm_out[...]                            # (L*B, 256)
            gin_f[...] = (jnp.dot(h_lstm, gw_ih_f[...], preferred_element_type=f32)
                          + gb_ih_f[...])                     # fwd gins in sub-lanes 0:64
            gin_b[...] = (jnp.dot(h_lstm, gw_ih_b[...], preferred_element_type=f32)
                          + gb_ih_b[...])                     # bwd gins in sub-lanes 64:128
            w_hh = gw_hh[...]
            bh = gb_hh[...]

            def step(i, carry):
                h, s, m = carry                               # (B, 128) packed [fwd|bwd]
                rf = pl.multiple_of(i * B, B)
                rb = pl.multiple_of((L - 1 - i) * B, B)
                gi = gin_f[pl.ds(rf, B), :] + gin_b[pl.ds(rb, B), :]   # one VPU add merges dirs
                gh = jnp.dot(h, w_hh, preferred_element_type=f32) + bh
                rg = jax.nn.sigmoid(gi[:, 0 * GPF:1 * GPF] + gh[:, 0 * GPF:1 * GPF])
                zg = jax.nn.sigmoid(gi[:, 1 * GPF:2 * GPF] + gh[:, 1 * GPF:2 * GPF])
                ng = jnp.tanh(gi[:, 2 * GPF:3 * GPF] + rg * gh[:, 2 * GPF:3 * GPF])
                h = (1.0 - zg) * ng + zg * h
                s = s + h
                m = jnp.maximum(m, h)
                return h, s, m

            z = jnp.zeros((B, GPF), f32)
            neg = jnp.full((B, GPF), -jnp.inf, f32)           # safe: L >= 1 and padded
            h_last, s, m = lax.fori_loop(                     # lanes are 0 every step
                0, L, step, (z, z, neg), unroll=unroll)
            avg = s * (1.0 / L)

            # h_last packs [gru_fwd last step | gru_bwd first step]; avg/max pack both dirs.
            pre = (jnp.dot(h_last, w1_h[...], preferred_element_type=f32)
                   + jnp.dot(avg, w1_a[...], preferred_element_type=f32)
                   + jnp.dot(m, w1_m[...], preferred_element_type=f32)
                   + f_ref[...] * w1_f[...]
                   + b1[...])
            hid = jnp.maximum(pre, 0.0)                       # ReLU; Dropout identity (eval)
            hid = hid * bn_scale[...] + bn_shift[...]         # BatchNorm1d eval, folded
            out_ref[...] = jnp.dot(hid, w2[...], preferred_element_type=f32) + b2[...]

        pl.run_scoped(gru_phase,
                      pltpu.VMEM((L * B, GG), f32),
                      pltpu.VMEM((L * B, GG), f32))

    return kernel


# ----------------------------------------------------------------------------- params
def init_raw_params(key, max_features=MAX_FEATURES, embed=EMBED):
    """Unpadded 'PyTorch-like' weights (already transposed to (in, out) math layout)."""
    ks = iter(jax.random.split(key, 24))

    def u(shape, scale=0.1):
        return jax.random.uniform(next(ks), shape, jnp.float32, -1.0, 1.0) * scale

    p = {"embedding": u((max_features, embed), 1.0)}
    for d in ("f", "b"):
        p[f"lstm_w_ih_{d}"] = u((embed, 4 * LSTM_H))
        p[f"lstm_w_hh_{d}"] = u((LSTM_H, 4 * LSTM_H))
        p[f"lstm_b_{d}"] = u((1, 4 * LSTM_H))            # b_ih + b_hh combined
        p[f"gru_w_ih_{d}"] = u((2 * LSTM_H, 3 * GRU_H))
        p[f"gru_w_hh_{d}"] = u((GRU_H, 3 * GRU_H))
        p[f"gru_b_ih_{d}"] = u((1, 3 * GRU_H))
        p[f"gru_b_hh_{d}"] = u((1, 3 * GRU_H))
    p["w1"] = u((GRU_H * 6 + 1, 16))
    p["b1"] = u((1, 16))
    # BatchNorm1d(16) running stats (eval mode)
    p["bn_gamma"] = jnp.ones((16,), jnp.float32)
    p["bn_beta"] = jnp.zeros((16,), jnp.float32)
    p["bn_mean"] = jnp.zeros((16,), jnp.float32)
    p["bn_var"] = jnp.ones((16,), jnp.float32)
    p["w2"] = u((16, 1))
    p["b2"] = u((1, 1))
    return p


def pack_params(raw):
    """Pack/pad weights into the lane-packed fwd|bwd layouts the kernel expects.

    Invariant: every padded row/column and padded bias lane is exactly zero, so padded
    hidden lanes stay 0 throughout both recurrences and contribute nothing to the head.
    """
    f32 = jnp.float32
    p = {"embedding": raw["embedding"].astype(f32)}

    H = LSTM_H
    HPF = 2 * LSTM_HP        # 256
    G = GRU_H
    GP = GRU_HP              # 64
    GPF = 2 * GRU_HP         # 128

    # ---- LSTM: packed [fwd|bwd] lanes, 4 gate blocks of width 256 (order i, f, g, o) ----
    w_ih = jnp.zeros((2 * EMBED, 4 * HPF), f32)     # rows 0:32 fwd emb, 32:64 bwd emb
    w_hh = jnp.zeros((HPF, 4 * HPF), f32)           # block-diagonal per direction
    b = jnp.zeros((1, 4 * HPF), f32)
    for g in range(4):
        c0 = g * HPF                  # fwd sub-lanes of this gate block
        c1 = c0 + LSTM_HP             # bwd sub-lanes
        sl = slice(g * H, (g + 1) * H)
        w_ih = w_ih.at[0:EMBED, c0:c0 + H].set(raw["lstm_w_ih_f"][:, sl])
        w_ih = w_ih.at[EMBED:2 * EMBED, c1:c1 + H].set(raw["lstm_w_ih_b"][:, sl])
        w_hh = w_hh.at[0:H, c0:c0 + H].set(raw["lstm_w_hh_f"][:, sl])
        w_hh = w_hh.at[LSTM_HP:LSTM_HP + H, c1:c1 + H].set(raw["lstm_w_hh_b"][:, sl])
        b = b.at[:, c0:c0 + H].set(raw["lstm_b_f"][:, sl])
        b = b.at[:, c1:c1 + H].set(raw["lstm_b_b"][:, sl])
    p["lstm_w_ih"], p["lstm_w_hh"], p["lstm_b"] = w_ih, w_hh, b

    # ---- GRU: packed 128-lane hidden [fwd 0:64 | bwd 64:128], 3 gate blocks (r, z, n) ----
    gw_ih_f = jnp.zeros((HPF, 3 * GPF), f32)        # input rows match lstm_out layout
    gw_ih_b = jnp.zeros((HPF, 3 * GPF), f32)
    gw_hh = jnp.zeros((GPF, 3 * GPF), f32)
    gb_ih_f = jnp.zeros((1, 3 * GPF), f32)
    gb_ih_b = jnp.zeros((1, 3 * GPF), f32)
    gb_hh = jnp.zeros((1, 3 * GPF), f32)
    for g in range(3):
        cf = g * GPF                  # fwd sub-lanes of this gate block
        cb = cf + GP                  # bwd sub-lanes
        sl = slice(g * G, (g + 1) * G)
        # input rows: 0:120 <- fwd-LSTM lanes of lstm_out, 128:248 <- bwd-LSTM lanes
        gw_ih_f = gw_ih_f.at[0:H, cf:cf + G].set(raw["gru_w_ih_f"][0:H, sl])
        gw_ih_f = gw_ih_f.at[LSTM_HP:LSTM_HP + H, cf:cf + G].set(raw["gru_w_ih_f"][H:2 * H, sl])
        gw_ih_b = gw_ih_b.at[0:H, cb:cb + G].set(raw["gru_w_ih_b"][0:H, sl])
        gw_ih_b = gw_ih_b.at[LSTM_HP:LSTM_HP + H, cb:cb + G].set(raw["gru_w_ih_b"][H:2 * H, sl])
        gw_hh = gw_hh.at[0:G, cf:cf + G].set(raw["gru_w_hh_f"][:, sl])
        gw_hh = gw_hh.at[GP:GP + G, cb:cb + G].set(raw["gru_w_hh_b"][:, sl])
        gb_ih_f = gb_ih_f.at[:, cf:cf + G].set(raw["gru_b_ih_f"][:, sl])
        gb_ih_b = gb_ih_b.at[:, cb:cb + G].set(raw["gru_b_ih_b"][:, sl])
        gb_hh = gb_hh.at[:, cf:cf + G].set(raw["gru_b_hh_f"][:, sl])
        gb_hh = gb_hh.at[:, cb:cb + G].set(raw["gru_b_hh_b"][:, sl])
    p["gru_w_ih_f"], p["gru_w_ih_b"], p["gru_w_hh"] = gw_ih_f, gw_ih_b, gw_hh
    p["gru_b_ih_f"], p["gru_b_ih_b"], p["gru_b_hh"] = gb_ih_f, gb_ih_b, gb_hh

    # ---- Head Linear(361 -> 16): rows packed to the GRU 128-lane hidden layout ----
    w1 = raw["w1"].astype(f32)

    def pack_head(fwd_rows, bwd_rows):
        m = jnp.zeros((GPF, 16), f32)
        m = m.at[0:G, :].set(fwd_rows)
        m = m.at[GP:GP + G, :].set(bwd_rows)
        return m

    p["w1_h"] = pack_head(w1[0:G], w1[G:2 * G])               # last fwd | first bwd
    p["w1_a"] = pack_head(w1[2 * G:3 * G], w1[3 * G:4 * G])   # avg pool
    p["w1_m"] = pack_head(w1[4 * G:5 * G], w1[5 * G:6 * G])   # max pool
    p["w1_feat"] = w1[6 * G:6 * G + 1]                        # (1, 16) feature row
    p["b1"] = raw["b1"].astype(f32)

    scale = raw["bn_gamma"] / jnp.sqrt(raw["bn_var"] + BN_EPS)
    shift = raw["bn_beta"] - raw["bn_mean"] * scale
    p["bn_scale"] = scale.reshape(1, 16).astype(f32)
    p["bn_shift"] = shift.reshape(1, 16).astype(f32)
    p["w2"] = raw["w2"].astype(f32)
    p["b2"] = raw["b2"].astype(f32)
    return p


# ----------------------------------------------------------------------------- sizing
def _vmem_capacity_bytes():
    try:
        info = pltpu.get_tpu_info()
        cap = getattr(info, "vmem_capacity_bytes", None)
        if cap:
            return int(cap)
    except Exception:
        pass
    return 64 * 1024 * 1024   # conservative fallback (v7x per-TensorCore VMEM)


# Peak per-(t, b)-row VMEM bytes inside one grid step:
#   lstm_out (256 f32) + LSTM gin slab (1024 f32, > GRU gin 2*384 f32)
#   + transient matmul result (worst case == gin slab) + double-buffered x rows (2*64 f32)
_PER_ROW_BYTES = 4 * (2 * LSTM_HP) + 4 * (4 * 2 * LSTM_HP) + 4 * (4 * 2 * LSTM_HP) + 2 * 4 * (2 * EMBED)


def _choose_b_tile(L, weight_bytes, cap):
    budget = int(cap * 0.55) - 2 * weight_bytes        # weights are double-buffered
    for bt in (128, 112, 96, 80, 64, 48, 32, 24, 16, 8):
        if L * bt * _PER_ROW_BYTES <= budget:
            return bt
    return 8


# ----------------------------------------------------------------------------- wrapper
def lstm_forward_backward(params, token_ids, extra_feat, *, b_tile=None):
    B, L = token_ids.shape
    assert L >= 1
    E = EMBED

    weights = [
        params["lstm_w_ih"], params["lstm_w_hh"], params["lstm_b"],
        params["gru_w_ih_f"], params["gru_w_ih_b"], params["gru_w_hh"],
        params["gru_b_ih_f"], params["gru_b_ih_b"], params["gru_b_hh"],
        params["w1_h"], params["w1_a"], params["w1_m"], params["w1_feat"], params["b1"],
        params["bn_scale"], params["bn_shift"], params["w2"], params["b2"],
    ]
    weight_bytes = int(sum(int(w.size) * 4 for w in weights))

    cap = _vmem_capacity_bytes()
    if b_tile is None:
        b_tile = _choose_b_tile(L, weight_bytes, cap)
    b_tile = max(8, min(int(b_tile), ((B + 7) // 8) * 8))     # don't exceed (padded) batch

    n_tiles = -(-B // b_tile)                                 # NOTE: even n_tiles best on v7x
    b_pad = n_tiles * b_tile
    pad = b_pad - B

    tok = jnp.pad(token_ids, ((0, pad), (0, 0)))
    feat = jnp.pad(extra_feat.astype(jnp.float32), ((0, pad), (0, 0)))     # (b_pad, 1)

    # Embedding gather (glue, plain JAX); GaussianNoise / Dropout2d are identity in eval.
    emb = params["embedding"][tok].astype(jnp.float32)                     # (b_pad, L, E)
    # Per batch tile, a time-major flattened slab: row = t*b_tile + b, with lanes holding
    # [emb(t) | emb(L-1-t)] so one hoisted matmul feeds both LSTM directions.
    x = jnp.concatenate([emb, emb[:, ::-1, :]], axis=-1)                   # (b_pad, L, 2E)
    x = (x.reshape(n_tiles, b_tile, L, 2 * E)
          .transpose(0, 2, 1, 3)
          .reshape(n_tiles, L * b_tile, 2 * E))

    kernel = _make_kernel(L, b_tile)

    in_specs = (
        [pl.BlockSpec((None, L * b_tile, 2 * E), lambda j: (j, 0, 0)),   # x: one batch tile
         pl.BlockSpec((b_tile, 1), lambda j: (j, 0))]                    # extra feature
        + [pl.BlockSpec(w.shape, lambda j: (0, 0)) for w in weights]      # full weights
    )
    out_specs = pl.BlockSpec((b_tile, 1), lambda j: (j, 0))

    vmem_limit = max(32 * 1024 * 1024, min(int(cap * 0.8), 120 * 1024 * 1024))

    out = pl.pallas_call(
        kernel,
        out_shape=jax.ShapeDtypeStruct((b_pad, 1), jnp.float32),
        grid=(n_tiles,),
        in_specs=in_specs,
        out_specs=out_specs,
        scratch_shapes=[
            # Shared packed biLSTM output (fwd lanes 0:128, bwd lanes 128:256); the gate
            # input slabs live in sequential pl.run_scoped regions inside the kernel.
            pltpu.VMEM((L * b_tile, 2 * LSTM_HP), jnp.float32),
        ],
        compiler_params=pltpu.CompilerParams(
            dimension_semantics=("parallel",),
            vmem_limit_bytes=vmem_limit,
        ),
    )(x, feat, *weights)
    return out[:B]


if __name__ == "__main__":
    B, L = 4, 8
    key = jax.random.PRNGKey(0)
    k_param, k_tok, k_feat = jax.random.split(key, 3)

    raw = init_raw_params(k_param)
    params = pack_params(raw)
    token_ids = jax.random.randint(k_tok, (B, L), 0, MAX_FEATURES, dtype=jnp.int32)
    extra_feat = jax.random.uniform(k_feat, (B, 1), jnp.float32)

    out = jax.jit(lstm_forward_backward)(params, token_ids, extra_feat)
    out = jax.block_until_ready(out)
    assert out.shape == (B, 1) and out.dtype == jnp.float32
    assert bool(jnp.all(jnp.isfinite(out)))
    print("KERNEL_OK")
</pallas_src>

<mosaic_0001>
module attributes {stable_mosaic.version = 11 : i64} {
  func.func @kernel(%arg0: i32, %arg1: memref<1x64x64xf32, #tpu.memory_space<vmem>>, %arg2: memref<8x1xf32, #tpu.memory_space<vmem>>, %arg3: memref<64x1024xf32, #tpu.memory_space<vmem>>, %arg4: memref<256x1024xf32, #tpu.memory_space<vmem>>, %arg5: memref<1x1024xf32, #tpu.memory_space<vmem>>, %arg6: memref<256x384xf32, #tpu.memory_space<vmem>>, %arg7: memref<256x384xf32, #tpu.memory_space<vmem>>, %arg8: memref<128x384xf32, #tpu.memory_space<vmem>>, %arg9: memref<1x384xf32, #tpu.memory_space<vmem>>, %arg10: memref<1x384xf32, #tpu.memory_space<vmem>>, %arg11: memref<1x384xf32, #tpu.memory_space<vmem>>, %arg12: memref<128x16xf32, #tpu.memory_space<vmem>>, %arg13: memref<128x16xf32, #tpu.memory_space<vmem>>, %arg14: memref<128x16xf32, #tpu.memory_space<vmem>>, %arg15: memref<1x16xf32, #tpu.memory_space<vmem>>, %arg16: memref<1x16xf32, #tpu.memory_space<vmem>>, %arg17: memref<1x16xf32, #tpu.memory_space<vmem>>, %arg18: memref<1x16xf32, #tpu.memory_space<vmem>>, %arg19: memref<16x1xf32, #tpu.memory_space<vmem>>, %arg20: memref<1x1xf32, #tpu.memory_space<vmem>>, %arg21: memref<8x1xf32, #tpu.memory_space<vmem>>, %arg22: memref<64x256xf32, #tpu.memory_space<vmem>>) attributes {dimension_semantics = [#tpu.dimension_semantics<parallel>], iteration_bounds = array<i64: 1>, scalar_prefetch = 0 : i64, scratch_operands = 1 : i64, tpu.core_type = #tpu.core_type<tc>, window_params = [{transform_indices = @transform_0, window_bounds = array<i64: 1, 64, 64>}, {transform_indices = @transform_1, window_bounds = array<i64: 8, 1>}, {pipeline_mode = #tpu.pipeline_mode<synchronous>, transform_indices = @transform_2, window_bounds = array<i64: 64, 1024>}, {pipeline_mode = #tpu.pipeline_mode<synchronous>, transform_indices = @transform_3, window_bounds = array<i64: 256, 1024>}, {pipeline_mode = #tpu.pipeline_mode<synchronous>, transform_indices = @transform_4, window_bounds = array<i64: 1, 1024>}, {pipeline_mode = #tpu.pipeline_mode<synchronous>, transform_indices = @transform_5, window_bounds = array<i64: 256, 384>}, {pipeline_mode = #tpu.pipeline_mode<synchronous>, transform_indices = @transform_6, window_bounds = array<i64: 256, 384>}, {pipeline_mode = #tpu.pipeline_mode<synchronous>, transform_indices = @transform_7, window_bounds = array<i64: 128, 384>}, {pipeline_mode = #tpu.pipeline_mode<synchronous>, transform_indices = @transform_8, window_bounds = array<i64: 1, 384>}, {pipeline_mode = #tpu.pipeline_mode<synchronous>, transform_indices = @transform_9, window_bounds = array<i64: 1, 384>}, {pipeline_mode = #tpu.pipeline_mode<synchronous>, transform_indices = @transform_10, window_bounds = array<i64: 1, 384>}, {pipeline_mode = #tpu.pipeline_mode<synchronous>, transform_indices = @transform_11, window_bounds = array<i64: 128, 16>}, {pipeline_mode = #tpu.pipeline_mode<synchronous>, transform_indices = @transform_12, window_bounds = array<i64: 128, 16>}, {pipeline_mode = #tpu.pipeline_mode<synchronous>, transform_indices = @transform_13, window_bounds = array<i64: 128, 16>}, {pipeline_mode = #tpu.pipeline_mode<synchronous>, transform_indices = @transform_14, window_bounds = array<i64: 1, 16>}, {pipeline_mode = #tpu.pipeline_mode<synchronous>, transform_indices = @transform_15, window_bounds = array<i64: 1, 16>}, {pipeline_mode = #tpu.pipeline_mode<synchronous>, transform_indices = @transform_16, window_bounds = array<i64: 1, 16>}, {pipeline_mode = #tpu.pipeline_mode<synchronous>, transform_indices = @transform_17, window_bounds = array<i64: 1, 16>}, {pipeline_mode = #tpu.pipeline_mode<synchronous>, transform_indices = @transform_18, window_bounds = array<i64: 16, 1>}, {pipeline_mode = #tpu.pipeline_mode<synchronous>, transform_indices = @transform_19, window_bounds = array<i64: 1, 1>}, {transform_indices = @transform_20, window_bounds = array<i64: 8, 1>}]} {
    "tpu.region"() ({
      %alloca = memref.alloca() : memref<64x1024xf32, #tpu.memory_space<vmem>>
      %c0 = arith.constant 0 : index
      %c0_0 = arith.constant 0 : index
      %c0_1 = arith.constant 0 : index
      %0 = vector.load %arg1[%c0, %c0_0, %c0_1] : memref<1x64x64xf32, #tpu.memory_space<vmem>>, vector<1x64x64xf32>
      %1 = vector.shape_cast %0 : vector<1x64x64xf32> to vector<64x64xf32>
      %c0_2 = arith.constant 0 : index
      %c0_3 = arith.constant 0 : index
      %2 = vector.load %arg3[%c0_2, %c0_3] : memref<64x1024xf32, #tpu.memory_space<vmem>>, vector<64x1024xf32>
      %cst = arith.constant dense<0.000000e+00> : vector<64x1024xf32>
      %3 = tpu.matmul %1, %2, %cst {dimension_numbers = #tpu.dot_dimension_numbers<[1], [0], [0], [1], [0, 0, 1, 1], [], []>} : vector<64x64xf32>, vector<64x1024xf32>, vector<64x1024xf32> -> vector<64x1024xf32>
      %c0_4 = arith.constant 0 : index
      %c0_5 = arith.constant 0 : index
      %4 = vector.load %arg5[%c0_4, %c0_5] : memref<1x1024xf32, #tpu.memory_space<vmem>>, vector<1x1024xf32>
      %5 = vector.broadcast %4 : vector<1x1024xf32> to vector<64x1024xf32>
      %6 = arith.addf %3, %5 : vector<64x1024xf32>
      %c0_6 = arith.constant 0 : index
      %c0_7 = arith.constant 0 : index
      %7 = vector.load %alloca[%c0_6, %c0_7] : memref<64x1024xf32, #tpu.memory_space<vmem>>, vector<64x1024xf32>
      tpu.vector_store %alloca[%c0_6, %c0_7], %6 {strides = array<i32>} : memref<64x1024xf32, #tpu.memory_space<vmem>>, vector<64x1024xf32>,
      %c0_8 = arith.constant 0 : index
      %c0_9 = arith.constant 0 : index
      %8 = vector.load %arg4[%c0_8, %c0_9] : memref<256x1024xf32, #tpu.memory_space<vmem>>, vector<256x1024xf32>
      %cst_10 = arith.constant 0.000000e+00 : f32
      %9 = vector.broadcast %cst_10 : f32 to vector<8x256xf32>
      %c0_i32 = arith.constant 0 : i32
      %c8_i32 = arith.constant 8 : i32
      %10 = arith.muli %c0_i32, %c8_i32 : i32
      %11 = tpu.assume_multiple %10, 8 : i32
      %12 = arith.index_cast %11 : i32 to index
      %c0_11 = arith.constant 0 : index
      %13 = vector.load %alloca[%12, %c0_11] : memref<64x1024xf32, #tpu.memory_space<vmem>>, vector<8x1024xf32>
      %cst_12 = arith.constant dense<0.000000e+00> : vector<8x1024xf32>
      %14 = tpu.matmul %9, %8, %cst_12 {dimension_numbers = #tpu.dot_dimension_numbers<[1], [0], [0], [1], [0, 0, 1, 1], [], []>} : vector<8x256xf32>, vector<256x1024xf32>, vector<8x1024xf32> -> vector<8x1024xf32>
      %15 = arith.addf %13, %14 : vector<8x1024xf32>
      %16 = vector.extract_strided_slice %15 {offsets = [0, 0], sizes = [8, 256], strides = [1, 1]} : vector<8x1024xf32> to vector<8x256xf32>
      %17 = arith.negf %16 : vector<8x256xf32>
      %18 = math.exp %17 : vector<8x256xf32>
      %cst_13 = arith.constant 1.000000e+00 : f32
      %19 = vector.broadcast %cst_13 : f32 to vector<8x256xf32>
      %20 = arith.addf %19, %18 : vector<8x256xf32>
      %21 = arith.divf %19, %20 : vector<8x256xf32>
      %22 = vector.extract_strided_slice %15 {offsets = [0, 256], sizes = [8, 256], strides = [1, 1]} : vector<8x1024xf32> to vector<8x256xf32>
      %23 = arith.negf %22 : vector<8x256xf32>
      %24 = math.exp %23 : vector<8x256xf32>
      %cst_14 = arith.constant 1.000000e+00 : f32
      %25 = vector.broadcast %cst_14 : f32 to vector<8x256xf32>
      %26 = arith.addf %25, %24 : vector<8x256xf32>
      %27 = arith.divf %25, %26 : vector<8x256xf32>
      %28 = vector.extract_strided_slice %15 {offsets = [0, 512], sizes = [8, 256], strides = [1, 1]} : vector<8x1024xf32> to vector<8x256xf32>
      %29 = math.tanh %28 : vector<8x256xf32>
      %30 = vector.extract_strided_slice %15 {offsets = [0, 768], sizes = [8, 256], strides = [1, 1]} : vector<8x1024xf32> to vector<8x256xf32>
      %31 = arith.negf %30 : vector<8x256xf32>
      %32 = math.exp %31 : vector<8x256xf32>
      %cst_15 = arith.constant 1.000000e+00 : f32
      %33 = vector.broadcast %cst_15 : f32 to vector<8x256xf32>
      %34 = arith.addf %33, %32 : vector<8x256xf32>
      %35 = arith.divf %33, %34 : vector<8x256xf32>
      %36 = arith.mulf %27, %9 : vector<8x256xf32>
      %37 = arith.mulf %21, %29 : vector<8x256xf32>
      %38 = arith.addf %36, %37 : vector<8x256xf32>
      %39 = math.tanh %38 : vector<8x256xf32>
      %40 = arith.mulf %35, %39 : vector<8x256xf32>
      %c7_i32 = arith.constant 7 : i32
      %41 = arith.subi %c7_i32, %c0_i32 : i32
      %c8_i32_16 = arith.constant 8 : i32
      %42 = arith.muli %41, %c8_i32_16 : i32
      %43 = tpu.assume_multiple %42, 8 : i32
      %44 = vector.extract_strided_slice %40 {offsets = [0, 0], sizes = [8, 128], strides = [1, 1]} : vector<8x256xf32> to vector<8x128xf32>
      %45 = arith.index_cast %11 : i32 to index
      %c0_17 = arith.constant 0 : index
      %46 = vector.load %arg22[%45, %c0_17] : memref<64x256xf32, #tpu.memory_space<vmem>>, vector<8x128xf32>
      tpu.vector_store %arg22[%45, %c0_17], %44 {strides = array<i32>} : memref<64x256xf32, #tpu.memory_space<vmem>>, vector<8x128xf32>,
      %47 = vector.extract_strided_slice %40 {offsets = [0, 128], sizes = [8, 128], strides = [1, 1]} : vector<8x256xf32> to vector<8x128xf32>
      %48 = arith.index_cast %43 : i32 to index
      %c128 = arith.constant 128 : index
      %49 = vector.load %arg22[%48, %c128] : memref<64x256xf32, #tpu.memory_space<vmem>>, vector<8x128xf32>
      tpu.vector_store %arg22[%48, %c128], %47 {strides = array<i32>} : memref<64x256xf32, #tpu.memory_space<vmem>>, vector<8x128xf32>,
      %c1_i32 = arith.constant 1 : i32
      %c8_i32_18 = arith.constant 8 : i32
      %50 = arith.muli %c1_i32, %c8_i32_18 : i32
      %51 = tpu.assume_multiple %50, 8 : i32
      %52 = arith.index_cast %51 : i32 to index
      %c0_19 = arith.constant 0 : index
      %53 = vector.load %alloca[%52, %c0_19] : memref<64x1024xf32, #tpu.memory_space<vmem>>, vector<8x1024xf32>
      %cst_20 = arith.constant dense<0.000000e+00> : vector<8x1024xf32>
      %54 = tpu.matmul %40, %8, %cst_20 {dimension_numbers = #tpu.dot_dimension_numbers<[1], [0], [0], [1], [0, 0, 1, 1], [], []>} : vector<8x256xf32>, vector<256x1024xf32>, vector<8x1024xf32> -> vector<8x1024xf32>
      %55 = arith.addf %53, %54 : vector<8x1024xf32>
      %56 = vector.extract_strided_slice %55 {offsets = [0, 0], sizes = [8, 256], strides = [1, 1]} : vector<8x1024xf32> to vector<8x256xf32>
      %57 = arith.negf %56 : vector<8x256xf32>
      %58 = math.exp %57 : vector<8x256xf32>
      %cst_21 = arith.constant 1.000000e+00 : f32
      %59 = vector.broadcast %cst_21 : f32 to vector<8x256xf32>
      %60 = arith.addf %59, %58 : vector<8x256xf32>
      %61 = arith.divf %59, %60 : vector<8x256xf32>
      %62 = vector.extract_strided_slice %55 {offsets = [0, 256], sizes = [8, 256], strides = [1, 1]} : vector<8x1024xf32> to vector<8x256xf32>
      %63 = arith.negf %62 : vector<8x256xf32>
      %64 = math.exp %63 : vector<8x256xf32>
      %cst_22 = arith.constant 1.000000e+00 : f32
      %65 = vector.broadcast %cst_22 : f32 to vector<8x256xf32>
      %66 = arith.addf %65, %64 : vector<8x256xf32>
      %67 = arith.divf %65, %66 : vector<8x256xf32>
      %68 = vector.extract_strided_slice %55 {offsets = [0, 512], sizes = [8, 256], strides = [1, 1]} : vector<8x1024xf32> to vector<8x256xf32>
      %69 = math.tanh %68 : vector<8x256xf32>
      %70 = vector.extract_strided_slice %55 {offsets = [0, 768], sizes = [8, 256], strides = [1, 1]} : vector<8x1024xf32> to vector<8x256xf32>
      %71 = arith.negf %70 : vector<8x256xf32>
      %72 = math.exp %71 : vector<8x256xf32>
      %cst_23 = arith.constant 1.000000e+00 : f32
      %73 = vector.broadcast %cst_23 : f32 to vector<8x256xf32>
      %74 = arith.addf %73, %72 : vector<8x256xf32>
      %75 = arith.divf %73, %74 : vector<8x256xf32>
      %76 = arith.mulf %67, %38 : vector<8x256xf32>
      %77 = arith.mulf %61, %69 : vector<8x256xf32>
      %78 = arith.addf %76, %77 : vector<8x256xf32>
      %79 = math.tanh %78 : vector<8x256xf32>
      %80 = arith.mulf %75, %79 : vector<8x256xf32>
      %c7_i32_24 = arith.constant 7 : i32
      %81 = arith.subi %c7_i32_24, %c1_i32 : i32
      %c8_i32_25 = arith.constant 8 : i32
      %82 = arith.muli %81, %c8_i32_25 : i32
      %83 = tpu.assume_multiple %82, 8 : i32
      %84 = vector.extract_strided_slice %80 {offsets = [0, 0], sizes = [8, 128], strides = [1, 1]} : vector<8x256xf32> to vector<8x128xf32>
      %85 = arith.index_cast %51 : i32 to index
      %c0_26 = arith.constant 0 : index
      %86 = vector.load %arg22[%85, %c0_26] : memref<64x256xf32, #tpu.memory_space<vmem>>, vector<8x128xf32>
      tpu.vector_store %arg22[%85, %c0_26], %84 {strides = array<i32>} : memref<64x256xf32, #tpu.memory_space<vmem>>, vector<8x128xf32>,
      %87 = vector.extract_strided_slice %80 {offsets = [0, 128], sizes = [8, 128], strides = [1, 1]} : vector<8x256xf32> to vector<8x128xf32>
      %88 = arith.index_cast %83 : i32 to index
      %c128_27 = arith.constant 128 : index
      %89 = vector.load %arg22[%88, %c128_27] : memref<64x256xf32, #tpu.memory_space<vmem>>, vector<8x128xf32>
      tpu.vector_store %arg22[%88, %c128_27], %87 {strides = array<i32>} : memref<64x256xf32, #tpu.memory_space<vmem>>, vector<8x128xf32>,
      %c2_i32 = arith.constant 2 : i32
      %c8_i32_28 = arith.constant 8 : i32
      %90 = arith.muli %c2_i32, %c8_i32_28 : i32
      %91 = tpu.assume_multiple %90, 8 : i32
      %92 = arith.index_cast %91 : i32 to index
      %c0_29 = arith.constant 0 : index
      %93 = vector.load %alloca[%92, %c0_29] : memref<64x1024xf32, #tpu.memory_space<vmem>>, vector<8x1024xf32>
      %cst_30 = arith.constant dense<0.000000e+00> : vector<8x1024xf32>
      %94 = tpu.matmul %80, %8, %cst_30 {dimension_numbers = #tpu.dot_dimension_numbers<[1], [0], [0], [1], [0, 0, 1, 1], [], []>} : vector<8x256xf32>, vector<256x1024xf32>, vector<8x1024xf32> -> vector<8x1024xf32>
      %95 = arith.addf %93, %94 : vector<8x1024xf32>
      %96 = vector.extract_strided_slice %95 {offsets = [0, 0], sizes = [8, 256], strides = [1, 1]} : vector<8x1024xf32> to vector<8x256xf32>
      %97 = arith.negf %96 : vector<8x256xf32>
      %98 = math.exp %97 : vector<8x256xf32>
      %cst_31 = arith.constant 1.000000e+00 : f32
      %99 = vector.broadcast %cst_31 : f32 to vector<8x256xf32>
      %100 = arith.addf %99, %98 : vector<8x256xf32>
      %101 = arith.divf %99, %100 : vector<8x256xf32>
      %102 = vector.extract_strided_slice %95 {offsets = [0, 256], sizes = [8, 256], strides = [1, 1]} : vector<8x1024xf32> to vector<8x256xf32>
      %103 = arith.negf %102 : vector<8x256xf32>
      %104 = math.exp %103 : vector<8x256xf32>
      %cst_32 = arith.constant 1.000000e+00 : f32
      %105 = vector.broadcast %cst_32 : f32 to vector<8x256xf32>
      %106 = arith.addf %105, %104 : vector<8x256xf32>
      %107 = arith.divf %105, %106 : vector<8x256xf32>
      %108 = vector.extract_strided_slice %95 {offsets = [0, 512], sizes = [8, 256], strides = [1, 1]} : vector<8x1024xf32> to vector<8x256xf32>
      %109 = math.tanh %108 : vector<8x256xf32>
      %110 = vector.extract_strided_slice %95 {offsets = [0, 768], sizes = [8, 256], strides = [1, 1]} : vector<8x1024xf32> to vector<8x256xf32>
      %111 = arith.negf %110 : vector<8x256xf32>
      %112 = math.exp %111 : vector<8x256xf32>
      %cst_33 = arith.constant 1.000000e+00 : f32
      %113 = vector.broadcast %cst_33 : f32 to vector<8x256xf32>
      %114 = arith.addf %113, %112 : vector<8x256xf32>
      %115 = arith.divf %113, %114 : vector<8x256xf32>
      %116 = arith.mulf %107, %78 : vector<8x256xf32>
      %117 = arith.mulf %101, %109 : vector<8x256xf32>
      %118 = arith.addf %116, %117 : vector<8x256xf32>
      %119 = math.tanh %118 : vector<8x256xf32>
      %120 = arith.mulf %115, %119 : vector<8x256xf32>
      %c7_i32_34 = arith.constant 7 : i32
      %121 = arith.subi %c7_i32_34, %c2_i32 : i32
      %c8_i32_35 = arith.constant 8 : i32
      %122 = arith.muli %121, %c8_i32_35 : i32
      %123 = tpu.assume_multiple %122, 8 : i32
      %124 = vector.extract_strided_slice %120 {offsets = [0, 0], sizes = [8, 128], strides = [1, 1]} : vector<8x256xf32> to vector<8x128xf32>
      %125 = arith.index_cast %91 : i32 to index
      %c0_36 = arith.constant 0 : index
      %126 = vector.load %arg22[%125, %c0_36] : memref<64x256xf32, #tpu.memory_space<vmem>>, vector<8x128xf32>
      tpu.vector_store %arg22[%125, %c0_36], %124 {strides = array<i32>} : memref<64x256xf32, #tpu.memory_space<vmem>>, vector<8x128xf32>,
      %127 = vector.extract_strided_slice %120 {offsets = [0, 128], sizes = [8, 128], strides = [1, 1]} : vector<8x256xf32> to vector<8x128xf32>
      %128 = arith.index_cast %123 : i32 to index
      %c128_37 = arith.constant 128 : index
      %129 = vector.load %arg22[%128, %c128_37] : memref<64x256xf32, #tpu.memory_space<vmem>>, vector<8x128xf32>
      tpu.vector_store %arg22[%128, %c128_37], %127 {strides = array<i32>} : memref<64x256xf32, #tpu.memory_space<vmem>>, vector<8x128xf32>,
      %c3_i32 = arith.constant 3 : i32
      %c8_i32_38 = arith.constant 8 : i32
      %130 = arith.muli %c3_i32, %c8_i32_38 : i32
      %131 = tpu.assume_multiple %130, 8 : i32
      %132 = arith.index_cast %131 : i32 to index
      %c0_39 = arith.constant 0 : index
      %133 = vector.load %alloca[%132, %c0_39] : memref<64x1024xf32, #tpu.memory_space<vmem>>, vector<8x1024xf32>
      %cst_40 = arith.constant dense<0.000000e+00> : vector<8x1024xf32>
      %134 = tpu.matmul %120, %8, %cst_40 {dimension_numbers = #tpu.dot_dimension_numbers<[1], [0], [0], [1], [0, 0, 1, 1], [], []>} : vector<8x256xf32>, vector<256x1024xf32>, vector<8x1024xf32> -> vector<8x1024xf32>
      %135 = arith.addf %133, %134 : vector<8x1024xf32>
      %136 = vector.extract_strided_slice %135 {offsets = [0, 0], sizes = [8, 256], strides = [1, 1]} : vector<8x1024xf32> to vector<8x256xf32>
      %137 = arith.negf %136 : vector<8x256xf32>
      %138 = math.exp %137 : vector<8x256xf32>
      %cst_41 = arith.constant 1.000000e+00 : f32
      %139 = vector.broadcast %cst_41 : f32 to vector<8x256xf32>
      %140 = arith.addf %139, %138 : vector<8x256xf32>
      %141 = arith.divf %139, %140 : vector<8x256xf32>
      %142 = vector.extract_strided_slice %135 {offsets = [0, 256], sizes = [8, 256], strides = [1, 1]} : vector<8x1024xf32> to vector<8x256xf32>
      %143 = arith.negf %142 : vector<8x256xf32>
      %144 = math.exp %143 : vector<8x256xf32>
      %cst_42 = arith.constant 1.000000e+00 : f32
      %145 = vector.broadcast %cst_42 : f32 to vector<8x256xf32>
      %146 = arith.addf %145, %144 : vector<8x256xf32>
      %147 = arith.divf %145, %146 : vector<8x256xf32>
      %148 = vector.extract_strided_slice %135 {offsets = [0, 512], sizes = [8, 256], strides = [1, 1]} : vector<8x1024xf32> to vector<8x256xf32>
      %149 = math.tanh %148 : vector<8x256xf32>
      %150 = vector.extract_strided_slice %135 {offsets = [0, 768], sizes = [8, 256], strides = [1, 1]} : vector<8x1024xf32> to vector<8x256xf32>
      %151 = arith.negf %150 : vector<8x256xf32>
      %152 = math.exp %151 : vector<8x256xf32>
      %cst_43 = arith.constant 1.000000e+00 : f32
      %153 = vector.broadcast %cst_43 : f32 to vector<8x256xf32>
      %154 = arith.addf %153, %152 : vector<8x256xf32>
      %155 = arith.divf %153, %154 : vector<8x256xf32>
      %156 = arith.mulf %147, %118 : vector<8x256xf32>
      %157 = arith.mulf %141, %149 : vector<8x256xf32>
      %158 = arith.addf %156, %157 : vector<8x256xf32>
      %159 = math.tanh %158 : vector<8x256xf32>
      %160 = arith.mulf %155, %159 : vector<8x256xf32>
      %c7_i32_44 = arith.constant 7 : i32
      %161 = arith.subi %c7_i32_44, %c3_i32 : i32
      %c8_i32_45 = arith.constant 8 : i32
      %162 = arith.muli %161, %c8_i32_45 : i32
      %163 = tpu.assume_multiple %162, 8 : i32
      %164 = vector.extract_strided_slice %160 {offsets = [0, 0], sizes = [8, 128], strides = [1, 1]} : vector<8x256xf32> to vector<8x128xf32>
      %165 = arith.index_cast %131 : i32 to index
      %c0_46 = arith.constant 0 : index
      %166 = vector.load %arg22[%165, %c0_46] : memref<64x256xf32, #tpu.memory_space<vmem>>, vector<8x128xf32>
      tpu.vector_store %arg22[%165, %c0_46], %164 {strides = array<i32>} : memref<64x256xf32, #tpu.memory_space<vmem>>, vector<8x128xf32>,
      %167 = vector.extract_strided_slice %160 {offsets = [0, 128], sizes = [8, 128], strides = [1, 1]} : vector<8x256xf32> to vector<8x128xf32>
      %168 = arith.index_cast %163 : i32 to index
      %c128_47 = arith.constant 128 : index
      %169 = vector.load %arg22[%168, %c128_47] : memref<64x256xf32, #tpu.memory_space<vmem>>, vector<8x128xf32>
      tpu.vector_store %arg22[%168, %c128_47], %167 {strides = array<i32>} : memref<64x256xf32, #tpu.memory_space<vmem>>, vector<8x128xf32>,
      %c4_i32 = arith.constant 4 : i32
      %c8_i32_48 = arith.constant 8 : i32
      %170 = arith.muli %c4_i32, %c8_i32_48 : i32
      %171 = tpu.assume_multiple %170, 8 : i32
      %172 = arith.index_cast %171 : i32 to index
      %c0_49 = arith.constant 0 : index
      %173 = vector.load %alloca[%172, %c0_49] : memref<64x1024xf32, #tpu.memory_space<vmem>>, vector<8x1024xf32>
      %cst_50 = arith.constant dense<0.000000e+00> : vector<8x1024xf32>
      %174 = tpu.matmul %160, %8, %cst_50 {dimension_numbers = #tpu.dot_dimension_numbers<[1], [0], [0], [1], [0, 0, 1, 1], [], []>} : vector<8x256xf32>, vector<256x1024xf32>, vector<8x1024xf32> -> vector<8x1024xf32>
      %175 = arith.addf %173, %174 : vector<8x1024xf32>
      %176 = vector.extract_strided_slice %175 {offsets = [0, 0], sizes = [8, 256], strides = [1, 1]} : vector<8x1024xf32> to vector<8x256xf32>
      %177 = arith.negf %176 : vector<8x256xf32>
      %178 = math.exp %177 : vector<8x256xf32>
      %cst_51 = arith.constant 1.000000e+00 : f32
      %179 = vector.broadcast %cst_51 : f32 to vector<8x256xf32>
      %180 = arith.addf %179, %178 : vector<8x256xf32>
      %181 = arith.divf %179, %180 : vector<8x256xf32>
      %182 = vector.extract_strided_slice %175 {offsets = [0, 256], sizes = [8, 256], strides = [1, 1]} : vector<8x1024xf32> to vector<8x256xf32>
      %183 = arith.negf %182 : vector<8x256xf32>
      %184 = math.exp %183 : vector<8x256xf32>
      %cst_52 = arith.constant 1.000000e+00 : f32
      %185 = vector.broadcast %cst_52 : f32 to vector<8x256xf32>
      %186 = arith.addf %185, %184 : vector<8x256xf32>
      %187 = arith.divf %185, %186 : vector<8x256xf32>
      %188 = vector.extract_strided_slice %175 {offsets = [0, 512], sizes = [8, 256], strides = [1, 1]} : vector<8x1024xf32> to vector<8x256xf32>
      %189 = math.tanh %188 : vector<8x256xf32>
      %190 = vector.extract_strided_slice %175 {offsets = [0, 768], sizes = [8, 256], strides = [1, 1]} : vector<8x1024xf32> to vector<8x256xf32>
      %191 = arith.negf %190 : vector<8x256xf32>
      %192 = math.exp %191 : vector<8x256xf32>
      %cst_53 = arith.constant 1.000000e+00 : f32
      %193 = vector.broadcast %cst_53 : f32 to vector<8x256xf32>
      %194 = arith.addf %193, %192 : vector<8x256xf32>
      %195 = arith.divf %193, %194 : vector<8x256xf32>
      %196 = arith.mulf %187, %158 : vector<8x256xf32>
      %197 = arith.mulf %181, %189 : vector<8x256xf32>
      %198 = arith.addf %196, %197 : vector<8x256xf32>
      %199 = math.tanh %198 : vector<8x256xf32>
      %200 = arith.mulf %195, %199 : vector<8x256xf32>
      %c7_i32_54 = arith.constant 7 : i32
      %201 = arith.subi %c7_i32_54, %c4_i32 : i32
      %c8_i32_55 = arith.constant 8 : i32
      %202 = arith.muli %201, %c8_i32_55 : i32
      %203 = tpu.assume_multiple %202, 8 : i32
      %204 = vector.extract_strided_slice %200 {offsets = [0, 0], sizes = [8, 128], strides = [1, 1]} : vector<8x256xf32> to vector<8x128xf32>
      %205 = arith.index_cast %171 : i32 to index
      %c0_56 = arith.constant 0 : index
      %206 = vector.load %arg22[%205, %c0_56] : memref<64x256xf32, #tpu.memory_space<vmem>>, vector<8x128xf32>
      tpu.vector_store %arg22[%205, %c0_56], %204 {strides = array<i32>} : memref<64x256xf32, #tpu.memory_space<vmem>>, vector<8x128xf32>,
      %207 = vector.extract_strided_slice %200 {offsets = [0, 128], sizes = [8, 128], strides = [1, 1]} : vector<8x256xf32> to vector<8x128xf32>
      %208 = arith.index_cast %203 : i32 to index
      %c128_57 = arith.constant 128 : index
      %209 = vector.load %arg22[%208, %c128_57] : memref<64x256xf32, #tpu.memory_space<vmem>>, vector<8x128xf32>
      tpu.vector_store %arg22[%208, %c128_57], %207 {strides = array<i32>} : memref<64x256xf32, #tpu.memory_space<vmem>>, vector<8x128xf32>,
      %c5_i32 = arith.constant 5 : i32
      %c8_i32_58 = arith.constant 8 : i32
      %210 = arith.muli %c5_i32, %c8_i32_58 : i32
      %211 = tpu.assume_multiple %210, 8 : i32
      %212 = arith.index_cast %211 : i32 to index
      %c0_59 = arith.constant 0 : index
      %213 = vector.load %alloca[%212, %c0_59] : memref<64x1024xf32, #tpu.memory_space<vmem>>, vector<8x1024xf32>
      %cst_60 = arith.constant dense<0.000000e+00> : vector<8x1024xf32>
      %214 = tpu.matmul %200, %8, %cst_60 {dimension_numbers = #tpu.dot_dimension_numbers<[1], [0], [0], [1], [0, 0, 1, 1], [], []>} : vector<8x256xf32>, vector<256x1024xf32>, vector<8x1024xf32> -> vector<8x1024xf32>
      %215 = arith.addf %213, %214 : vector<8x1024xf32>
      %216 = vector.extract_strided_slice %215 {offsets = [0, 0], sizes = [8, 256], strides = [1, 1]} : vector<8x1024xf32> to vector<8x256xf32>
      %217 = arith.negf %216 : vector<8x256xf32>
      %218 = math.exp %217 : vector<8x256xf32>
      %cst_61 = arith.constant 1.000000e+00 : f32
      %219 = vector.broadcast %cst_61 : f32 to vector<8x256xf32>
      %220 = arith.addf %219, %218 : vector<8x256xf32>
      %221 = arith.divf %219, %220 : vector<8x256xf32>
      %222 = vector.extract_strided_slice %215 {offsets = [0, 256], sizes = [8, 256], strides = [1, 1]} : vector<8x1024xf32> to vector<8x256xf32>
      %223 = arith.negf %222 : vector<8x256xf32>
      %224 = math.exp %223 : vector<8x256xf32>
      %cst_62 = arith.constant 1.000000e+00 : f32
      %225 = vector.broadcast %cst_62 : f32 to vector<8x256xf32>
      %226 = arith.addf %225, %224 : vector<8x256xf32>
      %227 = arith.divf %225, %226 : vector<8x256xf32>
      %228 = vector.extract_strided_slice %215 {offsets = [0, 512], sizes = [8, 256], strides = [1, 1]} : vector<8x1024xf32> to vector<8x256xf32>
      %229 = math.tanh %228 : vector<8x256xf32>
      %230 = vector.extract_strided_slice %215 {offsets = [0, 768], sizes = [8, 256], strides = [1, 1]} : vector<8x1024xf32> to vector<8x256xf32>
      %231 = arith.negf %230 : vector<8x256xf32>
      %232 = math.exp %231 : vector<8x256xf32>
      %cst_63 = arith.constant 1.000000e+00 : f32
      %233 = vector.broadcast %cst_63 : f32 to vector<8x256xf32>
      %234 = arith.addf %233, %232 : vector<8x256xf32>
      %235 = arith.divf %233, %234 : vector<8x256xf32>
      %236 = arith.mulf %227, %198 : vector<8x256xf32>
      %237 = arith.mulf %221, %229 : vector<8x256xf32>
      %238 = arith.addf %236, %237 : vector<8x256xf32>
      %239 = math.tanh %238 : vector<8x256xf32>
      %240 = arith.mulf %235, %239 : vector<8x256xf32>
      %c7_i32_64 = arith.constant 7 : i32
      %241 = arith.subi %c7_i32_64, %c5_i32 : i32
      %c8_i32_65 = arith.constant 8 : i32
      %242 = arith.muli %241, %c8_i32_65 : i32
      %243 = tpu.assume_multiple %242, 8 : i32
      %244 = vector.extract_strided_slice %240 {offsets = [0, 0], sizes = [8, 128], strides = [1, 1]} : vector<8x256xf32> to vector<8x128xf32>
      %245 = arith.index_cast %211 : i32 to index
      %c0_66 = arith.constant 0 : index
      %246 = vector.load %arg22[%245, %c0_66] : memref<64x256xf32, #tpu.memory_space<vmem>>, vector<8x128xf32>
      tpu.vector_store %arg22[%245, %c0_66], %244 {strides = array<i32>} : memref<64x256xf32, #tpu.memory_space<vmem>>, vector<8x128xf32>,
      %247 = vector.extract_strided_slice %240 {offsets = [0, 128], sizes = [8, 128], strides = [1, 1]} : vector<8x256xf32> to vector<8x128xf32>
      %248 = arith.index_cast %243 : i32 to index
      %c128_67 = arith.constant 128 : index
      %249 = vector.load %arg22[%248, %c128_67] : memref<64x256xf32, #tpu.memory_space<vmem>>, vector<8x128xf32>
      tpu.vector_store %arg22[%248, %c128_67], %247 {strides = array<i32>} : memref<64x256xf32, #tpu.memory_space<vmem>>, vector<8x128xf32>,
      %c6_i32 = arith.constant 6 : i32
      %c8_i32_68 = arith.constant 8 : i32
      %250 = arith.muli %c6_i32, %c8_i32_68 : i32
      %251 = tpu.assume_multiple %250, 8 : i32
      %252 = arith.index_cast %251 : i32 to index
      %c0_69 = arith.constant 0 : index
      %253 = vector.load %alloca[%252, %c0_69] : memref<64x1024xf32, #tpu.memory_space<vmem>>, vector<8x1024xf32>
      %cst_70 = arith.constant dense<0.000000e+00> : vector<8x1024xf32>
      %254 = tpu.matmul %240, %8, %cst_70 {dimension_numbers = #tpu.dot_dimension_numbers<[1], [0], [0], [1], [0, 0, 1, 1], [], []>} : vector<8x256xf32>, vector<256x1024xf32>, vector<8x1024xf32> -> vector<8x1024xf32>
      %255 = arith.addf %253, %254 : vector<8x1024xf32>
      %256 = vector.extract_strided_slice %255 {offsets = [0, 0], sizes = [8, 256], strides = [1, 1]} : vector<8x1024xf32> to vector<8x256xf32>
      %257 = arith.negf %256 : vector<8x256xf32>
      %258 = math.exp %257 : vector<8x256xf32>
      %cst_71 = arith.constant 1.000000e+00 : f32
      %259 = vector.broadcast %cst_71 : f32 to vector<8x256xf32>
      %260 = arith.addf %259, %258 : vector<8x256xf32>
      %261 = arith.divf %259, %260 : vector<8x256xf32>
      %262 = vector.extract_strided_slice %255 {offsets = [0, 256], sizes = [8, 256], strides = [1, 1]} : vector<8x1024xf32> to vector<8x256xf32>
      %263 = arith.negf %262 : vector<8x256xf32>
      %264 = math.exp %263 : vector<8x256xf32>
      %cst_72 = arith.constant 1.000000e+00 : f32
      %265 = vector.broadcast %cst_72 : f32 to vector<8x256xf32>
      %266 = arith.addf %265, %264 : vector<8x256xf32>
      %267 = arith.divf %265, %266 : vector<8x256xf32>
      %268 = vector.extract_strided_slice %255 {offsets = [0, 512], sizes = [8, 256], strides = [1, 1]} : vector<8x1024xf32> to vector<8x256xf32>
      %269 = math.tanh %268 : vector<8x256xf32>
      %270 = vector.extract_strided_slice %255 {offsets = [0, 768], sizes = [8, 256], strides = [1, 1]} : vector<8x1024xf32> to vector<8x256xf32>
      %271 = arith.negf %270 : vector<8x256xf32>
      %272 = math.exp %271 : vector<8x256xf32>
      %cst_73 = arith.constant 1.000000e+00 : f32
      %273 = vector.broadcast %cst_73 : f32 to vector<8x256xf32>
      %274 = arith.addf %273, %272 : vector<8x256xf32>
      %275 = arith.divf %273, %274 : vector<8x256xf32>
      %276 = arith.mulf %267, %238 : vector<8x256xf32>
      %277 = arith.mulf %261, %269 : vector<8x256xf32>
      %278 = arith.addf %276, %277 : vector<8x256xf32>
      %279 = math.tanh %278 : vector<8x256xf32>
      %280 = arith.mulf %275, %279 : vector<8x256xf32>
      %c7_i32_74 = arith.constant 7 : i32
      %281 = arith.subi %c7_i32_74, %c6_i32 : i32
      %c8_i32_75 = arith.constant 8 : i32
      %282 = arith.muli %281, %c8_i32_75 : i32
      %283 = tpu.assume_multiple %282, 8 : i32
      %284 = vector.extract_strided_slice %280 {offsets = [0, 0], sizes = [8, 128], strides = [1, 1]} : vector<8x256xf32> to vector<8x128xf32>
      %285 = arith.index_cast %251 : i32 to index
      %c0_76 = arith.constant 0 : index
      %286 = vector.load %arg22[%285, %c0_76] : memref<64x256xf32, #tpu.memory_space<vmem>>, vector<8x128xf32>
      tpu.vector_store %arg22[%285, %c0_76], %284 {strides = array<i32>} : memref<64x256xf32, #tpu.memory_space<vmem>>, vector<8x128xf32>,
      %287 = vector.extract_strided_slice %280 {offsets = [0, 128], sizes = [8, 128], strides = [1, 1]} : vector<8x256xf32> to vector<8x128xf32>
      %288 = arith.index_cast %283 : i32 to index
      %c128_77 = arith.constant 128 : index
      %289 = vector.load %arg22[%288, %c128_77] : memref<64x256xf32, #tpu.memory_space<vmem>>, vector<8x128xf32>
      tpu.vector_store %arg22[%288, %c128_77], %287 {strides = array<i32>} : memref<64x256xf32, #tpu.memory_space<vmem>>, vector<8x128xf32>,
      %c7_i32_78 = arith.constant 7 : i32
      %c8_i32_79 = arith.constant 8 : i32
      %290 = arith.muli %c7_i32_78, %c8_i32_79 : i32
      %291 = tpu.assume_multiple %290, 8 : i32
      %292 = arith.index_cast %291 : i32 to index
      %c0_80 = arith.constant 0 : index
      %293 = vector.load %alloca[%292, %c0_80] : memref<64x1024xf32, #tpu.memory_space<vmem>>, vector<8x1024xf32>
      %cst_81 = arith.constant dense<0.000000e+00> : vector<8x1024xf32>
      %294 = tpu.matmul %280, %8, %cst_81 {dimension_numbers = #tpu.dot_dimension_numbers<[1], [0], [0], [1], [0, 0, 1, 1], [], []>} : vector<8x256xf32>, vector<256x1024xf32>, vector<8x1024xf32> -> vector<8x1024xf32>
      %295 = arith.addf %293, %294 : vector<8x1024xf32>
      %296 = vector.extract_strided_slice %295 {offsets = [0, 0], sizes = [8, 256], strides = [1, 1]} : vector<8x1024xf32> to vector<8x256xf32>
      %297 = arith.negf %296 : vector<8x256xf32>
      %298 = math.exp %297 : vector<8x256xf32>
      %cst_82 = arith.constant 1.000000e+00 : f32
      %299 = vector.broadcast %cst_82 : f32 to vector<8x256xf32>
      %300 = arith.addf %299, %298 : vector<8x256xf32>
      %301 = arith.divf %299, %300 : vector<8x256xf32>
      %302 = vector.extract_strided_slice %295 {offsets = [0, 256], sizes = [8, 256], strides = [1, 1]} : vector<8x1024xf32> to vector<8x256xf32>
      %303 = arith.negf %302 : vector<8x256xf32>
      %304 = math.exp %303 : vector<8x256xf32>
      %cst_83 = arith.constant 1.000000e+00 : f32
      %305 = vector.broadcast %cst_83 : f32 to vector<8x256xf32>
      %306 = arith.addf %305, %304 : vector<8x256xf32>
      %307 = arith.divf %305, %306 : vector<8x256xf32>
      %308 = vector.extract_strided_slice %295 {offsets = [0, 512], sizes = [8, 256], strides = [1, 1]} : vector<8x1024xf32> to vector<8x256xf32>
      %309 = math.tanh %308 : vector<8x256xf32>
      %310 = vector.extract_strided_slice %295 {offsets = [0, 768], sizes = [8, 256], strides = [1, 1]} : vector<8x1024xf32> to vector<8x256xf32>
      %311 = arith.negf %310 : vector<8x256xf32>
      %312 = math.exp %311 : vector<8x256xf32>
      %cst_84 = arith.constant 1.000000e+00 : f32
      %313 = vector.broadcast %cst_84 : f32 to vector<8x256xf32>
      %314 = arith.addf %313, %312 : vector<8x256xf32>
      %315 = arith.divf %313, %314 : vector<8x256xf32>
      %316 = arith.mulf %307, %278 : vector<8x256xf32>
      %317 = arith.mulf %301, %309 : vector<8x256xf32>
      %318 = arith.addf %316, %317 : vector<8x256xf32>
      %319 = math.tanh %318 : vector<8x256xf32>
      %320 = arith.mulf %315, %319 : vector<8x256xf32>
      %c7_i32_85 = arith.constant 7 : i32
      %321 = arith.subi %c7_i32_85, %c7_i32_78 : i32
      %c8_i32_86 = arith.constant 8 : i32
      %322 = arith.muli %321, %c8_i32_86 : i32
      %323 = tpu.assume_multiple %322, 8 : i32
      %324 = vector.extract_strided_slice %320 {offsets = [0, 0], sizes = [8, 128], strides = [1, 1]} : vector<8x256xf32> to vector<8x128xf32>
      %325 = arith.index_cast %291 : i32 to index
      %c0_87 = arith.constant 0 : index
      %326 = vector.load %arg22[%325, %c0_87] : memref<64x256xf32, #tpu.memory_space<vmem>>, vector<8x128xf32>
      tpu.vector_store %arg22[%325, %c0_87], %324 {strides = array<i32>} : memref<64x256xf32, #tpu.memory_space<vmem>>, vector<8x128xf32>,
      %327 = vector.extract_strided_slice %320 {offsets = [0, 128], sizes = [8, 128], strides = [1, 1]} : vector<8x256xf32> to vector<8x128xf32>
      %328 = arith.index_cast %323 : i32 to index
      %c128_88 = arith.constant 128 : index
      %329 = vector.load %arg22[%328, %c128_88] : memref<64x256xf32, #tpu.memory_space<vmem>>, vector<8x128xf32>
      tpu.vector_store %arg22[%328, %c128_88], %327 {strides = array<i32>} : memref<64x256xf32, #tpu.memory_space<vmem>>, vector<8x128xf32>,
      %c8_i32_89 = arith.constant 8 : i32
      tpu.yield
    }) : () -> ()
    "tpu.region"() ({
      %alloca = memref.alloca() : memref<64x384xf32, #tpu.memory_space<vmem>>
      %alloca_0 = memref.alloca() : memref<64x384xf32, #tpu.memory_space<vmem>>
      %c0 = arith.constant 0 : index
      %c0_1 = arith.constant 0 : index
      %0 = vector.load %arg22[%c0, %c0_1] : memref<64x256xf32, #tpu.memory_space<vmem>>, vector<64x256xf32>
      %c0_2 = arith.constant 0 : index
      %c0_3 = arith.constant 0 : index
      %1 = vector.load %arg6[%c0_2, %c0_3] : memref<256x384xf32, #tpu.memory_space<vmem>>, vector<256x384xf32>
      %cst = arith.constant dense<0.000000e+00> : vector<64x384xf32>
      %2 = tpu.matmul %0, %1, %cst {dimension_numbers = #tpu.dot_dimension_numbers<[1], [0], [0], [1], [0, 0, 1, 1], [], []>} : vector<64x256xf32>, vector<256x384xf32>, vector<64x384xf32> -> vector<64x384xf32>
      %c0_4 = arith.constant 0 : index
      %c0_5 = arith.constant 0 : index
      %3 = vector.load %arg9[%c0_4, %c0_5] : memref<1x384xf32, #tpu.memory_space<vmem>>, vector<1x384xf32>
      %4 = vector.broadcast %3 : vector<1x384xf32> to vector<64x384xf32>
      %5 = arith.addf %2, %4 : vector<64x384xf32>
      %c0_6 = arith.constant 0 : index
      %c0_7 = arith.constant 0 : index
      %6 = vector.load %alloca[%c0_6, %c0_7] : memref<64x384xf32, #tpu.memory_space<vmem>>, vector<64x384xf32>
      tpu.vector_store %alloca[%c0_6, %c0_7], %5 {strides = array<i32>} : memref<64x384xf32, #tpu.memory_space<vmem>>, vector<64x384xf32>,
      %c0_8 = arith.constant 0 : index
      %c0_9 = arith.constant 0 : index
      %7 = vector.load %arg7[%c0_8, %c0_9] : memref<256x384xf32, #tpu.memory_space<vmem>>, vector<256x384xf32>
      %cst_10 = arith.constant dense<0.000000e+00> : vector<64x384xf32>
      %8 = tpu.matmul %0, %7, %cst_10 {dimension_numbers = #tpu.dot_dimension_numbers<[1], [0], [0], [1], [0, 0, 1, 1], [], []>} : vector<64x256xf32>, vector<256x384xf32>, vector<64x384xf32> -> vector<64x384xf32>
      %c0_11 = arith.constant 0 : index
      %c0_12 = arith.constant 0 : index
      %9 = vector.load %arg10[%c0_11, %c0_12] : memref<1x384xf32, #tpu.memory_space<vmem>>, vector<1x384xf32>
      %10 = vector.broadcast %9 : vector<1x384xf32> to vector<64x384xf32>
      %11 = arith.addf %8, %10 : vector<64x384xf32>
      %c0_13 = arith.constant 0 : index
      %c0_14 = arith.constant 0 : index
      %12 = vector.load %alloca_0[%c0_13, %c0_14] : memref<64x384xf32, #tpu.memory_space<vmem>>, vector<64x384xf32>
      tpu.vector_store %alloca_0[%c0_13, %c0_14], %11 {strides = array<i32>} : memref<64x384xf32, #tpu.memory_space<vmem>>, vector<64x384xf32>,
      %c0_15 = arith.constant 0 : index
      %c0_16 = arith.constant 0 : index
      %13 = vector.load %arg8[%c0_15, %c0_16] : memref<128x384xf32, #tpu.memory_space<vmem>>, vector<128x384xf32>
      %c0_17 = arith.constant 0 : index
      %c0_18 = arith.constant 0 : index
      %14 = vector.load %arg11[%c0_17, %c0_18] : memref<1x384xf32, #tpu.memory_space<vmem>>, vector<1x384xf32>
      %cst_19 = arith.constant 0.000000e+00 : f32
      %15 = vector.broadcast %cst_19 : f32 to vector<8x128xf32>
      %cst_20 = arith.constant 0xFF800000 : f32
      %16 = vector.broadcast %cst_20 : f32 to vector<8x128xf32>
      %c0_i32 = arith.constant 0 : i32
      %c8_i32 = arith.constant 8 : i32
      %17 = arith.muli %c0_i32, %c8_i32 : i32
      %18 = tpu.assume_multiple %17, 8 : i32
      %c7_i32 = arith.constant 7 : i32
      %19 = arith.subi %c7_i32, %c0_i32 : i32
      %c8_i32_21 = arith.constant 8 : i32
      %20 = arith.muli %19, %c8_i32_21 : i32
      %21 = tpu.assume_multiple %20, 8 : i32
      %22 = arith.index_cast %18 : i32 to index
      %c0_22 = arith.constant 0 : index
      %23 = vector.load %alloca[%22, %c0_22] : memref<64x384xf32, #tpu.memory_space<vmem>>, vector<8x384xf32>
      %24 = arith.index_cast %21 : i32 to index
      %c0_23 = arith.constant 0 : index
      %25 = vector.load %alloca_0[%24, %c0_23] : memref<64x384xf32, #tpu.memory_space<vmem>>, vector<8x384xf32>
      %26 = arith.addf %23, %25 : vector<8x384xf32>
      %cst_24 = arith.constant dense<0.000000e+00> : vector<8x384xf32>
      %27 = tpu.matmul %15, %13, %cst_24 {dimension_numbers = #tpu.dot_dimension_numbers<[1], [0], [0], [1], [0, 0, 1, 1], [], []>} : vector<8x128xf32>, vector<128x384xf32>, vector<8x384xf32> -> vector<8x384xf32>
      %28 = vector.broadcast %14 : vector<1x384xf32> to vector<8x384xf32>
      %29 = arith.addf %27, %28 : vector<8x384xf32>
      %30 = vector.extract_strided_slice %26 {offsets = [0, 0], sizes = [8, 128], strides = [1, 1]} : vector<8x384xf32> to vector<8x128xf32>
      %31 = vector.extract_strided_slice %29 {offsets = [0, 0], sizes = [8, 128], strides = [1, 1]} : vector<8x384xf32> to vector<8x128xf32>
      %32 = arith.addf %30, %31 : vector<8x128xf32>
      %33 = arith.negf %32 : vector<8x128xf32>
      %34 = math.exp %33 : vector<8x128xf32>
      %cst_25 = arith.constant 1.000000e+00 : f32
      %35 = vector.broadcast %cst_25 : f32 to vector<8x128xf32>
      %36 = arith.addf %35, %34 : vector<8x128xf32>
      %37 = arith.divf %35, %36 : vector<8x128xf32>
      %38 = vector.extract_strided_slice %26 {offsets = [0, 128], sizes = [8, 128], strides = [1, 1]} : vector<8x384xf32> to vector<8x128xf32>
      %39 = vector.extract_strided_slice %29 {offsets = [0, 128], sizes = [8, 128], strides = [1, 1]} : vector<8x384xf32> to vector<8x128xf32>
      %40 = arith.addf %38, %39 : vector<8x128xf32>
      %41 = arith.negf %40 : vector<8x128xf32>
      %42 = math.exp %41 : vector<8x128xf32>
      %cst_26 = arith.constant 1.000000e+00 : f32
      %43 = vector.broadcast %cst_26 : f32 to vector<8x128xf32>
      %44 = arith.addf %43, %42 : vector<8x128xf32>
      %45 = arith.divf %43, %44 : vector<8x128xf32>
      %46 = vector.extract_strided_slice %26 {offsets = [0, 256], sizes = [8, 128], strides = [1, 1]} : vector<8x384xf32> to vector<8x128xf32>
      %47 = vector.extract_strided_slice %29 {offsets = [0, 256], sizes = [8, 128], strides = [1, 1]} : vector<8x384xf32> to vector<8x128xf32>
      %48 = arith.mulf %37, %47 : vector<8x128xf32>
      %49 = arith.addf %46, %48 : vector<8x128xf32>
      %50 = math.tanh %49 : vector<8x128xf32>
      %cst_27 = arith.constant 1.000000e+00 : f32
      %51 = vector.broadcast %cst_27 : f32 to vector<8x128xf32>
      %52 = arith.subf %51, %45 : vector<8x128xf32>
      %53 = arith.mulf %52, %50 : vector<8x128xf32>
      %54 = arith.mulf %45, %15 : vector<8x128xf32>
      %55 = arith.addf %53, %54 : vector<8x128xf32>
      %56 = arith.addf %15, %55 : vector<8x128xf32>
      %57 = arith.maximumf %16, %55 : vector<8x128xf32>
      %c1_i32 = arith.constant 1 : i32
      %c8_i32_28 = arith.constant 8 : i32
      %58 = arith.muli %c1_i32, %c8_i32_28 : i32
      %59 = tpu.assume_multiple %58, 8 : i32
      %c7_i32_29 = arith.constant 7 : i32
      %60 = arith.subi %c7_i32_29, %c1_i32 : i32
      %c8_i32_30 = arith.constant 8 : i32
      %61 = arith.muli %60, %c8_i32_30 : i32
      %62 = tpu.assume_multiple %61, 8 : i32
      %63 = arith.index_cast %59 : i32 to index
      %c0_31 = arith.constant 0 : index
      %64 = vector.load %alloca[%63, %c0_31] : memref<64x384xf32, #tpu.memory_space<vmem>>, vector<8x384xf32>
      %65 = arith.index_cast %62 : i32 to index
      %c0_32 = arith.constant 0 : index
      %66 = vector.load %alloca_0[%65, %c0_32] : memref<64x384xf32, #tpu.memory_space<vmem>>, vector<8x384xf32>
      %67 = arith.addf %64, %66 : vector<8x384xf32>
      %cst_33 = arith.constant dense<0.000000e+00> : vector<8x384xf32>
      %68 = tpu.matmul %55, %13, %cst_33 {dimension_numbers = #tpu.dot_dimension_numbers<[1], [0], [0], [1], [0, 0, 1, 1], [], []>} : vector<8x128xf32>, vector<128x384xf32>, vector<8x384xf32> -> vector<8x384xf32>
      %69 = vector.broadcast %14 : vector<1x384xf32> to vector<8x384xf32>
      %70 = arith.addf %68, %69 : vector<8x384xf32>
      %71 = vector.extract_strided_slice %67 {offsets = [0, 0], sizes = [8, 128], strides = [1, 1]} : vector<8x384xf32> to vector<8x128xf32>
      %72 = vector.extract_strided_slice %70 {offsets = [0, 0], sizes = [8, 128], strides = [1, 1]} : vector<8x384xf32> to vector<8x128xf32>
      %73 = arith.addf %71, %72 : vector<8x128xf32>
      %74 = arith.negf %73 : vector<8x128xf32>
      %75 = math.exp %74 : vector<8x128xf32>
      %cst_34 = arith.constant 1.000000e+00 : f32
      %76 = vector.broadcast %cst_34 : f32 to vector<8x128xf32>
      %77 = arith.addf %76, %75 : vector<8x128xf32>
      %78 = arith.divf %76, %77 : vector<8x128xf32>
      %79 = vector.extract_strided_slice %67 {offsets = [0, 128], sizes = [8, 128], strides = [1, 1]} : vector<8x384xf32> to vector<8x128xf32>
      %80 = vector.extract_strided_slice %70 {offsets = [0, 128], sizes = [8, 128], strides = [1, 1]} : vector<8x384xf32> to vector<8x128xf32>
      %81 = arith.addf %79, %80 : vector<8x128xf32>
      %82 = arith.negf %81 : vector<8x128xf32>
      %83 = math.exp %82 : vector<8x128xf32>
      %cst_35 = arith.constant 1.000000e+00 : f32
      %84 = vector.broadcast %cst_35 : f32 to vector<8x128xf32>
      %85 = arith.addf %84, %83 : vector<8x128xf32>
      %86 = arith.divf %84, %85 : vector<8x128xf32>
      %87 = vector.extract_strided_slice %67 {offsets = [0, 256], sizes = [8, 128], strides = [1, 1]} : vector<8x384xf32> to vector<8x128xf32>
      %88 = vector.extract_strided_slice %70 {offsets = [0, 256], sizes = [8, 128], strides = [1, 1]} : vector<8x384xf32> to vector<8x128xf32>
      %89 = arith.mulf %78, %88 : vector<8x128xf32>
      %90 = arith.addf %87, %89 : vector<8x128xf32>
      %91 = math.tanh %90 : vector<8x128xf32>
      %cst_36 = arith.constant 1.000000e+00 : f32
      %92 = vector.broadcast %cst_36 : f32 to vector<8x128xf32>
      %93 = arith.subf %92, %86 : vector<8x128xf32>
      %94 = arith.mulf %93, %91 : vector<8x128xf32>
      %95 = arith.mulf %86, %55 : vector<8x128xf32>
      %96 = arith.addf %94, %95 : vector<8x128xf32>
      %97 = arith.addf %56, %96 : vector<8x128xf32>
      %98 = arith.maximumf %57, %96 : vector<8x128xf32>
      %c2_i32 = arith.constant 2 : i32
      %c8_i32_37 = arith.constant 8 : i32
      %99 = arith.muli %c2_i32, %c8_i32_37 : i32
      %100 = tpu.assume_multiple %99, 8 : i32
      %c7_i32_38 = arith.constant 7 : i32
      %101 = arith.subi %c7_i32_38, %c2_i32 : i32
      %c8_i32_39 = arith.constant 8 : i32
      %102 = arith.muli %101, %c8_i32_39 : i32
      %103 = tpu.assume_multiple %102, 8 : i32
      %104 = arith.index_cast %100 : i32 to index
      %c0_40 = arith.constant 0 : index
      %105 = vector.load %alloca[%104, %c0_40] : memref<64x384xf32, #tpu.memory_space<vmem>>, vector<8x384xf32>
      %106 = arith.index_cast %103 : i32 to index
      %c0_41 = arith.constant 0 : index
      %107 = vector.load %alloca_0[%106, %c0_41] : memref<64x384xf32, #tpu.memory_space<vmem>>, vector<8x384xf32>
      %108 = arith.addf %105, %107 : vector<8x384xf32>
      %cst_42 = arith.constant dense<0.000000e+00> : vector<8x384xf32>
      %109 = tpu.matmul %96, %13, %cst_42 {dimension_numbers = #tpu.dot_dimension_numbers<[1], [0], [0], [1], [0, 0, 1, 1], [], []>} : vector<8x128xf32>, vector<128x384xf32>, vector<8x384xf32> -> vector<8x384xf32>
      %110 = vector.broadcast %14 : vector<1x384xf32> to vector<8x384xf32>
      %111 = arith.addf %109, %110 : vector<8x384xf32>
      %112 = vector.extract_strided_slice %108 {offsets = [0, 0], sizes = [8, 128], strides = [1, 1]} : vector<8x384xf32> to vector<8x128xf32>
      %113 = vector.extract_strided_slice %111 {offsets = [0, 0], sizes = [8, 128], strides = [1, 1]} : vector<8x384xf32> to vector<8x128xf32>
      %114 = arith.addf %112, %113 : vector<8x128xf32>
      %115 = arith.negf %114 : vector<8x128xf32>
      %116 = math.exp %115 : vector<8x128xf32>
      %cst_43 = arith.constant 1.000000e+00 : f32
      %117 = vector.broadcast %cst_43 : f32 to vector<8x128xf32>
      %118 = arith.addf %117, %116 : vector<8x128xf32>
      %119 = arith.divf %117, %118 : vector<8x128xf32>
      %120 = vector.extract_strided_slice %108 {offsets = [0, 128], sizes = [8, 128], strides = [1, 1]} : vector<8x384xf32> to vector<8x128xf32>
      %121 = vector.extract_strided_slice %111 {offsets = [0, 128], sizes = [8, 128], strides = [1, 1]} : vector<8x384xf32> to vector<8x128xf32>
      %122 = arith.addf %120, %121 : vector<8x128xf32>
      %123 = arith.negf %122 : vector<8x128xf32>
      %124 = math.exp %123 : vector<8x128xf32>
      %cst_44 = arith.constant 1.000000e+00 : f32
      %125 = vector.broadcast %cst_44 : f32 to vector<8x128xf32>
      %126 = arith.addf %125, %124 : vector<8x128xf32>
      %127 = arith.divf %125, %126 : vector<8x128xf32>
      %128 = vector.extract_strided_slice %108 {offsets = [0, 256], sizes = [8, 128], strides = [1, 1]} : vector<8x384xf32> to vector<8x128xf32>
      %129 = vector.extract_strided_slice %111 {offsets = [0, 256], sizes = [8, 128], strides = [1, 1]} : vector<8x384xf32> to vector<8x128xf32>
      %130 = arith.mulf %119, %129 : vector<8x128xf32>
      %131 = arith.addf %128, %130 : vector<8x128xf32>
      %132 = math.tanh %131 : vector<8x128xf32>
      %cst_45 = arith.constant 1.000000e+00 : f32
      %133 = vector.broadcast %cst_45 : f32 to vector<8x128xf32>
      %134 = arith.subf %133, %127 : vector<8x128xf32>
      %135 = arith.mulf %134, %132 : vector<8x128xf32>
      %136 = arith.mulf %127, %96 : vector<8x128xf32>
      %137 = arith.addf %135, %136 : vector<8x128xf32>
      %138 = arith.addf %97, %137 : vector<8x128xf32>
      %139 = arith.maximumf %98, %137 : vector<8x128xf32>
      %c3_i32 = arith.constant 3 : i32
      %c8_i32_46 = arith.constant 8 : i32
      %140 = arith.muli %c3_i32, %c8_i32_46 : i32
      %141 = tpu.assume_multiple %140, 8 : i32
      %c7_i32_47 = arith.constant 7 : i32
      %142 = arith.subi %c7_i32_47, %c3_i32 : i32
      %c8_i32_48 = arith.constant 8 : i32
      %143 = arith.muli %142, %c8_i32_48 : i32
      %144 = tpu.assume_multiple %143, 8 : i32
      %145 = arith.index_cast %141 : i32 to index
      %c0_49 = arith.constant 0 : index
      %146 = vector.load %alloca[%145, %c0_49] : memref<64x384xf32, #tpu.memory_space<vmem>>, vector<8x384xf32>
      %147 = arith.index_cast %144 : i32 to index
      %c0_50 = arith.constant 0 : index
      %148 = vector.load %alloca_0[%147, %c0_50] : memref<64x384xf32, #tpu.memory_space<vmem>>, vector<8x384xf32>
      %149 = arith.addf %146, %148 : vector<8x384xf32>
      %cst_51 = arith.constant dense<0.000000e+00> : vector<8x384xf32>
      %150 = tpu.matmul %137, %13, %cst_51 {dimension_numbers = #tpu.dot_dimension_numbers<[1], [0], [0], [1], [0, 0, 1, 1], [], []>} : vector<8x128xf32>, vector<128x384xf32>, vector<8x384xf32> -> vector<8x384xf32>
      %151 = vector.broadcast %14 : vector<1x384xf32> to vector<8x384xf32>
      %152 = arith.addf %150, %151 : vector<8x384xf32>
      %153 = vector.extract_strided_slice %149 {offsets = [0, 0], sizes = [8, 128], strides = [1, 1]} : vector<8x384xf32> to vector<8x128xf32>
      %154 = vector.extract_strided_slice %152 {offsets = [0, 0], sizes = [8, 128], strides = [1, 1]} : vector<8x384xf32> to vector<8x128xf32>
      %155 = arith.addf %153, %154 : vector<8x128xf32>
      %156 = arith.negf %155 : vector<8x128xf32>
      %157 = math.exp %156 : vector<8x128xf32>
      %cst_52 = arith.constant 1.000000e+00 : f32
      %158 = vector.broadcast %cst_52 : f32 to vector<8x128xf32>
      %159 = arith.addf %158, %157 : vector<8x128xf32>
      %160 = arith.divf %158, %159 : vector<8x128xf32>
      %161 = vector.extract_strided_slice %149 {offsets = [0, 128], sizes = [8, 128], strides = [1, 1]} : vector<8x384xf32> to vector<8x128xf32>
      %162 = vector.extract_strided_slice %152 {offsets = [0, 128], sizes = [8, 128], strides = [1, 1]} : vector<8x384xf32> to vector<8x128xf32>
      %163 = arith.addf %161, %162 : vector<8x128xf32>
      %164 = arith.negf %163 : vector<8x128xf32>
      %165 = math.exp %164 : vector<8x128xf32>
      %cst_53 = arith.constant 1.000000e+00 : f32
      %166 = vector.broadcast %cst_53 : f32 to vector<8x128xf32>
      %167 = arith.addf %166, %165 : vector<8x128xf32>
      %168 = arith.divf %166, %167 : vector<8x128xf32>
      %169 = vector.extract_strided_slice %149 {offsets = [0, 256], sizes = [8, 128], strides = [1, 1]} : vector<8x384xf32> to vector<8x128xf32>
      %170 = vector.extract_strided_slice %152 {offsets = [0, 256], sizes = [8, 128], strides = [1, 1]} : vector<8x384xf32> to vector<8x128xf32>
      %171 = arith.mulf %160, %170 : vector<8x128xf32>
      %172 = arith.addf %169, %171 : vector<8x128xf32>
      %173 = math.tanh %172 : vector<8x128xf32>
      %cst_54 = arith.constant 1.000000e+00 : f32
      %174 = vector.broadcast %cst_54 : f32 to vector<8x128xf32>
      %175 = arith.subf %174, %168 : vector<8x128xf32>
      %176 = arith.mulf %175, %173 : vector<8x128xf32>
      %177 = arith.mulf %168, %137 : vector<8x128xf32>
      %178 = arith.addf %176, %177 : vector<8x128xf32>
      %179 = arith.addf %138, %178 : vector<8x128xf32>
      %180 = arith.maximumf %139, %178 : vector<8x128xf32>
      %c4_i32 = arith.constant 4 : i32
      %c8_i32_55 = arith.constant 8 : i32
      %181 = arith.muli %c4_i32, %c8_i32_55 : i32
      %182 = tpu.assume_multiple %181, 8 : i32
      %c7_i32_56 = arith.constant 7 : i32
      %183 = arith.subi %c7_i32_56, %c4_i32 : i32
      %c8_i32_57 = arith.constant 8 : i32
      %184 = arith.muli %183, %c8_i32_57 : i32
      %185 = tpu.assume_multiple %184, 8 : i32
      %186 = arith.index_cast %182 : i32 to index
      %c0_58 = arith.constant 0 : index
      %187 = vector.load %alloca[%186, %c0_58] : memref<64x384xf32, #tpu.memory_space<vmem>>, vector<8x384xf32>
      %188 = arith.index_cast %185 : i32 to index
      %c0_59 = arith.constant 0 : index
      %189 = vector.load %alloca_0[%188, %c0_59] : memref<64x384xf32, #tpu.memory_space<vmem>>, vector<8x384xf32>
      %190 = arith.addf %187, %189 : vector<8x384xf32>
      %cst_60 = arith.constant dense<0.000000e+00> : vector<8x384xf32>
      %191 = tpu.matmul %178, %13, %cst_60 {dimension_numbers = #tpu.dot_dimension_numbers<[1], [0], [0], [1], [0, 0, 1, 1], [], []>} : vector<8x128xf32>, vector<128x384xf32>, vector<8x384xf32> -> vector<8x384xf32>
      %192 = vector.broadcast %14 : vector<1x384xf32> to vector<8x384xf32>
      %193 = arith.addf %191, %192 : vector<8x384xf32>
      %194 = vector.extract_strided_slice %190 {offsets = [0, 0], sizes = [8, 128], strides = [1, 1]} : vector<8x384xf32> to vector<8x128xf32>
      %195 = vector.extract_strided_slice %193 {offsets = [0, 0], sizes = [8, 128], strides = [1, 1]} : vector<8x384xf32> to vector<8x128xf32>
      %196 = arith.addf %194, %195 : vector<8x128xf32>
      %197 = arith.negf %196 : vector<8x128xf32>
      %198 = math.exp %197 : vector<8x128xf32>
      %cst_61 = arith.constant 1.000000e+00 : f32
      %199 = vector.broadcast %cst_61 : f32 to vector<8x128xf32>
      %200 = arith.addf %199, %198 : vector<8x128xf32>
      %201 = arith.divf %199, %200 : vector<8x128xf32>
      %202 = vector.extract_strided_slice %190 {offsets = [0, 128], sizes = [8, 128], strides = [1, 1]} : vector<8x384xf32> to vector<8x128xf32>
      %203 = vector.extract_strided_slice %193 {offsets = [0, 128], sizes = [8, 128], strides = [1, 1]} : vector<8x384xf32> to vector<8x128xf32>
      %204 = arith.addf %202, %203 : vector<8x128xf32>
      %205 = arith.negf %204 : vector<8x128xf32>
      %206 = math.exp %205 : vector<8x128xf32>
      %cst_62 = arith.constant 1.000000e+00 : f32
      %207 = vector.broadcast %cst_62 : f32 to vector<8x128xf32>
      %208 = arith.addf %207, %206 : vector<8x128xf32>
      %209 = arith.divf %207, %208 : vector<8x128xf32>
      %210 = vector.extract_strided_slice %190 {offsets = [0, 256], sizes = [8, 128], strides = [1, 1]} : vector<8x384xf32> to vector<8x128xf32>
      %211 = vector.extract_strided_slice %193 {offsets = [0, 256], sizes = [8, 128], strides = [1, 1]} : vector<8x384xf32> to vector<8x128xf32>
      %212 = arith.mulf %201, %211 : vector<8x128xf32>
      %213 = arith.addf %210, %212 : vector<8x128xf32>
      %214 = math.tanh %213 : vector<8x128xf32>
      %cst_63 = arith.constant 1.000000e+00 : f32
      %215 = vector.broadcast %cst_63 : f32 to vector<8x128xf32>
      %216 = arith.subf %215, %209 : vector<8x128xf32>
      %217 = arith.mulf %216, %214 : vector<8x128xf32>
      %218 = arith.mulf %209, %178 : vector<8x128xf32>
      %219 = arith.addf %217, %218 : vector<8x128xf32>
      %220 = arith.addf %179, %219 : vector<8x128xf32>
      %221 = arith.maximumf %180, %219 : vector<8x128xf32>
      %c5_i32 = arith.constant 5 : i32
      %c8_i32_64 = arith.constant 8 : i32
      %222 = arith.muli %c5_i32, %c8_i32_64 : i32
      %223 = tpu.assume_multiple %222, 8 : i32
      %c7_i32_65 = arith.constant 7 : i32
      %224 = arith.subi %c7_i32_65, %c5_i32 : i32
      %c8_i32_66 = arith.constant 8 : i32
      %225 = arith.muli %224, %c8_i32_66 : i32
      %226 = tpu.assume_multiple %225, 8 : i32
      %227 = arith.index_cast %223 : i32 to index
      %c0_67 = arith.constant 0 : index
      %228 = vector.load %alloca[%227, %c0_67] : memref<64x384xf32, #tpu.memory_space<vmem>>, vector<8x384xf32>
      %229 = arith.index_cast %226 : i32 to index
      %c0_68 = arith.constant 0 : index
      %230 = vector.load %alloca_0[%229, %c0_68] : memref<64x384xf32, #tpu.memory_space<vmem>>, vector<8x384xf32>
      %231 = arith.addf %228, %230 : vector<8x384xf32>
      %cst_69 = arith.constant dense<0.000000e+00> : vector<8x384xf32>
      %232 = tpu.matmul %219, %13, %cst_69 {dimension_numbers = #tpu.dot_dimension_numbers<[1], [0], [0], [1], [0, 0, 1, 1], [], []>} : vector<8x128xf32>, vector<128x384xf32>, vector<8x384xf32> -> vector<8x384xf32>
      %233 = vector.broadcast %14 : vector<1x384xf32> to vector<8x384xf32>
      %234 = arith.addf %232, %233 : vector<8x384xf32>
      %235 = vector.extract_strided_slice %231 {offsets = [0, 0], sizes = [8, 128], strides = [1, 1]} : vector<8x384xf32> to vector<8x128xf32>
      %236 = vector.extract_strided_slice %234 {offsets = [0, 0], sizes = [8, 128], strides = [1, 1]} : vector<8x384xf32> to vector<8x128xf32>
      %237 = arith.addf %235, %236 : vector<8x128xf32>
      %238 = arith.negf %237 : vector<8x128xf32>
      %239 = math.exp %238 : vector<8x128xf32>
      %cst_70 = arith.constant 1.000000e+00 : f32
      %240 = vector.broadcast %cst_70 : f32 to vector<8x128xf32>
      %241 = arith.addf %240, %239 : vector<8x128xf32>
      %242 = arith.divf %240, %241 : vector<8x128xf32>
      %243 = vector.extract_strided_slice %231 {offsets = [0, 128], sizes = [8, 128], strides = [1, 1]} : vector<8x384xf32> to vector<8x128xf32>
      %244 = vector.extract_strided_slice %234 {offsets = [0, 128], sizes = [8, 128], strides = [1, 1]} : vector<8x384xf32> to vector<8x128xf32>
      %245 = arith.addf %243, %244 : vector<8x128xf32>
      %246 = arith.negf %245 : vector<8x128xf32>
      %247 = math.exp %246 : vector<8x128xf32>
      %cst_71 = arith.constant 1.000000e+00 : f32
      %248 = vector.broadcast %cst_71 : f32 to vector<8x128xf32>
      %249 = arith.addf %248, %247 : vector<8x128xf32>
      %250 = arith.divf %248, %249 : vector<8x128xf32>
      %251 = vector.extract_strided_slice %231 {offsets = [0, 256], sizes = [8, 128], strides = [1, 1]} : vector<8x384xf32> to vector<8x128xf32>
      %252 = vector.extract_strided_slice %234 {offsets = [0, 256], sizes = [8, 128], strides = [1, 1]} : vector<8x384xf32> to vector<8x128xf32>
      %253 = arith.mulf %242, %252 : vector<8x128xf32>
      %254 = arith.addf %251, %253 : vector<8x128xf32>
      %255 = math.tanh %254 : vector<8x128xf32>
      %cst_72 = arith.constant 1.000000e+00 : f32
      %256 = vector.broadcast %cst_72 : f32 to vector<8x128xf32>
      %257 = arith.subf %256, %250 : vector<8x128xf32>
      %258 = arith.mulf %257, %255 : vector<8x128xf32>
      %259 = arith.mulf %250, %219 : vector<8x128xf32>
      %260 = arith.addf %258, %259 : vector<8x128xf32>
      %261 = arith.addf %220, %260 : vector<8x128xf32>
      %262 = arith.maximumf %221, %260 : vector<8x128xf32>
      %c6_i32 = arith.constant 6 : i32
      %c8_i32_73 = arith.constant 8 : i32
      %263 = arith.muli %c6_i32, %c8_i32_73 : i32
      %264 = tpu.assume_multiple %263, 8 : i32
      %c7_i32_74 = arith.constant 7 : i32
      %265 = arith.subi %c7_i32_74, %c6_i32 : i32
      %c8_i32_75 = arith.constant 8 : i32
      %266 = arith.muli %265, %c8_i32_75 : i32
      %267 = tpu.assume_multiple %266, 8 : i32
      %268 = arith.index_cast %264 : i32 to index
      %c0_76 = arith.constant 0 : index
      %269 = vector.load %alloca[%268, %c0_76] : memref<64x384xf32, #tpu.memory_space<vmem>>, vector<8x384xf32>
      %270 = arith.index_cast %267 : i32 to index
      %c0_77 = arith.constant 0 : index
      %271 = vector.load %alloca_0[%270, %c0_77] : memref<64x384xf32, #tpu.memory_space<vmem>>, vector<8x384xf32>
      %272 = arith.addf %269, %271 : vector<8x384xf32>
      %cst_78 = arith.constant dense<0.000000e+00> : vector<8x384xf32>
      %273 = tpu.matmul %260, %13, %cst_78 {dimension_numbers = #tpu.dot_dimension_numbers<[1], [0], [0], [1], [0, 0, 1, 1], [], []>} : vector<8x128xf32>, vector<128x384xf32>, vector<8x384xf32> -> vector<8x384xf32>
      %274 = vector.broadcast %14 : vector<1x384xf32> to vector<8x384xf32>
      %275 = arith.addf %273, %274 : vector<8x384xf32>
      %276 = vector.extract_strided_slice %272 {offsets = [0, 0], sizes = [8, 128], strides = [1, 1]} : vector<8x384xf32> to vector<8x128xf32>
      %277 = vector.extract_strided_slice %275 {offsets = [0, 0], sizes = [8, 128], strides = [1, 1]} : vector<8x384xf32> to vector<8x128xf32>
      %278 = arith.addf %276, %277 : vector<8x128xf32>
      %279 = arith.negf %278 : vector<8x128xf32>
      %280 = math.exp %279 : vector<8x128xf32>
      %cst_79 = arith.constant 1.000000e+00 : f32
      %281 = vector.broadcast %cst_79 : f32 to vector<8x128xf32>
      %282 = arith.addf %281, %280 : vector<8x128xf32>
      %283 = arith.divf %281, %282 : vector<8x128xf32>
      %284 = vector.extract_strided_slice %272 {offsets = [0, 128], sizes = [8, 128], strides = [1, 1]} : vector<8x384xf32> to vector<8x128xf32>
      %285 = vector.extract_strided_slice %275 {offsets = [0, 128], sizes = [8, 128], strides = [1, 1]} : vector<8x384xf32> to vector<8x128xf32>
      %286 = arith.addf %284, %285 : vector<8x128xf32>
      %287 = arith.negf %286 : vector<8x128xf32>
      %288 = math.exp %287 : vector<8x128xf32>
      %cst_80 = arith.constant 1.000000e+00 : f32
      %289 = vector.broadcast %cst_80 : f32 to vector<8x128xf32>
      %290 = arith.addf %289, %288 : vector<8x128xf32>
      %291 = arith.divf %289, %290 : vector<8x128xf32>
      %292 = vector.extract_strided_slice %272 {offsets = [0, 256], sizes = [8, 128], strides = [1, 1]} : vector<8x384xf32> to vector<8x128xf32>
      %293 = vector.extract_strided_slice %275 {offsets = [0, 256], sizes = [8, 128], strides = [1, 1]} : vector<8x384xf32> to vector<8x128xf32>
      %294 = arith.mulf %283, %293 : vector<8x128xf32>
      %295 = arith.addf %292, %294 : vector<8x128xf32>
      %296 = math.tanh %295 : vector<8x128xf32>
      %cst_81 = arith.constant 1.000000e+00 : f32
      %297 = vector.broadcast %cst_81 : f32 to vector<8x128xf32>
      %298 = arith.subf %297, %291 : vector<8x128xf32>
      %299 = arith.mulf %298, %296 : vector<8x128xf32>
      %300 = arith.mulf %291, %260 : vector<8x128xf32>
      %301 = arith.addf %299, %300 : vector<8x128xf32>
      %302 = arith.addf %261, %301 : vector<8x128xf32>
      %303 = arith.maximumf %262, %301 : vector<8x128xf32>
      %c7_i32_82 = arith.constant 7 : i32
      %c8_i32_83 = arith.constant 8 : i32
      %304 = arith.muli %c7_i32_82, %c8_i32_83 : i32
      %305 = tpu.assume_multiple %304, 8 : i32
      %c7_i32_84 = arith.constant 7 : i32
      %306 = arith.subi %c7_i32_84, %c7_i32_82 : i32
      %c8_i32_85 = arith.constant 8 : i32
      %307 = arith.muli %306, %c8_i32_85 : i32
      %308 = tpu.assume_multiple %307, 8 : i32
      %309 = arith.index_cast %305 : i32 to index
      %c0_86 = arith.constant 0 : index
      %310 = vector.load %alloca[%309, %c0_86] : memref<64x384xf32, #tpu.memory_space<vmem>>, vector<8x384xf32>
      %311 = arith.index_cast %308 : i32 to index
      %c0_87 = arith.constant 0 : index
      %312 = vector.load %alloca_0[%311, %c0_87] : memref<64x384xf32, #tpu.memory_space<vmem>>, vector<8x384xf32>
      %313 = arith.addf %310, %312 : vector<8x384xf32>
      %cst_88 = arith.constant dense<0.000000e+00> : vector<8x384xf32>
      %314 = tpu.matmul %301, %13, %cst_88 {dimension_numbers = #tpu.dot_dimension_numbers<[1], [0], [0], [1], [0, 0, 1, 1], [], []>} : vector<8x128xf32>, vector<128x384xf32>, vector<8x384xf32> -> vector<8x384xf32>
      %315 = vector.broadcast %14 : vector<1x384xf32> to vector<8x384xf32>
      %316 = arith.addf %314, %315 : vector<8x384xf32>
      %317 = vector.extract_strided_slice %313 {offsets = [0, 0], sizes = [8, 128], strides = [1, 1]} : vector<8x384xf32> to vector<8x128xf32>
      %318 = vector.extract_strided_slice %316 {offsets = [0, 0], sizes = [8, 128], strides = [1, 1]} : vector<8x384xf32> to vector<8x128xf32>
      %319 = arith.addf %317, %318 : vector<8x128xf32>
      %320 = arith.negf %319 : vector<8x128xf32>
      %321 = math.exp %320 : vector<8x128xf32>
      %cst_89 = arith.constant 1.000000e+00 : f32
      %322 = vector.broadcast %cst_89 : f32 to vector<8x128xf32>
      %323 = arith.addf %322, %321 : vector<8x128xf32>
      %324 = arith.divf %322, %323 : vector<8x128xf32>
      %325 = vector.extract_strided_slice %313 {offsets = [0, 128], sizes = [8, 128], strides = [1, 1]} : vector<8x384xf32> to vector<8x128xf32>
      %326 = vector.extract_strided_slice %316 {offsets = [0, 128], sizes = [8, 128], strides = [1, 1]} : vector<8x384xf32> to vector<8x128xf32>
      %327 = arith.addf %325, %326 : vector<8x128xf32>
      %328 = arith.negf %327 : vector<8x128xf32>
      %329 = math.exp %328 : vector<8x128xf32>
      %cst_90 = arith.constant 1.000000e+00 : f32
      %330 = vector.broadcast %cst_90 : f32 to vector<8x128xf32>
      %331 = arith.addf %330, %329 : vector<8x128xf32>
      %332 = arith.divf %330, %331 : vector<8x128xf32>
      %333 = vector.extract_strided_slice %313 {offsets = [0, 256], sizes = [8, 128], strides = [1, 1]} : vector<8x384xf32> to vector<8x128xf32>
      %334 = vector.extract_strided_slice %316 {offsets = [0, 256], sizes = [8, 128], strides = [1, 1]} : vector<8x384xf32> to vector<8x128xf32>
      %335 = arith.mulf %324, %334 : vector<8x128xf32>
      %336 = arith.addf %333, %335 : vector<8x128xf32>
      %337 = math.tanh %336 : vector<8x128xf32>
      %cst_91 = arith.constant 1.000000e+00 : f32
      %338 = vector.broadcast %cst_91 : f32 to vector<8x128xf32>
      %339 = arith.subf %338, %332 : vector<8x128xf32>
      %340 = arith.mulf %339, %337 : vector<8x128xf32>
      %341 = arith.mulf %332, %301 : vector<8x128xf32>
      %342 = arith.addf %340, %341 : vector<8x128xf32>
      %343 = arith.addf %302, %342 : vector<8x128xf32>
      %344 = arith.maximumf %303, %342 : vector<8x128xf32>
      %c8_i32_92 = arith.constant 8 : i32
      %cst_93 = arith.constant 1.250000e-01 : f32
      %345 = vector.broadcast %cst_93 : f32 to vector<8x128xf32>
      %346 = arith.mulf %343, %345 : vector<8x128xf32>
      %c0_94 = arith.constant 0 : index
      %c0_95 = arith.constant 0 : index
      %347 = vector.load %arg12[%c0_94, %c0_95] : memref<128x16xf32, #tpu.memory_space<vmem>>, vector<128x16xf32>
      %cst_96 = arith.constant dense<0.000000e+00> : vector<8x16xf32>
      %348 = tpu.matmul %342, %347, %cst_96 {dimension_numbers = #tpu.dot_dimension_numbers<[1], [0], [0], [1], [0, 0, 1, 1], [], []>} : vector<8x128xf32>, vector<128x16xf32>, vector<8x16xf32> -> vector<8x16xf32>
      %c0_97 = arith.constant 0 : index
      %c0_98 = arith.constant 0 : index
      %349 = vector.load %arg13[%c0_97, %c0_98] : memref<128x16xf32, #tpu.memory_space<vmem>>, vector<128x16xf32>
      %cst_99 = arith.constant dense<0.000000e+00> : vector<8x16xf32>
      %350 = tpu.matmul %346, %349, %cst_99 {dimension_numbers = #tpu.dot_dimension_numbers<[1], [0], [0], [1], [0, 0, 1, 1], [], []>} : vector<8x128xf32>, vector<128x16xf32>, vector<8x16xf32> -> vector<8x16xf32>
      %351 = arith.addf %348, %350 : vector<8x16xf32>
      %c0_100 = arith.constant 0 : index
      %c0_101 = arith.constant 0 : index
      %352 = vector.load %arg14[%c0_100, %c0_101] : memref<128x16xf32, #tpu.memory_space<vmem>>, vector<128x16xf32>
      %cst_102 = arith.constant dense<0.000000e+00> : vector<8x16xf32>
      %353 = tpu.matmul %344, %352, %cst_102 {dimension_numbers = #tpu.dot_dimension_numbers<[1], [0], [0], [1], [0, 0, 1, 1], [], []>} : vector<8x128xf32>, vector<128x16xf32>, vector<8x16xf32> -> vector<8x16xf32>
      %354 = arith.addf %351, %353 : vector<8x16xf32>
      %c0_103 = arith.constant 0 : index
      %c0_104 = arith.constant 0 : index
      %355 = vector.load %arg2[%c0_103, %c0_104] : memref<8x1xf32, #tpu.memory_space<vmem>>, vector<8x1xf32>
      %c0_105 = arith.constant 0 : index
      %c0_106 = arith.constant 0 : index
      %356 = vector.load %arg15[%c0_105, %c0_106] : memref<1x16xf32, #tpu.memory_space<vmem>>, vector<1x16xf32>
      %357 = vector.broadcast %355 : vector<8x1xf32> to vector<8x16xf32>
      %358 = vector.broadcast %356 : vector<1x16xf32> to vector<8x16xf32>
      %359 = arith.mulf %357, %358 : vector<8x16xf32>
      %360 = arith.addf %354, %359 : vector<8x16xf32>
      %c0_107 = arith.constant 0 : index
      %c0_108 = arith.constant 0 : index
      %361 = vector.load %arg16[%c0_107, %c0_108] : memref<1x16xf32, #tpu.memory_space<vmem>>, vector<1x16xf32>
      %362 = vector.broadcast %361 : vector<1x16xf32> to vector<8x16xf32>
      %363 = arith.addf %360, %362 : vector<8x16xf32>
      %cst_109 = arith.constant 0.000000e+00 : f32
      %364 = vector.broadcast %cst_109 : f32 to vector<8x16xf32>
      %365 = arith.maximumf %363, %364 : vector<8x16xf32>
      %c0_110 = arith.constant 0 : index
      %c0_111 = arith.constant 0 : index
      %366 = vector.load %arg17[%c0_110, %c0_111] : memref<1x16xf32, #tpu.memory_space<vmem>>, vector<1x16xf32>
      %367 = vector.broadcast %366 : vector<1x16xf32> to vector<8x16xf32>
      %368 = arith.mulf %365, %367 : vector<8x16xf32>
      %c0_112 = arith.constant 0 : index
      %c0_113 = arith.constant 0 : index
      %369 = vector.load %arg18[%c0_112, %c0_113] : memref<1x16xf32, #tpu.memory_space<vmem>>, vector<1x16xf32>
      %370 = vector.broadcast %369 : vector<1x16xf32> to vector<8x16xf32>
      %371 = arith.addf %368, %370 : vector<8x16xf32>
      %c0_114 = arith.constant 0 : index
      %c0_115 = arith.constant 0 : index
      %372 = vector.load %arg19[%c0_114, %c0_115] : memref<16x1xf32, #tpu.memory_space<vmem>>, vector<16x1xf32>
      %cst_116 = arith.constant dense<0.000000e+00> : vector<8x1xf32>
      %373 = tpu.matmul %371, %372, %cst_116 {dimension_numbers = #tpu.dot_dimension_numbers<[1], [0], [0], [1], [0, 0, 1, 1], [], []>} : vector<8x16xf32>, vector<16x1xf32>, vector<8x1xf32> -> vector<8x1xf32>
      %c0_117 = arith.constant 0 : index
      %c0_118 = arith.constant 0 : index
      %374 = vector.load %arg20[%c0_117, %c0_118] : memref<1x1xf32, #tpu.memory_space<vmem>>, vector<1x1xf32>
      %375 = vector.broadcast %374 : vector<1x1xf32> to vector<8x1xf32>
      %376 = arith.addf %373, %375 : vector<8x1xf32>
      %c0_119 = arith.constant 0 : index
      %c0_120 = arith.constant 0 : index
      %377 = vector.load %arg21[%c0_119, %c0_120] : memref<8x1xf32, #tpu.memory_space<vmem>>, vector<8x1xf32>
      tpu.vector_store %arg21[%c0_119, %c0_120], %376 {strides = array<i32>} : memref<8x1xf32, #tpu.memory_space<vmem>>, vector<8x1xf32>,
      tpu.yield
    }) : () -> ()
    return
  }
  func.func @transform_0(%arg0: i32) -> (i32, i32, i32) {
    %c0_i32 = arith.constant 0 : i32
    %c0_i32_0 = arith.constant 0 : i32
    %c0_i32_1 = arith.constant 0 : i32
    return %arg0, %c0_i32, %c0_i32_0 : i32, i32, i32
  }
  func.func @transform_1(%arg0: i32) -> (i32, i32) {
    %c0_i32 = arith.constant 0 : i32
    %c0_i32_0 = arith.constant 0 : i32
    return %arg0, %c0_i32 : i32, i32
  }
  func.func @transform_2(%arg0: i32) -> (i32, i32) {
    %c0_i32 = arith.constant 0 : i32
    %c0_i32_0 = arith.constant 0 : i32
    %c0_i32_1 = arith.constant 0 : i32
    return %c0_i32, %c0_i32_0 : i32, i32
  }
  func.func @transform_3(%arg0: i32) -> (i32, i32) {
    %c0_i32 = arith.constant 0 : i32
    %c0_i32_0 = arith.constant 0 : i32
    %c0_i32_1 = arith.constant 0 : i32
    return %c0_i32, %c0_i32_0 : i32, i32
  }
  func.func @transform_4(%arg0: i32) -> (i32, i32) {
    %c0_i32 = arith.constant 0 : i32
    %c0_i32_0 = arith.constant 0 : i32
    %c0_i32_1 = arith.constant 0 : i32
    return %c0_i32, %c0_i32_0 : i32, i32
  }
  func.func @transform_5(%arg0: i32) -> (i32, i32) {
    %c0_i32 = arith.constant 0 : i32
    %c0_i32_0 = arith.constant 0 : i32
    %c0_i32_1 = arith.constant 0 : i32
    return %c0_i32, %c0_i32_0 : i32, i32
  }
  func.func @transform_6(%arg0: i32) -> (i32, i32) {
    %c0_i32 = arith.constant 0 : i32
    %c0_i32_0 = arith.constant 0 : i32
    %c0_i32_1 = arith.constant 0 : i32
    return %c0_i32, %c0_i32_0 : i32, i32
  }
  func.func @transform_7(%arg0: i32) -> (i32, i32) {
    %c0_i32 = arith.constant 0 : i32
    %c0_i32_0 = arith.constant 0 : i32
    %c0_i32_1 = arith.constant 0 : i32
    return %c0_i32, %c0_i32_0 : i32, i32
  }
  func.func @transform_8(%arg0: i32) -> (i32, i32) {
    %c0_i32 = arith.constant 0 : i32
    %c0_i32_0 = arith.constant 0 : i32
    %c0_i32_1 = arith.constant 0 : i32
    return %c0_i32, %c0_i32_0 : i32, i32
  }
  func.func @transform_9(%arg0: i32) -> (i32, i32) {
    %c0_i32 = arith.constant 0 : i32
    %c0_i32_0 = arith.constant 0 : i32
    %c0_i32_1 = arith.constant 0 : i32
    return %c0_i32, %c0_i32_0 : i32, i32
  }
  func.func @transform_10(%arg0: i32) -> (i32, i32) {
    %c0_i32 = arith.constant 0 : i32
    %c0_i32_0 = arith.constant 0 : i32
    %c0_i32_1 = arith.constant 0 : i32
    return %c0_i32, %c0_i32_0 : i32, i32
  }
  func.func @transform_11(%arg0: i32) -> (i32, i32) {
    %c0_i32 = arith.constant 0 : i32
    %c0_i32_0 = arith.constant 0 : i32
    %c0_i32_1 = arith.constant 0 : i32
    return %c0_i32, %c0_i32_0 : i32, i32
  }
  func.func @transform_12(%arg0: i32) -> (i32, i32) {
    %c0_i32 = arith.constant 0 : i32
    %c0_i32_0 = arith.constant 0 : i32
    %c0_i32_1 = arith.constant 0 : i32
    return %c0_i32, %c0_i32_0 : i32, i32
  }
  func.func @transform_13(%arg0: i32) -> (i32, i32) {
    %c0_i32 = arith.constant 0 : i32
    %c0_i32_0 = arith.constant 0 : i32
    %c0_i32_1 = arith.constant 0 : i32
    return %c0_i32, %c0_i32_0 : i32, i32
  }
  func.func @transform_14(%arg0: i32) -> (i32, i32) {
    %c0_i32 = arith.constant 0 : i32
    %c0_i32_0 = arith.constant 0 : i32
    %c0_i32_1 = arith.constant 0 : i32
    return %c0_i32, %c0_i32_0 : i32, i32
  }
  func.func @transform_15(%arg0: i32) -> (i32, i32) {
    %c0_i32 = arith.constant 0 : i32
    %c0_i32_0 = arith.constant 0 : i32
    %c0_i32_1 = arith.constant 0 : i32
    return %c0_i32, %c0_i32_0 : i32, i32
  }
  func.func @transform_16(%arg0: i32) -> (i32, i32) {
    %c0_i32 = arith.constant 0 : i32
    %c0_i32_0 = arith.constant 0 : i32
    %c0_i32_1 = arith.constant 0 : i32
    return %c0_i32, %c0_i32_0 : i32, i32
  }
  func.func @transform_17(%arg0: i32) -> (i32, i32) {
    %c0_i32 = arith.constant 0 : i32
    %c0_i32_0 = arith.constant 0 : i32
    %c0_i32_1 = arith.constant 0 : i32
    return %c0_i32, %c0_i32_0 : i32, i32
  }
  func.func @transform_18(%arg0: i32) -> (i32, i32) {
    %c0_i32 = arith.constant 0 : i32
    %c0_i32_0 = arith.constant 0 : i32
    %c0_i32_1 = arith.constant 0 : i32
    return %c0_i32, %c0_i32_0 : i32, i32
  }
  func.func @transform_19(%arg0: i32) -> (i32, i32) {
    %c0_i32 = arith.constant 0 : i32
    %c0_i32_0 = arith.constant 0 : i32
    %c0_i32_1 = arith.constant 0 : i32
    return %c0_i32, %c0_i32_0 : i32, i32
  }
  func.func @transform_20(%arg0: i32) -> (i32, i32) {
    %c0_i32 = arith.constant 0 : i32
    %c0_i32_0 = arith.constant 0 : i32
    return %arg0, %c0_i32 : i32, i32
  }
}

</mosaic_0001>

<llo_original>
// kernel: lstm_forward_backward.1
$region0: #{lstm_forward_backward.1}
  #allocation0 [shape = 'u32[]', space=smem, size = 0x4, offset = 0x4, fixed_abs, tag = 'smem constant byte address 0x4 - core index']
  #allocation1 [shape = 'u32[72,128]{1,0:T(1,128)}', space=vmem, size = 0x9000, scoped, tag = 'internal scratch']
  #allocation2 [shape = 'f32[64,256]{1,0:T(8,128)}', space=vmem, size = 0x10000, scoped, tag = 'scratch operand']
  #allocation3 [shape = 'f32[1,1]{1,0:T(1,128)S(1)}', space=vmem, size = 0x200, scoped, tag = 'scoped memory for lstm_forward_backward.1']
  %s0 = inlined_call_operand.vmem [shape: f32[1,64,64], index: 0, kind: input, shape index: {}]
  %s1 = inlined_call_operand.vmem [shape: f32[8,1], index: 1, kind: input, shape index: {}]
  %s2 = inlined_call_operand.hbm [shape: f32[64,1024], index: 2, kind: input, shape index: {}]
  %s3 = inlined_call_operand.hbm [shape: f32[256,1024], index: 3, kind: input, shape index: {}]
  %s4 = inlined_call_operand.vmem [shape: f32[1,1024], index: 4, kind: input, shape index: {}]
  %s5 = inlined_call_operand.vmem [shape: f32[256,384], index: 5, kind: input, shape index: {}]
  %s6 = inlined_call_operand.hbm [shape: f32[256,384], index: 6, kind: input, shape index: {}]
  %s7 = inlined_call_operand.hbm [shape: f32[128,384], index: 7, kind: input, shape index: {}]
  %s8 = inlined_call_operand.vmem [shape: f32[1,384], index: 8, kind: input, shape index: {}]
  %s9 = inlined_call_operand.vmem [shape: f32[1,384], index: 9, kind: input, shape index: {}]
  %s10 = inlined_call_operand.vmem [shape: f32[1,384], index: 10, kind: input, shape index: {}]
  %s11 = inlined_call_operand.vmem [shape: f32[128,16], index: 11, kind: input, shape index: {}]
  %s12 = inlined_call_operand.vmem [shape: f32[128,16], index: 12, kind: input, shape index: {}]
  %s13 = inlined_call_operand.vmem [shape: f32[128,16], index: 13, kind: input, shape index: {}]
  %s14 = inlined_call_operand.vmem [shape: f32[1,16], index: 14, kind: input, shape index: {}]
  %s15 = inlined_call_operand.vmem [shape: f32[1,16], index: 15, kind: input, shape index: {}]
  %s16 = inlined_call_operand.vmem [shape: f32[1,16], index: 16, kind: input, shape index: {}]
  %s17 = inlined_call_operand.vmem [shape: f32[1,16], index: 17, kind: input, shape index: {}]
  %s18 = inlined_call_operand.vmem [shape: f32[16,1], index: 18, kind: input, shape index: {}]
  %s19 = inlined_call_operand.<no memory space> [shape: f32[1,1], index: 19, kind: input, shape index: {}]
  %s20 = inlined_call_operand.vmem [shape: f32[8,1], index: 20, kind: output, shape index: {}]
  %s21 = sld [smem:[#allocation0]]
  $region108: #{lstm_forward_backward.1} parent=0
    _
  %s23 = ssub.s32 1, %s21
  %s24 = scalar_select 0, %s23, %s21
  %v25 = vstv %s19
  %26 = vst [vmem:[#allocation3] sm:$0x1] %v25
  $region1: #{lstm_forward_backward.1} parent=0
    #allocation4 [shape = 'u8[262144]{0}', space=vmem, size = 0x40000, scoped, tag = 'input window, operand 2, single buffered']
    #allocation5 [shape = 's32[1]{0}', space=sflag, size = 0x4, scoped, tag = 'scoped memory for lstm_forward_backward.1']
    #allocation6 [shape = 'u8[1048576]{0}', space=vmem, size = 0x100000, scoped, tag = 'input window, operand 3, single buffered']
    #allocation7 [shape = 's32[1]{0}', space=sflag, size = 0x4, scoped, tag = 'scoped memory for lstm_forward_backward.1']
    #allocation8 [shape = 'u8[393216]{0}', space=vmem, size = 0x60000, scoped, tag = 'input window, operand 6, single buffered']
    #allocation9 [shape = 'u8[196608]{0}', space=vmem, size = 0x30000, scoped, tag = 'input window, operand 7, single buffered']
    #allocation10 [shape = 's32[1]{0}', space=sflag, size = 0x4, scoped, tag = 'scoped memory for lstm_forward_backward.1']
    %27 = vsyncpa [#allocation5], 0
    %28 = vsyncpa [#allocation7], 0
    %29 = vsyncpa [#allocation10], 0
    // Predicated region
    $region2: #{lstm_forward_backward.1} parent=1 // pred_check
      _
    $region3: #{lstm_forward_backward.1} parent=1 // pred_check_branch
      %31 = sbr.rel (0) target = $region5
    $region4: #{lstm_forward_backward.1} parent=1 // pred_region
      _
    $region5: #{lstm_forward_backward.1} parent=1 // pred_fallthru
      _
    // Predicated region
    $region6: #{lstm_forward_backward.1} parent=1 // pred_check
      _
    $region7: #{lstm_forward_backward.1} parent=1 // pred_check_branch
      %33 = sbr.rel (0) target = $region9
    $region8: #{lstm_forward_backward.1} parent=1 // pred_region
      _
    $region9: #{lstm_forward_backward.1} parent=1 // pred_fallthru
      _
    // Predicated region
    $region10: #{lstm_forward_backward.1} parent=1 // pred_check
      _
    $region11: #{lstm_forward_backward.1} parent=1 // pred_check_branch
      %35 = sbr.rel (0) target = $region13
    $region12: #{lstm_forward_backward.1} parent=1 // pred_region
      %37 = vsyncadd [#allocation5], 0
      %s38 = sshll.u32 %s2, 4
      %s39 = int_to_ptr.hbm [resolvable:$true] %s38
      %s40 = sshll.u32 [#allocation4], 4
      %s41 = int_to_ptr.vmem [resolvable:$true] %s40
      %46 = dma.hbm_to_vmem [thread:$0]  %s39, 8192, %s41, [#allocation5], 1024, 1024, 64
    $region13: #{lstm_forward_backward.1} parent=1 // pred_fallthru
      _
    // Predicated region
    $region14: #{lstm_forward_backward.1} parent=1 // pred_check
      _
    $region15: #{lstm_forward_backward.1} parent=1 // pred_check_branch
      %48 = sbr.rel (0) target = $region17
    $region16: #{lstm_forward_backward.1} parent=1 // pred_region
      %50 = vsyncadd [#allocation7], 0
      %s51 = sshll.u32 %s3, 4
      %s52 = int_to_ptr.hbm [resolvable:$true] %s51
      %s53 = sshll.u32 [#allocation6], 4
      %s54 = int_to_ptr.vmem [resolvable:$true] %s53
      %59 = dma.hbm_to_vmem [thread:$0]  %s52, 32768, %s54, [#allocation7], 1024, 1024, 64
    $region17: #{lstm_forward_backward.1} parent=1 // pred_fallthru
      _
    // Predicated region
    $region18: #{lstm_forward_backward.1} parent=1 // pred_check
      _
    $region19: #{lstm_forward_backward.1} parent=1 // pred_check_branch
      %61 = sbr.rel (0) target = $region21
    $region20: #{lstm_forward_backward.1} parent=1 // pred_region
      _
    $region21: #{lstm_forward_backward.1} parent=1 // pred_fallthru
      _
    // Predicated region
    $region22: #{lstm_forward_backward.1} parent=1 // pred_check
      _
    $region23: #{lstm_forward_backward.1} parent=1 // pred_check_branch
      %63 = sbr.rel (0) target = $region25
    $region24: #{lstm_forward_backward.1} parent=1 // pred_region
      _
    $region25: #{lstm_forward_backward.1} parent=1 // pred_fallthru
      _
    // Predicated region
    $region26: #{lstm_forward_backward.1} parent=1 // pred_check
      _
    $region27: #{lstm_forward_backward.1} parent=1 // pred_check_branch
      %65 = sbr.rel (0) target = $region29
    $region28: #{lstm_forward_backward.1} parent=1 // pred_region
      %67 = vsyncadd [#allocation7], 0
      %s68 = sshll.u32 %s6, 4
      %s69 = int_to_ptr.hbm [resolvable:$true] %s68
      %s70 = sshll.u32 [#allocation8], 4
      %s71 = int_to_ptr.vmem [resolvable:$true] %s70
      %76 = dma.hbm_to_vmem [thread:$0]  %s69, 12288, %s71, [#allocation7], 384, 384, 24
    $region29: #{lstm_forward_backward.1} parent=1 // pred_fallthru
      _
    // Predicated region
    $region30: #{lstm_forward_backward.1} parent=1 // pred_check
      _
    $region31: #{lstm_forward_backward.1} parent=1 // pred_check_branch
      %78 = sbr.rel (0) target = $region33
    $region32: #{lstm_forward_backward.1} parent=1 // pred_region
      %80 = vsyncadd [#allocation10], 0
      %s81 = sshll.u32 %s7, 4
      %s82 = int_to_ptr.hbm [resolvable:$true] %s81
      %s83 = sshll.u32 [#allocation9], 4
      %s84 = int_to_ptr.vmem [resolvable:$true] %s83
      %89 = dma.hbm_to_vmem [thread:$0]  %s82, 6144, %s84, [#allocation10], 384, 384, 24
    $region33: #{lstm_forward_backward.1} parent=1 // pred_fallthru
      _
    // Predicated region
    $region34: #{lstm_forward_backward.1} parent=1 // pred_check
      _
    $region35: #{lstm_forward_backward.1} parent=1 // pred_check_branch
      %91 = sbr.rel (0) target = $region37
    $region36: #{lstm_forward_backward.1} parent=1 // pred_region
      _
    $region37: #{lstm_forward_backward.1} parent=1 // pred_fallthru
      _
    // Predicated region
    $region38: #{lstm_forward_backward.1} parent=1 // pred_check
      _
    $region39: #{lstm_forward_backward.1} parent=1 // pred_check_branch
      %93 = sbr.rel (0) target = $region41
    $region40: #{lstm_forward_backward.1} parent=1 // pred_region
      _
    $region41: #{lstm_forward_backward.1} parent=1 // pred_fallthru
      _
    // Predicated region
    $region42: #{lstm_forward_backward.1} parent=1 // pred_check
      _
    $region43: #{lstm_forward_backward.1} parent=1 // pred_check_branch
      %95 = sbr.rel (0) target = $region45
    $region44: #{lstm_forward_backward.1} parent=1 // pred_region
      _
    $region45: #{lstm_forward_backward.1} parent=1 // pred_fallthru
      _
    // Predicated region
    $region46: #{lstm_forward_backward.1} parent=1 // pred_check
      _
    $region47: #{lstm_forward_backward.1} parent=1 // pred_check_branch
      %97 = sbr.rel (0) target = $region49
    $region48: #{lstm_forward_backward.1} parent=1 // pred_region
      _
    $region49: #{lstm_forward_backward.1} parent=1 // pred_fallthru
      _
    // Predicated region
    $region50: #{lstm_forward_backward.1} parent=1 // pred_check
      _
    $region51: #{lstm_forward_backward.1} parent=1 // pred_check_branch
      %99 = sbr.rel (0) target = $region53
    $region52: #{lstm_forward_backward.1} parent=1 // pred_region
      _
    $region53: #{lstm_forward_backward.1} parent=1 // pred_fallthru
      _
    // Predicated region
    $region54: #{lstm_forward_backward.1} parent=1 // pred_check
      _
    $region55: #{lstm_forward_backward.1} parent=1 // pred_check_branch
      %101 = sbr.rel (0) target = $region57
    $region56: #{lstm_forward_backward.1} parent=1 // pred_region
      _
    $region57: #{lstm_forward_backward.1} parent=1 // pred_fallthru
      _
    // Predicated region
    $region58: #{lstm_forward_backward.1} parent=1 // pred_check
      _
    $region59: #{lstm_forward_backward.1} parent=1 // pred_check_branch
      %103 = sbr.rel (0) target = $region61
    $region60: #{lstm_forward_backward.1} parent=1 // pred_region
      _
    $region61: #{lstm_forward_backward.1} parent=1 // pred_fallthru
      _
    // Predicated region
    $region62: #{lstm_forward_backward.1} parent=1 // pred_check
      _
    $region63: #{lstm_forward_backward.1} parent=1 // pred_check_branch
      %105 = sbr.rel (0) target = $region65
    $region64: #{lstm_forward_backward.1} parent=1 // pred_region
      _
    $region65: #{lstm_forward_backward.1} parent=1 // pred_fallthru
      _
    // Predicated region
    $region66: #{lstm_forward_backward.1} parent=1 // pred_check
      _
    $region67: #{lstm_forward_backward.1} parent=1 // pred_check_branch
      %107 = sbr.rel (0) target = $region69
    $region68: #{lstm_forward_backward.1} parent=1 // pred_region
      _
    $region69: #{lstm_forward_backward.1} parent=1 // pred_fallthru
      _
    // Predicated region
    $region70: #{lstm_forward_backward.1} parent=1 // pred_check
      _
    $region71: #{lstm_forward_backward.1} parent=1 // pred_check_branch
      %109 = sbr.rel (0) target = $region73
    $region72: #{lstm_forward_backward.1} parent=1 // pred_region
      _
    $region73: #{lstm_forward_backward.1} parent=1 // pred_fallthru
      _
    // Predicated region
    $region74: #{lstm_forward_backward.1} parent=1 // pred_check
      _
    $region75: #{lstm_forward_backward.1} parent=1 // pred_check_branch
      %111 = sbr.rel (0) target = $region77
    $region76: #{lstm_forward_backward.1} parent=1 // pred_region
      _
    $region77: #{lstm_forward_backward.1} parent=1 // pred_fallthru
      _
    // Predicated region
    $region78: #{lstm_forward_backward.1} parent=1 // pred_check
      _
    $region79: #{lstm_forward_backward.1} parent=1 // pred_check_branch
      %113 = sbr.rel (0) target = $region81
    $region80: #{lstm_forward_backward.1} parent=1 // pred_region
      _
    $region81: #{lstm_forward_backward.1} parent=1 // pred_fallthru
      _
    // Predicated region
    $region82: #{lstm_forward_backward.1} parent=1 // pred_check
      _
    $region83: #{lstm_forward_backward.1} parent=1 // pred_check_branch
      %115 = sbr.rel (0) target = $region85
    $region84: #{lstm_forward_backward.1} parent=1 // pred_region
      %117 = dma.done [#allocation5], 8192
    $region85: #{lstm_forward_backward.1} parent=1 // pred_fallthru
      _
    // Predicated region
    $region86: #{lstm_forward_backward.1} parent=1 // pred_check
      _
    $region87: #{lstm_forward_backward.1} parent=1 // pred_check_branch
      %119 = sbr.rel (0) target = $region89
    $region88: #{lstm_forward_backward.1} parent=1 // pred_region
      %121 = dma.done [#allocation7], 32768
    $region89: #{lstm_forward_backward.1} parent=1 // pred_fallthru
      _
    // Predicated region
    $region90: #{lstm_forward_backward.1} parent=1 // pred_check
      _
    $region91: #{lstm_forward_backward.1} parent=1 // pred_check_branch
      %123 = sbr.rel (0) target = $region93
    $region92: #{lstm_forward_backward.1} parent=1 // pred_region
      %125 = dma.done [#allocation7], 12288
    $region93: #{lstm_forward_backward.1} parent=1 // pred_fallthru
      _
    // Predicated region
    $region94: #{lstm_forward_backward.1} parent=1 // pred_check
      _
    $region95: #{lstm_forward_backward.1} parent=1 // pred_check_branch
      %127 = sbr.rel (0) target = $region97
    $region96: #{lstm_forward_backward.1} parent=1 // pred_region
      %129 = dma.done [#allocation10], 6144
    $region97: #{lstm_forward_backward.1} parent=1 // pred_fallthru
      _
    $region98: #{lstm_forward_backward.1} parent=1
      #allocation11 [shape = 'u8[262144]{0}', space=vmem, size = 0x40000, scoped, tag = 'scoped memory for lstm_forward_backward.1']
      %v130 = vld [vmem:[%s0] sm:$0xff]
      %v131 = vld [vmem:[%s0 + $0x8] sm:$0xff]
      %v132 = vld [vmem:[%s0 + $0x10] sm:$0xff]
      %v133 = vld [vmem:[%s0 + $0x18] sm:$0xff]
      %v134 = vld [vmem:[%s0 + $0x20] sm:$0xff]
      %v135 = vld [vmem:[%s0 + $0x28] sm:$0xff]
      %v136 = vld [vmem:[%s0 + $0x30] sm:$0xff]
      %v137 = vld [vmem:[%s0 + $0x38] sm:$0xff]
      %v138 = vld [vmem:[#allocation4] sm:$0xff]
      %v139 = vld [vmem:[#allocation4 + $0x8] sm:$0xff]
      %v140 = vld [vmem:[#allocation4 + $0x10] sm:$0xff]
      %v141 = vld [vmem:[#allocation4 + $0x18] sm:$0xff]
      %v142 = vld [vmem:[#allocation4 + $0x20] sm:$0xff]
      %v143 = vld [vmem:[#allocation4 + $0x28] sm:$0xff]
      %v144 = vld [vmem:[#allocation4 + $0x30] sm:$0xff]
      %v145 = vld [vmem:[#allocation4 + $0x38] sm:$0xff]
      %v146 = vld [vmem:[#allocation4 + $0x40] sm:$0xff]
      %v147 = vld [vmem:[#allocation4 + $0x48] sm:$0xff]
      %v148 = vld [vmem:[#allocation4 + $0x50] sm:$0xff]
      %v149 = vld [vmem:[#allocation4 + $0x58] sm:$0xff]
      %v150 = vld [vmem:[#allocation4 + $0x60] sm:$0xff]
      %v151 = vld [vmem:[#allocation4 + $0x68] sm:$0xff]
      %v152 = vld [vmem:[#allocation4 + $0x70] sm:$0xff]
      %v153 = vld [vmem:[#allocation4 + $0x78] sm:$0xff]
      %v154 = vld [vmem:[#allocation4 + $0x80] sm:$0xff]
      %v155 = vld [vmem:[#allocation4 + $0x88] sm:$0xff]
      %v156 = vld [vmem:[#allocation4 + $0x90] sm:$0xff]
      %v157 = vld [vmem:[#allocation4 + $0x98] sm:$0xff]
      %v158 = vld [vmem:[#allocation4 + $0xa0] sm:$0xff]
      %v159 = vld [vmem:[#allocation4 + $0xa8] sm:$0xff]
      %v160 = vld [vmem:[#allocation4 + $0xb0] sm:$0xff]
      %v161 = vld [vmem:[#allocation4 + $0xb8] sm:$0xff]
      %v162 = vld [vmem:[#allocation4 + $0xc0] sm:$0xff]
      %v163 = vld [vmem:[#allocation4 + $0xc8] sm:$0xff]
      %v164 = vld [vmem:[#allocation4 + $0xd0] sm:$0xff]
      %v165 = vld [vmem:[#allocation4 + $0xd8] sm:$0xff]
      %v166 = vld [vmem:[#allocation4 + $0xe0] sm:$0xff]
      %v167 = vld [vmem:[#allocation4 + $0xe8] sm:$0xff]
      %v168 = vld [vmem:[#allocation4 + $0xf0] sm:$0xff]
      %v169 = vld [vmem:[#allocation4 + $0xf8] sm:$0xff]
      %v170 = vld [vmem:[#allocation4 + $0x100] sm:$0xff]
      %v171 = vld [vmem:[#allocation4 + $0x108] sm:$0xff]
      %v172 = vld [vmem:[#allocation4 + $0x110] sm:$0xff]
      %v173 = vld [vmem:[#allocation4 + $0x118] sm:$0xff]
      %v174 = vld [vmem:[#allocation4 + $0x120] sm:$0xff]
      %v175 = vld [vmem:[#allocation4 + $0x128] sm:$0xff]
      %v176 = vld [vmem:[#allocation4 + $0x130] sm:$0xff]
      %v177 = vld [vmem:[#allocation4 + $0x138] sm:$0xff]
      %v178 = vld [vmem:[#allocation4 + $0x140] sm:$0xff]
      %v179 = vld [vmem:[#allocation4 + $0x148] sm:$0xff]
      %v180 = vld [vmem:[#allocation4 + $0x150] sm:$0xff]
      %v181 = vld [vmem:[#allocation4 + $0x158] sm:$0xff]
      %v182 = vld [vmem:[#allocation4 + $0x160] sm:$0xff]
      %v183 = vld [vmem:[#allocation4 + $0x168] sm:$0xff]
      %v184 = vld [vmem:[#allocation4 + $0x170] sm:$0xff]
      %v185 = vld [vmem:[#allocation4 + $0x178] sm:$0xff]
      %v186 = vld [vmem:[#allocation4 + $0x180] sm:$0xff]
      %v187 = vld [vmem:[#allocation4 + $0x188] sm:$0xff]
      %v188 = vld [vmem:[#allocation4 + $0x190] sm:$0xff]
      %v189 = vld [vmem:[#allocation4 + $0x198] sm:$0xff]
      %v190 = vld [vmem:[#allocation4 + $0x1a0] sm:$0xff]
      %v191 = vld [vmem:[#allocation4 + $0x1a8] sm:$0xff]
      %v192 = vld [vmem:[#allocation4 + $0x1b0] sm:$0xff]
      %v193 = vld [vmem:[#allocation4 + $0x1b8] sm:$0xff]
      %v194 = vld [vmem:[#allocation4 + $0x1c0] sm:$0xff]
      %v195 = vld [vmem:[#allocation4 + $0x1c8] sm:$0xff]
      %v196 = vld [vmem:[#allocation4 + $0x1d0] sm:$0xff]
      %v197 = vld [vmem:[#allocation4 + $0x1d8] sm:$0xff]
      %v198 = vld [vmem:[#allocation4 + $0x1e0] sm:$0xff]
      %v199 = vld [vmem:[#allocation4 + $0x1e8] sm:$0xff]
      %v200 = vld [vmem:[#allocation4 + $0x1f0] sm:$0xff]
      %v201 = vld [vmem:[#allocation4 + $0x1f8] sm:$0xff]
      %v202 = vld [vmem:[%s4] sm:$0xff]
      %v204 = vperm.slane %v202, 0
      %v205 = vperm.slane %v202, 1
      %v206 = vperm.slane %v202, 2
      %v207 = vperm.slane %v202, 3
      %v208 = vperm.slane %v202, 4
      %v209 = vperm.slane %v202, 5
      %v210 = vperm.slane %v202, 6
      %v211 = vperm.slane %v202, 7
      %vm220 = vcmask 523264
      %v222 = vsel %vm220, %v130, 0
      %v225 = vsel %vm220, %v131, 0
      %v228 = vsel %vm220, %v132, 0
      %v231 = vsel %vm220, %v133, 0
      %v234 = vsel %vm220, %v134, 0
      %v237 = vsel %vm220, %v135, 0
      %v240 = vsel %vm220, %v136, 0
      %v243 = vsel %vm220, %v137, 0
      %245 = vmatpush.msra.mxu0 0.0
      %246 = vmatpush.msra.mxu0 0.0
      %247 = vmatpush.msra.mxu0 0.0
      %248 = vmatpush.msra.mxu0 0.0
      %249 = vmatpush.msra.mxu0 0.0
      %250 = vmatpush.msra.mxu0 0.0
      %251 = vmatpush.msra.mxu0 0.0
      %252 = vmatpush.msra.mxu0 0.0
      %253 = vmatpush.msra.mxu0 %v194
      %254 = vmatpush.msra.mxu0 %v186
      %255 = vmatpush.msra.mxu0 %v178
      %256 = vmatpush.msra.mxu0 %v170
      %257 = vmatpush.msra.mxu0 %v162
      %258 = vmatpush.msra.mxu0 %v154
      %259 = vmatpush.msra.mxu0 %v146
      %260 = vmatpush.msra.mxu0 %v138
      %261 = vmatmul.f32.gmra.mxu0 %v222
      %v262 = vpop.f32.mrf.mxu0
      %v263 = vadd.f32 %v204, %v262
      %264 = vmatmul.f32.gmra.mxu0 %v225
      %v265 = vpop.f32.mrf.mxu0
      %v266 = vadd.f32 %v204, %v265
      %267 = vmatmul.f32.gmra.mxu0 %v228
      %v268 = vpop.f32.mrf.mxu0
      %v269 = vadd.f32 %v204, %v268
      %270 = vmatmul.f32.gmra.mxu0 %v231
      %v271 = vpop.f32.mrf.mxu0
      %v272 = vadd.f32 %v204, %v271
      %273 = vmatmul.f32.gmra.mxu0 %v234
      %v274 = vpop.f32.mrf.mxu0
      %v275 = vadd.f32 %v204, %v274
      %276 = vmatmul.f32.gmra.mxu0 %v237
      %v277 = vpop.f32.mrf.mxu0
      %v278 = vadd.f32 %v204, %v277
      %279 = vmatmul.f32.gmra.mxu0 %v240
      %v280 = vpop.f32.mrf.mxu0
      %v281 = vadd.f32 %v204, %v280
      %282 = vmatmul.f32.gmra.mxu0 %v243
      %v283 = vpop.f32.mrf.mxu0
      %v284 = vadd.f32 %v204, %v283
      %285 = vdwg.mxu0
      %286 = vmatpush.msra.mxu0 0.0
      %287 = vmatpush.msra.mxu0 0.0
      %288 = vmatpush.msra.mxu0 0.0
      %289 = vmatpush.msra.mxu0 0.0
      %290 = vmatpush.msra.mxu0 0.0
      %291 = vmatpush.msra.mxu0 0.0
      %292 = vmatpush.msra.mxu0 0.0
      %293 = vmatpush.msra.mxu0 0.0
      %294 = vmatpush.msra.mxu0 %v195
      %295 = vmatpush.msra.mxu0 %v187
      %296 = vmatpush.msra.mxu0 %v179
      %297 = vmatpush.msra.mxu0 %v171
      %298 = vmatpush.msra.mxu0 %v163
      %299 = vmatpush.msra.mxu0 %v155
      %300 = vmatpush.msra.mxu0 %v147
      %301 = vmatpush.msra.mxu0 %v139
      %302 = vmatmul.f32.gmra.mxu0 %v222
      %v303 = vpop.f32.mrf.mxu0
      %v304 = vadd.f32 %v205, %v303
      %305 = vmatmul.f32.gmra.mxu0 %v225
      %v306 = vpop.f32.mrf.mxu0
      %v307 = vadd.f32 %v205, %v306
      %308 = vmatmul.f32.gmra.mxu0 %v228
      %v309 = vpop.f32.mrf.mxu0
      %v310 = vadd.f32 %v205, %v309
      %311 = vmatmul.f32.gmra.mxu0 %v231
      %v312 = vpop.f32.mrf.mxu0
      %v313 = vadd.f32 %v205, %v312
      %314 = vmatmul.f32.gmra.mxu0 %v234
      %v315 = vpop.f32.mrf.mxu0
      %v316 = vadd.f32 %v205, %v315
      %317 = vmatmul.f32.gmra.mxu0 %v237
      %v318 = vpop.f32.mrf.mxu0
      %v319 = vadd.f32 %v205, %v318
      %320 = vmatmul.f32.gmra.mxu0 %v240
      %v321 = vpop.f32.mrf.mxu0
      %v322 = vadd.f32 %v205, %v321
      %323 = vmatmul.f32.gmra.mxu0 %v243
      %v324 = vpop.f32.mrf.mxu0
      %v325 = vadd.f32 %v205, %v324
      %326 = vdwg.mxu0
      %327 = vmatpush.msra.mxu0 0.0
      %328 = vmatpush.msra.mxu0 0.0
      %329 = vmatpush.msra.mxu0 0.0
      %330 = vmatpush.msra.mxu0 0.0
      %331 = vmatpush.msra.mxu0 0.0
      %332 = vmatpush.msra.mxu0 0.0
      %333 = vmatpush.msra.mxu0 0.0
      %334 = vmatpush.msra.mxu0 0.0
      %335 = vmatpush.msra.mxu0 %v196
      %336 = vmatpush.msra.mxu0 %v188
      %337 = vmatpush.msra.mxu0 %v180
      %338 = vmatpush.msra.mxu0 %v172
      %339 = vmatpush.msra.mxu0 %v164
      %340 = vmatpush.msra.mxu0 %v156
      %341 = vmatpush.msra.mxu0 %v148
      %342 = vmatpush.msra.mxu0 %v140
      %343 = vmatmul.f32.gmra.mxu0 %v222
      %v344 = vpop.f32.mrf.mxu0
      %v345 = vadd.f32 %v206, %v344
      %346 = vmatmul.f32.gmra.mxu0 %v225
      %v347 = vpop.f32.mrf.mxu0
      %v348 = vadd.f32 %v206, %v347
      %349 = vmatmul.f32.gmra.mxu0 %v228
      %v350 = vpop.f32.mrf.mxu0
      %v351 = vadd.f32 %v206, %v350
      %352 = vmatmul.f32.gmra.mxu0 %v231
      %v353 = vpop.f32.mrf.mxu0
      %v354 = vadd.f32 %v206, %v353
      %355 = vmatmul.f32.gmra.mxu0 %v234
      %v356 = vpop.f32.mrf.mxu0
      %v357 = vadd.f32 %v206, %v356
      %358 = vmatmul.f32.gmra.mxu0 %v237
      %v359 = vpop.f32.mrf.mxu0
      %v360 = vadd.f32 %v206, %v359
      %361 = vmatmul.f32.gmra.mxu0 %v240
      %v362 = vpop.f32.mrf.mxu0
      %v363 = vadd.f32 %v206, %v362
      %364 = vmatmul.f32.gmra.mxu0 %v243
      %v365 = vpop.f32.mrf.mxu0
      %v366 = vadd.f32 %v206, %v365
      %367 = vdwg.mxu0
      %368 = vmatpush.msra.mxu0 0.0
      %369 = vmatpush.msra.mxu0 0.0
      %370 = vmatpush.msra.mxu0 0.0
      %371 = vmatpush.msra.mxu0 0.0
      %372 = vmatpush.msra.mxu0 0.0
      %373 = vmatpush.msra.mxu0 0.0
      %374 = vmatpush.msra.mxu0 0.0
      %375 = vmatpush.msra.mxu0 0.0
      %376 = vmatpush.msra.mxu0 %v197
      %377 = vmatpush.msra.mxu0 %v189
      %378 = vmatpush.msra.mxu0 %v181
      %379 = vmatpush.msra.mxu0 %v173
      %380 = vmatpush.msra.mxu0 %v165
      %381 = vmatpush.msra.mxu0 %v157
      %382 = vmatpush.msra.mxu0 %v149
      %383 = vmatpush.msra.mxu0 %v141
      %384 = vmatmul.f32.gmra.mxu0 %v222
      %v385 = vpop.f32.mrf.mxu0
      %v386 = vadd.f32 %v207, %v385
      %387 = vmatmul.f32.gmra.mxu0 %v225
      %v388 = vpop.f32.mrf.mxu0
      %v389 = vadd.f32 %v207, %v388
      %390 = vmatmul.f32.gmra.mxu0 %v228
      %v391 = vpop.f32.mrf.mxu0
      %v392 = vadd.f32 %v207, %v391
      %393 = vmatmul.f32.gmra.mxu0 %v231
      %v394 = vpop.f32.mrf.mxu0
      %v395 = vadd.f32 %v207, %v394
      %396 = vmatmul.f32.gmra.mxu0 %v234
      %v397 = vpop.f32.mrf.mxu0
      %v398 = vadd.f32 %v207, %v397
      %399 = vmatmul.f32.gmra.mxu0 %v237
      %v400 = vpop.f32.mrf.mxu0
      %v401 = vadd.f32 %v207, %v400
      %402 = vmatmul.f32.gmra.mxu0 %v240
      %v403 = vpop.f32.mrf.mxu0
      %v404 = vadd.f32 %v207, %v403
      %405 = vmatmul.f32.gmra.mxu0 %v243
      %v406 = vpop.f32.mrf.mxu0
      %v407 = vadd.f32 %v207, %v406
      %408 = vdwg.mxu0
      %409 = vmatpush.msra.mxu0 0.0
      %410 = vmatpush.msra.mxu0 0.0
      %411 = vmatpush.msra.mxu0 0.0
      %412 = vmatpush.msra.mxu0 0.0
      %413 = vmatpush.msra.mxu0 0.0
      %414 = vmatpush.msra.mxu0 0.0
      %415 = vmatpush.msra.mxu0 0.0
      %416 = vmatpush.msra.mxu0 0.0
      %417 = vmatpush.msra.mxu0 %v198
      %418 = vmatpush.msra.mxu0 %v190
      %419 = vmatpush.msra.mxu0 %v182
      %420 = vmatpush.msra.mxu0 %v174
      %421 = vmatpush.msra.mxu0 %v166
      %422 = vmatpush.msra.mxu0 %v158
      %423 = vmatpush.msra.mxu0 %v150
      %424 = vmatpush.msra.mxu0 %v142
      %425 = vmatmul.f32.gmra.mxu0 %v222
      %v426 = vpop.f32.mrf.mxu0
      %v427 = vadd.f32 %v208, %v426
      %428 = vmatmul.f32.gmra.mxu0 %v225
      %v429 = vpop.f32.mrf.mxu0
      %v430 = vadd.f32 %v208, %v429
      %431 = vmatmul.f32.gmra.mxu0 %v228
      %v432 = vpop.f32.mrf.mxu0
      %v433 = vadd.f32 %v208, %v432
      %434 = vmatmul.f32.gmra.mxu0 %v231
      %v435 = vpop.f32.mrf.mxu0
      %v436 = vadd.f32 %v208, %v435
      %437 = vmatmul.f32.gmra.mxu0 %v234
      %v438 = vpop.f32.mrf.mxu0
      %v439 = vadd.f32 %v208, %v438
      %440 = vmatmul.f32.gmra.mxu0 %v237
      %v441 = vpop.f32.mrf.mxu0
      %v442 = vadd.f32 %v208, %v441
      %443 = vmatmul.f32.gmra.mxu0 %v240
      %v444 = vpop.f32.mrf.mxu0
      %v445 = vadd.f32 %v208, %v444
      %446 = vmatmul.f32.gmra.mxu0 %v243
      %v447 = vpop.f32.mrf.mxu0
      %v448 = vadd.f32 %v208, %v447
      %449 = vdwg.mxu0
      %450 = vmatpush.msra.mxu0 0.0
      %451 = vmatpush.msra.mxu0 0.0
      %452 = vmatpush.msra.mxu0 0.0
      %453 = vmatpush.msra.mxu0 0.0
      %454 = vmatpush.msra.mxu0 0.0
      %455 = vmatpush.msra.mxu0 0.0
      %456 = vmatpush.msra.mxu0 0.0
      %457 = vmatpush.msra.mxu0 0.0
      %458 = vmatpush.msra.mxu0 %v199
      %459 = vmatpush.msra.mxu0 %v191
      %460 = vmatpush.msra.mxu0 %v183
      %461 = vmatpush.msra.mxu0 %v175
      %462 = vmatpush.msra.mxu0 %v167
      %463 = vmatpush.msra.mxu0 %v159
      %464 = vmatpush.msra.mxu0 %v151
      %465 = vmatpush.msra.mxu0 %v143
      %466 = vmatmul.f32.gmra.mxu0 %v222
      %v467 = vpop.f32.mrf.mxu0
      %v468 = vadd.f32 %v209, %v467
      %469 = vmatmul.f32.gmra.mxu0 %v225
      %v470 = vpop.f32.mrf.mxu0
      %v471 = vadd.f32 %v209, %v470
      %472 = vmatmul.f32.gmra.mxu0 %v228
      %v473 = vpop.f32.mrf.mxu0
      %v474 = vadd.f32 %v209, %v473
      %475 = vmatmul.f32.gmra.mxu0 %v231
      %v476 = vpop.f32.mrf.mxu0
      %v477 = vadd.f32 %v209, %v476
      %478 = vmatmul.f32.gmra.mxu0 %v234
      %v479 = vpop.f32.mrf.mxu0
      %v480 = vadd.f32 %v209, %v479
      %481 = vmatmul.f32.gmra.mxu0 %v237
      %v482 = vpop.f32.mrf.mxu0
      %v483 = vadd.f32 %v209, %v482
      %484 = vmatmul.f32.gmra.mxu0 %v240
      %v485 = vpop.f32.mrf.mxu0
      %v486 = vadd.f32 %v209, %v485
      %487 = vmatmul.f32.gmra.mxu0 %v243
      %v488 = vpop.f32.mrf.mxu0
      %v489 = vadd.f32 %v209, %v488
      %490 = vdwg.mxu0
      %491 = vmatpush.msra.mxu0 0.0
      %492 = vmatpush.msra.mxu0 0.0
      %493 = vmatpush.msra.mxu0 0.0
      %494 = vmatpush.msra.mxu0 0.0
      %495 = vmatpush.msra.mxu0 0.0
      %496 = vmatpush.msra.mxu0 0.0
      %497 = vmatpush.msra.mxu0 0.0
      %498 = vmatpush.msra.mxu0 0.0
      %499 = vmatpush.msra.mxu0 %v200
      %500 = vmatpush.msra.mxu0 %v192
      %501 = vmatpush.msra.mxu0 %v184
      %502 = vmatpush.msra.mxu0 %v176
      %503 = vmatpush.msra.mxu0 %v168
      %504 = vmatpush.msra.mxu0 %v160
      %505 = vmatpush.msra.mxu0 %v152
      %506 = vmatpush.msra.mxu0 %v144
      %507 = vmatmul.f32.gmra.mxu0 %v222
      %v508 = vpop.f32.mrf.mxu0
      %v509 = vadd.f32 %v210, %v508
      %510 = vmatmul.f32.gmra.mxu0 %v225
      %v511 = vpop.f32.mrf.mxu0
      %v512 = vadd.f32 %v210, %v511
      %513 = vmatmul.f32.gmra.mxu0 %v228
      %v514 = vpop.f32.mrf.mxu0
      %v515 = vadd.f32 %v210, %v514
      %516 = vmatmul.f32.gmra.mxu0 %v231
      %v517 = vpop.f32.mrf.mxu0
      %v518 = vadd.f32 %v210, %v517
      %519 = vmatmul.f32.gmra.mxu0 %v234
      %v520 = vpop.f32.mrf.mxu0
      %v521 = vadd.f32 %v210, %v520
      %522 = vmatmul.f32.gmra.mxu0 %v237
      %v523 = vpop.f32.mrf.mxu0
      %v524 = vadd.f32 %v210, %v523
      %525 = vmatmul.f32.gmra.mxu0 %v240
      %v526 = vpop.f32.mrf.mxu0
      %v527 = vadd.f32 %v210, %v526
      %528 = vmatmul.f32.gmra.mxu0 %v243
      %v529 = vpop.f32.mrf.mxu0
      %v530 = vadd.f32 %v210, %v529
      %531 = vdwg.mxu0
      %532 = vmatpush.msra.mxu0 0.0
      %533 = vmatpush.msra.mxu0 0.0
      %534 = vmatpush.msra.mxu0 0.0
      %535 = vmatpush.msra.mxu0 0.0
      %536 = vmatpush.msra.mxu0 0.0
      %537 = vmatpush.msra.mxu0 0.0
      %538 = vmatpush.msra.mxu0 0.0
      %539 = vmatpush.msra.mxu0 0.0
      %540 = vmatpush.msra.mxu0 %v201
      %541 = vmatpush.msra.mxu0 %v193
      %542 = vmatpush.msra.mxu0 %v185
      %543 = vmatpush.msra.mxu0 %v177
      %544 = vmatpush.msra.mxu0 %v169
      %545 = vmatpush.msra.mxu0 %v161
      %546 = vmatpush.msra.mxu0 %v153
      %547 = vmatpush.msra.mxu0 %v145
      %548 = vmatmul.f32.gmra.mxu0 %v222
      %v549 = vpop.f32.mrf.mxu0
      %v550 = vadd.f32 %v211, %v549
      %551 = vmatmul.f32.gmra.mxu0 %v225
      %v552 = vpop.f32.mrf.mxu0
      %v553 = vadd.f32 %v211, %v552
      %554 = vmatmul.f32.gmra.mxu0 %v228
      %v555 = vpop.f32.mrf.mxu0
      %v556 = vadd.f32 %v211, %v555
      %557 = vmatmul.f32.gmra.mxu0 %v231
      %v558 = vpop.f32.mrf.mxu0
      %v559 = vadd.f32 %v211, %v558
      %560 = vmatmul.f32.gmra.mxu0 %v234
      %v561 = vpop.f32.mrf.mxu0
      %v562 = vadd.f32 %v211, %v561
      %563 = vmatmul.f32.gmra.mxu0 %v237
      %v564 = vpop.f32.mrf.mxu0
      %v565 = vadd.f32 %v211, %v564
      %566 = vmatmul.f32.gmra.mxu0 %v240
      %v567 = vpop.f32.mrf.mxu0
      %v568 = vadd.f32 %v211, %v567
      %569 = vmatmul.f32.gmra.mxu0 %v243
      %v570 = vpop.f32.mrf.mxu0
      %v571 = vadd.f32 %v211, %v570
      %572 = vdwg.mxu0
      %573 = vst [vmem:[#allocation11] sm:$0xff] %v263
      %574 = vst [vmem:[#allocation11 + $0x8] sm:$0xff] %v304
      %575 = vst [vmem:[#allocation11 + $0x10] sm:$0xff] %v345
      %576 = vst [vmem:[#allocation11 + $0x18] sm:$0xff] %v386
      %577 = vst [vmem:[#allocation11 + $0x20] sm:$0xff] %v427
      %578 = vst [vmem:[#allocation11 + $0x28] sm:$0xff] %v468
      %579 = vst [vmem:[#allocation11 + $0x30] sm:$0xff] %v509
      %580 = vst [vmem:[#allocation11 + $0x38] sm:$0xff] %v550
      %581 = vst [vmem:[#allocation11 + $0x40] sm:$0xff] %v266
      %582 = vst [vmem:[#allocation11 + $0x48] sm:$0xff] %v307
      %583 = vst [vmem:[#allocation11 + $0x50] sm:$0xff] %v348
      %584 = vst [vmem:[#allocation11 + $0x58] sm:$0xff] %v389
      %585 = vst [vmem:[#allocation11 + $0x60] sm:$0xff] %v430
      %586 = vst [vmem:[#allocation11 + $0x68] sm:$0xff] %v471
      %587 = vst [vmem:[#allocation11 + $0x70] sm:$0xff] %v512
      %588 = vst [vmem:[#allocation11 + $0x78] sm:$0xff] %v553
      %589 = vst [vmem:[#allocation11 + $0x80] sm:$0xff] %v269
      %590 = vst [vmem:[#allocation11 + $0x88] sm:$0xff] %v310
      %591 = vst [vmem:[#allocation11 + $0x90] sm:$0xff] %v351
      %592 = vst [vmem:[#allocation11 + $0x98] sm:$0xff] %v392
      %593 = vst [vmem:[#allocation11 + $0xa0] sm:$0xff] %v433
      %594 = vst [vmem:[#allocation11 + $0xa8] sm:$0xff] %v474
      %595 = vst [vmem:[#allocation11 + $0xb0] sm:$0xff] %v515
      %596 = vst [vmem:[#allocation11 + $0xb8] sm:$0xff] %v556
      %597 = vst [vmem:[#allocation11 + $0xc0] sm:$0xff] %v272
      %598 = vst [vmem:[#allocation11 + $0xc8] sm:$0xff] %v313
      %599 = vst [vmem:[#allocation11 + $0xd0] sm:$0xff] %v354
      %600 = vst [vmem:[#allocation11 + $0xd8] sm:$0xff] %v395
      %601 = vst [vmem:[#allocation11 + $0xe0] sm:$0xff] %v436
      %602 = vst [vmem:[#allocation11 + $0xe8] sm:$0xff] %v477
      %603 = vst [vmem:[#allocation11 + $0xf0] sm:$0xff] %v518
      %604 = vst [vmem:[#allocation11 + $0xf8] sm:$0xff] %v559
      %605 = vst [vmem:[#allocation11 + $0x100] sm:$0xff] %v275
      %606 = vst [vmem:[#allocation11 + $0x108] sm:$0xff] %v316
      %607 = vst [vmem:[#allocation11 + $0x110] sm:$0xff] %v357
      %608 = vst [vmem:[#allocation11 + $0x118] sm:$0xff] %v398
      %609 = vst [vmem:[#allocation11 + $0x120] sm:$0xff] %v439
      %610 = vst [vmem:[#allocation11 + $0x128] sm:$0xff] %v480
      %611 = vst [vmem:[#allocation11 + $0x130] sm:$0xff] %v521
      %612 = vst [vmem:[#allocation11 + $0x138] sm:$0xff] %v562
      %613 = vst [vmem:[#allocation11 + $0x140] sm:$0xff] %v278
      %614 = vst [vmem:[#allocation11 + $0x148] sm:$0xff] %v319
      %615 = vst [vmem:[#allocation11 + $0x150] sm:$0xff] %v360
      %616 = vst [vmem:[#allocation11 + $0x158] sm:$0xff] %v401
      %617 = vst [vmem:[#allocation11 + $0x160] sm:$0xff] %v442
      %618 = vst [vmem:[#allocation11 + $0x168] sm:$0xff] %v483
      %619 = vst [vmem:[#allocation11 + $0x170] sm:$0xff] %v524
      %620 = vst [vmem:[#allocation11 + $0x178] sm:$0xff] %v565
      %621 = vst [vmem:[#allocation11 + $0x180] sm:$0xff] %v281
      %622 = vst [vmem:[#allocation11 + $0x188] sm:$0xff] %v322
      %623 = vst [vmem:[#allocation11 + $0x190] sm:$0xff] %v363
      %624 = vst [vmem:[#allocation11 + $0x198] sm:$0xff] %v404
      %625 = vst [vmem:[#allocation11 + $0x1a0] sm:$0xff] %v445
      %626 = vst [vmem:[#allocation11 + $0x1a8] sm:$0xff] %v486
      %627 = vst [vmem:[#allocation11 + $0x1b0] sm:$0xff] %v527
      %628 = vst [vmem:[#allocation11 + $0x1b8] sm:$0xff] %v568
      %629 = vst [vmem:[#allocation11 + $0x1c0] sm:$0xff] %v284
      %630 = vst [vmem:[#allocation11 + $0x1c8] sm:$0xff] %v325
      %631 = vst [vmem:[#allocation11 + $0x1d0] sm:$0xff] %v366
      %632 = vst [vmem:[#allocation11 + $0x1d8] sm:$0xff] %v407
      %633 = vst [vmem:[#allocation11 + $0x1e0] sm:$0xff] %v448
      %634 = vst [vmem:[#allocation11 + $0x1e8] sm:$0xff] %v489
      %635 = vst [vmem:[#allocation11 + $0x1f0] sm:$0xff] %v530
      %636 = vst [vmem:[#allocation11 + $0x1f8] sm:$0xff] %v571
      %v637 = vld [vmem:[#allocation6] sm:$0xff]
      %v638 = vld [vmem:[#allocation6 + $0x8] sm:$0xff]
      %v639 = vld [vmem:[#allocation6 + $0x10] sm:$0xff]
      %v640 = vld [vmem:[#allocation6 + $0x18] sm:$0xff]
      %v641 = vld [vmem:[#allocation6 + $0x20] sm:$0xff]
      %v642 = vld [vmem:[#allocation6 + $0x28] sm:$0xff]
      %v643 = vld [vmem:[#allocation6 + $0x30] sm:$0xff]
      %v644 = vld [vmem:[#allocation6 + $0x38] sm:$0xff]
      %v645 = vld [vmem:[#allocation6 + $0x40] sm:$0xff]
      %v646 = vld [vmem:[#allocation6 + $0x48] sm:$0xff]
      %v647 = vld [vmem:[#allocation6 + $0x50] sm:$0xff]
      %v648 = vld [vmem:[#allocation6 + $0x58] sm:$0xff]
      %v649 = vld [vmem:[#allocation6 + $0x60] sm:$0xff]
      %v650 = vld [vmem:[#allocation6 + $0x68] sm:$0xff]
      %v651 = vld [vmem:[#allocation6 + $0x70] sm:$0xff]
      %v652 = vld [vmem:[#allocation6 + $0x78] sm:$0xff]
      %v653 = vld [vmem:[#allocation6 + $0x80] sm:$0xff]
      %v654 = vld [vmem:[#allocation6 + $0x88] sm:$0xff]
      %v655 = vld [vmem:[#allocation6 + $0x90] sm:$0xff]
      %v656 = vld [vmem:[#allocation6 + $0x98] sm:$0xff]
      %v657 = vld [vmem:[#allocation6 + $0xa0] sm:$0xff]
      %v658 = vld [vmem:[#allocation6 + $0xa8] sm:$0xff]
      %v659 = vld [vmem:[#allocation6 + $0xb0] sm:$0xff]
      %v660 = vld [vmem:[#allocation6 + $0xb8] sm:$0xff]
      %v661 = vld [vmem:[#allocation6 + $0xc0] sm:$0xff]
      %v662 = vld [vmem:[#allocation6 + $0xc8] sm:$0xff]
      %v663 = vld [vmem:[#allocation6 + $0xd0] sm:$0xff]
      %v664 = vld [vmem:[#allocation6 + $0xd8] sm:$0xff]
      %v665 = vld [vmem:[#allocation6 + $0xe0] sm:$0xff]
      %v666 = vld [vmem:[#allocation6 + $0xe8] sm:$0xff]
      %v667 = vld [vmem:[#allocation6 + $0xf0] sm:$0xff]
      %v668 = vld [vmem:[#allocation6 + $0xf8] sm:$0xff]
      %v669 = vld [vmem:[#allocation6 + $0x100] sm:$0xff]
      %v670 = vld [vmem:[#allocation6 + $0x108] sm:$0xff]
      %v671 = vld [vmem:[#allocation6 + $0x110] sm:$0xff]
      %v672 = vld [vmem:[#allocation6 + $0x118] sm:$0xff]
      %v673 = vld [vmem:[#allocation6 + $0x120] sm:$0xff]
      %v674 = vld [vmem:[#allocation6 + $0x128] sm:$0xff]
      %v675 = vld [vmem:[#allocation6 + $0x130] sm:$0xff]
      %v676 = vld [vmem:[#allocation6 + $0x138] sm:$0xff]
      %v677 = vld [vmem:[#allocation6 + $0x140] sm:$0xff]
      %v678 = vld [vmem:[#allocation6 + $0x148] sm:$0xff]
      %v679 = vld [vmem:[#allocation6 + $0x150] sm:$0xff]
      %v680 = vld [vmem:[#allocation6 + $0x158] sm:$0xff]
      %v681 = vld [vmem:[#allocation6 + $0x160] sm:$0xff]
      %v682 = vld [vmem:[#allocation6 + $0x168] sm:$0xff]
      %v683 = vld [vmem:[#allocation6 + $0x170] sm:$0xff]
      %v684 = vld [vmem:[#allocation6 + $0x178] sm:$0xff]
      %v685 = vld [vmem:[#allocation6 + $0x180] sm:$0xff]
      %v686 = vld [vmem:[#allocation6 + $0x188] sm:$0xff]
      %v687 = vld [vmem:[#allocation6 + $0x190] sm:$0xff]
      %v688 = vld [vmem:[#allocation6 + $0x198] sm:$0xff]
      %v689 = vld [vmem:[#allocation6 + $0x1a0] sm:$0xff]
      %v690 = vld [vmem:[#allocation6 + $0x1a8] sm:$0xff]
      %v691 = vld [vmem:[#allocation6 + $0x1b0] sm:$0xff]
      %v692 = vld [vmem:[#allocation6 + $0x1b8] sm:$0xff]
      %v693 = vld [vmem:[#allocation6 + $0x1c0] sm:$0xff]
      %v694 = vld [vmem:[#allocation6 + $0x1c8] sm:$0xff]
      %v695 = vld [vmem:[#allocation6 + $0x1d0] sm:$0xff]
      %v696 = vld [vmem:[#allocation6 + $0x1d8] sm:$0xff]
      %v697 = vld [vmem:[#allocation6 + $0x1e0] sm:$0xff]
      %v698 = vld [vmem:[#allocation6 + $0x1e8] sm:$0xff]
      %v699 = vld [vmem:[#allocation6 + $0x1f0] sm:$0xff]
      %v700 = vld [vmem:[#allocation6 + $0x1f8] sm:$0xff]
      %v701 = vld [vmem:[#allocation6 + $0x200] sm:$0xff]
      %v702 = vld [vmem:[#allocation6 + $0x208] sm:$0xff]
      %v703 = vld [vmem:[#allocation6 + $0x210] sm:$0xff]
      %v704 = vld [vmem:[#allocation6 + $0x218] sm:$0xff]
      %v705 = vld [vmem:[#allocation6 + $0x220] sm:$0xff]
      %v706 = vld [vmem:[#allocation6 + $0x228] sm:$0xff]
      %v707 = vld [vmem:[#allocation6 + $0x230] sm:$0xff]
      %v708 = vld [vmem:[#allocation6 + $0x238] sm:$0xff]
      %v709 = vld [vmem:[#allocation6 + $0x240] sm:$0xff]
      %v710 = vld [vmem:[#allocation6 + $0x248] sm:$0xff]
      %v711 = vld [vmem:[#allocation6 + $0x250] sm:$0xff]
      %v712 = vld [vmem:[#allocation6 + $0x258] sm:$0xff]
      %v713 = vld [vmem:[#allocation6 + $0x260] sm:$0xff]
      %v714 = vld [vmem:[#allocation6 + $0x268] sm:$0xff]
      %v715 = vld [vmem:[#allocation6 + $0x270] sm:$0xff]
      %v716 = vld [vmem:[#allocation6 + $0x278] sm:$0xff]
      %v717 = vld [vmem:[#allocation6 + $0x280] sm:$0xff]
      %v718 = vld [vmem:[#allocation6 + $0x288] sm:$0xff]
      %v719 = vld [vmem:[#allocation6 + $0x290] sm:$0xff]
      %v720 = vld [vmem:[#allocation6 + $0x298] sm:$0xff]
      %v721 = vld [vmem:[#allocation6 + $0x2a0] sm:$0xff]
      %v722 = vld [vmem:[#allocation6 + $0x2a8] sm:$0xff]
      %v723 = vld [vmem:[#allocation6 + $0x2b0] sm:$0xff]
      %v724 = vld [vmem:[#allocation6 + $0x2b8] sm:$0xff]
      %v725 = vld [vmem:[#allocation6 + $0x2c0] sm:$0xff]
      %v726 = vld [vmem:[#allocation6 + $0x2c8] sm:$0xff]
      %v727 = vld [vmem:[#allocation6 + $0x2d0] sm:$0xff]
      %v728 = vld [vmem:[#allocation6 + $0x2d8] sm:$0xff]
      %v729 = vld [vmem:[#allocation6 + $0x2e0] sm:$0xff]
      %v730 = vld [vmem:[#allocation6 + $0x2e8] sm:$0xff]
      %v731 = vld [vmem:[#allocation6 + $0x2f0] sm:$0xff]
      %v732 = vld [vmem:[#allocation6 + $0x2f8] sm:$0xff]
      %v733 = vld [vmem:[#allocation6 + $0x300] sm:$0xff]
      %v734 = vld [vmem:[#allocation6 + $0x308] sm:$0xff]
      %v735 = vld [vmem:[#allocation6 + $0x310] sm:$0xff]
      %v736 = vld [vmem:[#allocation6 + $0x318] sm:$0xff]
      %v737 = vld [vmem:[#allocation6 + $0x320] sm:$0xff]
      %v738 = vld [vmem:[#allocation6 + $0x328] sm:$0xff]
      %v739 = vld [vmem:[#allocation6 + $0x330] sm:$0xff]
      %v740 = vld [vmem:[#allocation6 + $0x338] sm:$0xff]
      %v741 = vld [vmem:[#allocation6 + $0x340] sm:$0xff]
      %v742 = vld [vmem:[#allocation6 + $0x348] sm:$0xff]
      %v743 = vld [vmem:[#allocation6 + $0x350] sm:$0xff]
      %v744 = vld [vmem:[#allocation6 + $0x358] sm:$0xff]
      %v745 = vld [vmem:[#allocation6 + $0x360] sm:$0xff]
      %v746 = vld [vmem:[#allocation6 + $0x368] sm:$0xff]
      %v747 = vld [vmem:[#allocation6 + $0x370] sm:$0xff]
      %v748 = vld [vmem:[#allocation6 + $0x378] sm:$0xff]
      %v749 = vld [vmem:[#allocation6 + $0x380] sm:$0xff]
      %v750 = vld [vmem:[#allocation6 + $0x388] sm:$0xff]
      %v751 = vld [vmem:[#allocation6 + $0x390] sm:$0xff]
      %v752 = vld [vmem:[#allocation6 + $0x398] sm:$0xff]
      %v753 = vld [vmem:[#allocation6 + $0x3a0] sm:$0xff]
      %v754 = vld [vmem:[#allocation6 + $0x3a8] sm:$0xff]
      %v755 = vld [vmem:[#allocation6 + $0x3b0] sm:$0xff]
      %v756 = vld [vmem:[#allocation6 + $0x3b8] sm:$0xff]
      %v757 = vld [vmem:[#allocation6 + $0x3c0] sm:$0xff]
      %v758 = vld [vmem:[#allocation6 + $0x3c8] sm:$0xff]
      %v759 = vld [vmem:[#allocation6 + $0x3d0] sm:$0xff]
      %v760 = vld [vmem:[#allocation6 + $0x3d8] sm:$0xff]
      %v761 = vld [vmem:[#allocation6 + $0x3e0] sm:$0xff]
      %v762 = vld [vmem:[#allocation6 + $0x3e8] sm:$0xff]
      %v763 = vld [vmem:[#allocation6 + $0x3f0] sm:$0xff]
      %v764 = vld [vmem:[#allocation6 + $0x3f8] sm:$0xff]
      %v765 = vld [vmem:[#allocation6 + $0x400] sm:$0xff]
      %v766 = vld [vmem:[#allocation6 + $0x408] sm:$0xff]
      %v767 = vld [vmem:[#allocation6 + $0x410] sm:$0xff]
      %v768 = vld [vmem:[#allocation6 + $0x418] sm:$0xff]
      %v769 = vld [vmem:[#allocation6 + $0x420] sm:$0xff]
      %v770 = vld [vmem:[#allocation6 + $0x428] sm:$0xff]
      %v771 = vld [vmem:[#allocation6 + $0x430] sm:$0xff]
      %v772 = vld [vmem:[#allocation6 + $0x438] sm:$0xff]
      %v773 = vld [vmem:[#allocation6 + $0x440] sm:$0xff]
      %v774 = vld [vmem:[#allocation6 + $0x448] sm:$0xff]
      %v775 = vld [vmem:[#allocation6 + $0x450] sm:$0xff]
      %v776 = vld [vmem:[#allocation6 + $0x458] sm:$0xff]
      %v777 = vld [vmem:[#allocation6 + $0x460] sm:$0xff]
      %v778 = vld [vmem:[#allocation6 + $0x468] sm:$0xff]
      %v779 = vld [vmem:[#allocation6 + $0x470] sm:$0xff]
      %v780 = vld [vmem:[#allocation6 + $0x478] sm:$0xff]
      %v781 = vld [vmem:[#allocation6 + $0x480] sm:$0xff]
      %v782 = vld [vmem:[#allocation6 + $0x488] sm:$0xff]
      %v783 = vld [vmem:[#allocation6 + $0x490] sm:$0xff]
      %v784 = vld [vmem:[#allocation6 + $0x498] sm:$0xff]
      %v785 = vld [vmem:[#allocation6 + $0x4a0] sm:$0xff]
      %v786 = vld [vmem:[#allocation6 + $0x4a8] sm:$0xff]
      %v787 = vld [vmem:[#allocation6 + $0x4b0] sm:$0xff]
      %v788 = vld [vmem:[#allocation6 + $0x4b8] sm:$0xff]
      %v789 = vld [vmem:[#allocation6 + $0x4c0] sm:$0xff]
      %v790 = vld [vmem:[#allocation6 + $0x4c8] sm:$0xff]
      %v791 = vld [vmem:[#allocation6 + $0x4d0] sm:$0xff]
      %v792 = vld [vmem:[#allocation6 + $0x4d8] sm:$0xff]
      %v793 = vld [vmem:[#allocation6 + $0x4e0] sm:$0xff]
      %v794 = vld [vmem:[#allocation6 + $0x4e8] sm:$0xff]
      %v795 = vld [vmem:[#allocation6 + $0x4f0] sm:$0xff]
      %v796 = vld [vmem:[#allocation6 + $0x4f8] sm:$0xff]
      %v797 = vld [vmem:[#allocation6 + $0x500] sm:$0xff]
      %v798 = vld [vmem:[#allocation6 + $0x508] sm:$0xff]
      %v799 = vld [vmem:[#allocation6 + $0x510] sm:$0xff]
      %v800 = vld [vmem:[#allocation6 + $0x518] sm:$0xff]
      %v801 = vld [vmem:[#allocation6 + $0x520] sm:$0xff]
      %v802 = vld [vmem:[#allocation6 + $0x528] sm:$0xff]
      %v803 = vld [vmem:[#allocation6 + $0x530] sm:$0xff]
      %v804 = vld [vmem:[#allocation6 + $0x538] sm:$0xff]
      %v805 = vld [vmem:[#allocation6 + $0x540] sm:$0xff]
      %v806 = vld [vmem:[#allocation6 + $0x548] sm:$0xff]
      %v807 = vld [vmem:[#allocation6 + $0x550] sm:$0xff]
      %v808 = vld [vmem:[#allocation6 + $0x558] sm:$0xff]
      %v809 = vld [vmem:[#allocation6 + $0x560] sm:$0xff]
      %v810 = vld [vmem:[#allocation6 + $0x568] sm:$0xff]
      %v811 = vld [vmem:[#allocation6 + $0x570] sm:$0xff]
      %v812 = vld [vmem:[#allocation6 + $0x578] sm:$0xff]
      %v813 = vld [vmem:[#allocation6 + $0x580] sm:$0xff]
      %v814 = vld [vmem:[#allocation6 + $0x588] sm:$0xff]
      %v815 = vld [vmem:[#allocation6 + $0x590] sm:$0xff]
      %v816 = vld [vmem:[#allocation6 + $0x598] sm:$0xff]
      %v817 = vld [vmem:[#allocation6 + $0x5a0] sm:$0xff]
      %v818 = vld [vmem:[#allocation6 + $0x5a8] sm:$0xff]
      %v819 = vld [vmem:[#allocation6 + $0x5b0] sm:$0xff]
      %v820 = vld [vmem:[#allocation6 + $0x5b8] sm:$0xff]
      %v821 = vld [vmem:[#allocation6 + $0x5c0] sm:$0xff]
      %v822 = vld [vmem:[#allocation6 + $0x5c8] sm:$0xff]
      %v823 = vld [vmem:[#allocation6 + $0x5d0] sm:$0xff]
      %v824 = vld [vmem:[#allocation6 + $0x5d8] sm:$0xff]
      %v825 = vld [vmem:[#allocation6 + $0x5e0] sm:$0xff]
      %v826 = vld [vmem:[#allocation6 + $0x5e8] sm:$0xff]
      %v827 = vld [vmem:[#allocation6 + $0x5f0] sm:$0xff]
      %v828 = vld [vmem:[#allocation6 + $0x5f8] sm:$0xff]
      %v829 = vld [vmem:[#allocation6 + $0x600] sm:$0xff]
      %v830 = vld [vmem:[#allocation6 + $0x608] sm:$0xff]
      %v831 = vld [vmem:[#allocation6 + $0x610] sm:$0xff]
      %v832 = vld [vmem:[#allocation6 + $0x618] sm:$0xff]
      %v833 = vld [vmem:[#allocation6 + $0x620] sm:$0xff]
      %v834 = vld [vmem:[#allocation6 + $0x628] sm:$0xff]
      %v835 = vld [vmem:[#allocation6 + $0x630] sm:$0xff]
      %v836 = vld [vmem:[#allocation6 + $0x638] sm:$0xff]
      %v837 = vld [vmem:[#allocation6 + $0x640] sm:$0xff]
      %v838 = vld [vmem:[#allocation6 + $0x648] sm:$0xff]
      %v839 = vld [vmem:[#allocation6 + $0x650] sm:$0xff]
      %v840 = vld [vmem:[#allocation6 + $0x658] sm:$0xff]
      %v841 = vld [vmem:[#allocation6 + $0x660] sm:$0xff]
      %v842 = vld [vmem:[#allocation6 + $0x668] sm:$0xff]
      %v843 = vld [vmem:[#allocation6 + $0x670] sm:$0xff]
      %v844 = vld [vmem:[#allocation6 + $0x678] sm:$0xff]
      %v845 = vld [vmem:[#allocation6 + $0x680] sm:$0xff]
      %v846 = vld [vmem:[#allocation6 + $0x688] sm:$0xff]
      %v847 = vld [vmem:[#allocation6 + $0x690] sm:$0xff]
      %v848 = vld [vmem:[#allocation6 + $0x698] sm:$0xff]
      %v849 = vld [vmem:[#allocation6 + $0x6a0] sm:$0xff]
      %v850 = vld [vmem:[#allocation6 + $0x6a8] sm:$0xff]
      %v851 = vld [vmem:[#allocation6 + $0x6b0] sm:$0xff]
      %v852 = vld [vmem:[#allocation6 + $0x6b8] sm:$0xff]
      %v853 = vld [vmem:[#allocation6 + $0x6c0] sm:$0xff]
      %v854 = vld [vmem:[#allocation6 + $0x6c8] sm:$0xff]
      %v855 = vld [vmem:[#allocation6 + $0x6d0] sm:$0xff]
      %v856 = vld [vmem:[#allocation6 + $0x6d8] sm:$0xff]
      %v857 = vld [vmem:[#allocation6 + $0x6e0] sm:$0xff]
      %v858 = vld [vmem:[#allocation6 + $0x6e8] sm:$0xff]
      %v859 = vld [vmem:[#allocation6 + $0x6f0] sm:$0xff]
      %v860 = vld [vmem:[#allocation6 + $0x6f8] sm:$0xff]
      %v861 = vld [vmem:[#allocation6 + $0x700] sm:$0xff]
      %v862 = vld [vmem:[#allocation6 + $0x708] sm:$0xff]
      %v863 = vld [vmem:[#allocation6 + $0x710] sm:$0xff]
      %v864 = vld [vmem:[#allocation6 + $0x718] sm:$0xff]
      %v865 = vld [vmem:[#allocation6 + $0x720] sm:$0xff]
      %v866 = vld [vmem:[#allocation6 + $0x728] sm:$0xff]
      %v867 = vld [vmem:[#allocation6 + $0x730] sm:$0xff]
      %v868 = vld [vmem:[#allocation6 + $0x738] sm:$0xff]
      %v869 = vld [vmem:[#allocation6 + $0x740] sm:$0xff]
      %v870 = vld [vmem:[#allocation6 + $0x748] sm:$0xff]
      %v871 = vld [vmem:[#allocation6 + $0x750] sm:$0xff]
      %v872 = vld [vmem:[#allocation6 + $0x758] sm:$0xff]
      %v873 = vld [vmem:[#allocation6 + $0x760] sm:$0xff]
      %v874 = vld [vmem:[#allocation6 + $0x768] sm:$0xff]
      %v875 = vld [vmem:[#allocation6 + $0x770] sm:$0xff]
      %v876 = vld [vmem:[#allocation6 + $0x778] sm:$0xff]
      %v877 = vld [vmem:[#allocation6 + $0x780] sm:$0xff]
      %v878 = vld [vmem:[#allocation6 + $0x788] sm:$0xff]
      %v879 = vld [vmem:[#allocation6 + $0x790] sm:$0xff]
      %v880 = vld [vmem:[#allocation6 + $0x798] sm:$0xff]
      %v881 = vld [vmem:[#allocation6 + $0x7a0] sm:$0xff]
      %v882 = vld [vmem:[#allocation6 + $0x7a8] sm:$0xff]
      %v883 = vld [vmem:[#allocation6 + $0x7b0] sm:$0xff]
      %v884 = vld [vmem:[#allocation6 + $0x7b8] sm:$0xff]
      %v885 = vld [vmem:[#allocation6 + $0x7c0] sm:$0xff]
      %v886 = vld [vmem:[#allocation6 + $0x7c8] sm:$0xff]
      %v887 = vld [vmem:[#allocation6 + $0x7d0] sm:$0xff]
      %v888 = vld [vmem:[#allocation6 + $0x7d8] sm:$0xff]
      %v889 = vld [vmem:[#allocation6 + $0x7e0] sm:$0xff]
      %v890 = vld [vmem:[#allocation6 + $0x7e8] sm:$0xff]
      %v891 = vld [vmem:[#allocation6 + $0x7f0] sm:$0xff]
      %v892 = vld [vmem:[#allocation6 + $0x7f8] sm:$0xff]
      %s893 = smul.u32 0, 8
      %s894 = smul.addr %s893, 8
      %s895 = scalar_lea.vmem [#allocation11], %s894
      %v896 = vld [vmem:[%s895] sm:$0xff]
      %v897 = vld [vmem:[%s895 + $0x8] sm:$0xff]
      %v898 = vld [vmem:[%s895 + $0x10] sm:$0xff]
      %v899 = vld [vmem:[%s895 + $0x18] sm:$0xff]
      %v900 = vld [vmem:[%s895 + $0x20] sm:$0xff]
      %v901 = vld [vmem:[%s895 + $0x28] sm:$0xff]
      %v902 = vld [vmem:[%s895 + $0x30] sm:$0xff]
      %v903 = vld [vmem:[%s895 + $0x38] sm:$0xff]
      %904 = vmatpush.msra.mxu0 %v757
      %905 = vmatpush.msra.mxu0 %v749
      %906 = vmatpush.msra.mxu0 %v741
      %907 = vmatpush.msra.mxu0 %v733
      %908 = vmatpush.msra.mxu0 %v725
      %909 = vmatpush.msra.mxu0 %v717
      %910 = vmatpush.msra.mxu0 %v709
      %911 = vmatpush.msra.mxu0 %v701
      %912 = vmatpush.msra.mxu0 %v693
      %913 = vmatpush.msra.mxu0 %v685
      %914 = vmatpush.msra.mxu0 %v677
      %915 = vmatpush.msra.mxu0 %v669
      %916 = vmatpush.msra.mxu0 %v661
      %917 = vmatpush.msra.mxu0 %v653
      %918 = vmatpush.msra.mxu0 %v645
      %919 = vmatpush.msra.mxu0 %v637
      %920 = vmatmul.f32.gmra.mxu0 0.0
      %v921 = vpop.f32.mrf.mxu0
      %v922 = vadd.f32 0.0, %v921
      %923 = vdwg.mxu0
      %924 = vmatpush.msra.mxu0 %v885
      %925 = vmatpush.msra.mxu0 %v877
      %926 = vmatpush.msra.mxu0 %v869
      %927 = vmatpush.msra.mxu0 %v861
      %928 = vmatpush.msra.mxu0 %v853
      %929 = vmatpush.msra.mxu0 %v845
      %930 = vmatpush.msra.mxu0 %v837
      %931 = vmatpush.msra.mxu0 %v829
      %932 = vmatpush.msra.mxu0 %v821
      %933 = vmatpush.msra.mxu0 %v813
      %934 = vmatpush.msra.mxu0 %v805
      %935 = vmatpush.msra.mxu0 %v797
      %936 = vmatpush.msra.mxu0 %v789
      %937 = vmatpush.msra.mxu0 %v781
      %938 = vmatpush.msra.mxu0 %v773
      %939 = vmatpush.msra.mxu0 %v765
      %940 = vmatmul.f32.gmra.mxu0 0.0
      %v941 = vpop.f32.mrf.mxu0
      %v942 = vadd.f32 %v922, %v941
      %943 = vdwg.mxu0
      %944 = vmatpush.msra.mxu0 %v758
      %945 = vmatpush.msra.mxu0 %v750
      %946 = vmatpush.msra.mxu0 %v742
      %947 = vmatpush.msra.mxu0 %v734
      %948 = vmatpush.msra.mxu0 %v726
      %949 = vmatpush.msra.mxu0 %v718
      %950 = vmatpush.msra.mxu0 %v710
      %951 = vmatpush.msra.mxu0 %v702
      %952 = vmatpush.msra.mxu0 %v694
      %953 = vmatpush.msra.mxu0 %v686
      %954 = vmatpush.msra.mxu0 %v678
      %955 = vmatpush.msra.mxu0 %v670
      %956 = vmatpush.msra.mxu0 %v662
      %957 = vmatpush.msra.mxu0 %v654
      %958 = vmatpush.msra.mxu0 %v646
      %959 = vmatpush.msra.mxu0 %v638
      %960 = vmatmul.f32.gmra.mxu0 0.0
      %v961 = vpop.f32.mrf.mxu0
      %v962 = vadd.f32 0.0, %v961
      %963 = vdwg.mxu0
      %964 = vmatpush.msra.mxu0 %v886
      %965 = vmatpush.msra.mxu0 %v878
      %966 = vmatpush.msra.mxu0 %v870
      %967 = vmatpush.msra.mxu0 %v862
      %968 = vmatpush.msra.mxu0 %v854
      %969 = vmatpush.msra.mxu0 %v846
      %970 = vmatpush.msra.mxu0 %v838
      %971 = vmatpush.msra.mxu0 %v830
      %972 = vmatpush.msra.mxu0 %v822
      %973 = vmatpush.msra.mxu0 %v814
      %974 = vmatpush.msra.mxu0 %v806
      %975 = vmatpush.msra.mxu0 %v798
      %976 = vmatpush.msra.mxu0 %v790
      %977 = vmatpush.msra.mxu0 %v782
      %978 = vmatpush.msra.mxu0 %v774
      %979 = vmatpush.msra.mxu0 %v766
      %980 = vmatmul.f32.gmra.mxu0 0.0
      %v981 = vpop.f32.mrf.mxu0
      %v982 = vadd.f32 %v962, %v981
      %983 = vdwg.mxu0
      %984 = vmatpush.msra.mxu0 %v759
      %985 = vmatpush.msra.mxu0 %v751
      %986 = vmatpush.msra.mxu0 %v743
      %987 = vmatpush.msra.mxu0 %v735
      %988 = vmatpush.msra.mxu0 %v727
      %989 = vmatpush.msra.mxu0 %v719
      %990 = vmatpush.msra.mxu0 %v711
      %991 = vmatpush.msra.mxu0 %v703
      %992 = vmatpush.msra.mxu0 %v695
      %993 = vmatpush.msra.mxu0 %v687
      %994 = vmatpush.msra.mxu0 %v679
      %995 = vmatpush.msra.mxu0 %v671
      %996 = vmatpush.msra.mxu0 %v663
      %997 = vmatpush.msra.mxu0 %v655
      %998 = vmatpush.msra.mxu0 %v647
      %999 = vmatpush.msra.mxu0 %v639
      %1000 = vmatmul.f32.gmra.mxu0 0.0
      %v1001 = vpop.f32.mrf.mxu0
      %v1002 = vadd.f32 0.0, %v1001
      %1003 = vdwg.mxu0
      %1004 = vmatpush.msra.mxu0 %v887
      %1005 = vmatpush.msra.mxu0 %v879
      %1006 = vmatpush.msra.mxu0 %v871
      %1007 = vmatpush.msra.mxu0 %v863
      %1008 = vmatpush.msra.mxu0 %v855
      %1009 = vmatpush.msra.mxu0 %v847
      %1010 = vmatpush.msra.mxu0 %v839
      %1011 = vmatpush.msra.mxu0 %v831
      %1012 = vmatpush.msra.mxu0 %v823
      %1013 = vmatpush.msra.mxu0 %v815
      %1014 = vmatpush.msra.mxu0 %v807
      %1015 = vmatpush.msra.mxu0 %v799
      %1016 = vmatpush.msra.mxu0 %v791
      %1017 = vmatpush.msra.mxu0 %v783
      %1018 = vmatpush.msra.mxu0 %v775
      %1019 = vmatpush.msra.mxu0 %v767
      %1020 = vmatmul.f32.gmra.mxu0 0.0
      %v1021 = vpop.f32.mrf.mxu0
      %v1022 = vadd.f32 %v1002, %v1021
      %1023 = vdwg.mxu0
      %1024 = vmatpush.msra.mxu0 %v760
      %1025 = vmatpush.msra.mxu0 %v752
      %1026 = vmatpush.msra.mxu0 %v744
      %1027 = vmatpush.msra.mxu0 %v736
      %1028 = vmatpush.msra.mxu0 %v728
      %1029 = vmatpush.msra.mxu0 %v720
      %1030 = vmatpush.msra.mxu0 %v712
      %1031 = vmatpush.msra.mxu0 %v704
      %1032 = vmatpush.msra.mxu0 %v696
      %1033 = vmatpush.msra.mxu0 %v688
      %1034 = vmatpush.msra.mxu0 %v680
      %1035 = vmatpush.msra.mxu0 %v672
      %1036 = vmatpush.msra.mxu0 %v664
      %1037 = vmatpush.msra.mxu0 %v656
      %1038 = vmatpush.msra.mxu0 %v648
      %1039 = vmatpush.msra.mxu0 %v640
      %1040 = vmatmul.f32.gmra.mxu0 0.0
      %v1041 = vpop.f32.mrf.mxu0
      %v1042 = vadd.f32 0.0, %v1041
      %1043 = vdwg.mxu0
      %1044 = vmatpush.msra.mxu0 %v888
      %1045 = vmatpush.msra.mxu0 %v880
      %1046 = vmatpush.msra.mxu0 %v872
      %1047 = vmatpush.msra.mxu0 %v864
      %1048 = vmatpush.msra.mxu0 %v856
      %1049 = vmatpush.msra.mxu0 %v848
      %1050 = vmatpush.msra.mxu0 %v840
      %1051 = vmatpush.msra.mxu0 %v832
      %1052 = vmatpush.msra.mxu0 %v824
      %1053 = vmatpush.msra.mxu0 %v816
      %1054 = vmatpush.msra.mxu0 %v808
      %1055 = vmatpush.msra.mxu0 %v800
      %1056 = vmatpush.msra.mxu0 %v792
      %1057 = vmatpush.msra.mxu0 %v784
      %1058 = vmatpush.msra.mxu0 %v776
      %1059 = vmatpush.msra.mxu0 %v768
      %1060 = vmatmul.f32.gmra.mxu0 0.0
      %v1061 = vpop.f32.mrf.mxu0
      %v1062 = vadd.f32 %v1042, %v1061
      %1063 = vdwg.mxu0
      %1064 = vmatpush.msra.mxu0 %v761
      %1065 = vmatpush.msra.mxu0 %v753
      %1066 = vmatpush.msra.mxu0 %v745
      %1067 = vmatpush.msra.mxu0 %v737
      %1068 = vmatpush.msra.mxu0 %v729
      %1069 = vmatpush.msra.mxu0 %v721
      %1070 = vmatpush.msra.mxu0 %v713
      %1071 = vmatpush.msra.mxu0 %v705
      %1072 = vmatpush.msra.mxu0 %v697
      %1073 = vmatpush.msra.mxu0 %v689
      %1074 = vmatpush.msra.mxu0 %v681
      %1075 = vmatpush.msra.mxu0 %v673
      %1076 = vmatpush.msra.mxu0 %v665
      %1077 = vmatpush.msra.mxu0 %v657
      %1078 = vmatpush.msra.mxu0 %v649
      %1079 = vmatpush.msra.mxu0 %v641
      %1080 = vmatmul.f32.gmra.mxu0 0.0
      %v1081 = vpop.f32.mrf.mxu0
      %v1082 = vadd.f32 0.0, %v1081
      %1083 = vdwg.mxu0
      %1084 = vmatpush.msra.mxu0 %v889
      %1085 = vmatpush.msra.mxu0 %v881
      %1086 = vmatpush.msra.mxu0 %v873
      %1087 = vmatpush.msra.mxu0 %v865
      %1088 = vmatpush.msra.mxu0 %v857
      %1089 = vmatpush.msra.mxu0 %v849
      %1090 = vmatpush.msra.mxu0 %v841
      %1091 = vmatpush.msra.mxu0 %v833
      %1092 = vmatpush.msra.mxu0 %v825
      %1093 = vmatpush.msra.mxu0 %v817
      %1094 = vmatpush.msra.mxu0 %v809
      %1095 = vmatpush.msra.mxu0 %v801
      %1096 = vmatpush.msra.mxu0 %v793
      %1097 = vmatpush.msra.mxu0 %v785
      %1098 = vmatpush.msra.mxu0 %v777
      %1099 = vmatpush.msra.mxu0 %v769
      %1100 = vmatmul.f32.gmra.mxu0 0.0
      %v1101 = vpop.f32.mrf.mxu0
      %v1102 = vadd.f32 %v1082, %v1101
      %1103 = vdwg.mxu0
      %1104 = vmatpush.msra.mxu0 %v762
      %1105 = vmatpush.msra.mxu0 %v754
      %1106 = vmatpush.msra.mxu0 %v746
      %1107 = vmatpush.msra.mxu0 %v738
      %1108 = vmatpush.msra.mxu0 %v730
      %1109 = vmatpush.msra.mxu0 %v722
      %1110 = vmatpush.msra.mxu0 %v714
      %1111 = vmatpush.msra.mxu0 %v706
      %1112 = vmatpush.msra.mxu0 %v698
      %1113 = vmatpush.msra.mxu0 %v690
      %1114 = vmatpush.msra.mxu0 %v682
      %1115 = vmatpush.msra.mxu0 %v674
      %1116 = vmatpush.msra.mxu0 %v666
      %1117 = vmatpush.msra.mxu0 %v658
      %1118 = vmatpush.msra.mxu0 %v650
      %1119 = vmatpush.msra.mxu0 %v642
      %1120 = vmatmul.f32.gmra.mxu0 0.0
      %v1121 = vpop.f32.mrf.mxu0
      %v1122 = vadd.f32 0.0, %v1121
      %1123 = vdwg.mxu0
      %1124 = vmatpush.msra.mxu0 %v890
      %1125 = vmatpush.msra.mxu0 %v882
      %1126 = vmatpush.msra.mxu0 %v874
      %1127 = vmatpush.msra.mxu0 %v866
      %1128 = vmatpush.msra.mxu0 %v858
      %1129 = vmatpush.msra.mxu0 %v850
      %1130 = vmatpush.msra.mxu0 %v842
      %1131 = vmatpush.msra.mxu0 %v834
      %1132 = vmatpush.msra.mxu0 %v826
      %1133 = vmatpush.msra.mxu0 %v818
      %1134 = vmatpush.msra.mxu0 %v810
      %1135 = vmatpush.msra.mxu0 %v802
      %1136 = vmatpush.msra.mxu0 %v794
      %1137 = vmatpush.msra.mxu0 %v786
      %1138 = vmatpush.msra.mxu0 %v778
      %1139 = vmatpush.msra.mxu0 %v770
      %1140 = vmatmul.f32.gmra.mxu0 0.0
      %v1141 = vpop.f32.mrf.mxu0
      %v1142 = vadd.f32 %v1122, %v1141
      %1143 = vdwg.mxu0
      %1144 = vmatpush.msra.mxu0 %v763
      %1145 = vmatpush.msra.mxu0 %v755
      %1146 = vmatpush.msra.mxu0 %v747
      %1147 = vmatpush.msra.mxu0 %v739
      %1148 = vmatpush.msra.mxu0 %v731
      %1149 = vmatpush.msra.mxu0 %v723
      %1150 = vmatpush.msra.mxu0 %v715
      %1151 = vmatpush.msra.mxu0 %v707
      %1152 = vmatpush.msra.mxu0 %v699
      %1153 = vmatpush.msra.mxu0 %v691
      %1154 = vmatpush.msra.mxu0 %v683
      %1155 = vmatpush.msra.mxu0 %v675
      %1156 = vmatpush.msra.mxu0 %v667
      %1157 = vmatpush.msra.mxu0 %v659
      %1158 = vmatpush.msra.mxu0 %v651
      %1159 = vmatpush.msra.mxu0 %v643
      %1160 = vmatmul.f32.gmra.mxu0 0.0
      %v1161 = vpop.f32.mrf.mxu0
      %v1162 = vadd.f32 0.0, %v1161
      %1163 = vdwg.mxu0
      %1164 = vmatpush.msra.mxu0 %v891
      %1165 = vmatpush.msra.mxu0 %v883
      %1166 = vmatpush.msra.mxu0 %v875
      %1167 = vmatpush.msra.mxu0 %v867
      %1168 = vmatpush.msra.mxu0 %v859
      %1169 = vmatpush.msra.mxu0 %v851
      %1170 = vmatpush.msra.mxu0 %v843
      %1171 = vmatpush.msra.mxu0 %v835
      %1172 = vmatpush.msra.mxu0 %v827
      %1173 = vmatpush.msra.mxu0 %v819
      %1174 = vmatpush.msra.mxu0 %v811
      %1175 = vmatpush.msra.mxu0 %v803
      %1176 = vmatpush.msra.mxu0 %v795
      %1177 = vmatpush.msra.mxu0 %v787
      %1178 = vmatpush.msra.mxu0 %v779
      %1179 = vmatpush.msra.mxu0 %v771
      %1180 = vmatmul.f32.gmra.mxu0 0.0
      %v1181 = vpop.f32.mrf.mxu0
      %v1182 = vadd.f32 %v1162, %v1181
      %1183 = vdwg.mxu0
      %1184 = vmatpush.msra.mxu0 %v764
      %1185 = vmatpush.msra.mxu0 %v756
      %1186 = vmatpush.msra.mxu0 %v748
      %1187 = vmatpush.msra.mxu0 %v740
      %1188 = vmatpush.msra.mxu0 %v732
      %1189 = vmatpush.msra.mxu0 %v724
      %1190 = vmatpush.msra.mxu0 %v716
      %1191 = vmatpush.msra.mxu0 %v708
      %1192 = vmatpush.msra.mxu0 %v700
      %1193 = vmatpush.msra.mxu0 %v692
      %1194 = vmatpush.msra.mxu0 %v684
      %1195 = vmatpush.msra.mxu0 %v676
      %1196 = vmatpush.msra.mxu0 %v668
      %1197 = vmatpush.msra.mxu0 %v660
      %1198 = vmatpush.msra.mxu0 %v652
      %1199 = vmatpush.msra.mxu0 %v644
      %1200 = vmatmul.f32.gmra.mxu0 0.0
      %v1201 = vpop.f32.mrf.mxu0
      %v1202 = vadd.f32 0.0, %v1201
      %1203 = vdwg.mxu0
      %1204 = vmatpush.msra.mxu0 %v892
      %1205 = vmatpush.msra.mxu0 %v884
      %1206 = vmatpush.msra.mxu0 %v876
      %1207 = vmatpush.msra.mxu0 %v868
      %1208 = vmatpush.msra.mxu0 %v860
      %1209 = vmatpush.msra.mxu0 %v852
      %1210 = vmatpush.msra.mxu0 %v844
      %1211 = vmatpush.msra.mxu0 %v836
      %1212 = vmatpush.msra.mxu0 %v828
      %1213 = vmatpush.msra.mxu0 %v820
      %1214 = vmatpush.msra.mxu0 %v812
      %1215 = vmatpush.msra.mxu0 %v804
      %1216 = vmatpush.msra.mxu0 %v796
      %1217 = vmatpush.msra.mxu0 %v788
      %1218 = vmatpush.msra.mxu0 %v780
      %1219 = vmatpush.msra.mxu0 %v772
      %1220 = vmatmul.f32.gmra.mxu0 0.0
      %v1221 = vpop.f32.mrf.mxu0
      %v1222 = vadd.f32 %v1202, %v1221
      %1223 = vdwg.mxu0
      %v1224 = vadd.f32 %v896, %v942
      %v1225 = vadd.f32 %v897, %v982
      %v1226 = vadd.f32 %v898, %v1022
      %v1227 = vadd.f32 %v899, %v1062
      %v1228 = vadd.f32 %v900, %v1102
      %v1229 = vadd.f32 %v901, %v1142
      %v1230 = vadd.f32 %v902, %v1182
      %v1231 = vadd.f32 %v903, %v1222
      %v1232 = vxor.u32 %v1224, 2147483648
      %v1233 = vxor.u32 %v1225, 2147483648
      %v1234 = vmul.f32 %v1232, 1.442695
      %v1235 = vpow.pop %v1234
      %v1236 = vmul.f32 %v1233, 1.442695
      %v1237 = vpow.pop %v1236
      %v1238 = vadd.f32 %v1235, 1.0
      %v1239 = vadd.f32 %v1237, 1.0
      %v1240 = vrcp.pop %v1238
      %v1241 = vmul.f32 %v1238, %v1240
      %v1242 = vsub.f32 1.0, %v1241
      %v1243 = vmul.f32 %v1240, %v1242
      %v1244 = vadd.f32 %v1240, %v1243
      %vm1245 = vweird.f32 %v1238
      %vm1246 = vweird.f32 %v1240
      %vm1247 = vmor %vm1245, %vm1246
      %v1248 = vsel %vm1247, %v1240, %v1244
      %v1249 = vand.u32 2147483647, %v1238
      %vm1250 = vcmp.eq.f32.partialorder %v1249, 8.507059e+37
      %v1251 = vand.u32 %v1238, 2147483648
      %v1252 = vor.u32 1.1754944e-38, %v1251
      %v1253 = vsel %vm1250, %v1252, %v1248
      %v1254 = vmul.f32 1.0, %v1253
      %v1255 = vrcp.pop %v1239
      %v1256 = vmul.f32 %v1239, %v1255
      %v1257 = vsub.f32 1.0, %v1256
      %v1258 = vmul.f32 %v1255, %v1257
      %v1259 = vadd.f32 %v1255, %v1258
      %vm1260 = vweird.f32 %v1239
      %vm1261 = vweird.f32 %v1255
      %vm1262 = vmor %vm1260, %vm1261
      %v1263 = vsel %vm1262, %v1255, %v1259
      %v1264 = vand.u32 2147483647, %v1239
      %vm1265 = vcmp.eq.f32.partialorder %v1264, 8.507059e+37
      %v1266 = vand.u32 %v1239, 2147483648
      %v1267 = vor.u32 1.1754944e-38, %v1266
      %v1268 = vsel %vm1265, %v1267, %v1263
      %v1269 = vmul.f32 1.0, %v1268
      %v1270 = vxor.u32 %v1226, 2147483648
      %v1271 = vxor.u32 %v1227, 2147483648
      %v1272 = vmul.f32 %v1270, 1.442695
      %v1273 = vpow.pop %v1272
      %v1274 = vmul.f32 %v1271, 1.442695
      %v1275 = vpow.pop %v1274
      %v1276 = vadd.f32 %v1273, 1.0
      %v1277 = vadd.f32 %v1275, 1.0
      %v1278 = vrcp.pop %v1276
      %v1279 = vmul.f32 %v1276, %v1278
      %v1280 = vsub.f32 1.0, %v1279
      %v1281 = vmul.f32 %v1278, %v1280
      %v1282 = vadd.f32 %v1278, %v1281
      %vm1283 = vweird.f32 %v1276
      %vm1284 = vweird.f32 %v1278
      %vm1285 = vmor %vm1283, %vm1284
      %v1286 = vsel %vm1285, %v1278, %v1282
      %v1287 = vand.u32 2147483647, %v1276
      %vm1288 = vcmp.eq.f32.partialorder %v1287, 8.507059e+37
      %v1289 = vand.u32 %v1276, 2147483648
      %v1290 = vor.u32 1.1754944e-38, %v1289
      %v1291 = vsel %vm1288, %v1290, %v1286
      %v1292 = vmul.f32 1.0, %v1291
      %v1293 = vrcp.pop %v1277
      %v1294 = vmul.f32 %v1277, %v1293
      %v1295 = vsub.f32 1.0, %v1294
      %v1296 = vmul.f32 %v1293, %v1295
      %v1297 = vadd.f32 %v1293, %v1296
      %vm1298 = vweird.f32 %v1277
      %vm1299 = vweird.f32 %v1293
      %vm1300 = vmor %vm1298, %vm1299
      %v1301 = vsel %vm1300, %v1293, %v1297
      %v1302 = vand.u32 2147483647, %v1277
      %vm1303 = vcmp.eq.f32.partialorder %v1302, 8.507059e+37
      %v1304 = vand.u32 %v1277, 2147483648
      %v1305 = vor.u32 1.1754944e-38, %v1304
      %v1306 = vsel %vm1303, %v1305, %v1301
      %v1307 = vmul.f32 1.0, %v1306
      %v1308 = vtanh.pop %v1228
      %v1309 = vtanh.pop %v1229
      %v1310 = vxor.u32 %v1230, 2147483648
      %v1311 = vxor.u32 %v1231, 2147483648
      %v1312 = vmul.f32 %v1310, 1.442695
      %v1313 = vpow.pop %v1312
      %v1314 = vmul.f32 %v1311, 1.442695
      %v1315 = vpow.pop %v1314
      %v1316 = vadd.f32 %v1313, 1.0
      %v1317 = vadd.f32 %v1315, 1.0
      %v1318 = vrcp.pop %v1316
      %v1319 = vmul.f32 %v1316, %v1318
      %v1320 = vsub.f32 1.0, %v1319
      %v1321 = vmul.f32 %v1318, %v1320
      %v1322 = vadd.f32 %v1318, %v1321
      %vm1323 = vweird.f32 %v1316
      %vm1324 = vweird.f32 %v1318
      %vm1325 = vmor %vm1323, %vm1324
      %v1326 = vsel %vm1325, %v1318, %v1322
      %v1327 = vand.u32 2147483647, %v1316
      %vm1328 = vcmp.eq.f32.partialorder %v1327, 8.507059e+37
      %v1329 = vand.u32 %v1316, 2147483648
      %v1330 = vor.u32 1.1754944e-38, %v1329
      %v1331 = vsel %vm1328, %v1330, %v1326
      %v1332 = vmul.f32 1.0, %v1331
      %v1333 = vrcp.pop %v1317
      %v1334 = vmul.f32 %v1317, %v1333
      %v1335 = vsub.f32 1.0, %v1334
      %v1336 = vmul.f32 %v1333, %v1335
      %v1337 = vadd.f32 %v1333, %v1336
      %vm1338 = vweird.f32 %v1317
      %vm1339 = vweird.f32 %v1333
      %vm1340 = vmor %vm1338, %vm1339
      %v1341 = vsel %vm1340, %v1333, %v1337
      %v1342 = vand.u32 2147483647, %v1317
      %vm1343 = vcmp.eq.f32.partialorder %v1342, 8.507059e+37
      %v1344 = vand.u32 %v1317, 2147483648
      %v1345 = vor.u32 1.1754944e-38, %v1344
      %v1346 = vsel %vm1343, %v1345, %v1341
      %v1347 = vmul.f32 1.0, %v1346
      %v1348 = vmul.f32 %v1292, 0.0
      %v1349 = vmul.f32 %v1307, 0.0
      %v1350 = vmul.f32 %v1254, %v1308
      %v1351 = vmul.f32 %v1269, %v1309
      %v1352 = vadd.f32 %v1348, %v1350
      %v1353 = vadd.f32 %v1349, %v1351
      %v1354 = vtanh.pop %v1352
      %v1355 = vtanh.pop %v1353
      %v1356 = vmul.f32 %v1332, %v1354
      %v1357 = vmul.f32 %v1347, %v1355
      %s1358 = smul.u32 0, 2
      %s1359 = smul.addr %s1358, 8
      %s1360 = scalar_lea.vmem [#allocation2], %s1359
      %1361 = vst [vmem:[%s1360] sm:$0xff] %v1356
      %s1362 = smul.u32 7, 2
      %s1363 = smul.addr %s1362, 8
      %s1364 = scalar_lea.vmem [#allocation2], %s1363
      %1365 = vst [vmem:[%s1364 + $0x8] sm:$0xff] %v1357
      %s1366 = smul.u32 1, 8
      %s1367 = smul.addr %s1366, 8
      %s1368 = scalar_lea.vmem [#allocation11], %s1367
      %v1369 = vld [vmem:[%s1368] sm:$0xff]
      %v1370 = vld [vmem:[%s1368 + $0x8] sm:$0xff]
      %v1371 = vld [vmem:[%s1368 + $0x10] sm:$0xff]
      %v1372 = vld [vmem:[%s1368 + $0x18] sm:$0xff]
      %v1373 = vld [vmem:[%s1368 + $0x20] sm:$0xff]
      %v1374 = vld [vmem:[%s1368 + $0x28] sm:$0xff]
      %v1375 = vld [vmem:[%s1368 + $0x30] sm:$0xff]
      %v1376 = vld [vmem:[%s1368 + $0x38] sm:$0xff]
      %1377 = vmatpush.msra.mxu0 %v757
      %1378 = vmatpush.msra.mxu0 %v749
      %1379 = vmatpush.msra.mxu0 %v741
      %1380 = vmatpush.msra.mxu0 %v733
      %1381 = vmatpush.msra.mxu0 %v725
      %1382 = vmatpush.msra.mxu0 %v717
      %1383 = vmatpush.msra.mxu0 %v709
      %1384 = vmatpush.msra.mxu0 %v701
      %1385 = vmatpush.msra.mxu0 %v693
      %1386 = vmatpush.msra.mxu0 %v685
      %1387 = vmatpush.msra.mxu0 %v677
      %1388 = vmatpush.msra.mxu0 %v669
      %1389 = vmatpush.msra.mxu0 %v661
      %1390 = vmatpush.msra.mxu0 %v653
      %1391 = vmatpush.msra.mxu0 %v645
      %1392 = vmatpush.msra.mxu0 %v637
      %1393 = vmatmul.f32.gmra.mxu0 %v1356
      %v1394 = vpop.f32.mrf.mxu0
      %v1395 = vadd.f32 0.0, %v1394
      %1396 = vdwg.mxu0
      %1397 = vmatpush.msra.mxu0 %v885
      %1398 = vmatpush.msra.mxu0 %v877
      %1399 = vmatpush.msra.mxu0 %v869
      %1400 = vmatpush.msra.mxu0 %v861
      %1401 = vmatpush.msra.mxu0 %v853
      %1402 = vmatpush.msra.mxu0 %v845
      %1403 = vmatpush.msra.mxu0 %v837
      %1404 = vmatpush.msra.mxu0 %v829
      %1405 = vmatpush.msra.mxu0 %v821
      %1406 = vmatpush.msra.mxu0 %v813
      %1407 = vmatpush.msra.mxu0 %v805
      %1408 = vmatpush.msra.mxu0 %v797
      %1409 = vmatpush.msra.mxu0 %v789
      %1410 = vmatpush.msra.mxu0 %v781
      %1411 = vmatpush.msra.mxu0 %v773
      %1412 = vmatpush.msra.mxu0 %v765
      %1413 = vmatmul.f32.gmra.mxu0 %v1357
      %v1414 = vpop.f32.mrf.mxu0
      %v1415 = vadd.f32 %v1395, %v1414
      %1416 = vdwg.mxu0
      %1417 = vmatpush.msra.mxu0 %v758
      %1418 = vmatpush.msra.mxu0 %v750
      %1419 = vmatpush.msra.mxu0 %v742
      %1420 = vmatpush.msra.mxu0 %v734
      %1421 = vmatpush.msra.mxu0 %v726
      %1422 = vmatpush.msra.mxu0 %v718
      %1423 = vmatpush.msra.mxu0 %v710
      %1424 = vmatpush.msra.mxu0 %v702
      %1425 = vmatpush.msra.mxu0 %v694
      %1426 = vmatpush.msra.mxu0 %v686
      %1427 = vmatpush.msra.mxu0 %v678
      %1428 = vmatpush.msra.mxu0 %v670
      %1429 = vmatpush.msra.mxu0 %v662
      %1430 = vmatpush.msra.mxu0 %v654
      %1431 = vmatpush.msra.mxu0 %v646
      %1432 = vmatpush.msra.mxu0 %v638
      %1433 = vmatmul.f32.gmra.mxu0 %v1356
      %v1434 = vpop.f32.mrf.mxu0
      %v1435 = vadd.f32 0.0, %v1434
      %1436 = vdwg.mxu0
      %1437 = vmatpush.msra.mxu0 %v886
      %1438 = vmatpush.msra.mxu0 %v878
      %1439 = vmatpush.msra.mxu0 %v870
      %1440 = vmatpush.msra.mxu0 %v862
      %1441 = vmatpush.msra.mxu0 %v854
      %1442 = vmatpush.msra.mxu0 %v846
      %1443 = vmatpush.msra.mxu0 %v838
      %1444 = vmatpush.msra.mxu0 %v830
      %1445 = vmatpush.msra.mxu0 %v822
      %1446 = vmatpush.msra.mxu0 %v814
      %1447 = vmatpush.msra.mxu0 %v806
      %1448 = vmatpush.msra.mxu0 %v798
      %1449 = vmatpush.msra.mxu0 %v790
      %1450 = vmatpush.msra.mxu0 %v782
      %1451 = vmatpush.msra.mxu0 %v774
      %1452 = vmatpush.msra.mxu0 %v766
      %1453 = vmatmul.f32.gmra.mxu0 %v1357
      %v1454 = vpop.f32.mrf.mxu0
      %v1455 = vadd.f32 %v1435, %v1454
      %1456 = vdwg.mxu0
      %1457 = vmatpush.msra.mxu0 %v759
      %1458 = vmatpush.msra.mxu0 %v751
      %1459 = vmatpush.msra.mxu0 %v743
      %1460 = vmatpush.msra.mxu0 %v735
      %1461 = vmatpush.msra.mxu0 %v727
      %1462 = vmatpush.msra.mxu0 %v719
      %1463 = vmatpush.msra.mxu0 %v711
      %1464 = vmatpush.msra.mxu0 %v703
      %1465 = vmatpush.msra.mxu0 %v695
      %1466 = vmatpush.msra.mxu0 %v687
      %1467 = vmatpush.msra.mxu0 %v679
      %1468 = vmatpush.msra.mxu0 %v671
      %1469 = vmatpush.msra.mxu0 %v663
      %1470 = vmatpush.msra.mxu0 %v655
      %1471 = vmatpush.msra.mxu0 %v647
      %1472 = vmatpush.msra.mxu0 %v639
      %1473 = vmatmul.f32.gmra.mxu0 %v1356
      %v1474 = vpop.f32.mrf.mxu0
      %v1475 = vadd.f32 0.0, %v1474
      %1476 = vdwg.mxu0
      %1477 = vmatpush.msra.mxu0 %v887
      %1478 = vmatpush.msra.mxu0 %v879
      %1479 = vmatpush.msra.mxu0 %v871
      %1480 = vmatpush.msra.mxu0 %v863
      %1481 = vmatpush.msra.mxu0 %v855
      %1482 = vmatpush.msra.mxu0 %v847
      %1483 = vmatpush.msra.mxu0 %v839
      %1484 = vmatpush.msra.mxu0 %v831
      %1485 = vmatpush.msra.mxu0 %v823
      %1486 = vmatpush.msra.mxu0 %v815
      %1487 = vmatpush.msra.mxu0 %v807
      %1488 = vmatpush.msra.mxu0 %v799
      %1489 = vmatpush.msra.mxu0 %v791
      %1490 = vmatpush.msra.mxu0 %v783
      %1491 = vmatpush.msra.mxu0 %v775
      %1492 = vmatpush.msra.mxu0 %v767
      %1493 = vmatmul.f32.gmra.mxu0 %v1357
      %v1494 = vpop.f32.mrf.mxu0
      %v1495 = vadd.f32 %v1475, %v1494
      %1496 = vdwg.mxu0
      %1497 = vmatpush.msra.mxu0 %v760
      %1498 = vmatpush.msra.mxu0 %v752
      %1499 = vmatpush.msra.mxu0 %v744
      %1500 = vmatpush.msra.mxu0 %v736
      %1501 = vmatpush.msra.mxu0 %v728
      %1502 = vmatpush.msra.mxu0 %v720
      %1503 = vmatpush.msra.mxu0 %v712
      %1504 = vmatpush.msra.mxu0 %v704
      %1505 = vmatpush.msra.mxu0 %v696
      %1506 = vmatpush.msra.mxu0 %v688
      %1507 = vmatpush.msra.mxu0 %v680
      %1508 = vmatpush.msra.mxu0 %v672
      %1509 = vmatpush.msra.mxu0 %v664
      %1510 = vmatpush.msra.mxu0 %v656
      %1511 = vmatpush.msra.mxu0 %v648
      %1512 = vmatpush.msra.mxu0 %v640
      %1513 = vmatmul.f32.gmra.mxu0 %v1356
      %v1514 = vpop.f32.mrf.mxu0
      %v1515 = vadd.f32 0.0, %v1514
      %1516 = vdwg.mxu0
      %1517 = vmatpush.msra.mxu0 %v888
      %1518 = vmatpush.msra.mxu0 %v880
      %1519 = vmatpush.msra.mxu0 %v872
      %1520 = vmatpush.msra.mxu0 %v864
      %1521 = vmatpush.msra.mxu0 %v856
      %1522 = vmatpush.msra.mxu0 %v848
      %1523 = vmatpush.msra.mxu0 %v840
      %1524 = vmatpush.msra.mxu0 %v832
      %1525 = vmatpush.msra.mxu0 %v824
      %1526 = vmatpush.msra.mxu0 %v816
      %1527 = vmatpush.msra.mxu0 %v808
      %1528 = vmatpush.msra.mxu0 %v800
      %1529 = vmatpush.msra.mxu0 %v792
      %1530 = vmatpush.msra.mxu0 %v784
      %1531 = vmatpush.msra.mxu0 %v776
      %1532 = vmatpush.msra.mxu0 %v768
      %1533 = vmatmul.f32.gmra.mxu0 %v1357
      %v1534 = vpop.f32.mrf.mxu0
      %v1535 = vadd.f32 %v1515, %v1534
      %1536 = vdwg.mxu0
      %1537 = vmatpush.msra.mxu0 %v761
      %1538 = vmatpush.msra.mxu0 %v753
      %1539 = vmatpush.msra.mxu0 %v745
      %1540 = vmatpush.msra.mxu0 %v737
      %1541 = vmatpush.msra.mxu0 %v729
      %1542 = vmatpush.msra.mxu0 %v721
      %1543 = vmatpush.msra.mxu0 %v713
      %1544 = vmatpush.msra.mxu0 %v705
      %1545 = vmatpush.msra.mxu0 %v697
      %1546 = vmatpush.msra.mxu0 %v689
      %1547 = vmatpush.msra.mxu0 %v681
      %1548 = vmatpush.msra.mxu0 %v673
      %1549 = vmatpush.msra.mxu0 %v665
      %1550 = vmatpush.msra.mxu0 %v657
      %1551 = vmatpush.msra.mxu0 %v649
      %1552 = vmatpush.msra.mxu0 %v641
      %1553 = vmatmul.f32.gmra.mxu0 %v1356
      %v1554 = vpop.f32.mrf.mxu0
      %v1555 = vadd.f32 0.0, %v1554
      %1556 = vdwg.mxu0
      %1557 = vmatpush.msra.mxu0 %v889
      %1558 = vmatpush.msra.mxu0 %v881
      %1559 = vmatpush.msra.mxu0 %v873
      %1560 = vmatpush.msra.mxu0 %v865
      %1561 = vmatpush.msra.mxu0 %v857
      %1562 = vmatpush.msra.mxu0 %v849
      %1563 = vmatpush.msra.mxu0 %v841
      %1564 = vmatpush.msra.mxu0 %v833
      %1565 = vmatpush.msra.mxu0 %v825
      %1566 = vmatpush.msra.mxu0 %v817
      %1567 = vmatpush.msra.mxu0 %v809
      %1568 = vmatpush.msra.mxu0 %v801
      %1569 = vmatpush.msra.mxu0 %v793
      %1570 = vmatpush.msra.mxu0 %v785
      %1571 = vmatpush.msra.mxu0 %v777
      %1572 = vmatpush.msra.mxu0 %v769
      %1573 = vmatmul.f32.gmra.mxu0 %v1357
      %v1574 = vpop.f32.mrf.mxu0
      %v1575 = vadd.f32 %v1555, %v1574
      %1576 = vdwg.mxu0
      %1577 = vmatpush.msra.mxu0 %v762
      %1578 = vmatpush.msra.mxu0 %v754
      %1579 = vmatpush.msra.mxu0 %v746
      %1580 = vmatpush.msra.mxu0 %v738
      %1581 = vmatpush.msra.mxu0 %v730
      %1582 = vmatpush.msra.mxu0 %v722
      %1583 = vmatpush.msra.mxu0 %v714
      %1584 = vmatpush.msra.mxu0 %v706
      %1585 = vmatpush.msra.mxu0 %v698
      %1586 = vmatpush.msra.mxu0 %v690
      %1587 = vmatpush.msra.mxu0 %v682
      %1588 = vmatpush.msra.mxu0 %v674
      %1589 = vmatpush.msra.mxu0 %v666
      %1590 = vmatpush.msra.mxu0 %v658
      %1591 = vmatpush.msra.mxu0 %v650
      %1592 = vmatpush.msra.mxu0 %v642
      %1593 = vmatmul.f32.gmra.mxu0 %v1356
      %v1594 = vpop.f32.mrf.mxu0
      %v1595 = vadd.f32 0.0, %v1594
      %1596 = vdwg.mxu0
      %1597 = vmatpush.msra.mxu0 %v890
      %1598 = vmatpush.msra.mxu0 %v882
      %1599 = vmatpush.msra.mxu0 %v874
      %1600 = vmatpush.msra.mxu0 %v866
      %1601 = vmatpush.msra.mxu0 %v858
      %1602 = vmatpush.msra.mxu0 %v850
      %1603 = vmatpush.msra.mxu0 %v842
      %1604 = vmatpush.msra.mxu0 %v834
      %1605 = vmatpush.msra.mxu0 %v826
      %1606 = vmatpush.msra.mxu0 %v818
      %1607 = vmatpush.msra.mxu0 %v810
      %1608 = vmatpush.msra.mxu0 %v802
      %1609 = vmatpush.msra.mxu0 %v794
      %1610 = vmatpush.msra.mxu0 %v786
      %1611 = vmatpush.msra.mxu0 %v778
      %1612 = vmatpush.msra.mxu0 %v770
      %1613 = vmatmul.f32.gmra.mxu0 %v1357
      %v1614 = vpop.f32.mrf.mxu0
      %v1615 = vadd.f32 %v1595, %v1614
      %1616 = vdwg.mxu0
      %1617 = vmatpush.msra.mxu0 %v763
      %1618 = vmatpush.msra.mxu0 %v755
      %1619 = vmatpush.msra.mxu0 %v747
      %1620 = vmatpush.msra.mxu0 %v739
      %1621 = vmatpush.msra.mxu0 %v731
      %1622 = vmatpush.msra.mxu0 %v723
      %1623 = vmatpush.msra.mxu0 %v715
      %1624 = vmatpush.msra.mxu0 %v707
      %1625 = vmatpush.msra.mxu0 %v699
      %1626 = vmatpush.msra.mxu0 %v691
      %1627 = vmatpush.msra.mxu0 %v683
      %1628 = vmatpush.msra.mxu0 %v675
      %1629 = vmatpush.msra.mxu0 %v667
      %1630 = vmatpush.msra.mxu0 %v659
      %1631 = vmatpush.msra.mxu0 %v651
      %1632 = vmatpush.msra.mxu0 %v643
      %1633 = vmatmul.f32.gmra.mxu0 %v1356
      %v1634 = vpop.f32.mrf.mxu0
      %v1635 = vadd.f32 0.0, %v1634
      %1636 = vdwg.mxu0
      %1637 = vmatpush.msra.mxu0 %v891
      %1638 = vmatpush.msra.mxu0 %v883
      %1639 = vmatpush.msra.mxu0 %v875
      %1640 = vmatpush.msra.mxu0 %v867
      %1641 = vmatpush.msra.mxu0 %v859
      %1642 = vmatpush.msra.mxu0 %v851
      %1643 = vmatpush.msra.mxu0 %v843
      %1644 = vmatpush.msra.mxu0 %v835
      %1645 = vmatpush.msra.mxu0 %v827
      %1646 = vmatpush.msra.mxu0 %v819
      %1647 = vmatpush.msra.mxu0 %v811
      %1648 = vmatpush.msra.mxu0 %v803
      %1649 = vmatpush.msra.mxu0 %v795
      %1650 = vmatpush.msra.mxu0 %v787
      %1651 = vmatpush.msra.mxu0 %v779
      %1652 = vmatpush.msra.mxu0 %v771
      %1653 = vmatmul.f32.gmra.mxu0 %v1357
      %v1654 = vpop.f32.mrf.mxu0
      %v1655 = vadd.f32 %v1635, %v1654
      %1656 = vdwg.mxu0
      %1657 = vmatpush.msra.mxu0 %v764
      %1658 = vmatpush.msra.mxu0 %v756
      %1659 = vmatpush.msra.mxu0 %v748
      %1660 = vmatpush.msra.mxu0 %v740
      %1661 = vmatpush.msra.mxu0 %v732
      %1662 = vmatpush.msra.mxu0 %v724
      %1663 = vmatpush.msra.mxu0 %v716
      %1664 = vmatpush.msra.mxu0 %v708
      %1665 = vmatpush.msra.mxu0 %v700
      %1666 = vmatpush.msra.mxu0 %v692
      %1667 = vmatpush.msra.mxu0 %v684
      %1668 = vmatpush.msra.mxu0 %v676
      %1669 = vmatpush.msra.mxu0 %v668
      %1670 = vmatpush.msra.mxu0 %v660
      %1671 = vmatpush.msra.mxu0 %v652
      %1672 = vmatpush.msra.mxu0 %v644
      %1673 = vmatmul.f32.gmra.mxu0 %v1356
      %v1674 = vpop.f32.mrf.mxu0
      %v1675 = vadd.f32 0.0, %v1674
      %1676 = vdwg.mxu0
      %1677 = vmatpush.msra.mxu0 %v892
      %1678 = vmatpush.msra.mxu0 %v884
      %1679 = vmatpush.msra.mxu0 %v876
      %1680 = vmatpush.msra.mxu0 %v868
      %1681 = vmatpush.msra.mxu0 %v860
      %1682 = vmatpush.msra.mxu0 %v852
      %1683 = vmatpush.msra.mxu0 %v844
      %1684 = vmatpush.msra.mxu0 %v836
      %1685 = vmatpush.msra.mxu0 %v828
      %1686 = vmatpush.msra.mxu0 %v820
      %1687 = vmatpush.msra.mxu0 %v812
      %1688 = vmatpush.msra.mxu0 %v804
      %1689 = vmatpush.msra.mxu0 %v796
      %1690 = vmatpush.msra.mxu0 %v788
      %1691 = vmatpush.msra.mxu0 %v780
      %1692 = vmatpush.msra.mxu0 %v772
      %1693 = vmatmul.f32.gmra.mxu0 %v1357
      %v1694 = vpop.f32.mrf.mxu0
      %v1695 = vadd.f32 %v1675, %v1694
      %1696 = vdwg.mxu0
      %v1697 = vadd.f32 %v1369, %v1415
      %v1698 = vadd.f32 %v1370, %v1455
      %v1699 = vadd.f32 %v1371, %v1495
      %v1700 = vadd.f32 %v1372, %v1535
      %v1701 = vadd.f32 %v1373, %v1575
      %v1702 = vadd.f32 %v1374, %v1615
      %v1703 = vadd.f32 %v1375, %v1655
      %v1704 = vadd.f32 %v1376, %v1695
      %v1705 = vxor.u32 %v1697, 2147483648
      %v1706 = vxor.u32 %v1698, 2147483648
      %v1707 = vmul.f32 %v1705, 1.442695
      %v1708 = vpow.pop %v1707
      %v1709 = vmul.f32 %v1706, 1.442695
      %v1710 = vpow.pop %v1709
      %v1711 = vadd.f32 %v1708, 1.0
      %v1712 = vadd.f32 %v1710, 1.0
      %v1713 = vrcp.pop %v1711
      %v1714 = vmul.f32 %v1711, %v1713
      %v1715 = vsub.f32 1.0, %v1714
      %v1716 = vmul.f32 %v1713, %v1715
      %v1717 = vadd.f32 %v1713, %v1716
      %vm1718 = vweird.f32 %v1711
      %vm1719 = vweird.f32 %v1713
      %vm1720 = vmor %vm1718, %vm1719
      %v1721 = vsel %vm1720, %v1713, %v1717
      %v1722 = vand.u32 2147483647, %v1711
      %vm1723 = vcmp.eq.f32.partialorder %v1722, 8.507059e+37
      %v1724 = vand.u32 %v1711, 2147483648
      %v1725 = vor.u32 1.1754944e-38, %v1724
      %v1726 = vsel %vm1723, %v1725, %v1721
      %v1727 = vmul.f32 1.0, %v1726
      %v1728 = vrcp.pop %v1712
      %v1729 = vmul.f32 %v1712, %v1728
      %v1730 = vsub.f32 1.0, %v1729
      %v1731 = vmul.f32 %v1728, %v1730
      %v1732 = vadd.f32 %v1728, %v1731
      %vm1733 = vweird.f32 %v1712
      %vm1734 = vweird.f32 %v1728
      %vm1735 = vmor %vm1733, %vm1734
      %v1736 = vsel %vm1735, %v1728, %v1732
      %v1737 = vand.u32 2147483647, %v1712
      %vm1738 = vcmp.eq.f32.partialorder %v1737, 8.507059e+37
      %v1739 = vand.u32 %v1712, 2147483648
      %v1740 = vor.u32 1.1754944e-38, %v1739
      %v1741 = vsel %vm1738, %v1740, %v1736
      %v1742 = vmul.f32 1.0, %v1741
      %v1743 = vxor.u32 %v1699, 2147483648
      %v1744 = vxor.u32 %v1700, 2147483648
      %v1745 = vmul.f32 %v1743, 1.442695
      %v1746 = vpow.pop %v1745
      %v1747 = vmul.f32 %v1744, 1.442695
      %v1748 = vpow.pop %v1747
      %v1749 = vadd.f32 %v1746, 1.0
      %v1750 = vadd.f32 %v1748, 1.0
      %v1751 = vrcp.pop %v1749
      %v1752 = vmul.f32 %v1749, %v1751
      %v1753 = vsub.f32 1.0, %v1752
      %v1754 = vmul.f32 %v1751, %v1753
      %v1755 = vadd.f32 %v1751, %v1754
      %vm1756 = vweird.f32 %v1749
      %vm1757 = vweird.f32 %v1751
      %vm1758 = vmor %vm1756, %vm1757
      %v1759 = vsel %vm1758, %v1751, %v1755
      %v1760 = vand.u32 2147483647, %v1749
      %vm1761 = vcmp.eq.f32.partialorder %v1760, 8.507059e+37
      %v1762 = vand.u32 %v1749, 2147483648
      %v1763 = vor.u32 1.1754944e-38, %v1762
      %v1764 = vsel %vm1761, %v1763, %v1759
      %v1765 = vmul.f32 1.0, %v1764
      %v1766 = vrcp.pop %v1750
      %v1767 = vmul.f32 %v1750, %v1766
      %v1768 = vsub.f32 1.0, %v1767
      %v1769 = vmul.f32 %v1766, %v1768
      %v1770 = vadd.f32 %v1766, %v1769
      %vm1771 = vweird.f32 %v1750
      %vm1772 = vweird.f32 %v1766
      %vm1773 = vmor %vm1771, %vm1772
      %v1774 = vsel %vm1773, %v1766, %v1770
      %v1775 = vand.u32 2147483647, %v1750
      %vm1776 = vcmp.eq.f32.partialorder %v1775, 8.507059e+37
      %v1777 = vand.u32 %v1750, 2147483648
      %v1778 = vor.u32 1.1754944e-38, %v1777
      %v1779 = vsel %vm1776, %v1778, %v1774
      %v1780 = vmul.f32 1.0, %v1779
      %v1781 = vtanh.pop %v1701
      %v1782 = vtanh.pop %v1702
      %v1783 = vxor.u32 %v1703, 2147483648
      %v1784 = vxor.u32 %v1704, 2147483648
      %v1785 = vmul.f32 %v1783, 1.442695
      %v1786 = vpow.pop %v1785
      %v1787 = vmul.f32 %v1784, 1.442695
      %v1788 = vpow.pop %v1787
      %v1789 = vadd.f32 %v1786, 1.0
      %v1790 = vadd.f32 %v1788, 1.0
      %v1791 = vrcp.pop %v1789
      %v1792 = vmul.f32 %v1789, %v1791
      %v1793 = vsub.f32 1.0, %v1792
      %v1794 = vmul.f32 %v1791, %v1793
      %v1795 = vadd.f32 %v1791, %v1794
      %vm1796 = vweird.f32 %v1789
      %vm1797 = vweird.f32 %v1791
      %vm1798 = vmor %vm1796, %vm1797
      %v1799 = vsel %vm1798, %v1791, %v1795
      %v1800 = vand.u32 2147483647, %v1789
      %vm1801 = vcmp.eq.f32.partialorder %v1800, 8.507059e+37
      %v1802 = vand.u32 %v1789, 2147483648
      %v1803 = vor.u32 1.1754944e-38, %v1802
      %v1804 = vsel %vm1801, %v1803, %v1799
      %v1805 = vmul.f32 1.0, %v1804
      %v1806 = vrcp.pop %v1790
      %v1807 = vmul.f32 %v1790, %v1806
      %v1808 = vsub.f32 1.0, %v1807
      %v1809 = vmul.f32 %v1806, %v1808
      %v1810 = vadd.f32 %v1806, %v1809
      %vm1811 = vweird.f32 %v1790
      %vm1812 = vweird.f32 %v1806
      %vm1813 = vmor %vm1811, %vm1812
      %v1814 = vsel %vm1813, %v1806, %v1810
      %v1815 = vand.u32 2147483647, %v1790
      %vm1816 = vcmp.eq.f32.partialorder %v1815, 8.507059e+37
      %v1817 = vand.u32 %v1790, 2147483648
      %v1818 = vor.u32 1.1754944e-38, %v1817
      %v1819 = vsel %vm1816, %v1818, %v1814
      %v1820 = vmul.f32 1.0, %v1819
      %v1821 = vmul.f32 %v1765, %v1352
      %v1822 = vmul.f32 %v1780, %v1353
      %v1823 = vmul.f32 %v1727, %v1781
      %v1824 = vmul.f32 %v1742, %v1782
      %v1825 = vadd.f32 %v1821, %v1823
      %v1826 = vadd.f32 %v1822, %v1824
      %v1827 = vtanh.pop %v1825
      %v1828 = vtanh.pop %v1826
      %v1829 = vmul.f32 %v1805, %v1827
      %v1830 = vmul.f32 %v1820, %v1828
      %s1831 = smul.u32 1, 2
      %s1832 = smul.addr %s1831, 8
      %s1833 = scalar_lea.vmem [#allocation2], %s1832
      %1834 = vst [vmem:[%s1833] sm:$0xff] %v1829
      %s1835 = smul.u32 6, 2
      %s1836 = smul.addr %s1835, 8
      %s1837 = scalar_lea.vmem [#allocation2], %s1836
      %1838 = vst [vmem:[%s1837 + $0x8] sm:$0xff] %v1830
      %s1839 = smul.u32 2, 8
      %s1840 = smul.addr %s1839, 8
      %s1841 = scalar_lea.vmem [#allocation11], %s1840
      %v1842 = vld [vmem:[%s1841] sm:$0xff]
      %v1843 = vld [vmem:[%s1841 + $0x8] sm:$0xff]
      %v1844 = vld [vmem:[%s1841 + $0x10] sm:$0xff]
      %v1845 = vld [vmem:[%s1841 + $0x18] sm:$0xff]
      %v1846 = vld [vmem:[%s1841 + $0x20] sm:$0xff]
      %v1847 = vld [vmem:[%s1841 + $0x28] sm:$0xff]
      %v1848 = vld [vmem:[%s1841 + $0x30] sm:$0xff]
      %v1849 = vld [vmem:[%s1841 + $0x38] sm:$0xff]
      %1850 = vmatpush.msra.mxu0 %v757
      %1851 = vmatpush.msra.mxu0 %v749
      %1852 = vmatpush.msra.mxu0 %v741
      %1853 = vmatpush.msra.mxu0 %v733
      %1854 = vmatpush.msra.mxu0 %v725
      %1855 = vmatpush.msra.mxu0 %v717
      %1856 = vmatpush.msra.mxu0 %v709
      %1857 = vmatpush.msra.mxu0 %v701
      %1858 = vmatpush.msra.mxu0 %v693
      %1859 = vmatpush.msra.mxu0 %v685
      %1860 = vmatpush.msra.mxu0 %v677
      %1861 = vmatpush.msra.mxu0 %v669
      %1862 = vmatpush.msra.mxu0 %v661
      %1863 = vmatpush.msra.mxu0 %v653
      %1864 = vmatpush.msra.mxu0 %v645
      %1865 = vmatpush.msra.mxu0 %v637
      %1866 = vmatmul.f32.gmra.mxu0 %v1829
      %v1867 = vpop.f32.mrf.mxu0
      %v1868 = vadd.f32 0.0, %v1867
      %1869 = vdwg.mxu0
      %1870 = vmatpush.msra.mxu0 %v885
      %1871 = vmatpush.msra.mxu0 %v877
      %1872 = vmatpush.msra.mxu0 %v869
      %1873 = vmatpush.msra.mxu0 %v861
      %1874 = vmatpush.msra.mxu0 %v853
      %1875 = vmatpush.msra.mxu0 %v845
      %1876 = vmatpush.msra.mxu0 %v837
      %1877 = vmatpush.msra.mxu0 %v829
      %1878 = vmatpush.msra.mxu0 %v821
      %1879 = vmatpush.msra.mxu0 %v813
      %1880 = vmatpush.msra.mxu0 %v805
      %1881 = vmatpush.msra.mxu0 %v797
      %1882 = vmatpush.msra.mxu0 %v789
      %1883 = vmatpush.msra.mxu0 %v781
      %1884 = vmatpush.msra.mxu0 %v773
      %1885 = vmatpush.msra.mxu0 %v765
      %1886 = vmatmul.f32.gmra.mxu0 %v1830
      %v1887 = vpop.f32.mrf.mxu0
      %v1888 = vadd.f32 %v1868, %v1887
      %1889 = vdwg.mxu0
      %1890 = vmatpush.msra.mxu0 %v758
      %1891 = vmatpush.msra.mxu0 %v750
      %1892 = vmatpush.msra.mxu0 %v742
      %1893 = vmatpush.msra.mxu0 %v734
      %1894 = vmatpush.msra.mxu0 %v726
      %1895 = vmatpush.msra.mxu0 %v718
      %1896 = vmatpush.msra.mxu0 %v710
      %1897 = vmatpush.msra.mxu0 %v702
      %1898 = vmatpush.msra.mxu0 %v694
      %1899 = vmatpush.msra.mxu0 %v686
      %1900 = vmatpush.msra.mxu0 %v678
      %1901 = vmatpush.msra.mxu0 %v670
      %1902 = vmatpush.msra.mxu0 %v662
      %1903 = vmatpush.msra.mxu0 %v654
      %1904 = vmatpush.msra.mxu0 %v646
      %1905 = vmatpush.msra.mxu0 %v638
      %1906 = vmatmul.f32.gmra.mxu0 %v1829
      %v1907 = vpop.f32.mrf.mxu0
      %v1908 = vadd.f32 0.0, %v1907
      %1909 = vdwg.mxu0
      %1910 = vmatpush.msra.mxu0 %v886
      %1911 = vmatpush.msra.mxu0 %v878
      %1912 = vmatpush.msra.mxu0 %v870
      %1913 = vmatpush.msra.mxu0 %v862
      %1914 = vmatpush.msra.mxu0 %v854
      %1915 = vmatpush.msra.mxu0 %v846
      %1916 = vmatpush.msra.mxu0 %v838
      %1917 = vmatpush.msra.mxu0 %v830
      %1918 = vmatpush.msra.mxu0 %v822
      %1919 = vmatpush.msra.mxu0 %v814
      %1920 = vmatpush.msra.mxu0 %v806
      %1921 = vmatpush.msra.mxu0 %v798
      %1922 = vmatpush.msra.mxu0 %v790
      %1923 = vmatpush.msra.mxu0 %v782
      %1924 = vmatpush.msra.mxu0 %v774
      %1925 = vmatpush.msra.mxu0 %v766
      %1926 = vmatmul.f32.gmra.mxu0 %v1830
      %v1927 = vpop.f32.mrf.mxu0
      %v1928 = vadd.f32 %v1908, %v1927
      %1929 = vdwg.mxu0
      %1930 = vmatpush.msra.mxu0 %v759
      %1931 = vmatpush.msra.mxu0 %v751
      %1932 = vmatpush.msra.mxu0 %v743
      %1933 = vmatpush.msra.mxu0 %v735
      %1934 = vmatpush.msra.mxu0 %v727
      %1935 = vmatpush.msra.mxu0 %v719
      %1936 = vmatpush.msra.mxu0 %v711
      %1937 = vmatpush.msra.mxu0 %v703
      %1938 = vmatpush.msra.mxu0 %v695
      %1939 = vmatpush.msra.mxu0 %v687
      %1940 = vmatpush.msra.mxu0 %v679
      %1941 = vmatpush.msra.mxu0 %v671
      %1942 = vmatpush.msra.mxu0 %v663
      %1943 = vmatpush.msra.mxu0 %v655
      %1944 = vmatpush.msra.mxu0 %v647
      %1945 = vmatpush.msra.mxu0 %v639
      %1946 = vmatmul.f32.gmra.mxu0 %v1829
      %v1947 = vpop.f32.mrf.mxu0
      %v1948 = vadd.f32 0.0, %v1947
      %1949 = vdwg.mxu0
      %1950 = vmatpush.msra.mxu0 %v887
      %1951 = vmatpush.msra.mxu0 %v879
      %1952 = vmatpush.msra.mxu0 %v871
      %1953 = vmatpush.msra.mxu0 %v863
      %1954 = vmatpush.msra.mxu0 %v855
      %1955 = vmatpush.msra.mxu0 %v847
      %1956 = vmatpush.msra.mxu0 %v839
      %1957 = vmatpush.msra.mxu0 %v831
      %1958 = vmatpush.msra.mxu0 %v823
      %1959 = vmatpush.msra.mxu0 %v815
      %1960 = vmatpush.msra.mxu0 %v807
      %1961 = vmatpush.msra.mxu0 %v799
      %1962 = vmatpush.msra.mxu0 %v791
      %1963 = vmatpush.msra.mxu0 %v783
      %1964 = vmatpush.msra.mxu0 %v775
      %1965 = vmatpush.msra.mxu0 %v767
      %1966 = vmatmul.f32.gmra.mxu0 %v1830
      %v1967 = vpop.f32.mrf.mxu0
      %v1968 = vadd.f32 %v1948, %v1967
      %1969 = vdwg.mxu0
      %1970 = vmatpush.msra.mxu0 %v760
      %1971 = vmatpush.msra.mxu0 %v752
      %1972 = vmatpush.msra.mxu0 %v744
      %1973 = vmatpush.msra.mxu0 %v736
      %1974 = vmatpush.msra.mxu0 %v728
      %1975 = vmatpush.msra.mxu0 %v720
      %1976 = vmatpush.msra.mxu0 %v712
      %1977 = vmatpush.msra.mxu0 %v704
      %1978 = vmatpush.msra.mxu0 %v696
      %1979 = vmatpush.msra.mxu0 %v688
      %1980 = vmatpush.msra.mxu0 %v680
      %1981 = vmatpush.msra.mxu0 %v672
      %1982 = vmatpush.msra.mxu0 %v664
      %1983 = vmatpush.msra.mxu0 %v656
      %1984 = vmatpush.msra.mxu0 %v648
      %1985 = vmatpush.msra.mxu0 %v640
      %1986 = vmatmul.f32.gmra.mxu0 %v1829
      %v1987 = vpop.f32.mrf.mxu0
      %v1988 = vadd.f32 0.0, %v1987
      %1989 = vdwg.mxu0
      %1990 = vmatpush.msra.mxu0 %v888
      %1991 = vmatpush.msra.mxu0 %v880
      %1992 = vmatpush.msra.mxu0 %v872
      %1993 = vmatpush.msra.mxu0 %v864
      %1994 = vmatpush.msra.mxu0 %v856
      %1995 = vmatpush.msra.mxu0 %v848
      %1996 = vmatpush.msra.mxu0 %v840
      %1997 = vmatpush.msra.mxu0 %v832
      %1998 = vmatpush.msra.mxu0 %v824
      %1999 = vmatpush.msra.mxu0 %v816
      %2000 = vmatpush.msra.mxu0 %v808
      %2001 = vmatpush.msra.mxu0 %v800
      %2002 = vmatpush.msra.mxu0 %v792
      %2003 = vmatpush.msra.mxu0 %v784
      %2004 = vmatpush.msra.mxu0 %v776
      %2005 = vmatpush.msra.mxu0 %v768
      %2006 = vmatmul.f32.gmra.mxu0 %v1830
      %v2007 = vpop.f32.mrf.mxu0
      %v2008 = vadd.f32 %v1988, %v2007
      %2009 = vdwg.mxu0
      %2010 = vmatpush.msra.mxu0 %v761
      %2011 = vmatpush.msra.mxu0 %v753
      %2012 = vmatpush.msra.mxu0 %v745
      %2013 = vmatpush.msra.mxu0 %v737
      %2014 = vmatpush.msra.mxu0 %v729
      %2015 = vmatpush.msra.mxu0 %v721
      %2016 = vmatpush.msra.mxu0 %v713
      %2017 = vmatpush.msra.mxu0 %v705
      %2018 = vmatpush.msra.mxu0 %v697
      %2019 = vmatpush.msra.mxu0 %v689
      %2020 = vmatpush.msra.mxu0 %v681
      %2021 = vmatpush.msra.mxu0 %v673
      %2022 = vmatpush.msra.mxu0 %v665
      %2023 = vmatpush.msra.mxu0 %v657
      %2024 = vmatpush.msra.mxu0 %v649
      %2025 = vmatpush.msra.mxu0 %v641
      %2026 = vmatmul.f32.gmra.mxu0 %v1829
      %v2027 = vpop.f32.mrf.mxu0
      %v2028 = vadd.f32 0.0, %v2027
      %2029 = vdwg.mxu0
      %2030 = vmatpush.msra.mxu0 %v889
      %2031 = vmatpush.msra.mxu0 %v881
      %2032 = vmatpush.msra.mxu0 %v873
      %2033 = vmatpush.msra.mxu0 %v865
      %2034 = vmatpush.msra.mxu0 %v857
      %2035 = vmatpush.msra.mxu0 %v849
      %2036 = vmatpush.msra.mxu0 %v841
      %2037 = vmatpush.msra.mxu0 %v833
      %2038 = vmatpush.msra.mxu0 %v825
      %2039 = vmatpush.msra.mxu0 %v817
      %2040 = vmatpush.msra.mxu0 %v809
      %2041 = vmatpush.msra.mxu0 %v801
      %2042 = vmatpush.msra.mxu0 %v793
      %2043 = vmatpush.msra.mxu0 %v785
      %2044 = vmatpush.msra.mxu0 %v777
      %2045 = vmatpush.msra.mxu0 %v769
      %2046 = vmatmul.f32.gmra.mxu0 %v1830
      %v2047 = vpop.f32.mrf.mxu0
      %v2048 = vadd.f32 %v2028, %v2047
      %2049 = vdwg.mxu0
      %2050 = vmatpush.msra.mxu0 %v762
      %2051 = vmatpush.msra.mxu0 %v754
      %2052 = vmatpush.msra.mxu0 %v746
      %2053 = vmatpush.msra.mxu0 %v738
      %2054 = vmatpush.msra.mxu0 %v730
      %2055 = vmatpush.msra.mxu0 %v722
      %2056 = vmatpush.msra.mxu0 %v714
      %2057 = vmatpush.msra.mxu0 %v706
      %2058 = vmatpush.msra.mxu0 %v698
      %2059 = vmatpush.msra.mxu0 %v690
      %2060 = vmatpush.msra.mxu0 %v682
      %2061 = vmatpush.msra.mxu0 %v674
      %2062 = vmatpush.msra.mxu0 %v666
      %2063 = vmatpush.msra.mxu0 %v658
      %2064 = vmatpush.msra.mxu0 %v650
      %2065 = vmatpush.msra.mxu0 %v642
      %2066 = vmatmul.f32.gmra.mxu0 %v1829
      %v2067 = vpop.f32.mrf.mxu0
      %v2068 = vadd.f32 0.0, %v2067
      %2069 = vdwg.mxu0
      %2070 = vmatpush.msra.mxu0 %v890
      %2071 = vmatpush.msra.mxu0 %v882
      %2072 = vmatpush.msra.mxu0 %v874
      %2073 = vmatpush.msra.mxu0 %v866
      %2074 = vmatpush.msra.mxu0 %v858
      %2075 = vmatpush.msra.mxu0 %v850
      %2076 = vmatpush.msra.mxu0 %v842
      %2077 = vmatpush.msra.mxu0 %v834
      %2078 = vmatpush.msra.mxu0 %v826
      %2079 = vmatpush.msra.mxu0 %v818
      %2080 = vmatpush.msra.mxu0 %v810
      %2081 = vmatpush.msra.mxu0 %v802
      %2082 = vmatpush.msra.mxu0 %v794
      %2083 = vmatpush.msra.mxu0 %v786
      %2084 = vmatpush.msra.mxu0 %v778
      %2085 = vmatpush.msra.mxu0 %v770
      %2086 = vmatmul.f32.gmra.mxu0 %v1830
      %v2087 = vpop.f32.mrf.mxu0
      %v2088 = vadd.f32 %v2068, %v2087
      %2089 = vdwg.mxu0
      %2090 = vmatpush.msra.mxu0 %v763
      %2091 = vmatpush.msra.mxu0 %v755
      %2092 = vmatpush.msra.mxu0 %v747
      %2093 = vmatpush.msra.mxu0 %v739
      %2094 = vmatpush.msra.mxu0 %v731
      %2095 = vmatpush.msra.mxu0 %v723
      %2096 = vmatpush.msra.mxu0 %v715
      %2097 = vmatpush.msra.mxu0 %v707
      %2098 = vmatpush.msra.mxu0 %v699
      %2099 = vmatpush.msra.mxu0 %v691
      %2100 = vmatpush.msra.mxu0 %v683
      %2101 = vmatpush.msra.mxu0 %v675
      %2102 = vmatpush.msra.mxu0 %v667
      %2103 = vmatpush.msra.mxu0 %v659
      %2104 = vmatpush.msra.mxu0 %v651
      %2105 = vmatpush.msra.mxu0 %v643
      %2106 = vmatmul.f32.gmra.mxu0 %v1829
      %v2107 = vpop.f32.mrf.mxu0
      %v2108 = vadd.f32 0.0, %v2107
      %2109 = vdwg.mxu0
      %2110 = vmatpush.msra.mxu0 %v891
      %2111 = vmatpush.msra.mxu0 %v883
      %2112 = vmatpush.msra.mxu0 %v875
      %2113 = vmatpush.msra.mxu0 %v867
      %2114 = vmatpush.msra.mxu0 %v859
      %2115 = vmatpush.msra.mxu0 %v851
      %2116 = vmatpush.msra.mxu0 %v843
      %2117 = vmatpush.msra.mxu0 %v835
      %2118 = vmatpush.msra.mxu0 %v827
      %2119 = vmatpush.msra.mxu0 %v819
      %2120 = vmatpush.msra.mxu0 %v811
      %2121 = vmatpush.msra.mxu0 %v803
      %2122 = vmatpush.msra.mxu0 %v795
      %2123 = vmatpush.msra.mxu0 %v787
      %2124 = vmatpush.msra.mxu0 %v779
      %2125 = vmatpush.msra.mxu0 %v771
      %2126 = vmatmul.f32.gmra.mxu0 %v1830
      %v2127 = vpop.f32.mrf.mxu0
      %v2128 = vadd.f32 %v2108, %v2127
      %2129 = vdwg.mxu0
      %2130 = vmatpush.msra.mxu0 %v764
      %2131 = vmatpush.msra.mxu0 %v756
      %2132 = vmatpush.msra.mxu0 %v748
      %2133 = vmatpush.msra.mxu0 %v740
      %2134 = vmatpush.msra.mxu0 %v732
      %2135 = vmatpush.msra.mxu0 %v724
      %2136 = vmatpush.msra.mxu0 %v716
      %2137 = vmatpush.msra.mxu0 %v708
      %2138 = vmatpush.msra.mxu0 %v700
      %2139 = vmatpush.msra.mxu0 %v692
      %2140 = vmatpush.msra.mxu0 %v684
      %2141 = vmatpush.msra.mxu0 %v676
      %2142 = vmatpush.msra.mxu0 %v668
      %2143 = vmatpush.msra.mxu0 %v660
      %2144 = vmatpush.msra.mxu0 %v652
      %2145 = vmatpush.msra.mxu0 %v644
      %2146 = vmatmul.f32.gmra.mxu0 %v1829
      %v2147 = vpop.f32.mrf.mxu0
      %v2148 = vadd.f32 0.0, %v2147
      %2149 = vdwg.mxu0
      %2150 = vmatpush.msra.mxu0 %v892
      %2151 = vmatpush.msra.mxu0 %v884
      %2152 = vmatpush.msra.mxu0 %v876
      %2153 = vmatpush.msra.mxu0 %v868
      %2154 = vmatpush.msra.mxu0 %v860
      %2155 = vmatpush.msra.mxu0 %v852
      %2156 = vmatpush.msra.mxu0 %v844
      %2157 = vmatpush.msra.mxu0 %v836
      %2158 = vmatpush.msra.mxu0 %v828
      %2159 = vmatpush.msra.mxu0 %v820
      %2160 = vmatpush.msra.mxu0 %v812
      %2161 = vmatpush.msra.mxu0 %v804
      %2162 = vmatpush.msra.mxu0 %v796
      %2163 = vmatpush.msra.mxu0 %v788
      %2164 = vmatpush.msra.mxu0 %v780
      %2165 = vmatpush.msra.mxu0 %v772
      %2166 = vmatmul.f32.gmra.mxu0 %v1830
      %v2167 = vpop.f32.mrf.mxu0
      %v2168 = vadd.f32 %v2148, %v2167
      %2169 = vdwg.mxu0
      %v2170 = vadd.f32 %v1842, %v1888
      %v2171 = vadd.f32 %v1843, %v1928
      %v2172 = vadd.f32 %v1844, %v1968
      %v2173 = vadd.f32 %v1845, %v2008
      %v2174 = vadd.f32 %v1846, %v2048
      %v2175 = vadd.f32 %v1847, %v2088
      %v2176 = vadd.f32 %v1848, %v2128
      %v2177 = vadd.f32 %v1849, %v2168
      %v2178 = vxor.u32 %v2170, 2147483648
      %v2179 = vxor.u32 %v2171, 2147483648
      %v2180 = vmul.f32 %v2178, 1.442695
      %v2181 = vpow.pop %v2180
      %v2182 = vmul.f32 %v2179, 1.442695
      %v2183 = vpow.pop %v2182
      %v2184 = vadd.f32 %v2181, 1.0
      %v2185 = vadd.f32 %v2183, 1.0
      %v2186 = vrcp.pop %v2184
      %v2187 = vmul.f32 %v2184, %v2186
      %v2188 = vsub.f32 1.0, %v2187
      %v2189 = vmul.f32 %v2186, %v2188
      %v2190 = vadd.f32 %v2186, %v2189
      %vm2191 = vweird.f32 %v2184
      %vm2192 = vweird.f32 %v2186
      %vm2193 = vmor %vm2191, %vm2192
      %v2194 = vsel %vm2193, %v2186, %v2190
      %v2195 = vand.u32 2147483647, %v2184
      %vm2196 = vcmp.eq.f32.partialorder %v2195, 8.507059e+37
      %v2197 = vand.u32 %v2184, 2147483648
      %v2198 = vor.u32 1.1754944e-38, %v2197
      %v2199 = vsel %vm2196, %v2198, %v2194
      %v2200 = vmul.f32 1.0, %v2199
      %v2201 = vrcp.pop %v2185
      %v2202 = vmul.f32 %v2185, %v2201
      %v2203 = vsub.f32 1.0, %v2202
      %v2204 = vmul.f32 %v2201, %v2203
      %v2205 = vadd.f32 %v2201, %v2204
      %vm2206 = vweird.f32 %v2185
      %vm2207 = vweird.f32 %v2201
      %vm2208 = vmor %vm2206, %vm2207
      %v2209 = vsel %vm2208, %v2201, %v2205
      %v2210 = vand.u32 2147483647, %v2185
      %vm2211 = vcmp.eq.f32.partialorder %v2210, 8.507059e+37
      %v2212 = vand.u32 %v2185, 2147483648
      %v2213 = vor.u32 1.1754944e-38, %v2212
      %v2214 = vsel %vm2211, %v2213, %v2209
      %v2215 = vmul.f32 1.0, %v2214
      %v2216 = vxor.u32 %v2172, 2147483648
      %v2217 = vxor.u32 %v2173, 2147483648
      %v2218 = vmul.f32 %v2216, 1.442695
      %v2219 = vpow.pop %v2218
      %v2220 = vmul.f32 %v2217, 1.442695
      %v2221 = vpow.pop %v2220
      %v2222 = vadd.f32 %v2219, 1.0
      %v2223 = vadd.f32 %v2221, 1.0
      %v2224 = vrcp.pop %v2222
      %v2225 = vmul.f32 %v2222, %v2224
      %v2226 = vsub.f32 1.0, %v2225
      %v2227 = vmul.f32 %v2224, %v2226
      %v2228 = vadd.f32 %v2224, %v2227
      %vm2229 = vweird.f32 %v2222
      %vm2230 = vweird.f32 %v2224
      %vm2231 = vmor %vm2229, %vm2230
      %v2232 = vsel %vm2231, %v2224, %v2228
      %v2233 = vand.u32 2147483647, %v2222
      %vm2234 = vcmp.eq.f32.partialorder %v2233, 8.507059e+37
      %v2235 = vand.u32 %v2222, 2147483648
      %v2236 = vor.u32 1.1754944e-38, %v2235
      %v2237 = vsel %vm2234, %v2236, %v2232
      %v2238 = vmul.f32 1.0, %v2237
      %v2239 = vrcp.pop %v2223
      %v2240 = vmul.f32 %v2223, %v2239
      %v2241 = vsub.f32 1.0, %v2240
      %v2242 = vmul.f32 %v2239, %v2241
      %v2243 = vadd.f32 %v2239, %v2242
      %vm2244 = vweird.f32 %v2223
      %vm2245 = vweird.f32 %v2239
      %vm2246 = vmor %vm2244, %vm2245
      %v2247 = vsel %vm2246, %v2239, %v2243
      %v2248 = vand.u32 2147483647, %v2223
      %vm2249 = vcmp.eq.f32.partialorder %v2248, 8.507059e+37
      %v2250 = vand.u32 %v2223, 2147483648
      %v2251 = vor.u32 1.1754944e-38, %v2250
      %v2252 = vsel %vm2249, %v2251, %v2247
      %v2253 = vmul.f32 1.0, %v2252
      %v2254 = vtanh.pop %v2174
      %v2255 = vtanh.pop %v2175
      %v2256 = vxor.u32 %v2176, 2147483648
      %v2257 = vxor.u32 %v2177, 2147483648
      %v2258 = vmul.f32 %v2256, 1.442695
      %v2259 = vpow.pop %v2258
      %v2260 = vmul.f32 %v2257, 1.442695
      %v2261 = vpow.pop %v2260
      %v2262 = vadd.f32 %v2259, 1.0
      %v2263 = vadd.f32 %v2261, 1.0
      %v2264 = vrcp.pop %v2262
      %v2265 = vmul.f32 %v2262, %v2264
      %v2266 = vsub.f32 1.0, %v2265
      %v2267 = vmul.f32 %v2264, %v2266
      %v2268 = vadd.f32 %v2264, %v2267
      %vm2269 = vweird.f32 %v2262
      %vm2270 = vweird.f32 %v2264
      %vm2271 = vmor %vm2269, %vm2270
      %v2272 = vsel %vm2271, %v2264, %v2268
      %v2273 = vand.u32 2147483647, %v2262
      %vm2274 = vcmp.eq.f32.partialorder %v2273, 8.507059e+37
      %v2275 = vand.u32 %v2262, 2147483648
      %v2276 = vor.u32 1.1754944e-38, %v2275
      %v2277 = vsel %vm2274, %v2276, %v2272
      %v2278 = vmul.f32 1.0, %v2277
      %v2279 = vrcp.pop %v2263
      %v2280 = vmul.f32 %v2263, %v2279
      %v2281 = vsub.f32 1.0, %v2280
      %v2282 = vmul.f32 %v2279, %v2281
      %v2283 = vadd.f32 %v2279, %v2282
      %vm2284 = vweird.f32 %v2263
      %vm2285 = vweird.f32 %v2279
      %vm2286 = vmor %vm2284, %vm2285
      %v2287 = vsel %vm2286, %v2279, %v2283
      %v2288 = vand.u32 2147483647, %v2263
      %vm2289 = vcmp.eq.f32.partialorder %v2288, 8.507059e+37
      %v2290 = vand.u32 %v2263, 2147483648
      %v2291 = vor.u32 1.1754944e-38, %v2290
      %v2292 = vsel %vm2289, %v2291, %v2287
      %v2293 = vmul.f32 1.0, %v2292
      %v2294 = vmul.f32 %v2238, %v1825
      %v2295 = vmul.f32 %v2253, %v1826
      %v2296 = vmul.f32 %v2200, %v2254
      %v2297 = vmul.f32 %v2215, %v2255
      %v2298 = vadd.f32 %v2294, %v2296
      %v2299 = vadd.f32 %v2295, %v2297
      %v2300 = vtanh.pop %v2298
      %v2301 = vtanh.pop %v2299
      %v2302 = vmul.f32 %v2278, %v2300
      %v2303 = vmul.f32 %v2293, %v2301
      %s2304 = smul.u32 2, 2
      %s2305 = smul.addr %s2304, 8
      %s2306 = scalar_lea.vmem [#allocation2], %s2305
      %2307 = vst [vmem:[%s2306] sm:$0xff] %v2302
      %s2308 = smul.u32 5, 2
      %s2309 = smul.addr %s2308, 8
      %s2310 = scalar_lea.vmem [#allocation2], %s2309
      %2311 = vst [vmem:[%s2310 + $0x8] sm:$0xff] %v2303
      %s2312 = smul.u32 3, 8
      %s2313 = smul.addr %s2312, 8
      %s2314 = scalar_lea.vmem [#allocation11], %s2313
      %v2315 = vld [vmem:[%s2314] sm:$0xff]
      %v2316 = vld [vmem:[%s2314 + $0x8] sm:$0xff]
      %v2317 = vld [vmem:[%s2314 + $0x10] sm:$0xff]
      %v2318 = vld [vmem:[%s2314 + $0x18] sm:$0xff]
      %v2319 = vld [vmem:[%s2314 + $0x20] sm:$0xff]
      %v2320 = vld [vmem:[%s2314 + $0x28] sm:$0xff]
      %v2321 = vld [vmem:[%s2314 + $0x30] sm:$0xff]
      %v2322 = vld [vmem:[%s2314 + $0x38] sm:$0xff]
      %2323 = vmatpush.msra.mxu0 %v757
      %2324 = vmatpush.msra.mxu0 %v749
      %2325 = vmatpush.msra.mxu0 %v741
      %2326 = vmatpush.msra.mxu0 %v733
      %2327 = vmatpush.msra.mxu0 %v725
      %2328 = vmatpush.msra.mxu0 %v717
      %2329 = vmatpush.msra.mxu0 %v709
      %2330 = vmatpush.msra.mxu0 %v701
      %2331 = vmatpush.msra.mxu0 %v693
      %2332 = vmatpush.msra.mxu0 %v685
      %2333 = vmatpush.msra.mxu0 %v677
      %2334 = vmatpush.msra.mxu0 %v669
      %2335 = vmatpush.msra.mxu0 %v661
      %2336 = vmatpush.msra.mxu0 %v653
      %2337 = vmatpush.msra.mxu0 %v645
      %2338 = vmatpush.msra.mxu0 %v637
      %2339 = vmatmul.f32.gmra.mxu0 %v2302
      %v2340 = vpop.f32.mrf.mxu0
      %v2341 = vadd.f32 0.0, %v2340
      %2342 = vdwg.mxu0
      %2343 = vmatpush.msra.mxu0 %v885
      %2344 = vmatpush.msra.mxu0 %v877
      %2345 = vmatpush.msra.mxu0 %v869
      %2346 = vmatpush.msra.mxu0 %v861
      %2347 = vmatpush.msra.mxu0 %v853
      %2348 = vmatpush.msra.mxu0 %v845
      %2349 = vmatpush.msra.mxu0 %v837
      %2350 = vmatpush.msra.mxu0 %v829
      %2351 = vmatpush.msra.mxu0 %v821
      %2352 = vmatpush.msra.mxu0 %v813
      %2353 = vmatpush.msra.mxu0 %v805
      %2354 = vmatpush.msra.mxu0 %v797
      %2355 = vmatpush.msra.mxu0 %v789
      %2356 = vmatpush.msra.mxu0 %v781
      %2357 = vmatpush.msra.mxu0 %v773
      %2358 = vmatpush.msra.mxu0 %v765
      %2359 = vmatmul.f32.gmra.mxu0 %v2303
      %v2360 = vpop.f32.mrf.mxu0
      %v2361 = vadd.f32 %v2341, %v2360
      %2362 = vdwg.mxu0
      %2363 = vmatpush.msra.mxu0 %v758
      %2364 = vmatpush.msra.mxu0 %v750
      %2365 = vmatpush.msra.mxu0 %v742
      %2366 = vmatpush.msra.mxu0 %v734
      %2367 = vmatpush.msra.mxu0 %v726
      %2368 = vmatpush.msra.mxu0 %v718
      %2369 = vmatpush.msra.mxu0 %v710
      %2370 = vmatpush.msra.mxu0 %v702
      %2371 = vmatpush.msra.mxu0 %v694
      %2372 = vmatpush.msra.mxu0 %v686
      %2373 = vmatpush.msra.mxu0 %v678
      %2374 = vmatpush.msra.mxu0 %v670
      %2375 = vmatpush.msra.mxu0 %v662
      %2376 = vmatpush.msra.mxu0 %v654
      %2377 = vmatpush.msra.mxu0 %v646
      %2378 = vmatpush.msra.mxu0 %v638
      %2379 = vmatmul.f32.gmra.mxu0 %v2302
      %v2380 = vpop.f32.mrf.mxu0
      %v2381 = vadd.f32 0.0, %v2380
      %2382 = vdwg.mxu0
      %2383 = vmatpush.msra.mxu0 %v886
      %2384 = vmatpush.msra.mxu0 %v878
      %2385 = vmatpush.msra.mxu0 %v870
      %2386 = vmatpush.msra.mxu0 %v862
      %2387 = vmatpush.msra.mxu0 %v854
      %2388 = vmatpush.msra.mxu0 %v846
      %2389 = vmatpush.msra.mxu0 %v838
      %2390 = vmatpush.msra.mxu0 %v830
      %2391 = vmatpush.msra.mxu0 %v822
      %2392 = vmatpush.msra.mxu0 %v814
      %2393 = vmatpush.msra.mxu0 %v806
      %2394 = vmatpush.msra.mxu0 %v798
      %2395 = vmatpush.msra.mxu0 %v790
      %2396 = vmatpush.msra.mxu0 %v782
      %2397 = vmatpush.msra.mxu0 %v774
      %2398 = vmatpush.msra.mxu0 %v766
      %2399 = vmatmul.f32.gmra.mxu0 %v2303
      %v2400 = vpop.f32.mrf.mxu0
      %v2401 = vadd.f32 %v2381, %v2400
      %2402 = vdwg.mxu0
      %2403 = vmatpush.msra.mxu0 %v759
      %2404 = vmatpush.msra.mxu0 %v751
      %2405 = vmatpush.msra.mxu0 %v743
      %2406 = vmatpush.msra.mxu0 %v735
      %2407 = vmatpush.msra.mxu0 %v727
      %2408 = vmatpush.msra.mxu0 %v719
      %2409 = vmatpush.msra.mxu0 %v711
      %2410 = vmatpush.msra.mxu0 %v703
      %2411 = vmatpush.msra.mxu0 %v695
      %2412 = vmatpush.msra.mxu0 %v687
      %2413 = vmatpush.msra.mxu0 %v679
      %2414 = vmatpush.msra.mxu0 %v671
      %2415 = vmatpush.msra.mxu0 %v663
      %2416 = vmatpush.msra.mxu0 %v655
      %2417 = vmatpush.msra.mxu0 %v647
      %2418 = vmatpush.msra.mxu0 %v639
      %2419 = vmatmul.f32.gmra.mxu0 %v2302
      %v2420 = vpop.f32.mrf.mxu0
      %v2421 = vadd.f32 0.0, %v2420
      %2422 = vdwg.mxu0
      %2423 = vmatpush.msra.mxu0 %v887
      %2424 = vmatpush.msra.mxu0 %v879
      %2425 = vmatpush.msra.mxu0 %v871
      %2426 = vmatpush.msra.mxu0 %v863
      %2427 = vmatpush.msra.mxu0 %v855
      %2428 = vmatpush.msra.mxu0 %v847
      %2429 = vmatpush.msra.mxu0 %v839
      %2430 = vmatpush.msra.mxu0 %v831
      %2431 = vmatpush.msra.mxu0 %v823
      %2432 = vmatpush.msra.mxu0 %v815
      %2433 = vmatpush.msra.mxu0 %v807
      %2434 = vmatpush.msra.mxu0 %v799
      %2435 = vmatpush.msra.mxu0 %v791
      %2436 = vmatpush.msra.mxu0 %v783
      %2437 = vmatpush.msra.mxu0 %v775
      %2438 = vmatpush.msra.mxu0 %v767
      %2439 = vmatmul.f32.gmra.mxu0 %v2303
      %v2440 = vpop.f32.mrf.mxu0
      %v2441 = vadd.f32 %v2421, %v2440
      %2442 = vdwg.mxu0
      %2443 = vmatpush.msra.mxu0 %v760
      %2444 = vmatpush.msra.mxu0 %v752
      %2445 = vmatpush.msra.mxu0 %v744
      %2446 = vmatpush.msra.mxu0 %v736
      %2447 = vmatpush.msra.mxu0 %v728
      %2448 = vmatpush.msra.mxu0 %v720
      %2449 = vmatpush.msra.mxu0 %v712
      %2450 = vmatpush.msra.mxu0 %v704
      %2451 = vmatpush.msra.mxu0 %v696
      %2452 = vmatpush.msra.mxu0 %v688
      %2453 = vmatpush.msra.mxu0 %v680
      %2454 = vmatpush.msra.mxu0 %v672
      %2455 = vmatpush.msra.mxu0 %v664
      %2456 = vmatpush.msra.mxu0 %v656
      %2457 = vmatpush.msra.mxu0 %v648
      %2458 = vmatpush.msra.mxu0 %v640
      %2459 = vmatmul.f32.gmra.mxu0 %v2302
      %v2460 = vpop.f32.mrf.mxu0
      %v2461 = vadd.f32 0.0, %v2460
      %2462 = vdwg.mxu0
      %2463 = vmatpush.msra.mxu0 %v888
      %2464 = vmatpush.msra.mxu0 %v880
      %2465 = vmatpush.msra.mxu0 %v872
      %2466 = vmatpush.msra.mxu0 %v864
      %2467 = vmatpush.msra.mxu0 %v856
      %2468 = vmatpush.msra.mxu0 %v848
      %2469 = vmatpush.msra.mxu0 %v840
      %2470 = vmatpush.msra.mxu0 %v832
      %2471 = vmatpush.msra.mxu0 %v824
      %2472 = vmatpush.msra.mxu0 %v816
      %2473 = vmatpush.msra.mxu0 %v808
      %2474 = vmatpush.msra.mxu0 %v800
      %2475 = vmatpush.msra.mxu0 %v792
      %2476 = vmatpush.msra.mxu0 %v784
      %2477 = vmatpush.msra.mxu0 %v776
      %2478 = vmatpush.msra.mxu0 %v768
      %2479 = vmatmul.f32.gmra.mxu0 %v2303
      %v2480 = vpop.f32.mrf.mxu0
      %v2481 = vadd.f32 %v2461, %v2480
      %2482 = vdwg.mxu0
      %2483 = vmatpush.msra.mxu0 %v761
      %2484 = vmatpush.msra.mxu0 %v753
      %2485 = vmatpush.msra.mxu0 %v745
      %2486 = vmatpush.msra.mxu0 %v737
      %2487 = vmatpush.msra.mxu0 %v729
      %2488 = vmatpush.msra.mxu0 %v721
      %2489 = vmatpush.msra.mxu0 %v713
      %2490 = vmatpush.msra.mxu0 %v705
      %2491 = vmatpush.msra.mxu0 %v697
      %2492 = vmatpush.msra.mxu0 %v689
      %2493 = vmatpush.msra.mxu0 %v681
      %2494 = vmatpush.msra.mxu0 %v673
      %2495 = vmatpush.msra.mxu0 %v665
      %2496 = vmatpush.msra.mxu0 %v657
      %2497 = vmatpush.msra.mxu0 %v649
      %2498 = vmatpush.msra.mxu0 %v641
      %2499 = vmatmul.f32.gmra.mxu0 %v2302
      %v2500 = vpop.f32.mrf.mxu0
      %v2501 = vadd.f32 0.0, %v2500
      %2502 = vdwg.mxu0
      %2503 = vmatpush.msra.mxu0 %v889
      %2504 = vmatpush.msra.mxu0 %v881
      %2505 = vmatpush.msra.mxu0 %v873
      %2506 = vmatpush.msra.mxu0 %v865
      %2507 = vmatpush.msra.mxu0 %v857
      %2508 = vmatpush.msra.mxu0 %v849
      %2509 = vmatpush.msra.mxu0 %v841
      %2510 = vmatpush.msra.mxu0 %v833
      %2511 = vmatpush.msra.mxu0 %v825
      %2512 = vmatpush.msra.mxu0 %v817
      %2513 = vmatpush.msra.mxu0 %v809
      %2514 = vmatpush.msra.mxu0 %v801
      %2515 = vmatpush.msra.mxu0 %v793
      %2516 = vmatpush.msra.mxu0 %v785
      %2517 = vmatpush.msra.mxu0 %v777
      %2518 = vmatpush.msra.mxu0 %v769
      %2519 = vmatmul.f32.gmra.mxu0 %v2303
      %v2520 = vpop.f32.mrf.mxu0
      %v2521 = vadd.f32 %v2501, %v2520
      %2522 = vdwg.mxu0
      %2523 = vmatpush.msra.mxu0 %v762
      %2524 = vmatpush.msra.mxu0 %v754
      %2525 = vmatpush.msra.mxu0 %v746
      %2526 = vmatpush.msra.mxu0 %v738
      %2527 = vmatpush.msra.mxu0 %v730
      %2528 = vmatpush.msra.mxu0 %v722
      %2529 = vmatpush.msra.mxu0 %v714
      %2530 = vmatpush.msra.mxu0 %v706
      %2531 = vmatpush.msra.mxu0 %v698
      %2532 = vmatpush.msra.mxu0 %v690
      %2533 = vmatpush.msra.mxu0 %v682
      %2534 = vmatpush.msra.mxu0 %v674
      %2535 = vmatpush.msra.mxu0 %v666
      %2536 = vmatpush.msra.mxu0 %v658
      %2537 = vmatpush.msra.mxu0 %v650
      %2538 = vmatpush.msra.mxu0 %v642
      %2539 = vmatmul.f32.gmra.mxu0 %v2302
      %v2540 = vpop.f32.mrf.mxu0
      %v2541 = vadd.f32 0.0, %v2540
      %2542 = vdwg.mxu0
      %2543 = vmatpush.msra.mxu0 %v890
      %2544 = vmatpush.msra.mxu0 %v882
      %2545 = vmatpush.msra.mxu0 %v874
      %2546 = vmatpush.msra.mxu0 %v866
      %2547 = vmatpush.msra.mxu0 %v858
      %2548 = vmatpush.msra.mxu0 %v850
      %2549 = vmatpush.msra.mxu0 %v842
      %2550 = vmatpush.msra.mxu0 %v834
      %2551 = vmatpush.msra.mxu0 %v826
      %2552 = vmatpush.msra.mxu0 %v818
      %2553 = vmatpush.msra.mxu0 %v810
      %2554 = vmatpush.msra.mxu0 %v802
      %2555 = vmatpush.msra.mxu0 %v794
      %2556 = vmatpush.msra.mxu0 %v786
      %2557 = vmatpush.msra.mxu0 %v778
      %2558 = vmatpush.msra.mxu0 %v770
      %2559 = vmatmul.f32.gmra.mxu0 %v2303
      %v2560 = vpop.f32.mrf.mxu0
      %v2561 = vadd.f32 %v2541, %v2560
      %2562 = vdwg.mxu0
      %2563 = vmatpush.msra.mxu0 %v763
      %2564 = vmatpush.msra.mxu0 %v755
      %2565 = vmatpush.msra.mxu0 %v747
      %2566 = vmatpush.msra.mxu0 %v739
      %2567 = vmatpush.msra.mxu0 %v731
      %2568 = vmatpush.msra.mxu0 %v723
      %2569 = vmatpush.msra.mxu0 %v715
      %2570 = vmatpush.msra.mxu0 %v707
      %2571 = vmatpush.msra.mxu0 %v699
      %2572 = vmatpush.msra.mxu0 %v691
      %2573 = vmatpush.msra.mxu0 %v683
      %2574 = vmatpush.msra.mxu0 %v675
      %2575 = vmatpush.msra.mxu0 %v667
      %2576 = vmatpush.msra.mxu0 %v659
      %2577 = vmatpush.msra.mxu0 %v651
      %2578 = vmatpush.msra.mxu0 %v643
      %2579 = vmatmul.f32.gmra.mxu0 %v2302
      %v2580 = vpop.f32.mrf.mxu0
      %v2581 = vadd.f32 0.0, %v2580
      %2582 = vdwg.mxu0
      %2583 = vmatpush.msra.mxu0 %v891
      %2584 = vmatpush.msra.mxu0 %v883
      %2585 = vmatpush.msra.mxu0 %v875
      %2586 = vmatpush.msra.mxu0 %v867
      %2587 = vmatpush.msra.mxu0 %v859
      %2588 = vmatpush.msra.mxu0 %v851
      %2589 = vmatpush.msra.mxu0 %v843
      %2590 = vmatpush.msra.mxu0 %v835
      %2591 = vmatpush.msra.mxu0 %v827
      %2592 = vmatpush.msra.mxu0 %v819
      %2593 = vmatpush.msra.mxu0 %v811
      %2594 = vmatpush.msra.mxu0 %v803
      %2595 = vmatpush.msra.mxu0 %v795
      %2596 = vmatpush.msra.mxu0 %v787
      %2597 = vmatpush.msra.mxu0 %v779
      %2598 = vmatpush.msra.mxu0 %v771
      %2599 = vmatmul.f32.gmra.mxu0 %v2303
      %v2600 = vpop.f32.mrf.mxu0
      %v2601 = vadd.f32 %v2581, %v2600
      %2602 = vdwg.mxu0
      %2603 = vmatpush.msra.mxu0 %v764
      %2604 = vmatpush.msra.mxu0 %v756
      %2605 = vmatpush.msra.mxu0 %v748
      %2606 = vmatpush.msra.mxu0 %v740
      %2607 = vmatpush.msra.mxu0 %v732
      %2608 = vmatpush.msra.mxu0 %v724
      %2609 = vmatpush.msra.mxu0 %v716
      %2610 = vmatpush.msra.mxu0 %v708
      %2611 = vmatpush.msra.mxu0 %v700
      %2612 = vmatpush.msra.mxu0 %v692
      %2613 = vmatpush.msra.mxu0 %v684
      %2614 = vmatpush.msra.mxu0 %v676
      %2615 = vmatpush.msra.mxu0 %v668
      %2616 = vmatpush.msra.mxu0 %v660
      %2617 = vmatpush.msra.mxu0 %v652
      %2618 = vmatpush.msra.mxu0 %v644
      %2619 = vmatmul.f32.gmra.mxu0 %v2302
      %v2620 = vpop.f32.mrf.mxu0
      %v2621 = vadd.f32 0.0, %v2620
      %2622 = vdwg.mxu0
      %2623 = vmatpush.msra.mxu0 %v892
      %2624 = vmatpush.msra.mxu0 %v884
      %2625 = vmatpush.msra.mxu0 %v876
      %2626 = vmatpush.msra.mxu0 %v868
      %2627 = vmatpush.msra.mxu0 %v860
      %2628 = vmatpush.msra.mxu0 %v852
      %2629 = vmatpush.msra.mxu0 %v844
      %2630 = vmatpush.msra.mxu0 %v836
      %2631 = vmatpush.msra.mxu0 %v828
      %2632 = vmatpush.msra.mxu0 %v820
      %2633 = vmatpush.msra.mxu0 %v812
      %2634 = vmatpush.msra.mxu0 %v804
      %2635 = vmatpush.msra.mxu0 %v796
      %2636 = vmatpush.msra.mxu0 %v788
      %2637 = vmatpush.msra.mxu0 %v780
      %2638 = vmatpush.msra.mxu0 %v772
      %2639 = vmatmul.f32.gmra.mxu0 %v2303
      %v2640 = vpop.f32.mrf.mxu0
      %v2641 = vadd.f32 %v2621, %v2640
      %2642 = vdwg.mxu0
      %v2643 = vadd.f32 %v2315, %v2361
      %v2644 = vadd.f32 %v2316, %v2401
      %v2645 = vadd.f32 %v2317, %v2441
      %v2646 = vadd.f32 %v2318, %v2481
      %v2647 = vadd.f32 %v2319, %v2521
      %v2648 = vadd.f32 %v2320, %v2561
      %v2649 = vadd.f32 %v2321, %v2601
      %v2650 = vadd.f32 %v2322, %v2641
      %v2651 = vxor.u32 %v2643, 2147483648
      %v2652 = vxor.u32 %v2644, 2147483648
      %v2653 = vmul.f32 %v2651, 1.442695
      %v2654 = vpow.pop %v2653
      %v2655 = vmul.f32 %v2652, 1.442695
      %v2656 = vpow.pop %v2655
      %v2657 = vadd.f32 %v2654, 1.0
      %v2658 = vadd.f32 %v2656, 1.0
      %v2659 = vrcp.pop %v2657
      %v2660 = vmul.f32 %v2657, %v2659
      %v2661 = vsub.f32 1.0, %v2660
      %v2662 = vmul.f32 %v2659, %v2661
      %v2663 = vadd.f32 %v2659, %v2662
      %vm2664 = vweird.f32 %v2657
      %vm2665 = vweird.f32 %v2659
      %vm2666 = vmor %vm2664, %vm2665
      %v2667 = vsel %vm2666, %v2659, %v2663
      %v2668 = vand.u32 2147483647, %v2657
      %vm2669 = vcmp.eq.f32.partialorder %v2668, 8.507059e+37
      %v2670 = vand.u32 %v2657, 2147483648
      %v2671 = vor.u32 1.1754944e-38, %v2670
      %v2672 = vsel %vm2669, %v2671, %v2667
      %v2673 = vmul.f32 1.0, %v2672
      %v2674 = vrcp.pop %v2658
      %v2675 = vmul.f32 %v2658, %v2674
      %v2676 = vsub.f32 1.0, %v2675
      %v2677 = vmul.f32 %v2674, %v2676
      %v2678 = vadd.f32 %v2674, %v2677
      %vm2679 = vweird.f32 %v2658
      %vm2680 = vweird.f32 %v2674
      %vm2681 = vmor %vm2679, %vm2680
      %v2682 = vsel %vm2681, %v2674, %v2678
      %v2683 = vand.u32 2147483647, %v2658
      %vm2684 = vcmp.eq.f32.partialorder %v2683, 8.507059e+37
      %v2685 = vand.u32 %v2658, 2147483648
      %v2686 = vor.u32 1.1754944e-38, %v2685
      %v2687 = vsel %vm2684, %v2686, %v2682
      %v2688 = vmul.f32 1.0, %v2687
      %v2689 = vxor.u32 %v2645, 2147483648
      %v2690 = vxor.u32 %v2646, 2147483648
      %v2691 = vmul.f32 %v2689, 1.442695
      %v2692 = vpow.pop %v2691
      %v2693 = vmul.f32 %v2690, 1.442695
      %v2694 = vpow.pop %v2693
      %v2695 = vadd.f32 %v2692, 1.0
      %v2696 = vadd.f32 %v2694, 1.0
      %v2697 = vrcp.pop %v2695
      %v2698 = vmul.f32 %v2695, %v2697
      %v2699 = vsub.f32 1.0, %v2698
      %v2700 = vmul.f32 %v2697, %v2699
      %v2701 = vadd.f32 %v2697, %v2700
      %vm2702 = vweird.f32 %v2695
      %vm2703 = vweird.f32 %v2697
      %vm2704 = vmor %vm2702, %vm2703
      %v2705 = vsel %vm2704, %v2697, %v2701
      %v2706 = vand.u32 2147483647, %v2695
      %vm2707 = vcmp.eq.f32.partialorder %v2706, 8.507059e+37
      %v2708 = vand.u32 %v2695, 2147483648
      %v2709 = vor.u32 1.1754944e-38, %v2708
      %v2710 = vsel %vm2707, %v2709, %v2705
      %v2711 = vmul.f32 1.0, %v2710
      %v2712 = vrcp.pop %v2696
      %v2713 = vmul.f32 %v2696, %v2712
      %v2714 = vsub.f32 1.0, %v2713
      %v2715 = vmul.f32 %v2712, %v2714
      %v2716 = vadd.f32 %v2712, %v2715
      %vm2717 = vweird.f32 %v2696
      %vm2718 = vweird.f32 %v2712
      %vm2719 = vmor %vm2717, %vm2718
      %v2720 = vsel %vm2719, %v2712, %v2716
      %v2721 = vand.u32 2147483647, %v2696
      %vm2722 = vcmp.eq.f32.partialorder %v2721, 8.507059e+37
      %v2723 = vand.u32 %v2696, 2147483648
      %v2724 = vor.u32 1.1754944e-38, %v2723
      %v2725 = vsel %vm2722, %v2724, %v2720
      %v2726 = vmul.f32 1.0, %v2725
      %v2727 = vtanh.pop %v2647
      %v2728 = vtanh.pop %v2648
      %v2729 = vxor.u32 %v2649, 2147483648
      %v2730 = vxor.u32 %v2650, 2147483648
      %v2731 = vmul.f32 %v2729, 1.442695
      %v2732 = vpow.pop %v2731
      %v2733 = vmul.f32 %v2730, 1.442695
      %v2734 = vpow.pop %v2733
      %v2735 = vadd.f32 %v2732, 1.0
      %v2736 = vadd.f32 %v2734, 1.0
      %v2737 = vrcp.pop %v2735
      %v2738 = vmul.f32 %v2735, %v2737
      %v2739 = vsub.f32 1.0, %v2738
      %v2740 = vmul.f32 %v2737, %v2739
      %v2741 = vadd.f32 %v2737, %v2740
      %vm2742 = vweird.f32 %v2735
      %vm2743 = vweird.f32 %v2737
      %vm2744 = vmor %vm2742, %vm2743
      %v2745 = vsel %vm2744, %v2737, %v2741
      %v2746 = vand.u32 2147483647, %v2735
      %vm2747 = vcmp.eq.f32.partialorder %v2746, 8.507059e+37
      %v2748 = vand.u32 %v2735, 2147483648
      %v2749 = vor.u32 1.1754944e-38, %v2748
      %v2750 = vsel %vm2747, %v2749, %v2745
      %v2751 = vmul.f32 1.0, %v2750
      %v2752 = vrcp.pop %v2736
      %v2753 = vmul.f32 %v2736, %v2752
      %v2754 = vsub.f32 1.0, %v2753
      %v2755 = vmul.f32 %v2752, %v2754
      %v2756 = vadd.f32 %v2752, %v2755
      %vm2757 = vweird.f32 %v2736
      %vm2758 = vweird.f32 %v2752
      %vm2759 = vmor %vm2757, %vm2758
      %v2760 = vsel %vm2759, %v2752, %v2756
      %v2761 = vand.u32 2147483647, %v2736
      %vm2762 = vcmp.eq.f32.partialorder %v2761, 8.507059e+37
      %v2763 = vand.u32 %v2736, 2147483648
      %v2764 = vor.u32 1.1754944e-38, %v2763
      %v2765 = vsel %vm2762, %v2764, %v2760
      %v2766 = vmul.f32 1.0, %v2765
      %v2767 = vmul.f32 %v2711, %v2298
      %v2768 = vmul.f32 %v2726, %v2299
      %v2769 = vmul.f32 %v2673, %v2727
      %v2770 = vmul.f32 %v2688, %v2728
      %v2771 = vadd.f32 %v2767, %v2769
      %v2772 = vadd.f32 %v2768, %v2770
      %v2773 = vtanh.pop %v2771
      %v2774 = vtanh.pop %v2772
      %v2775 = vmul.f32 %v2751, %v2773
      %v2776 = vmul.f32 %v2766, %v2774
      %s2777 = smul.u32 3, 2
      %s2778 = smul.addr %s2777, 8
      %s2779 = scalar_lea.vmem [#allocation2], %s2778
      %2780 = vst [vmem:[%s2779] sm:$0xff] %v2775
      %s2781 = smul.u32 4, 2
      %s2782 = smul.addr %s2781, 8
      %s2783 = scalar_lea.vmem [#allocation2], %s2782
      %2784 = vst [vmem:[%s2783 + $0x8] sm:$0xff] %v2776
      %s2785 = smul.u32 4, 8
      %s2786 = smul.addr %s2785, 8
      %s2787 = scalar_lea.vmem [#allocation11], %s2786
      %v2788 = vld [vmem:[%s2787] sm:$0xff]
      %v2789 = vld [vmem:[%s2787 + $0x8] sm:$0xff]
      %v2790 = vld [vmem:[%s2787 + $0x10] sm:$0xff]
      %v2791 = vld [vmem:[%s2787 + $0x18] sm:$0xff]
      %v2792 = vld [vmem:[%s2787 + $0x20] sm:$0xff]
      %v2793 = vld [vmem:[%s2787 + $0x28] sm:$0xff]
      %v2794 = vld [vmem:[%s2787 + $0x30] sm:$0xff]
      %v2795 = vld [vmem:[%s2787 + $0x38] sm:$0xff]
      %2796 = vmatpush.msra.mxu0 %v757
      %2797 = vmatpush.msra.mxu0 %v749
      %2798 = vmatpush.msra.mxu0 %v741
      %2799 = vmatpush.msra.mxu0 %v733
      %2800 = vmatpush.msra.mxu0 %v725
      %2801 = vmatpush.msra.mxu0 %v717
      %2802 = vmatpush.msra.mxu0 %v709
      %2803 = vmatpush.msra.mxu0 %v701
      %2804 = vmatpush.msra.mxu0 %v693
      %2805 = vmatpush.msra.mxu0 %v685
      %2806 = vmatpush.msra.mxu0 %v677
      %2807 = vmatpush.msra.mxu0 %v669
      %2808 = vmatpush.msra.mxu0 %v661
      %2809 = vmatpush.msra.mxu0 %v653
      %2810 = vmatpush.msra.mxu0 %v645
      %2811 = vmatpush.msra.mxu0 %v637
      %2812 = vmatmul.f32.gmra.mxu0 %v2775
      %v2813 = vpop.f32.mrf.mxu0
      %v2814 = vadd.f32 0.0, %v2813
      %2815 = vdwg.mxu0
      %2816 = vmatpush.msra.mxu0 %v885
      %2817 = vmatpush.msra.mxu0 %v877
      %2818 = vmatpush.msra.mxu0 %v869
      %2819 = vmatpush.msra.mxu0 %v861
      %2820 = vmatpush.msra.mxu0 %v853
      %2821 = vmatpush.msra.mxu0 %v845
      %2822 = vmatpush.msra.mxu0 %v837
      %2823 = vmatpush.msra.mxu0 %v829
      %2824 = vmatpush.msra.mxu0 %v821
      %2825 = vmatpush.msra.mxu0 %v813
      %2826 = vmatpush.msra.mxu0 %v805
      %2827 = vmatpush.msra.mxu0 %v797
      %2828 = vmatpush.msra.mxu0 %v789
      %2829 = vmatpush.msra.mxu0 %v781
      %2830 = vmatpush.msra.mxu0 %v773
      %2831 = vmatpush.msra.mxu0 %v765
      %2832 = vmatmul.f32.gmra.mxu0 %v2776
      %v2833 = vpop.f32.mrf.mxu0
      %v2834 = vadd.f32 %v2814, %v2833
      %2835 = vdwg.mxu0
      %2836 = vmatpush.msra.mxu0 %v758
      %2837 = vmatpush.msra.mxu0 %v750
      %2838 = vmatpush.msra.mxu0 %v742
      %2839 = vmatpush.msra.mxu0 %v734
      %2840 = vmatpush.msra.mxu0 %v726
      %2841 = vmatpush.msra.mxu0 %v718
      %2842 = vmatpush.msra.mxu0 %v710
      %2843 = vmatpush.msra.mxu0 %v702
      %2844 = vmatpush.msra.mxu0 %v694
      %2845 = vmatpush.msra.mxu0 %v686
      %2846 = vmatpush.msra.mxu0 %v678
      %2847 = vmatpush.msra.mxu0 %v670
      %2848 = vmatpush.msra.mxu0 %v662
      %2849 = vmatpush.msra.mxu0 %v654
      %2850 = vmatpush.msra.mxu0 %v646
      %2851 = vmatpush.msra.mxu0 %v638
      %2852 = vmatmul.f32.gmra.mxu0 %v2775
      %v2853 = vpop.f32.mrf.mxu0
      %v2854 = vadd.f32 0.0, %v2853
      %2855 = vdwg.mxu0
      %2856 = vmatpush.msra.mxu0 %v886
      %2857 = vmatpush.msra.mxu0 %v878
      %2858 = vmatpush.msra.mxu0 %v870
      %2859 = vmatpush.msra.mxu0 %v862
      %2860 = vmatpush.msra.mxu0 %v854
      %2861 = vmatpush.msra.mxu0 %v846
      %2862 = vmatpush.msra.mxu0 %v838
      %2863 = vmatpush.msra.mxu0 %v830
      %2864 = vmatpush.msra.mxu0 %v822
      %2865 = vmatpush.msra.mxu0 %v814
      %2866 = vmatpush.msra.mxu0 %v806
      %2867 = vmatpush.msra.mxu0 %v798
      %2868 = vmatpush.msra.mxu0 %v790
      %2869 = vmatpush.msra.mxu0 %v782
      %2870 = vmatpush.msra.mxu0 %v774
      %2871 = vmatpush.msra.mxu0 %v766
      %2872 = vmatmul.f32.gmra.mxu0 %v2776
      %v2873 = vpop.f32.mrf.mxu0
      %v2874 = vadd.f32 %v2854, %v2873
      %2875 = vdwg.mxu0
      %2876 = vmatpush.msra.mxu0 %v759
      %2877 = vmatpush.msra.mxu0 %v751
      %2878 = vmatpush.msra.mxu0 %v743
      %2879 = vmatpush.msra.mxu0 %v735
      %2880 = vmatpush.msra.mxu0 %v727
      %2881 = vmatpush.msra.mxu0 %v719
      %2882 = vmatpush.msra.mxu0 %v711
      %2883 = vmatpush.msra.mxu0 %v703
      %2884 = vmatpush.msra.mxu0 %v695
      %2885 = vmatpush.msra.mxu0 %v687
      %2886 = vmatpush.msra.mxu0 %v679
      %2887 = vmatpush.msra.mxu0 %v671
      %2888 = vmatpush.msra.mxu0 %v663
      %2889 = vmatpush.msra.mxu0 %v655
      %2890 = vmatpush.msra.mxu0 %v647
      %2891 = vmatpush.msra.mxu0 %v639
      %2892 = vmatmul.f32.gmra.mxu0 %v2775
      %v2893 = vpop.f32.mrf.mxu0
      %v2894 = vadd.f32 0.0, %v2893
      %2895 = vdwg.mxu0
      %2896 = vmatpush.msra.mxu0 %v887
      %2897 = vmatpush.msra.mxu0 %v879
      %2898 = vmatpush.msra.mxu0 %v871
      %2899 = vmatpush.msra.mxu0 %v863
      %2900 = vmatpush.msra.mxu0 %v855
      %2901 = vmatpush.msra.mxu0 %v847
      %2902 = vmatpush.msra.mxu0 %v839
      %2903 = vmatpush.msra.mxu0 %v831
      %2904 = vmatpush.msra.mxu0 %v823
      %2905 = vmatpush.msra.mxu0 %v815
      %2906 = vmatpush.msra.mxu0 %v807
      %2907 = vmatpush.msra.mxu0 %v799
      %2908 = vmatpush.msra.mxu0 %v791
      %2909 = vmatpush.msra.mxu0 %v783
      %2910 = vmatpush.msra.mxu0 %v775
      %2911 = vmatpush.msra.mxu0 %v767
      %2912 = vmatmul.f32.gmra.mxu0 %v2776
      %v2913 = vpop.f32.mrf.mxu0
      %v2914 = vadd.f32 %v2894, %v2913
      %2915 = vdwg.mxu0
      %2916 = vmatpush.msra.mxu0 %v760
      %2917 = vmatpush.msra.mxu0 %v752
      %2918 = vmatpush.msra.mxu0 %v744
      %2919 = vmatpush.msra.mxu0 %v736
      %2920 = vmatpush.msra.mxu0 %v728
      %2921 = vmatpush.msra.mxu0 %v720
      %2922 = vmatpush.msra.mxu0 %v712
      %2923 = vmatpush.msra.mxu0 %v704
      %2924 = vmatpush.msra.mxu0 %v696
      %2925 = vmatpush.msra.mxu0 %v688
      %2926 = vmatpush.msra.mxu0 %v680
      %2927 = vmatpush.msra.mxu0 %v672
      %2928 = vmatpush.msra.mxu0 %v664
      %2929 = vmatpush.msra.mxu0 %v656
      %2930 = vmatpush.msra.mxu0 %v648
      %2931 = vmatpush.msra.mxu0 %v640
      %2932 = vmatmul.f32.gmra.mxu0 %v2775
      %v2933 = vpop.f32.mrf.mxu0
      %v2934 = vadd.f32 0.0, %v2933
      %2935 = vdwg.mxu0
      %2936 = vmatpush.msra.mxu0 %v888
      %2937 = vmatpush.msra.mxu0 %v880
      %2938 = vmatpush.msra.mxu0 %v872
      %2939 = vmatpush.msra.mxu0 %v864
      %2940 = vmatpush.msra.mxu0 %v856
      %2941 = vmatpush.msra.mxu0 %v848
      %2942 = vmatpush.msra.mxu0 %v840
      %2943 = vmatpush.msra.mxu0 %v832
      %2944 = vmatpush.msra.mxu0 %v824
      %2945 = vmatpush.msra.mxu0 %v816
      %2946 = vmatpush.msra.mxu0 %v808
      %2947 = vmatpush.msra.mxu0 %v800
      %2948 = vmatpush.msra.mxu0 %v792
      %2949 = vmatpush.msra.mxu0 %v784
      %2950 = vmatpush.msra.mxu0 %v776
      %2951 = vmatpush.msra.mxu0 %v768
      %2952 = vmatmul.f32.gmra.mxu0 %v2776
      %v2953 = vpop.f32.mrf.mxu0
      %v2954 = vadd.f32 %v2934, %v2953
      %2955 = vdwg.mxu0
      %2956 = vmatpush.msra.mxu0 %v761
      %2957 = vmatpush.msra.mxu0 %v753
      %2958 = vmatpush.msra.mxu0 %v745
      %2959 = vmatpush.msra.mxu0 %v737
      %2960 = vmatpush.msra.mxu0 %v729
      %2961 = vmatpush.msra.mxu0 %v721
      %2962 = vmatpush.msra.mxu0 %v713
      %2963 = vmatpush.msra.mxu0 %v705
      %2964 = vmatpush.msra.mxu0 %v697
      %2965 = vmatpush.msra.mxu0 %v689
      %2966 = vmatpush.msra.mxu0 %v681
      %2967 = vmatpush.msra.mxu0 %v673
      %2968 = vmatpush.msra.mxu0 %v665
      %2969 = vmatpush.msra.mxu0 %v657
      %2970 = vmatpush.msra.mxu0 %v649
      %2971 = vmatpush.msra.mxu0 %v641
      %2972 = vmatmul.f32.gmra.mxu0 %v2775
      %v2973 = vpop.f32.mrf.mxu0
      %v2974 = vadd.f32 0.0, %v2973
      %2975 = vdwg.mxu0
      %2976 = vmatpush.msra.mxu0 %v889
      %2977 = vmatpush.msra.mxu0 %v881
      %2978 = vmatpush.msra.mxu0 %v873
      %2979 = vmatpush.msra.mxu0 %v865
      %2980 = vmatpush.msra.mxu0 %v857
      %2981 = vmatpush.msra.mxu0 %v849
      %2982 = vmatpush.msra.mxu0 %v841
      %2983 = vmatpush.msra.mxu0 %v833
      %2984 = vmatpush.msra.mxu0 %v825
      %2985 = vmatpush.msra.mxu0 %v817
      %2986 = vmatpush.msra.mxu0 %v809
      %2987 = vmatpush.msra.mxu0 %v801
      %2988 = vmatpush.msra.mxu0 %v793
      %2989 = vmatpush.msra.mxu0 %v785
      %2990 = vmatpush.msra.mxu0 %v777
      %2991 = vmatpush.msra.mxu0 %v769
      %2992 = vmatmul.f32.gmra.mxu0 %v2776
      %v2993 = vpop.f32.mrf.mxu0
      %v2994 = vadd.f32 %v2974, %v2993
      %2995 = vdwg.mxu0
      %2996 = vmatpush.msra.mxu0 %v762
      %2997 = vmatpush.msra.mxu0 %v754
      %2998 = vmatpush.msra.mxu0 %v746
      %2999 = vmatpush.msra.mxu0 %v738
      %3000 = vmatpush.msra.mxu0 %v730
      %3001 = vmatpush.msra.mxu0 %v722
      %3002 = vmatpush.msra.mxu0 %v714
      %3003 = vmatpush.msra.mxu0 %v706
      %3004 = vmatpush.msra.mxu0 %v698
      %3005 = vmatpush.msra.mxu0 %v690
      %3006 = vmatpush.msra.mxu0 %v682
      %3007 = vmatpush.msra.mxu0 %v674
      %3008 = vmatpush.msra.mxu0 %v666
      %3009 = vmatpush.msra.mxu0 %v658
      %3010 = vmatpush.msra.mxu0 %v650
      %3011 = vmatpush.msra.mxu0 %v642
      %3012 = vmatmul.f32.gmra.mxu0 %v2775
      %v3013 = vpop.f32.mrf.mxu0
      %v3014 = vadd.f32 0.0, %v3013
      %3015 = vdwg.mxu0
      %3016 = vmatpush.msra.mxu0 %v890
      %3017 = vmatpush.msra.mxu0 %v882
      %3018 = vmatpush.msra.mxu0 %v874
      %3019 = vmatpush.msra.mxu0 %v866
      %3020 = vmatpush.msra.mxu0 %v858
      %3021 = vmatpush.msra.mxu0 %v850
      %3022 = vmatpush.msra.mxu0 %v842
      %3023 = vmatpush.msra.mxu0 %v834
      %3024 = vmatpush.msra.mxu0 %v826
      %3025 = vmatpush.msra.mxu0 %v818
      %3026 = vmatpush.msra.mxu0 %v810
      %3027 = vmatpush.msra.mxu0 %v802
      %3028 = vmatpush.msra.mxu0 %v794
      %3029 = vmatpush.msra.mxu0 %v786
      %3030 = vmatpush.msra.mxu0 %v778
      %3031 = vmatpush.msra.mxu0 %v770
      %3032 = vmatmul.f32.gmra.mxu0 %v2776
      %v3033 = vpop.f32.mrf.mxu0
      %v3034 = vadd.f32 %v3014, %v3033
      %3035 = vdwg.mxu0
      %3036 = vmatpush.msra.mxu0 %v763
      %3037 = vmatpush.msra.mxu0 %v755
      %3038 = vmatpush.msra.mxu0 %v747
      %3039 = vmatpush.msra.mxu0 %v739
      %3040 = vmatpush.msra.mxu0 %v731
      %3041 = vmatpush.msra.mxu0 %v723
      %3042 = vmatpush.msra.mxu0 %v715
      %3043 = vmatpush.msra.mxu0 %v707
      %3044 = vmatpush.msra.mxu0 %v699
      %3045 = vmatpush.msra.mxu0 %v691
      %3046 = vmatpush.msra.mxu0 %v683
      %3047 = vmatpush.msra.mxu0 %v675
      %3048 = vmatpush.msra.mxu0 %v667
      %3049 = vmatpush.msra.mxu0 %v659
      %3050 = vmatpush.msra.mxu0 %v651
      %3051 = vmatpush.msra.mxu0 %v643
      %3052 = vmatmul.f32.gmra.mxu0 %v2775
      %v3053 = vpop.f32.mrf.mxu0
      %v3054 = vadd.f32 0.0, %v3053
      %3055 = vdwg.mxu0
      %3056 = vmatpush.msra.mxu0 %v891
      %3057 = vmatpush.msra.mxu0 %v883
      %3058 = vmatpush.msra.mxu0 %v875
      %3059 = vmatpush.msra.mxu0 %v867
      %3060 = vmatpush.msra.mxu0 %v859
      %3061 = vmatpush.msra.mxu0 %v851
      %3062 = vmatpush.msra.mxu0 %v843
      %3063 = vmatpush.msra.mxu0 %v835
      %3064 = vmatpush.msra.mxu0 %v827
      %3065 = vmatpush.msra.mxu0 %v819
      %3066 = vmatpush.msra.mxu0 %v811
      %3067 = vmatpush.msra.mxu0 %v803
      %3068 = vmatpush.msra.mxu0 %v795
      %3069 = vmatpush.msra.mxu0 %v787
      %3070 = vmatpush.msra.mxu0 %v779
      %3071 = vmatpush.msra.mxu0 %v771
      %3072 = vmatmul.f32.gmra.mxu0 %v2776
      %v3073 = vpop.f32.mrf.mxu0
      %v3074 = vadd.f32 %v3054, %v3073
      %3075 = vdwg.mxu0
      %3076 = vmatpush.msra.mxu0 %v764
      %3077 = vmatpush.msra.mxu0 %v756
      %3078 = vmatpush.msra.mxu0 %v748
      %3079 = vmatpush.msra.mxu0 %v740
      %3080 = vmatpush.msra.mxu0 %v732
      %3081 = vmatpush.msra.mxu0 %v724
      %3082 = vmatpush.msra.mxu0 %v716
      %3083 = vmatpush.msra.mxu0 %v708
      %3084 = vmatpush.msra.mxu0 %v700
      %3085 = vmatpush.msra.mxu0 %v692
      %3086 = vmatpush.msra.mxu0 %v684
      %3087 = vmatpush.msra.mxu0 %v676
      %3088 = vmatpush.msra.mxu0 %v668
      %3089 = vmatpush.msra.mxu0 %v660
      %3090 = vmatpush.msra.mxu0 %v652
      %3091 = vmatpush.msra.mxu0 %v644
      %3092 = vmatmul.f32.gmra.mxu0 %v2775
      %v3093 = vpop.f32.mrf.mxu0
      %v3094 = vadd.f32 0.0, %v3093
      %3095 = vdwg.mxu0
      %3096 = vmatpush.msra.mxu0 %v892
      %3097 = vmatpush.msra.mxu0 %v884
      %3098 = vmatpush.msra.mxu0 %v876
      %3099 = vmatpush.msra.mxu0 %v868
      %3100 = vmatpush.msra.mxu0 %v860
      %3101 = vmatpush.msra.mxu0 %v852
      %3102 = vmatpush.msra.mxu0 %v844
      %3103 = vmatpush.msra.mxu0 %v836
      %3104 = vmatpush.msra.mxu0 %v828
      %3105 = vmatpush.msra.mxu0 %v820
      %3106 = vmatpush.msra.mxu0 %v812
      %3107 = vmatpush.msra.mxu0 %v804
      %3108 = vmatpush.msra.mxu0 %v796
      %3109 = vmatpush.msra.mxu0 %v788
      %3110 = vmatpush.msra.mxu0 %v780
      %3111 = vmatpush.msra.mxu0 %v772
      %3112 = vmatmul.f32.gmra.mxu0 %v2776
      %v3113 = vpop.f32.mrf.mxu0
      %v3114 = vadd.f32 %v3094, %v3113
      %3115 = vdwg.mxu0
      %v3116 = vadd.f32 %v2788, %v2834
      %v3117 = vadd.f32 %v2789, %v2874
      %v3118 = vadd.f32 %v2790, %v2914
      %v3119 = vadd.f32 %v2791, %v2954
      %v3120 = vadd.f32 %v2792, %v2994
      %v3121 = vadd.f32 %v2793, %v3034
      %v3122 = vadd.f32 %v2794, %v3074
      %v3123 = vadd.f32 %v2795, %v3114
      %v3124 = vxor.u32 %v3116, 2147483648
      %v3125 = vxor.u32 %v3117, 2147483648
      %v3126 = vmul.f32 %v3124, 1.442695
      %v3127 = vpow.pop %v3126
      %v3128 = vmul.f32 %v3125, 1.442695
      %v3129 = vpow.pop %v3128
      %v3130 = vadd.f32 %v3127, 1.0
      %v3131 = vadd.f32 %v3129, 1.0
      %v3132 = vrcp.pop %v3130
      %v3133 = vmul.f32 %v3130, %v3132
      %v3134 = vsub.f32 1.0, %v3133
      %v3135 = vmul.f32 %v3132, %v3134
      %v3136 = vadd.f32 %v3132, %v3135
      %vm3137 = vweird.f32 %v3130
      %vm3138 = vweird.f32 %v3132
      %vm3139 = vmor %vm3137, %vm3138
      %v3140 = vsel %vm3139, %v3132, %v3136
      %v3141 = vand.u32 2147483647, %v3130
      %vm3142 = vcmp.eq.f32.partialorder %v3141, 8.507059e+37
      %v3143 = vand.u32 %v3130, 2147483648
      %v3144 = vor.u32 1.1754944e-38, %v3143
      %v3145 = vsel %vm3142, %v3144, %v3140
      %v3146 = vmul.f32 1.0, %v3145
      %v3147 = vrcp.pop %v3131
      %v3148 = vmul.f32 %v3131, %v3147
      %v3149 = vsub.f32 1.0, %v3148
      %v3150 = vmul.f32 %v3147, %v3149
      %v3151 = vadd.f32 %v3147, %v3150
      %vm3152 = vweird.f32 %v3131
      %vm3153 = vweird.f32 %v3147
      %vm3154 = vmor %vm3152, %vm3153
      %v3155 = vsel %vm3154, %v3147, %v3151
      %v3156 = vand.u32 2147483647, %v3131
      %vm3157 = vcmp.eq.f32.partialorder %v3156, 8.507059e+37
      %v3158 = vand.u32 %v3131, 2147483648
      %v3159 = vor.u32 1.1754944e-38, %v3158
      %v3160 = vsel %vm3157, %v3159, %v3155
      %v3161 = vmul.f32 1.0, %v3160
      %v3162 = vxor.u32 %v3118, 2147483648
      %v3163 = vxor.u32 %v3119, 2147483648
      %v3164 = vmul.f32 %v3162, 1.442695
      %v3165 = vpow.pop %v3164
      %v3166 = vmul.f32 %v3163, 1.442695
      %v3167 = vpow.pop %v3166
      %v3168 = vadd.f32 %v3165, 1.0
      %v3169 = vadd.f32 %v3167, 1.0
      %v3170 = vrcp.pop %v3168
      %v3171 = vmul.f32 %v3168, %v3170
      %v3172 = vsub.f32 1.0, %v3171
      %v3173 = vmul.f32 %v3170, %v3172
      %v3174 = vadd.f32 %v3170, %v3173
      %vm3175 = vweird.f32 %v3168
      %vm3176 = vweird.f32 %v3170
      %vm3177 = vmor %vm3175, %vm3176
      %v3178 = vsel %vm3177, %v3170, %v3174
      %v3179 = vand.u32 2147483647, %v3168
      %vm3180 = vcmp.eq.f32.partialorder %v3179, 8.507059e+37
      %v3181 = vand.u32 %v3168, 2147483648
      %v3182 = vor.u32 1.1754944e-38, %v3181
      %v3183 = vsel %vm3180, %v3182, %v3178
      %v3184 = vmul.f32 1.0, %v3183
      %v3185 = vrcp.pop %v3169
      %v3186 = vmul.f32 %v3169, %v3185
      %v3187 = vsub.f32 1.0, %v3186
      %v3188 = vmul.f32 %v3185, %v3187
      %v3189 = vadd.f32 %v3185, %v3188
      %vm3190 = vweird.f32 %v3169
      %vm3191 = vweird.f32 %v3185
      %vm3192 = vmor %vm3190, %vm3191
      %v3193 = vsel %vm3192, %v3185, %v3189
      %v3194 = vand.u32 2147483647, %v3169
      %vm3195 = vcmp.eq.f32.partialorder %v3194, 8.507059e+37
      %v3196 = vand.u32 %v3169, 2147483648
      %v3197 = vor.u32 1.1754944e-38, %v3196
      %v3198 = vsel %vm3195, %v3197, %v3193
      %v3199 = vmul.f32 1.0, %v3198
      %v3200 = vtanh.pop %v3120
      %v3201 = vtanh.pop %v3121
      %v3202 = vxor.u32 %v3122, 2147483648
      %v3203 = vxor.u32 %v3123, 2147483648
      %v3204 = vmul.f32 %v3202, 1.442695
      %v3205 = vpow.pop %v3204
      %v3206 = vmul.f32 %v3203, 1.442695
      %v3207 = vpow.pop %v3206
      %v3208 = vadd.f32 %v3205, 1.0
      %v3209 = vadd.f32 %v3207, 1.0
      %v3210 = vrcp.pop %v3208
      %v3211 = vmul.f32 %v3208, %v3210
      %v3212 = vsub.f32 1.0, %v3211
      %v3213 = vmul.f32 %v3210, %v3212
      %v3214 = vadd.f32 %v3210, %v3213
      %vm3215 = vweird.f32 %v3208
      %vm3216 = vweird.f32 %v3210
      %vm3217 = vmor %vm3215, %vm3216
      %v3218 = vsel %vm3217, %v3210, %v3214
      %v3219 = vand.u32 2147483647, %v3208
      %vm3220 = vcmp.eq.f32.partialorder %v3219, 8.507059e+37
      %v3221 = vand.u32 %v3208, 2147483648
      %v3222 = vor.u32 1.1754944e-38, %v3221
      %v3223 = vsel %vm3220, %v3222, %v3218
      %v3224 = vmul.f32 1.0, %v3223
      %v3225 = vrcp.pop %v3209
      %v3226 = vmul.f32 %v3209, %v3225
      %v3227 = vsub.f32 1.0, %v3226
      %v3228 = vmul.f32 %v3225, %v3227
      %v3229 = vadd.f32 %v3225, %v3228
      %vm3230 = vweird.f32 %v3209
      %vm3231 = vweird.f32 %v3225
      %vm3232 = vmor %vm3230, %vm3231
      %v3233 = vsel %vm3232, %v3225, %v3229
      %v3234 = vand.u32 2147483647, %v3209
      %vm3235 = vcmp.eq.f32.partialorder %v3234, 8.507059e+37
      %v3236 = vand.u32 %v3209, 2147483648
      %v3237 = vor.u32 1.1754944e-38, %v3236
      %v3238 = vsel %vm3235, %v3237, %v3233
      %v3239 = vmul.f32 1.0, %v3238
      %v3240 = vmul.f32 %v3184, %v2771
      %v3241 = vmul.f32 %v3199, %v2772
      %v3242 = vmul.f32 %v3146, %v3200
      %v3243 = vmul.f32 %v3161, %v3201
      %v3244 = vadd.f32 %v3240, %v3242
      %v3245 = vadd.f32 %v3241, %v3243
      %v3246 = vtanh.pop %v3244
      %v3247 = vtanh.pop %v3245
      %v3248 = vmul.f32 %v3224, %v3246
      %v3249 = vmul.f32 %v3239, %v3247
      %3250 = vst [vmem:[%s2783] sm:$0xff] %v3248
      %3251 = vst [vmem:[%s2779 + $0x8] sm:$0xff] %v3249
      %s3252 = smul.u32 5, 8
      %s3253 = smul.addr %s3252, 8
      %s3254 = scalar_lea.vmem [#allocation11], %s3253
      %v3255 = vld [vmem:[%s3254] sm:$0xff]
      %v3256 = vld [vmem:[%s3254 + $0x8] sm:$0xff]
      %v3257 = vld [vmem:[%s3254 + $0x10] sm:$0xff]
      %v3258 = vld [vmem:[%s3254 + $0x18] sm:$0xff]
      %v3259 = vld [vmem:[%s3254 + $0x20] sm:$0xff]
      %v3260 = vld [vmem:[%s3254 + $0x28] sm:$0xff]
      %v3261 = vld [vmem:[%s3254 + $0x30] sm:$0xff]
      %v3262 = vld [vmem:[%s3254 + $0x38] sm:$0xff]
      %3263 = vmatpush.msra.mxu0 %v757
      %3264 = vmatpush.msra.mxu0 %v749
      %3265 = vmatpush.msra.mxu0 %v741
      %3266 = vmatpush.msra.mxu0 %v733
      %3267 = vmatpush.msra.mxu0 %v725
      %3268 = vmatpush.msra.mxu0 %v717
      %3269 = vmatpush.msra.mxu0 %v709
      %3270 = vmatpush.msra.mxu0 %v701
      %3271 = vmatpush.msra.mxu0 %v693
      %3272 = vmatpush.msra.mxu0 %v685
      %3273 = vmatpush.msra.mxu0 %v677
      %3274 = vmatpush.msra.mxu0 %v669
      %3275 = vmatpush.msra.mxu0 %v661
      %3276 = vmatpush.msra.mxu0 %v653
      %3277 = vmatpush.msra.mxu0 %v645
      %3278 = vmatpush.msra.mxu0 %v637
      %3279 = vmatmul.f32.gmra.mxu0 %v3248
      %v3280 = vpop.f32.mrf.mxu0
      %v3281 = vadd.f32 0.0, %v3280
      %3282 = vdwg.mxu0
      %3283 = vmatpush.msra.mxu0 %v885
      %3284 = vmatpush.msra.mxu0 %v877
      %3285 = vmatpush.msra.mxu0 %v869
      %3286 = vmatpush.msra.mxu0 %v861
      %3287 = vmatpush.msra.mxu0 %v853
      %3288 = vmatpush.msra.mxu0 %v845
      %3289 = vmatpush.msra.mxu0 %v837
      %3290 = vmatpush.msra.mxu0 %v829
      %3291 = vmatpush.msra.mxu0 %v821
      %3292 = vmatpush.msra.mxu0 %v813
      %3293 = vmatpush.msra.mxu0 %v805
      %3294 = vmatpush.msra.mxu0 %v797
      %3295 = vmatpush.msra.mxu0 %v789
      %3296 = vmatpush.msra.mxu0 %v781
      %3297 = vmatpush.msra.mxu0 %v773
      %3298 = vmatpush.msra.mxu0 %v765
      %3299 = vmatmul.f32.gmra.mxu0 %v3249
      %v3300 = vpop.f32.mrf.mxu0
      %v3301 = vadd.f32 %v3281, %v3300
      %3302 = vdwg.mxu0
      %3303 = vmatpush.msra.mxu0 %v758
      %3304 = vmatpush.msra.mxu0 %v750
      %3305 = vmatpush.msra.mxu0 %v742
      %3306 = vmatpush.msra.mxu0 %v734
      %3307 = vmatpush.msra.mxu0 %v726
      %3308 = vmatpush.msra.mxu0 %v718
      %3309 = vmatpush.msra.mxu0 %v710
      %3310 = vmatpush.msra.mxu0 %v702
      %3311 = vmatpush.msra.mxu0 %v694
      %3312 = vmatpush.msra.mxu0 %v686
      %3313 = vmatpush.msra.mxu0 %v678
      %3314 = vmatpush.msra.mxu0 %v670
      %3315 = vmatpush.msra.mxu0 %v662
      %3316 = vmatpush.msra.mxu0 %v654
      %3317 = vmatpush.msra.mxu0 %v646
      %3318 = vmatpush.msra.mxu0 %v638
      %3319 = vmatmul.f32.gmra.mxu0 %v3248
      %v3320 = vpop.f32.mrf.mxu0
      %v3321 = vadd.f32 0.0, %v3320
      %3322 = vdwg.mxu0
      %3323 = vmatpush.msra.mxu0 %v886
      %3324 = vmatpush.msra.mxu0 %v878
      %3325 = vmatpush.msra.mxu0 %v870
      %3326 = vmatpush.msra.mxu0 %v862
      %3327 = vmatpush.msra.mxu0 %v854
      %3328 = vmatpush.msra.mxu0 %v846
      %3329 = vmatpush.msra.mxu0 %v838
      %3330 = vmatpush.msra.mxu0 %v830
      %3331 = vmatpush.msra.mxu0 %v822
      %3332 = vmatpush.msra.mxu0 %v814
      %3333 = vmatpush.msra.mxu0 %v806
      %3334 = vmatpush.msra.mxu0 %v798
      %3335 = vmatpush.msra.mxu0 %v790
      %3336 = vmatpush.msra.mxu0 %v782
      %3337 = vmatpush.msra.mxu0 %v774
      %3338 = vmatpush.msra.mxu0 %v766
      %3339 = vmatmul.f32.gmra.mxu0 %v3249
      %v3340 = vpop.f32.mrf.mxu0
      %v3341 = vadd.f32 %v3321, %v3340
      %3342 = vdwg.mxu0
      %3343 = vmatpush.msra.mxu0 %v759
      %3344 = vmatpush.msra.mxu0 %v751
      %3345 = vmatpush.msra.mxu0 %v743
      %3346 = vmatpush.msra.mxu0 %v735
      %3347 = vmatpush.msra.mxu0 %v727
      %3348 = vmatpush.msra.mxu0 %v719
      %3349 = vmatpush.msra.mxu0 %v711
      %3350 = vmatpush.msra.mxu0 %v703
      %3351 = vmatpush.msra.mxu0 %v695
      %3352 = vmatpush.msra.mxu0 %v687
      %3353 = vmatpush.msra.mxu0 %v679
      %3354 = vmatpush.msra.mxu0 %v671
      %3355 = vmatpush.msra.mxu0 %v663
      %3356 = vmatpush.msra.mxu0 %v655
      %3357 = vmatpush.msra.mxu0 %v647
      %3358 = vmatpush.msra.mxu0 %v639
      %3359 = vmatmul.f32.gmra.mxu0 %v3248
      %v3360 = vpop.f32.mrf.mxu0
      %v3361 = vadd.f32 0.0, %v3360
      %3362 = vdwg.mxu0
      %3363 = vmatpush.msra.mxu0 %v887
      %3364 = vmatpush.msra.mxu0 %v879
      %3365 = vmatpush.msra.mxu0 %v871
      %3366 = vmatpush.msra.mxu0 %v863
      %3367 = vmatpush.msra.mxu0 %v855
      %3368 = vmatpush.msra.mxu0 %v847
      %3369 = vmatpush.msra.mxu0 %v839
      %3370 = vmatpush.msra.mxu0 %v831
      %3371 = vmatpush.msra.mxu0 %v823
      %3372 = vmatpush.msra.mxu0 %v815
      %3373 = vmatpush.msra.mxu0 %v807
      %3374 = vmatpush.msra.mxu0 %v799
      %3375 = vmatpush.msra.mxu0 %v791
      %3376 = vmatpush.msra.mxu0 %v783
      %3377 = vmatpush.msra.mxu0 %v775
      %3378 = vmatpush.msra.mxu0 %v767
      %3379 = vmatmul.f32.gmra.mxu0 %v3249
      %v3380 = vpop.f32.mrf.mxu0
      %v3381 = vadd.f32 %v3361, %v3380
      %3382 = vdwg.mxu0
      %3383 = vmatpush.msra.mxu0 %v760
      %3384 = vmatpush.msra.mxu0 %v752
      %3385 = vmatpush.msra.mxu0 %v744
      %3386 = vmatpush.msra.mxu0 %v736
      %3387 = vmatpush.msra.mxu0 %v728
      %3388 = vmatpush.msra.mxu0 %v720
      %3389 = vmatpush.msra.mxu0 %v712
      %3390 = vmatpush.msra.mxu0 %v704
      %3391 = vmatpush.msra.mxu0 %v696
      %3392 = vmatpush.msra.mxu0 %v688
      %3393 = vmatpush.msra.mxu0 %v680
      %3394 = vmatpush.msra.mxu0 %v672
      %3395 = vmatpush.msra.mxu0 %v664
      %3396 = vmatpush.msra.mxu0 %v656
      %3397 = vmatpush.msra.mxu0 %v648
      %3398 = vmatpush.msra.mxu0 %v640
      %3399 = vmatmul.f32.gmra.mxu0 %v3248
      %v3400 = vpop.f32.mrf.mxu0
      %v3401 = vadd.f32 0.0, %v3400
      %3402 = vdwg.mxu0
      %3403 = vmatpush.msra.mxu0 %v888
      %3404 = vmatpush.msra.mxu0 %v880
      %3405 = vmatpush.msra.mxu0 %v872
      %3406 = vmatpush.msra.mxu0 %v864
      %3407 = vmatpush.msra.mxu0 %v856
      %3408 = vmatpush.msra.mxu0 %v848
      %3409 = vmatpush.msra.mxu0 %v840
      %3410 = vmatpush.msra.mxu0 %v832
      %3411 = vmatpush.msra.mxu0 %v824
      %3412 = vmatpush.msra.mxu0 %v816
      %3413 = vmatpush.msra.mxu0 %v808
      %3414 = vmatpush.msra.mxu0 %v800
      %3415 = vmatpush.msra.mxu0 %v792
      %3416 = vmatpush.msra.mxu0 %v784
      %3417 = vmatpush.msra.mxu0 %v776
      %3418 = vmatpush.msra.mxu0 %v768
      %3419 = vmatmul.f32.gmra.mxu0 %v3249
      %v3420 = vpop.f32.mrf.mxu0
      %v3421 = vadd.f32 %v3401, %v3420
      %3422 = vdwg.mxu0
      %3423 = vmatpush.msra.mxu0 %v761
      %3424 = vmatpush.msra.mxu0 %v753
      %3425 = vmatpush.msra.mxu0 %v745
      %3426 = vmatpush.msra.mxu0 %v737
      %3427 = vmatpush.msra.mxu0 %v729
      %3428 = vmatpush.msra.mxu0 %v721
      %3429 = vmatpush.msra.mxu0 %v713
      %3430 = vmatpush.msra.mxu0 %v705
      %3431 = vmatpush.msra.mxu0 %v697
      %3432 = vmatpush.msra.mxu0 %v689
      %3433 = vmatpush.msra.mxu0 %v681
      %3434 = vmatpush.msra.mxu0 %v673
      %3435 = vmatpush.msra.mxu0 %v665
      %3436 = vmatpush.msra.mxu0 %v657
      %3437 = vmatpush.msra.mxu0 %v649
      %3438 = vmatpush.msra.mxu0 %v641
      %3439 = vmatmul.f32.gmra.mxu0 %v3248
      %v3440 = vpop.f32.mrf.mxu0
      %v3441 = vadd.f32 0.0, %v3440
      %3442 = vdwg.mxu0
      %3443 = vmatpush.msra.mxu0 %v889
      %3444 = vmatpush.msra.mxu0 %v881
      %3445 = vmatpush.msra.mxu0 %v873
      %3446 = vmatpush.msra.mxu0 %v865
      %3447 = vmatpush.msra.mxu0 %v857
      %3448 = vmatpush.msra.mxu0 %v849
      %3449 = vmatpush.msra.mxu0 %v841
      %3450 = vmatpush.msra.mxu0 %v833
      %3451 = vmatpush.msra.mxu0 %v825
      %3452 = vmatpush.msra.mxu0 %v817
      %3453 = vmatpush.msra.mxu0 %v809
      %3454 = vmatpush.msra.mxu0 %v801
      %3455 = vmatpush.msra.mxu0 %v793
      %3456 = vmatpush.msra.mxu0 %v785
      %3457 = vmatpush.msra.mxu0 %v777
      %3458 = vmatpush.msra.mxu0 %v769
      %3459 = vmatmul.f32.gmra.mxu0 %v3249
      %v3460 = vpop.f32.mrf.mxu0
      %v3461 = vadd.f32 %v3441, %v3460
      %3462 = vdwg.mxu0
      %3463 = vmatpush.msra.mxu0 %v762
      %3464 = vmatpush.msra.mxu0 %v754
      %3465 = vmatpush.msra.mxu0 %v746
      %3466 = vmatpush.msra.mxu0 %v738
      %3467 = vmatpush.msra.mxu0 %v730
      %3468 = vmatpush.msra.mxu0 %v722
      %3469 = vmatpush.msra.mxu0 %v714
      %3470 = vmatpush.msra.mxu0 %v706
      %3471 = vmatpush.msra.mxu0 %v698
      %3472 = vmatpush.msra.mxu0 %v690
      %3473 = vmatpush.msra.mxu0 %v682
      %3474 = vmatpush.msra.mxu0 %v674
      %3475 = vmatpush.msra.mxu0 %v666
      %3476 = vmatpush.msra.mxu0 %v658
      %3477 = vmatpush.msra.mxu0 %v650
      %3478 = vmatpush.msra.mxu0 %v642
      %3479 = vmatmul.f32.gmra.mxu0 %v3248
      %v3480 = vpop.f32.mrf.mxu0
      %v3481 = vadd.f32 0.0, %v3480
      %3482 = vdwg.mxu0
      %3483 = vmatpush.msra.mxu0 %v890
      %3484 = vmatpush.msra.mxu0 %v882
      %3485 = vmatpush.msra.mxu0 %v874
      %3486 = vmatpush.msra.mxu0 %v866
      %3487 = vmatpush.msra.mxu0 %v858
      %3488 = vmatpush.msra.mxu0 %v850
      %3489 = vmatpush.msra.mxu0 %v842
      %3490 = vmatpush.msra.mxu0 %v834
      %3491 = vmatpush.msra.mxu0 %v826
      %3492 = vmatpush.msra.mxu0 %v818
      %3493 = vmatpush.msra.mxu0 %v810
      %3494 = vmatpush.msra.mxu0 %v802
      %3495 = vmatpush.msra.mxu0 %v794
      %3496 = vmatpush.msra.mxu0 %v786
      %3497 = vmatpush.msra.mxu0 %v778
      %3498 = vmatpush.msra.mxu0 %v770
      %3499 = vmatmul.f32.gmra.mxu0 %v3249
      %v3500 = vpop.f32.mrf.mxu0
      %v3501 = vadd.f32 %v3481, %v3500
      %3502 = vdwg.mxu0
      %3503 = vmatpush.msra.mxu0 %v763
      %3504 = vmatpush.msra.mxu0 %v755
      %3505 = vmatpush.msra.mxu0 %v747
      %3506 = vmatpush.msra.mxu0 %v739
      %3507 = vmatpush.msra.mxu0 %v731
      %3508 = vmatpush.msra.mxu0 %v723
      %3509 = vmatpush.msra.mxu0 %v715
      %3510 = vmatpush.msra.mxu0 %v707
      %3511 = vmatpush.msra.mxu0 %v699
      %3512 = vmatpush.msra.mxu0 %v691
      %3513 = vmatpush.msra.mxu0 %v683
      %3514 = vmatpush.msra.mxu0 %v675
      %3515 = vmatpush.msra.mxu0 %v667
      %3516 = vmatpush.msra.mxu0 %v659
      %3517 = vmatpush.msra.mxu0 %v651
      %3518 = vmatpush.msra.mxu0 %v643
      %3519 = vmatmul.f32.gmra.mxu0 %v3248
      %v3520 = vpop.f32.mrf.mxu0
      %v3521 = vadd.f32 0.0, %v3520
      %3522 = vdwg.mxu0
      %3523 = vmatpush.msra.mxu0 %v891
      %3524 = vmatpush.msra.mxu0 %v883
      %3525 = vmatpush.msra.mxu0 %v875
      %3526 = vmatpush.msra.mxu0 %v867
      %3527 = vmatpush.msra.mxu0 %v859
      %3528 = vmatpush.msra.mxu0 %v851
      %3529 = vmatpush.msra.mxu0 %v843
      %3530 = vmatpush.msra.mxu0 %v835
      %3531 = vmatpush.msra.mxu0 %v827
      %3532 = vmatpush.msra.mxu0 %v819
      %3533 = vmatpush.msra.mxu0 %v811
      %3534 = vmatpush.msra.mxu0 %v803
      %3535 = vmatpush.msra.mxu0 %v795
      %3536 = vmatpush.msra.mxu0 %v787
      %3537 = vmatpush.msra.mxu0 %v779
      %3538 = vmatpush.msra.mxu0 %v771
      %3539 = vmatmul.f32.gmra.mxu0 %v3249
      %v3540 = vpop.f32.mrf.mxu0
      %v3541 = vadd.f32 %v3521, %v3540
      %3542 = vdwg.mxu0
      %3543 = vmatpush.msra.mxu0 %v764
      %3544 = vmatpush.msra.mxu0 %v756
      %3545 = vmatpush.msra.mxu0 %v748
      %3546 = vmatpush.msra.mxu0 %v740
      %3547 = vmatpush.msra.mxu0 %v732
      %3548 = vmatpush.msra.mxu0 %v724
      %3549 = vmatpush.msra.mxu0 %v716
      %3550 = vmatpush.msra.mxu0 %v708
      %3551 = vmatpush.msra.mxu0 %v700
      %3552 = vmatpush.msra.mxu0 %v692
      %3553 = vmatpush.msra.mxu0 %v684
      %3554 = vmatpush.msra.mxu0 %v676
      %3555 = vmatpush.msra.mxu0 %v668
      %3556 = vmatpush.msra.mxu0 %v660
      %3557 = vmatpush.msra.mxu0 %v652
      %3558 = vmatpush.msra.mxu0 %v644
      %3559 = vmatmul.f32.gmra.mxu0 %v3248
      %v3560 = vpop.f32.mrf.mxu0
      %v3561 = vadd.f32 0.0, %v3560
      %3562 = vdwg.mxu0
      %3563 = vmatpush.msra.mxu0 %v892
      %3564 = vmatpush.msra.mxu0 %v884
      %3565 = vmatpush.msra.mxu0 %v876
      %3566 = vmatpush.msra.mxu0 %v868
      %3567 = vmatpush.msra.mxu0 %v860
      %3568 = vmatpush.msra.mxu0 %v852
      %3569 = vmatpush.msra.mxu0 %v844
      %3570 = vmatpush.msra.mxu0 %v836
      %3571 = vmatpush.msra.mxu0 %v828
      %3572 = vmatpush.msra.mxu0 %v820
      %3573 = vmatpush.msra.mxu0 %v812
      %3574 = vmatpush.msra.mxu0 %v804
      %3575 = vmatpush.msra.mxu0 %v796
      %3576 = vmatpush.msra.mxu0 %v788
      %3577 = vmatpush.msra.mxu0 %v780
      %3578 = vmatpush.msra.mxu0 %v772
      %3579 = vmatmul.f32.gmra.mxu0 %v3249
      %v3580 = vpop.f32.mrf.mxu0
      %v3581 = vadd.f32 %v3561, %v3580
      %3582 = vdwg.mxu0
      %v3583 = vadd.f32 %v3255, %v3301
      %v3584 = vadd.f32 %v3256, %v3341
      %v3585 = vadd.f32 %v3257, %v3381
      %v3586 = vadd.f32 %v3258, %v3421
      %v3587 = vadd.f32 %v3259, %v3461
      %v3588 = vadd.f32 %v3260, %v3501
      %v3589 = vadd.f32 %v3261, %v3541
      %v3590 = vadd.f32 %v3262, %v3581
      %v3591 = vxor.u32 %v3583, 2147483648
      %v3592 = vxor.u32 %v3584, 2147483648
      %v3593 = vmul.f32 %v3591, 1.442695
      %v3594 = vpow.pop %v3593
      %v3595 = vmul.f32 %v3592, 1.442695
      %v3596 = vpow.pop %v3595
      %v3597 = vadd.f32 %v3594, 1.0
      %v3598 = vadd.f32 %v3596, 1.0
      %v3599 = vrcp.pop %v3597
      %v3600 = vmul.f32 %v3597, %v3599
      %v3601 = vsub.f32 1.0, %v3600
      %v3602 = vmul.f32 %v3599, %v3601
      %v3603 = vadd.f32 %v3599, %v3602
      %vm3604 = vweird.f32 %v3597
      %vm3605 = vweird.f32 %v3599
      %vm3606 = vmor %vm3604, %vm3605
      %v3607 = vsel %vm3606, %v3599, %v3603
      %v3608 = vand.u32 2147483647, %v3597
      %vm3609 = vcmp.eq.f32.partialorder %v3608, 8.507059e+37
      %v3610 = vand.u32 %v3597, 2147483648
      %v3611 = vor.u32 1.1754944e-38, %v3610
      %v3612 = vsel %vm3609, %v3611, %v3607
      %v3613 = vmul.f32 1.0, %v3612
      %v3614 = vrcp.pop %v3598
      %v3615 = vmul.f32 %v3598, %v3614
      %v3616 = vsub.f32 1.0, %v3615
      %v3617 = vmul.f32 %v3614, %v3616
      %v3618 = vadd.f32 %v3614, %v3617
      %vm3619 = vweird.f32 %v3598
      %vm3620 = vweird.f32 %v3614
      %vm3621 = vmor %vm3619, %vm3620
      %v3622 = vsel %vm3621, %v3614, %v3618
      %v3623 = vand.u32 2147483647, %v3598
      %vm3624 = vcmp.eq.f32.partialorder %v3623, 8.507059e+37
      %v3625 = vand.u32 %v3598, 2147483648
      %v3626 = vor.u32 1.1754944e-38, %v3625
      %v3627 = vsel %vm3624, %v3626, %v3622
      %v3628 = vmul.f32 1.0, %v3627
      %v3629 = vxor.u32 %v3585, 2147483648
      %v3630 = vxor.u32 %v3586, 2147483648
      %v3631 = vmul.f32 %v3629, 1.442695
      %v3632 = vpow.pop %v3631
      %v3633 = vmul.f32 %v3630, 1.442695
      %v3634 = vpow.pop %v3633
      %v3635 = vadd.f32 %v3632, 1.0
      %v3636 = vadd.f32 %v3634, 1.0
      %v3637 = vrcp.pop %v3635
      %v3638 = vmul.f32 %v3635, %v3637
      %v3639 = vsub.f32 1.0, %v3638
      %v3640 = vmul.f32 %v3637, %v3639
      %v3641 = vadd.f32 %v3637, %v3640
      %vm3642 = vweird.f32 %v3635
      %vm3643 = vweird.f32 %v3637
      %vm3644 = vmor %vm3642, %vm3643
      %v3645 = vsel %vm3644, %v3637, %v3641
      %v3646 = vand.u32 2147483647, %v3635
      %vm3647 = vcmp.eq.f32.partialorder %v3646, 8.507059e+37
      %v3648 = vand.u32 %v3635, 2147483648
      %v3649 = vor.u32 1.1754944e-38, %v3648
      %v3650 = vsel %vm3647, %v3649, %v3645
      %v3651 = vmul.f32 1.0, %v3650
      %v3652 = vrcp.pop %v3636
      %v3653 = vmul.f32 %v3636, %v3652
      %v3654 = vsub.f32 1.0, %v3653
      %v3655 = vmul.f32 %v3652, %v3654
      %v3656 = vadd.f32 %v3652, %v3655
      %vm3657 = vweird.f32 %v3636
      %vm3658 = vweird.f32 %v3652
      %vm3659 = vmor %vm3657, %vm3658
      %v3660 = vsel %vm3659, %v3652, %v3656
      %v3661 = vand.u32 2147483647, %v3636
      %vm3662 = vcmp.eq.f32.partialorder %v3661, 8.507059e+37
      %v3663 = vand.u32 %v3636, 2147483648
      %v3664 = vor.u32 1.1754944e-38, %v3663
      %v3665 = vsel %vm3662, %v3664, %v3660
      %v3666 = vmul.f32 1.0, %v3665
      %v3667 = vtanh.pop %v3587
      %v3668 = vtanh.pop %v3588
      %v3669 = vxor.u32 %v3589, 2147483648
      %v3670 = vxor.u32 %v3590, 2147483648
      %v3671 = vmul.f32 %v3669, 1.442695
      %v3672 = vpow.pop %v3671
      %v3673 = vmul.f32 %v3670, 1.442695
      %v3674 = vpow.pop %v3673
      %v3675 = vadd.f32 %v3672, 1.0
      %v3676 = vadd.f32 %v3674, 1.0
      %v3677 = vrcp.pop %v3675
      %v3678 = vmul.f32 %v3675, %v3677
      %v3679 = vsub.f32 1.0, %v3678
      %v3680 = vmul.f32 %v3677, %v3679
      %v3681 = vadd.f32 %v3677, %v3680
      %vm3682 = vweird.f32 %v3675
      %vm3683 = vweird.f32 %v3677
      %vm3684 = vmor %vm3682, %vm3683
      %v3685 = vsel %vm3684, %v3677, %v3681
      %v3686 = vand.u32 2147483647, %v3675
      %vm3687 = vcmp.eq.f32.partialorder %v3686, 8.507059e+37
      %v3688 = vand.u32 %v3675, 2147483648
      %v3689 = vor.u32 1.1754944e-38, %v3688
      %v3690 = vsel %vm3687, %v3689, %v3685
      %v3691 = vmul.f32 1.0, %v3690
      %v3692 = vrcp.pop %v3676
      %v3693 = vmul.f32 %v3676, %v3692
      %v3694 = vsub.f32 1.0, %v3693
      %v3695 = vmul.f32 %v3692, %v3694
      %v3696 = vadd.f32 %v3692, %v3695
      %vm3697 = vweird.f32 %v3676
      %vm3698 = vweird.f32 %v3692
      %vm3699 = vmor %vm3697, %vm3698
      %v3700 = vsel %vm3699, %v3692, %v3696
      %v3701 = vand.u32 2147483647, %v3676
      %vm3702 = vcmp.eq.f32.partialorder %v3701, 8.507059e+37
      %v3703 = vand.u32 %v3676, 2147483648
      %v3704 = vor.u32 1.1754944e-38, %v3703
      %v3705 = vsel %vm3702, %v3704, %v3700
      %v3706 = vmul.f32 1.0, %v3705
      %v3707 = vmul.f32 %v3651, %v3244
      %v3708 = vmul.f32 %v3666, %v3245
      %v3709 = vmul.f32 %v3613, %v3667
      %v3710 = vmul.f32 %v3628, %v3668
      %v3711 = vadd.f32 %v3707, %v3709
      %v3712 = vadd.f32 %v3708, %v3710
      %v3713 = vtanh.pop %v3711
      %v3714 = vtanh.pop %v3712
      %v3715 = vmul.f32 %v3691, %v3713
      %v3716 = vmul.f32 %v3706, %v3714
      %3717 = vst [vmem:[%s2310] sm:$0xff] %v3715
      %3718 = vst [vmem:[%s2306 + $0x8] sm:$0xff] %v3716
      %s3719 = smul.u32 6, 8
      %s3720 = smul.addr %s3719, 8
      %s3721 = scalar_lea.vmem [#allocation11], %s3720
      %v3722 = vld [vmem:[%s3721] sm:$0xff]
      %v3723 = vld [vmem:[%s3721 + $0x8] sm:$0xff]
      %v3724 = vld [vmem:[%s3721 + $0x10] sm:$0xff]
      %v3725 = vld [vmem:[%s3721 + $0x18] sm:$0xff]
      %v3726 = vld [vmem:[%s3721 + $0x20] sm:$0xff]
      %v3727 = vld [vmem:[%s3721 + $0x28] sm:$0xff]
      %v3728 = vld [vmem:[%s3721 + $0x30] sm:$0xff]
      %v3729 = vld [vmem:[%s3721 + $0x38] sm:$0xff]
      %3730 = vmatpush.msra.mxu0 %v757
      %3731 = vmatpush.msra.mxu0 %v749
      %3732 = vmatpush.msra.mxu0 %v741
      %3733 = vmatpush.msra.mxu0 %v733
      %3734 = vmatpush.msra.mxu0 %v725
      %3735 = vmatpush.msra.mxu0 %v717
      %3736 = vmatpush.msra.mxu0 %v709
      %3737 = vmatpush.msra.mxu0 %v701
      %3738 = vmatpush.msra.mxu0 %v693
      %3739 = vmatpush.msra.mxu0 %v685
      %3740 = vmatpush.msra.mxu0 %v677
      %3741 = vmatpush.msra.mxu0 %v669
      %3742 = vmatpush.msra.mxu0 %v661
      %3743 = vmatpush.msra.mxu0 %v653
      %3744 = vmatpush.msra.mxu0 %v645
      %3745 = vmatpush.msra.mxu0 %v637
      %3746 = vmatmul.f32.gmra.mxu0 %v3715
      %v3747 = vpop.f32.mrf.mxu0
      %v3748 = vadd.f32 0.0, %v3747
      %3749 = vdwg.mxu0
      %3750 = vmatpush.msra.mxu0 %v885
      %3751 = vmatpush.msra.mxu0 %v877
      %3752 = vmatpush.msra.mxu0 %v869
      %3753 = vmatpush.msra.mxu0 %v861
      %3754 = vmatpush.msra.mxu0 %v853
      %3755 = vmatpush.msra.mxu0 %v845
      %3756 = vmatpush.msra.mxu0 %v837
      %3757 = vmatpush.msra.mxu0 %v829
      %3758 = vmatpush.msra.mxu0 %v821
      %3759 = vmatpush.msra.mxu0 %v813
      %3760 = vmatpush.msra.mxu0 %v805
      %3761 = vmatpush.msra.mxu0 %v797
      %3762 = vmatpush.msra.mxu0 %v789
      %3763 = vmatpush.msra.mxu0 %v781
      %3764 = vmatpush.msra.mxu0 %v773
      %3765 = vmatpush.msra.mxu0 %v765
      %3766 = vmatmul.f32.gmra.mxu0 %v3716
      %v3767 = vpop.f32.mrf.mxu0
      %v3768 = vadd.f32 %v3748, %v3767
      %3769 = vdwg.mxu0
      %3770 = vmatpush.msra.mxu0 %v758
      %3771 = vmatpush.msra.mxu0 %v750
      %3772 = vmatpush.msra.mxu0 %v742
      %3773 = vmatpush.msra.mxu0 %v734
      %3774 = vmatpush.msra.mxu0 %v726
      %3775 = vmatpush.msra.mxu0 %v718
      %3776 = vmatpush.msra.mxu0 %v710
      %3777 = vmatpush.msra.mxu0 %v702
      %3778 = vmatpush.msra.mxu0 %v694
      %3779 = vmatpush.msra.mxu0 %v686
      %3780 = vmatpush.msra.mxu0 %v678
      %3781 = vmatpush.msra.mxu0 %v670
      %3782 = vmatpush.msra.mxu0 %v662
      %3783 = vmatpush.msra.mxu0 %v654
      %3784 = vmatpush.msra.mxu0 %v646
      %3785 = vmatpush.msra.mxu0 %v638
      %3786 = vmatmul.f32.gmra.mxu0 %v3715
      %v3787 = vpop.f32.mrf.mxu0
      %v3788 = vadd.f32 0.0, %v3787
      %3789 = vdwg.mxu0
      %3790 = vmatpush.msra.mxu0 %v886
      %3791 = vmatpush.msra.mxu0 %v878
      %3792 = vmatpush.msra.mxu0 %v870
      %3793 = vmatpush.msra.mxu0 %v862
      %3794 = vmatpush.msra.mxu0 %v854
      %3795 = vmatpush.msra.mxu0 %v846
      %3796 = vmatpush.msra.mxu0 %v838
      %3797 = vmatpush.msra.mxu0 %v830
      %3798 = vmatpush.msra.mxu0 %v822
      %3799 = vmatpush.msra.mxu0 %v814
      %3800 = vmatpush.msra.mxu0 %v806
      %3801 = vmatpush.msra.mxu0 %v798
      %3802 = vmatpush.msra.mxu0 %v790
      %3803 = vmatpush.msra.mxu0 %v782
      %3804 = vmatpush.msra.mxu0 %v774
      %3805 = vmatpush.msra.mxu0 %v766
      %3806 = vmatmul.f32.gmra.mxu0 %v3716
      %v3807 = vpop.f32.mrf.mxu0
      %v3808 = vadd.f32 %v3788, %v3807
      %3809 = vdwg.mxu0
      %3810 = vmatpush.msra.mxu0 %v759
      %3811 = vmatpush.msra.mxu0 %v751
      %3812 = vmatpush.msra.mxu0 %v743
      %3813 = vmatpush.msra.mxu0 %v735
      %3814 = vmatpush.msra.mxu0 %v727
      %3815 = vmatpush.msra.mxu0 %v719
      %3816 = vmatpush.msra.mxu0 %v711
      %3817 = vmatpush.msra.mxu0 %v703
      %3818 = vmatpush.msra.mxu0 %v695
      %3819 = vmatpush.msra.mxu0 %v687
      %3820 = vmatpush.msra.mxu0 %v679
      %3821 = vmatpush.msra.mxu0 %v671
      %3822 = vmatpush.msra.mxu0 %v663
      %3823 = vmatpush.msra.mxu0 %v655
      %3824 = vmatpush.msra.mxu0 %v647
      %3825 = vmatpush.msra.mxu0 %v639
      %3826 = vmatmul.f32.gmra.mxu0 %v3715
      %v3827 = vpop.f32.mrf.mxu0
      %v3828 = vadd.f32 0.0, %v3827
      %3829 = vdwg.mxu0
      %3830 = vmatpush.msra.mxu0 %v887
      %3831 = vmatpush.msra.mxu0 %v879
      %3832 = vmatpush.msra.mxu0 %v871
      %3833 = vmatpush.msra.mxu0 %v863
      %3834 = vmatpush.msra.mxu0 %v855
      %3835 = vmatpush.msra.mxu0 %v847
      %3836 = vmatpush.msra.mxu0 %v839
      %3837 = vmatpush.msra.mxu0 %v831
      %3838 = vmatpush.msra.mxu0 %v823
      %3839 = vmatpush.msra.mxu0 %v815
      %3840 = vmatpush.msra.mxu0 %v807
      %3841 = vmatpush.msra.mxu0 %v799
      %3842 = vmatpush.msra.mxu0 %v791
      %3843 = vmatpush.msra.mxu0 %v783
      %3844 = vmatpush.msra.mxu0 %v775
      %3845 = vmatpush.msra.mxu0 %v767
      %3846 = vmatmul.f32.gmra.mxu0 %v3716
      %v3847 = vpop.f32.mrf.mxu0
      %v3848 = vadd.f32 %v3828, %v3847
      %3849 = vdwg.mxu0
      %3850 = vmatpush.msra.mxu0 %v760
      %3851 = vmatpush.msra.mxu0 %v752
      %3852 = vmatpush.msra.mxu0 %v744
      %3853 = vmatpush.msra.mxu0 %v736
      %3854 = vmatpush.msra.mxu0 %v728
      %3855 = vmatpush.msra.mxu0 %v720
      %3856 = vmatpush.msra.mxu0 %v712
      %3857 = vmatpush.msra.mxu0 %v704
      %3858 = vmatpush.msra.mxu0 %v696
      %3859 = vmatpush.msra.mxu0 %v688
      %3860 = vmatpush.msra.mxu0 %v680
      %3861 = vmatpush.msra.mxu0 %v672
      %3862 = vmatpush.msra.mxu0 %v664
      %3863 = vmatpush.msra.mxu0 %v656
      %3864 = vmatpush.msra.mxu0 %v648
      %3865 = vmatpush.msra.mxu0 %v640
      %3866 = vmatmul.f32.gmra.mxu0 %v3715
      %v3867 = vpop.f32.mrf.mxu0
      %v3868 = vadd.f32 0.0, %v3867
      %3869 = vdwg.mxu0
      %3870 = vmatpush.msra.mxu0 %v888
      %3871 = vmatpush.msra.mxu0 %v880
      %3872 = vmatpush.msra.mxu0 %v872
      %3873 = vmatpush.msra.mxu0 %v864
      %3874 = vmatpush.msra.mxu0 %v856
      %3875 = vmatpush.msra.mxu0 %v848
      %3876 = vmatpush.msra.mxu0 %v840
      %3877 = vmatpush.msra.mxu0 %v832
      %3878 = vmatpush.msra.mxu0 %v824
      %3879 = vmatpush.msra.mxu0 %v816
      %3880 = vmatpush.msra.mxu0 %v808
      %3881 = vmatpush.msra.mxu0 %v800
      %3882 = vmatpush.msra.mxu0 %v792
      %3883 = vmatpush.msra.mxu0 %v784
      %3884 = vmatpush.msra.mxu0 %v776
      %3885 = vmatpush.msra.mxu0 %v768
      %3886 = vmatmul.f32.gmra.mxu0 %v3716
      %v3887 = vpop.f32.mrf.mxu0
      %v3888 = vadd.f32 %v3868, %v3887
      %3889 = vdwg.mxu0
      %3890 = vmatpush.msra.mxu0 %v761
      %3891 = vmatpush.msra.mxu0 %v753
      %3892 = vmatpush.msra.mxu0 %v745
      %3893 = vmatpush.msra.mxu0 %v737
      %3894 = vmatpush.msra.mxu0 %v729
      %3895 = vmatpush.msra.mxu0 %v721
      %3896 = vmatpush.msra.mxu0 %v713
      %3897 = vmatpush.msra.mxu0 %v705
      %3898 = vmatpush.msra.mxu0 %v697
      %3899 = vmatpush.msra.mxu0 %v689
      %3900 = vmatpush.msra.mxu0 %v681
      %3901 = vmatpush.msra.mxu0 %v673
      %3902 = vmatpush.msra.mxu0 %v665
      %3903 = vmatpush.msra.mxu0 %v657
      %3904 = vmatpush.msra.mxu0 %v649
      %3905 = vmatpush.msra.mxu0 %v641
      %3906 = vmatmul.f32.gmra.mxu0 %v3715
      %v3907 = vpop.f32.mrf.mxu0
      %v3908 = vadd.f32 0.0, %v3907
      %3909 = vdwg.mxu0
      %3910 = vmatpush.msra.mxu0 %v889
      %3911 = vmatpush.msra.mxu0 %v881
      %3912 = vmatpush.msra.mxu0 %v873
      %3913 = vmatpush.msra.mxu0 %v865
      %3914 = vmatpush.msra.mxu0 %v857
      %3915 = vmatpush.msra.mxu0 %v849
      %3916 = vmatpush.msra.mxu0 %v841
      %3917 = vmatpush.msra.mxu0 %v833
      %3918 = vmatpush.msra.mxu0 %v825
      %3919 = vmatpush.msra.mxu0 %v817
      %3920 = vmatpush.msra.mxu0 %v809
      %3921 = vmatpush.msra.mxu0 %v801
      %3922 = vmatpush.msra.mxu0 %v793
      %3923 = vmatpush.msra.mxu0 %v785
      %3924 = vmatpush.msra.mxu0 %v777
      %3925 = vmatpush.msra.mxu0 %v769
      %3926 = vmatmul.f32.gmra.mxu0 %v3716
      %v3927 = vpop.f32.mrf.mxu0
      %v3928 = vadd.f32 %v3908, %v3927
      %3929 = vdwg.mxu0
      %3930 = vmatpush.msra.mxu0 %v762
      %3931 = vmatpush.msra.mxu0 %v754
      %3932 = vmatpush.msra.mxu0 %v746
      %3933 = vmatpush.msra.mxu0 %v738
      %3934 = vmatpush.msra.mxu0 %v730
      %3935 = vmatpush.msra.mxu0 %v722
      %3936 = vmatpush.msra.mxu0 %v714
      %3937 = vmatpush.msra.mxu0 %v706
      %3938 = vmatpush.msra.mxu0 %v698
      %3939 = vmatpush.msra.mxu0 %v690
      %3940 = vmatpush.msra.mxu0 %v682
      %3941 = vmatpush.msra.mxu0 %v674
      %3942 = vmatpush.msra.mxu0 %v666
      %3943 = vmatpush.msra.mxu0 %v658
      %3944 = vmatpush.msra.mxu0 %v650
      %3945 = vmatpush.msra.mxu0 %v642
      %3946 = vmatmul.f32.gmra.mxu0 %v3715
      %v3947 = vpop.f32.mrf.mxu0
      %v3948 = vadd.f32 0.0, %v3947
      %3949 = vdwg.mxu0
      %3950 = vmatpush.msra.mxu0 %v890
      %3951 = vmatpush.msra.mxu0 %v882
      %3952 = vmatpush.msra.mxu0 %v874
      %3953 = vmatpush.msra.mxu0 %v866
      %3954 = vmatpush.msra.mxu0 %v858
      %3955 = vmatpush.msra.mxu0 %v850
      %3956 = vmatpush.msra.mxu0 %v842
      %3957 = vmatpush.msra.mxu0 %v834
      %3958 = vmatpush.msra.mxu0 %v826
      %3959 = vmatpush.msra.mxu0 %v818
      %3960 = vmatpush.msra.mxu0 %v810
      %3961 = vmatpush.msra.mxu0 %v802
      %3962 = vmatpush.msra.mxu0 %v794
      %3963 = vmatpush.msra.mxu0 %v786
      %3964 = vmatpush.msra.mxu0 %v778
      %3965 = vmatpush.msra.mxu0 %v770
      %3966 = vmatmul.f32.gmra.mxu0 %v3716
      %v3967 = vpop.f32.mrf.mxu0
      %v3968 = vadd.f32 %v3948, %v3967
      %3969 = vdwg.mxu0
      %3970 = vmatpush.msra.mxu0 %v763
      %3971 = vmatpush.msra.mxu0 %v755
      %3972 = vmatpush.msra.mxu0 %v747
      %3973 = vmatpush.msra.mxu0 %v739
      %3974 = vmatpush.msra.mxu0 %v731
      %3975 = vmatpush.msra.mxu0 %v723
      %3976 = vmatpush.msra.mxu0 %v715
      %3977 = vmatpush.msra.mxu0 %v707
      %3978 = vmatpush.msra.mxu0 %v699
      %3979 = vmatpush.msra.mxu0 %v691
      %3980 = vmatpush.msra.mxu0 %v683
      %3981 = vmatpush.msra.mxu0 %v675
      %3982 = vmatpush.msra.mxu0 %v667
      %3983 = vmatpush.msra.mxu0 %v659
      %3984 = vmatpush.msra.mxu0 %v651
      %3985 = vmatpush.msra.mxu0 %v643
      %3986 = vmatmul.f32.gmra.mxu0 %v3715
      %v3987 = vpop.f32.mrf.mxu0
      %v3988 = vadd.f32 0.0, %v3987
      %3989 = vdwg.mxu0
      %3990 = vmatpush.msra.mxu0 %v891
      %3991 = vmatpush.msra.mxu0 %v883
      %3992 = vmatpush.msra.mxu0 %v875
      %3993 = vmatpush.msra.mxu0 %v867
      %3994 = vmatpush.msra.mxu0 %v859
      %3995 = vmatpush.msra.mxu0 %v851
      %3996 = vmatpush.msra.mxu0 %v843
      %3997 = vmatpush.msra.mxu0 %v835
      %3998 = vmatpush.msra.mxu0 %v827
      %3999 = vmatpush.msra.mxu0 %v819
      %4000 = vmatpush.msra.mxu0 %v811
      %4001 = vmatpush.msra.mxu0 %v803
      %4002 = vmatpush.msra.mxu0 %v795
      %4003 = vmatpush.msra.mxu0 %v787
      %4004 = vmatpush.msra.mxu0 %v779
      %4005 = vmatpush.msra.mxu0 %v771
      %4006 = vmatmul.f32.gmra.mxu0 %v3716
      %v4007 = vpop.f32.mrf.mxu0
      %v4008 = vadd.f32 %v3988, %v4007
      %4009 = vdwg.mxu0
      %4010 = vmatpush.msra.mxu0 %v764
      %4011 = vmatpush.msra.mxu0 %v756
      %4012 = vmatpush.msra.mxu0 %v748
      %4013 = vmatpush.msra.mxu0 %v740
      %4014 = vmatpush.msra.mxu0 %v732
      %4015 = vmatpush.msra.mxu0 %v724
      %4016 = vmatpush.msra.mxu0 %v716
      %4017 = vmatpush.msra.mxu0 %v708
      %4018 = vmatpush.msra.mxu0 %v700
      %4019 = vmatpush.msra.mxu0 %v692
      %4020 = vmatpush.msra.mxu0 %v684
      %4021 = vmatpush.msra.mxu0 %v676
      %4022 = vmatpush.msra.mxu0 %v668
      %4023 = vmatpush.msra.mxu0 %v660
      %4024 = vmatpush.msra.mxu0 %v652
      %4025 = vmatpush.msra.mxu0 %v644
      %4026 = vmatmul.f32.gmra.mxu0 %v3715
      %v4027 = vpop.f32.mrf.mxu0
      %v4028 = vadd.f32 0.0, %v4027
      %4029 = vdwg.mxu0
      %4030 = vmatpush.msra.mxu0 %v892
      %4031 = vmatpush.msra.mxu0 %v884
      %4032 = vmatpush.msra.mxu0 %v876
      %4033 = vmatpush.msra.mxu0 %v868
      %4034 = vmatpush.msra.mxu0 %v860
      %4035 = vmatpush.msra.mxu0 %v852
      %4036 = vmatpush.msra.mxu0 %v844
      %4037 = vmatpush.msra.mxu0 %v836
      %4038 = vmatpush.msra.mxu0 %v828
      %4039 = vmatpush.msra.mxu0 %v820
      %4040 = vmatpush.msra.mxu0 %v812
      %4041 = vmatpush.msra.mxu0 %v804
      %4042 = vmatpush.msra.mxu0 %v796
      %4043 = vmatpush.msra.mxu0 %v788
      %4044 = vmatpush.msra.mxu0 %v780
      %4045 = vmatpush.msra.mxu0 %v772
      %4046 = vmatmul.f32.gmra.mxu0 %v3716
      %v4047 = vpop.f32.mrf.mxu0
      %v4048 = vadd.f32 %v4028, %v4047
      %4049 = vdwg.mxu0
      %v4050 = vadd.f32 %v3722, %v3768
      %v4051 = vadd.f32 %v3723, %v3808
      %v4052 = vadd.f32 %v3724, %v3848
      %v4053 = vadd.f32 %v3725, %v3888
      %v4054 = vadd.f32 %v3726, %v3928
      %v4055 = vadd.f32 %v3727, %v3968
      %v4056 = vadd.f32 %v3728, %v4008
      %v4057 = vadd.f32 %v3729, %v4048
      %v4058 = vxor.u32 %v4050, 2147483648
      %v4059 = vxor.u32 %v4051, 2147483648
      %v4060 = vmul.f32 %v4058, 1.442695
      %v4061 = vpow.pop %v4060
      %v4062 = vmul.f32 %v4059, 1.442695
      %v4063 = vpow.pop %v4062
      %v4064 = vadd.f32 %v4061, 1.0
      %v4065 = vadd.f32 %v4063, 1.0
      %v4066 = vrcp.pop %v4064
      %v4067 = vmul.f32 %v4064, %v4066
      %v4068 = vsub.f32 1.0, %v4067
      %v4069 = vmul.f32 %v4066, %v4068
      %v4070 = vadd.f32 %v4066, %v4069
      %vm4071 = vweird.f32 %v4064
      %vm4072 = vweird.f32 %v4066
      %vm4073 = vmor %vm4071, %vm4072
      %v4074 = vsel %vm4073, %v4066, %v4070
      %v4075 = vand.u32 2147483647, %v4064
      %vm4076 = vcmp.eq.f32.partialorder %v4075, 8.507059e+37
      %v4077 = vand.u32 %v4064, 2147483648
      %v4078 = vor.u32 1.1754944e-38, %v4077
      %v4079 = vsel %vm4076, %v4078, %v4074
      %v4080 = vmul.f32 1.0, %v4079
      %v4081 = vrcp.pop %v4065
      %v4082 = vmul.f32 %v4065, %v4081
      %v4083 = vsub.f32 1.0, %v4082
      %v4084 = vmul.f32 %v4081, %v4083
      %v4085 = vadd.f32 %v4081, %v4084
      %vm4086 = vweird.f32 %v4065
      %vm4087 = vweird.f32 %v4081
      %vm4088 = vmor %vm4086, %vm4087
      %v4089 = vsel %vm4088, %v4081, %v4085
      %v4090 = vand.u32 2147483647, %v4065
      %vm4091 = vcmp.eq.f32.partialorder %v4090, 8.507059e+37
      %v4092 = vand.u32 %v4065, 2147483648
      %v4093 = vor.u32 1.1754944e-38, %v4092
      %v4094 = vsel %vm4091, %v4093, %v4089
      %v4095 = vmul.f32 1.0, %v4094
      %v4096 = vxor.u32 %v4052, 2147483648
      %v4097 = vxor.u32 %v4053, 2147483648
      %v4098 = vmul.f32 %v4096, 1.442695
      %v4099 = vpow.pop %v4098
      %v4100 = vmul.f32 %v4097, 1.442695
      %v4101 = vpow.pop %v4100
      %v4102 = vadd.f32 %v4099, 1.0
      %v4103 = vadd.f32 %v4101, 1.0
      %v4104 = vrcp.pop %v4102
      %v4105 = vmul.f32 %v4102, %v4104
      %v4106 = vsub.f32 1.0, %v4105
      %v4107 = vmul.f32 %v4104, %v4106
      %v4108 = vadd.f32 %v4104, %v4107
      %vm4109 = vweird.f32 %v4102
      %vm4110 = vweird.f32 %v4104
      %vm4111 = vmor %vm4109, %vm4110
      %v4112 = vsel %vm4111, %v4104, %v4108
      %v4113 = vand.u32 2147483647, %v4102
      %vm4114 = vcmp.eq.f32.partialorder %v4113, 8.507059e+37
      %v4115 = vand.u32 %v4102, 2147483648
      %v4116 = vor.u32 1.1754944e-38, %v4115
      %v4117 = vsel %vm4114, %v4116, %v4112
      %v4118 = vmul.f32 1.0, %v4117
      %v4119 = vrcp.pop %v4103
      %v4120 = vmul.f32 %v4103, %v4119
      %v4121 = vsub.f32 1.0, %v4120
      %v4122 = vmul.f32 %v4119, %v4121
      %v4123 = vadd.f32 %v4119, %v4122
      %vm4124 = vweird.f32 %v4103
      %vm4125 = vweird.f32 %v4119
      %vm4126 = vmor %vm4124, %vm4125
      %v4127 = vsel %vm4126, %v4119, %v4123
      %v4128 = vand.u32 2147483647, %v4103
      %vm4129 = vcmp.eq.f32.partialorder %v4128, 8.507059e+37
      %v4130 = vand.u32 %v4103, 2147483648
      %v4131 = vor.u32 1.1754944e-38, %v4130
      %v4132 = vsel %vm4129, %v4131, %v4127
      %v4133 = vmul.f32 1.0, %v4132
      %v4134 = vtanh.pop %v4054
      %v4135 = vtanh.pop %v4055
      %v4136 = vxor.u32 %v4056, 2147483648
      %v4137 = vxor.u32 %v4057, 2147483648
      %v4138 = vmul.f32 %v4136, 1.442695
      %v4139 = vpow.pop %v4138
      %v4140 = vmul.f32 %v4137, 1.442695
      %v4141 = vpow.pop %v4140
      %v4142 = vadd.f32 %v4139, 1.0
      %v4143 = vadd.f32 %v4141, 1.0
      %v4144 = vrcp.pop %v4142
      %v4145 = vmul.f32 %v4142, %v4144
      %v4146 = vsub.f32 1.0, %v4145
      %v4147 = vmul.f32 %v4144, %v4146
      %v4148 = vadd.f32 %v4144, %v4147
      %vm4149 = vweird.f32 %v4142
      %vm4150 = vweird.f32 %v4144
      %vm4151 = vmor %vm4149, %vm4150
      %v4152 = vsel %vm4151, %v4144, %v4148
      %v4153 = vand.u32 2147483647, %v4142
      %vm4154 = vcmp.eq.f32.partialorder %v4153, 8.507059e+37
      %v4155 = vand.u32 %v4142, 2147483648
      %v4156 = vor.u32 1.1754944e-38, %v4155
      %v4157 = vsel %vm4154, %v4156, %v4152
      %v4158 = vmul.f32 1.0, %v4157
      %v4159 = vrcp.pop %v4143
      %v4160 = vmul.f32 %v4143, %v4159
      %v4161 = vsub.f32 1.0, %v4160
      %v4162 = vmul.f32 %v4159, %v4161
      %v4163 = vadd.f32 %v4159, %v4162
      %vm4164 = vweird.f32 %v4143
      %vm4165 = vweird.f32 %v4159
      %vm4166 = vmor %vm4164, %vm4165
      %v4167 = vsel %vm4166, %v4159, %v4163
      %v4168 = vand.u32 2147483647, %v4143
      %vm4169 = vcmp.eq.f32.partialorder %v4168, 8.507059e+37
      %v4170 = vand.u32 %v4143, 2147483648
      %v4171 = vor.u32 1.1754944e-38, %v4170
      %v4172 = vsel %vm4169, %v4171, %v4167
      %v4173 = vmul.f32 1.0, %v4172
      %v4174 = vmul.f32 %v4118, %v3711
      %v4175 = vmul.f32 %v4133, %v3712
      %v4176 = vmul.f32 %v4080, %v4134
      %v4177 = vmul.f32 %v4095, %v4135
      %v4178 = vadd.f32 %v4174, %v4176
      %v4179 = vadd.f32 %v4175, %v4177
      %v4180 = vtanh.pop %v4178
      %v4181 = vtanh.pop %v4179
      %v4182 = vmul.f32 %v4158, %v4180
      %v4183 = vmul.f32 %v4173, %v4181
      %4184 = vst [vmem:[%s1837] sm:$0xff] %v4182
      %4185 = vst [vmem:[%s1833 + $0x8] sm:$0xff] %v4183
      %s4186 = smul.u32 7, 8
      %s4187 = smul.addr %s4186, 8
      %s4188 = scalar_lea.vmem [#allocation11], %s4187
      %v4189 = vld [vmem:[%s4188] sm:$0xff]
      %v4190 = vld [vmem:[%s4188 + $0x8] sm:$0xff]
      %v4191 = vld [vmem:[%s4188 + $0x10] sm:$0xff]
      %v4192 = vld [vmem:[%s4188 + $0x18] sm:$0xff]
      %v4193 = vld [vmem:[%s4188 + $0x20] sm:$0xff]
      %v4194 = vld [vmem:[%s4188 + $0x28] sm:$0xff]
      %v4195 = vld [vmem:[%s4188 + $0x30] sm:$0xff]
      %v4196 = vld [vmem:[%s4188 + $0x38] sm:$0xff]
      %4197 = vmatpush.msra.mxu0 %v757
      %4198 = vmatpush.msra.mxu0 %v749
      %4199 = vmatpush.msra.mxu0 %v741
      %4200 = vmatpush.msra.mxu0 %v733
      %4201 = vmatpush.msra.mxu0 %v725
      %4202 = vmatpush.msra.mxu0 %v717
      %4203 = vmatpush.msra.mxu0 %v709
      %4204 = vmatpush.msra.mxu0 %v701
      %4205 = vmatpush.msra.mxu0 %v693
      %4206 = vmatpush.msra.mxu0 %v685
      %4207 = vmatpush.msra.mxu0 %v677
      %4208 = vmatpush.msra.mxu0 %v669
      %4209 = vmatpush.msra.mxu0 %v661
      %4210 = vmatpush.msra.mxu0 %v653
      %4211 = vmatpush.msra.mxu0 %v645
      %4212 = vmatpush.msra.mxu0 %v637
      %4213 = vmatmul.f32.gmra.mxu0 %v4182
      %v4214 = vpop.f32.mrf.mxu0
      %v4215 = vadd.f32 0.0, %v4214
      %4216 = vdwg.mxu0
      %4217 = vmatpush.msra.mxu0 %v885
      %4218 = vmatpush.msra.mxu0 %v877
      %4219 = vmatpush.msra.mxu0 %v869
      %4220 = vmatpush.msra.mxu0 %v861
      %4221 = vmatpush.msra.mxu0 %v853
      %4222 = vmatpush.msra.mxu0 %v845
      %4223 = vmatpush.msra.mxu0 %v837
      %4224 = vmatpush.msra.mxu0 %v829
      %4225 = vmatpush.msra.mxu0 %v821
      %4226 = vmatpush.msra.mxu0 %v813
      %4227 = vmatpush.msra.mxu0 %v805
      %4228 = vmatpush.msra.mxu0 %v797
      %4229 = vmatpush.msra.mxu0 %v789
      %4230 = vmatpush.msra.mxu0 %v781
      %4231 = vmatpush.msra.mxu0 %v773
      %4232 = vmatpush.msra.mxu0 %v765
      %4233 = vmatmul.f32.gmra.mxu0 %v4183
      %v4234 = vpop.f32.mrf.mxu0
      %v4235 = vadd.f32 %v4215, %v4234
      %4236 = vdwg.mxu0
      %4237 = vmatpush.msra.mxu0 %v758
      %4238 = vmatpush.msra.mxu0 %v750
      %4239 = vmatpush.msra.mxu0 %v742
      %4240 = vmatpush.msra.mxu0 %v734
      %4241 = vmatpush.msra.mxu0 %v726
      %4242 = vmatpush.msra.mxu0 %v718
      %4243 = vmatpush.msra.mxu0 %v710
      %4244 = vmatpush.msra.mxu0 %v702
      %4245 = vmatpush.msra.mxu0 %v694
      %4246 = vmatpush.msra.mxu0 %v686
      %4247 = vmatpush.msra.mxu0 %v678
      %4248 = vmatpush.msra.mxu0 %v670
      %4249 = vmatpush.msra.mxu0 %v662
      %4250 = vmatpush.msra.mxu0 %v654
      %4251 = vmatpush.msra.mxu0 %v646
      %4252 = vmatpush.msra.mxu0 %v638
      %4253 = vmatmul.f32.gmra.mxu0 %v4182
      %v4254 = vpop.f32.mrf.mxu0
      %v4255 = vadd.f32 0.0, %v4254
      %4256 = vdwg.mxu0
      %4257 = vmatpush.msra.mxu0 %v886
      %4258 = vmatpush.msra.mxu0 %v878
      %4259 = vmatpush.msra.mxu0 %v870
      %4260 = vmatpush.msra.mxu0 %v862
      %4261 = vmatpush.msra.mxu0 %v854
      %4262 = vmatpush.msra.mxu0 %v846
      %4263 = vmatpush.msra.mxu0 %v838
      %4264 = vmatpush.msra.mxu0 %v830
      %4265 = vmatpush.msra.mxu0 %v822
      %4266 = vmatpush.msra.mxu0 %v814
      %4267 = vmatpush.msra.mxu0 %v806
      %4268 = vmatpush.msra.mxu0 %v798
      %4269 = vmatpush.msra.mxu0 %v790
      %4270 = vmatpush.msra.mxu0 %v782
      %4271 = vmatpush.msra.mxu0 %v774
      %4272 = vmatpush.msra.mxu0 %v766
      %4273 = vmatmul.f32.gmra.mxu0 %v4183
      %v4274 = vpop.f32.mrf.mxu0
      %v4275 = vadd.f32 %v4255, %v4274
      %4276 = vdwg.mxu0
      %4277 = vmatpush.msra.mxu0 %v759
      %4278 = vmatpush.msra.mxu0 %v751
      %4279 = vmatpush.msra.mxu0 %v743
      %4280 = vmatpush.msra.mxu0 %v735
      %4281 = vmatpush.msra.mxu0 %v727
      %4282 = vmatpush.msra.mxu0 %v719
      %4283 = vmatpush.msra.mxu0 %v711
      %4284 = vmatpush.msra.mxu0 %v703
      %4285 = vmatpush.msra.mxu0 %v695
      %4286 = vmatpush.msra.mxu0 %v687
      %4287 = vmatpush.msra.mxu0 %v679
      %4288 = vmatpush.msra.mxu0 %v671
      %4289 = vmatpush.msra.mxu0 %v663
      %4290 = vmatpush.msra.mxu0 %v655
      %4291 = vmatpush.msra.mxu0 %v647
      %4292 = vmatpush.msra.mxu0 %v639
      %4293 = vmatmul.f32.gmra.mxu0 %v4182
      %v4294 = vpop.f32.mrf.mxu0
      %v4295 = vadd.f32 0.0, %v4294
      %4296 = vdwg.mxu0
      %4297 = vmatpush.msra.mxu0 %v887
      %4298 = vmatpush.msra.mxu0 %v879
      %4299 = vmatpush.msra.mxu0 %v871
      %4300 = vmatpush.msra.mxu0 %v863
      %4301 = vmatpush.msra.mxu0 %v855
      %4302 = vmatpush.msra.mxu0 %v847
      %4303 = vmatpush.msra.mxu0 %v839
      %4304 = vmatpush.msra.mxu0 %v831
      %4305 = vmatpush.msra.mxu0 %v823
      %4306 = vmatpush.msra.mxu0 %v815
      %4307 = vmatpush.msra.mxu0 %v807
      %4308 = vmatpush.msra.mxu0 %v799
      %4309 = vmatpush.msra.mxu0 %v791
      %4310 = vmatpush.msra.mxu0 %v783
      %4311 = vmatpush.msra.mxu0 %v775
      %4312 = vmatpush.msra.mxu0 %v767
      %4313 = vmatmul.f32.gmra.mxu0 %v4183
      %v4314 = vpop.f32.mrf.mxu0
      %v4315 = vadd.f32 %v4295, %v4314
      %4316 = vdwg.mxu0
      %4317 = vmatpush.msra.mxu0 %v760
      %4318 = vmatpush.msra.mxu0 %v752
      %4319 = vmatpush.msra.mxu0 %v744
      %4320 = vmatpush.msra.mxu0 %v736
      %4321 = vmatpush.msra.mxu0 %v728
      %4322 = vmatpush.msra.mxu0 %v720
      %4323 = vmatpush.msra.mxu0 %v712
      %4324 = vmatpush.msra.mxu0 %v704
      %4325 = vmatpush.msra.mxu0 %v696
      %4326 = vmatpush.msra.mxu0 %v688
      %4327 = vmatpush.msra.mxu0 %v680
      %4328 = vmatpush.msra.mxu0 %v672
      %4329 = vmatpush.msra.mxu0 %v664
      %4330 = vmatpush.msra.mxu0 %v656
      %4331 = vmatpush.msra.mxu0 %v648
      %4332 = vmatpush.msra.mxu0 %v640
      %4333 = vmatmul.f32.gmra.mxu0 %v4182
      %v4334 = vpop.f32.mrf.mxu0
      %v4335 = vadd.f32 0.0, %v4334
      %4336 = vdwg.mxu0
      %4337 = vmatpush.msra.mxu0 %v888
      %4338 = vmatpush.msra.mxu0 %v880
      %4339 = vmatpush.msra.mxu0 %v872
      %4340 = vmatpush.msra.mxu0 %v864
      %4341 = vmatpush.msra.mxu0 %v856
      %4342 = vmatpush.msra.mxu0 %v848
      %4343 = vmatpush.msra.mxu0 %v840
      %4344 = vmatpush.msra.mxu0 %v832
      %4345 = vmatpush.msra.mxu0 %v824
      %4346 = vmatpush.msra.mxu0 %v816
      %4347 = vmatpush.msra.mxu0 %v808
      %4348 = vmatpush.msra.mxu0 %v800
      %4349 = vmatpush.msra.mxu0 %v792
      %4350 = vmatpush.msra.mxu0 %v784
      %4351 = vmatpush.msra.mxu0 %v776
      %4352 = vmatpush.msra.mxu0 %v768
      %4353 = vmatmul.f32.gmra.mxu0 %v4183
      %v4354 = vpop.f32.mrf.mxu0
      %v4355 = vadd.f32 %v4335, %v4354
      %4356 = vdwg.mxu0
      %4357 = vmatpush.msra.mxu0 %v761
      %4358 = vmatpush.msra.mxu0 %v753
      %4359 = vmatpush.msra.mxu0 %v745
      %4360 = vmatpush.msra.mxu0 %v737
      %4361 = vmatpush.msra.mxu0 %v729
      %4362 = vmatpush.msra.mxu0 %v721
      %4363 = vmatpush.msra.mxu0 %v713
      %4364 = vmatpush.msra.mxu0 %v705
      %4365 = vmatpush.msra.mxu0 %v697
      %4366 = vmatpush.msra.mxu0 %v689
      %4367 = vmatpush.msra.mxu0 %v681
      %4368 = vmatpush.msra.mxu0 %v673
      %4369 = vmatpush.msra.mxu0 %v665
      %4370 = vmatpush.msra.mxu0 %v657
      %4371 = vmatpush.msra.mxu0 %v649
      %4372 = vmatpush.msra.mxu0 %v641
      %4373 = vmatmul.f32.gmra.mxu0 %v4182
      %v4374 = vpop.f32.mrf.mxu0
      %v4375 = vadd.f32 0.0, %v4374
      %4376 = vdwg.mxu0
      %4377 = vmatpush.msra.mxu0 %v889
      %4378 = vmatpush.msra.mxu0 %v881
      %4379 = vmatpush.msra.mxu0 %v873
      %4380 = vmatpush.msra.mxu0 %v865
      %4381 = vmatpush.msra.mxu0 %v857
      %4382 = vmatpush.msra.mxu0 %v849
      %4383 = vmatpush.msra.mxu0 %v841
      %4384 = vmatpush.msra.mxu0 %v833
      %4385 = vmatpush.msra.mxu0 %v825
      %4386 = vmatpush.msra.mxu0 %v817
      %4387 = vmatpush.msra.mxu0 %v809
      %4388 = vmatpush.msra.mxu0 %v801
      %4389 = vmatpush.msra.mxu0 %v793
      %4390 = vmatpush.msra.mxu0 %v785
      %4391 = vmatpush.msra.mxu0 %v777
      %4392 = vmatpush.msra.mxu0 %v769
      %4393 = vmatmul.f32.gmra.mxu0 %v4183
      %v4394 = vpop.f32.mrf.mxu0
      %v4395 = vadd.f32 %v4375, %v4394
      %4396 = vdwg.mxu0
      %4397 = vmatpush.msra.mxu0 %v762
      %4398 = vmatpush.msra.mxu0 %v754
      %4399 = vmatpush.msra.mxu0 %v746
      %4400 = vmatpush.msra.mxu0 %v738
      %4401 = vmatpush.msra.mxu0 %v730
      %4402 = vmatpush.msra.mxu0 %v722
      %4403 = vmatpush.msra.mxu0 %v714
      %4404 = vmatpush.msra.mxu0 %v706
      %4405 = vmatpush.msra.mxu0 %v698
      %4406 = vmatpush.msra.mxu0 %v690
      %4407 = vmatpush.msra.mxu0 %v682
      %4408 = vmatpush.msra.mxu0 %v674
      %4409 = vmatpush.msra.mxu0 %v666
      %4410 = vmatpush.msra.mxu0 %v658
      %4411 = vmatpush.msra.mxu0 %v650
      %4412 = vmatpush.msra.mxu0 %v642
      %4413 = vmatmul.f32.gmra.mxu0 %v4182
      %v4414 = vpop.f32.mrf.mxu0
      %v4415 = vadd.f32 0.0, %v4414
      %4416 = vdwg.mxu0
      %4417 = vmatpush.msra.mxu0 %v890
      %4418 = vmatpush.msra.mxu0 %v882
      %4419 = vmatpush.msra.mxu0 %v874
      %4420 = vmatpush.msra.mxu0 %v866
      %4421 = vmatpush.msra.mxu0 %v858
      %4422 = vmatpush.msra.mxu0 %v850
      %4423 = vmatpush.msra.mxu0 %v842
      %4424 = vmatpush.msra.mxu0 %v834
      %4425 = vmatpush.msra.mxu0 %v826
      %4426 = vmatpush.msra.mxu0 %v818
      %4427 = vmatpush.msra.mxu0 %v810
      %4428 = vmatpush.msra.mxu0 %v802
      %4429 = vmatpush.msra.mxu0 %v794
      %4430 = vmatpush.msra.mxu0 %v786
      %4431 = vmatpush.msra.mxu0 %v778
      %4432 = vmatpush.msra.mxu0 %v770
      %4433 = vmatmul.f32.gmra.mxu0 %v4183
      %v4434 = vpop.f32.mrf.mxu0
      %v4435 = vadd.f32 %v4415, %v4434
      %4436 = vdwg.mxu0
      %4437 = vmatpush.msra.mxu0 %v763
      %4438 = vmatpush.msra.mxu0 %v755
      %4439 = vmatpush.msra.mxu0 %v747
      %4440 = vmatpush.msra.mxu0 %v739
      %4441 = vmatpush.msra.mxu0 %v731
      %4442 = vmatpush.msra.mxu0 %v723
      %4443 = vmatpush.msra.mxu0 %v715
      %4444 = vmatpush.msra.mxu0 %v707
      %4445 = vmatpush.msra.mxu0 %v699
      %4446 = vmatpush.msra.mxu0 %v691
      %4447 = vmatpush.msra.mxu0 %v683
      %4448 = vmatpush.msra.mxu0 %v675
      %4449 = vmatpush.msra.mxu0 %v667
      %4450 = vmatpush.msra.mxu0 %v659
      %4451 = vmatpush.msra.mxu0 %v651
      %4452 = vmatpush.msra.mxu0 %v643
      %4453 = vmatmul.f32.gmra.mxu0 %v4182
      %v4454 = vpop.f32.mrf.mxu0
      %v4455 = vadd.f32 0.0, %v4454
      %4456 = vdwg.mxu0
      %4457 = vmatpush.msra.mxu0 %v891
      %4458 = vmatpush.msra.mxu0 %v883
      %4459 = vmatpush.msra.mxu0 %v875
      %4460 = vmatpush.msra.mxu0 %v867
      %4461 = vmatpush.msra.mxu0 %v859
      %4462 = vmatpush.msra.mxu0 %v851
      %4463 = vmatpush.msra.mxu0 %v843
      %4464 = vmatpush.msra.mxu0 %v835
      %4465 = vmatpush.msra.mxu0 %v827
      %4466 = vmatpush.msra.mxu0 %v819
      %4467 = vmatpush.msra.mxu0 %v811
      %4468 = vmatpush.msra.mxu0 %v803
      %4469 = vmatpush.msra.mxu0 %v795
      %4470 = vmatpush.msra.mxu0 %v787
      %4471 = vmatpush.msra.mxu0 %v779
      %4472 = vmatpush.msra.mxu0 %v771
      %4473 = vmatmul.f32.gmra.mxu0 %v4183
      %v4474 = vpop.f32.mrf.mxu0
      %v4475 = vadd.f32 %v4455, %v4474
      %4476 = vdwg.mxu0
      %4477 = vmatpush.msra.mxu0 %v764
      %4478 = vmatpush.msra.mxu0 %v756
      %4479 = vmatpush.msra.mxu0 %v748
      %4480 = vmatpush.msra.mxu0 %v740
      %4481 = vmatpush.msra.mxu0 %v732
      %4482 = vmatpush.msra.mxu0 %v724
      %4483 = vmatpush.msra.mxu0 %v716
      %4484 = vmatpush.msra.mxu0 %v708
      %4485 = vmatpush.msra.mxu0 %v700
      %4486 = vmatpush.msra.mxu0 %v692
      %4487 = vmatpush.msra.mxu0 %v684
      %4488 = vmatpush.msra.mxu0 %v676
      %4489 = vmatpush.msra.mxu0 %v668
      %4490 = vmatpush.msra.mxu0 %v660
      %4491 = vmatpush.msra.mxu0 %v652
      %4492 = vmatpush.msra.mxu0 %v644
      %4493 = vmatmul.f32.gmra.mxu0 %v4182
      %v4494 = vpop.f32.mrf.mxu0
      %v4495 = vadd.f32 0.0, %v4494
      %4496 = vdwg.mxu0
      %4497 = vmatpush.msra.mxu0 %v892
      %4498 = vmatpush.msra.mxu0 %v884
      %4499 = vmatpush.msra.mxu0 %v876
      %4500 = vmatpush.msra.mxu0 %v868
      %4501 = vmatpush.msra.mxu0 %v860
      %4502 = vmatpush.msra.mxu0 %v852
      %4503 = vmatpush.msra.mxu0 %v844
      %4504 = vmatpush.msra.mxu0 %v836
      %4505 = vmatpush.msra.mxu0 %v828
      %4506 = vmatpush.msra.mxu0 %v820
      %4507 = vmatpush.msra.mxu0 %v812
      %4508 = vmatpush.msra.mxu0 %v804
      %4509 = vmatpush.msra.mxu0 %v796
      %4510 = vmatpush.msra.mxu0 %v788
      %4511 = vmatpush.msra.mxu0 %v780
      %4512 = vmatpush.msra.mxu0 %v772
      %4513 = vmatmul.f32.gmra.mxu0 %v4183
      %v4514 = vpop.f32.mrf.mxu0
      %v4515 = vadd.f32 %v4495, %v4514
      %4516 = vdwg.mxu0
      %v4517 = vadd.f32 %v4189, %v4235
      %v4518 = vadd.f32 %v4190, %v4275
      %v4519 = vadd.f32 %v4191, %v4315
      %v4520 = vadd.f32 %v4192, %v4355
      %v4521 = vadd.f32 %v4193, %v4395
      %v4522 = vadd.f32 %v4194, %v4435
      %v4523 = vadd.f32 %v4195, %v4475
      %v4524 = vadd.f32 %v4196, %v4515
      %v4525 = vxor.u32 %v4517, 2147483648
      %v4526 = vxor.u32 %v4518, 2147483648
      %v4527 = vmul.f32 %v4525, 1.442695
      %v4528 = vpow.pop %v4527
      %v4529 = vmul.f32 %v4526, 1.442695
      %v4530 = vpow.pop %v4529
      %v4531 = vadd.f32 %v4528, 1.0
      %v4532 = vadd.f32 %v4530, 1.0
      %v4533 = vrcp.pop %v4531
      %v4534 = vmul.f32 %v4531, %v4533
      %v4535 = vsub.f32 1.0, %v4534
      %v4536 = vmul.f32 %v4533, %v4535
      %v4537 = vadd.f32 %v4533, %v4536
      %vm4538 = vweird.f32 %v4531
      %vm4539 = vweird.f32 %v4533
      %vm4540 = vmor %vm4538, %vm4539
      %v4541 = vsel %vm4540, %v4533, %v4537
      %v4542 = vand.u32 2147483647, %v4531
      %vm4543 = vcmp.eq.f32.partialorder %v4542, 8.507059e+37
      %v4544 = vand.u32 %v4531, 2147483648
      %v4545 = vor.u32 1.1754944e-38, %v4544
      %v4546 = vsel %vm4543, %v4545, %v4541
      %v4547 = vmul.f32 1.0, %v4546
      %v4548 = vrcp.pop %v4532
      %v4549 = vmul.f32 %v4532, %v4548
      %v4550 = vsub.f32 1.0, %v4549
      %v4551 = vmul.f32 %v4548, %v4550
      %v4552 = vadd.f32 %v4548, %v4551
      %vm4553 = vweird.f32 %v4532
      %vm4554 = vweird.f32 %v4548
      %vm4555 = vmor %vm4553, %vm4554
      %v4556 = vsel %vm4555, %v4548, %v4552
      %v4557 = vand.u32 2147483647, %v4532
      %vm4558 = vcmp.eq.f32.partialorder %v4557, 8.507059e+37
      %v4559 = vand.u32 %v4532, 2147483648
      %v4560 = vor.u32 1.1754944e-38, %v4559
      %v4561 = vsel %vm4558, %v4560, %v4556
      %v4562 = vmul.f32 1.0, %v4561
      %v4563 = vxor.u32 %v4519, 2147483648
      %v4564 = vxor.u32 %v4520, 2147483648
      %v4565 = vmul.f32 %v4563, 1.442695
      %v4566 = vpow.pop %v4565
      %v4567 = vmul.f32 %v4564, 1.442695
      %v4568 = vpow.pop %v4567
      %v4569 = vadd.f32 %v4566, 1.0
      %v4570 = vadd.f32 %v4568, 1.0
      %v4571 = vrcp.pop %v4569
      %v4572 = vmul.f32 %v4569, %v4571
      %v4573 = vsub.f32 1.0, %v4572
      %v4574 = vmul.f32 %v4571, %v4573
      %v4575 = vadd.f32 %v4571, %v4574
      %vm4576 = vweird.f32 %v4569
      %vm4577 = vweird.f32 %v4571
      %vm4578 = vmor %vm4576, %vm4577
      %v4579 = vsel %vm4578, %v4571, %v4575
      %v4580 = vand.u32 2147483647, %v4569
      %vm4581 = vcmp.eq.f32.partialorder %v4580, 8.507059e+37
      %v4582 = vand.u32 %v4569, 2147483648
      %v4583 = vor.u32 1.1754944e-38, %v4582
      %v4584 = vsel %vm4581, %v4583, %v4579
      %v4585 = vmul.f32 1.0, %v4584
      %v4586 = vrcp.pop %v4570
      %v4587 = vmul.f32 %v4570, %v4586
      %v4588 = vsub.f32 1.0, %v4587
      %v4589 = vmul.f32 %v4586, %v4588
      %v4590 = vadd.f32 %v4586, %v4589
      %vm4591 = vweird.f32 %v4570
      %vm4592 = vweird.f32 %v4586
      %vm4593 = vmor %vm4591, %vm4592
      %v4594 = vsel %vm4593, %v4586, %v4590
      %v4595 = vand.u32 2147483647, %v4570
      %vm4596 = vcmp.eq.f32.partialorder %v4595, 8.507059e+37
      %v4597 = vand.u32 %v4570, 2147483648
      %v4598 = vor.u32 1.1754944e-38, %v4597
      %v4599 = vsel %vm4596, %v4598, %v4594
      %v4600 = vmul.f32 1.0, %v4599
      %v4601 = vtanh.pop %v4521
      %v4602 = vtanh.pop %v4522
      %v4603 = vxor.u32 %v4523, 2147483648
      %v4604 = vxor.u32 %v4524, 2147483648
      %v4605 = vmul.f32 %v4603, 1.442695
      %v4606 = vpow.pop %v4605
      %v4607 = vmul.f32 %v4604, 1.442695
      %v4608 = vpow.pop %v4607
      %v4609 = vadd.f32 %v4606, 1.0
      %v4610 = vadd.f32 %v4608, 1.0
      %v4611 = vrcp.pop %v4609
      %v4612 = vmul.f32 %v4609, %v4611
      %v4613 = vsub.f32 1.0, %v4612
      %v4614 = vmul.f32 %v4611, %v4613
      %v4615 = vadd.f32 %v4611, %v4614
      %vm4616 = vweird.f32 %v4609
      %vm4617 = vweird.f32 %v4611
      %vm4618 = vmor %vm4616, %vm4617
      %v4619 = vsel %vm4618, %v4611, %v4615
      %v4620 = vand.u32 2147483647, %v4609
      %vm4621 = vcmp.eq.f32.partialorder %v4620, 8.507059e+37
      %v4622 = vand.u32 %v4609, 2147483648
      %v4623 = vor.u32 1.1754944e-38, %v4622
      %v4624 = vsel %vm4621, %v4623, %v4619
      %v4625 = vmul.f32 1.0, %v4624
      %v4626 = vrcp.pop %v4610
      %v4627 = vmul.f32 %v4610, %v4626
      %v4628 = vsub.f32 1.0, %v4627
      %v4629 = vmul.f32 %v4626, %v4628
      %v4630 = vadd.f32 %v4626, %v4629
      %vm4631 = vweird.f32 %v4610
      %vm4632 = vweird.f32 %v4626
      %vm4633 = vmor %vm4631, %vm4632
      %v4634 = vsel %vm4633, %v4626, %v4630
      %v4635 = vand.u32 2147483647, %v4610
      %vm4636 = vcmp.eq.f32.partialorder %v4635, 8.507059e+37
      %v4637 = vand.u32 %v4610, 2147483648
      %v4638 = vor.u32 1.1754944e-38, %v4637
      %v4639 = vsel %vm4636, %v4638, %v4634
      %v4640 = vmul.f32 1.0, %v4639
      %v4641 = vmul.f32 %v4585, %v4178
      %v4642 = vmul.f32 %v4600, %v4179
      %v4643 = vmul.f32 %v4547, %v4601
      %v4644 = vmul.f32 %v4562, %v4602
      %v4645 = vadd.f32 %v4641, %v4643
      %v4646 = vadd.f32 %v4642, %v4644
      %v4647 = vtanh.pop %v4645
      %v4648 = vtanh.pop %v4646
      %v4649 = vmul.f32 %v4625, %v4647
      %v4650 = vmul.f32 %v4640, %v4648
      %4651 = vst [vmem:[%s1364] sm:$0xff] %v4649
      %4652 = vst [vmem:[%s1360 + $0x8] sm:$0xff] %v4650
    $region99: #{lstm_forward_backward.1} parent=1
      #allocation12 [shape = 'u8[98304]{0}', space=vmem, size = 0x18000, scoped, tag = 'scoped memory for lstm_forward_backward.1']
      #allocation13 [shape = 'u8[98304]{0}', space=vmem, size = 0x18000, scoped, tag = 'scoped memory for lstm_forward_backward.1']
      %v4653 = vld [vmem:[#allocation2] sm:$0xff]
      %v4654 = vld [vmem:[#allocation2 + $0x8] sm:$0xff]
      %v4655 = vld [vmem:[#allocation2 + $0x10] sm:$0xff]
      %v4656 = vld [vmem:[#allocation2 + $0x18] sm:$0xff]
      %v4657 = vld [vmem:[#allocation2 + $0x20] sm:$0xff]
      %v4658 = vld [vmem:[#allocation2 + $0x28] sm:$0xff]
      %v4659 = vld [vmem:[#allocation2 + $0x30] sm:$0xff]
      %v4660 = vld [vmem:[#allocation2 + $0x38] sm:$0xff]
      %v4661 = vld [vmem:[#allocation2 + $0x40] sm:$0xff]
      %v4662 = vld [vmem:[#allocation2 + $0x48] sm:$0xff]
      %v4663 = vld [vmem:[#allocation2 + $0x50] sm:$0xff]
      %v4664 = vld [vmem:[#allocation2 + $0x58] sm:$0xff]
      %v4665 = vld [vmem:[#allocation2 + $0x60] sm:$0xff]
      %v4666 = vld [vmem:[#allocation2 + $0x68] sm:$0xff]
      %v4667 = vld [vmem:[#allocation2 + $0x70] sm:$0xff]
      %v4668 = vld [vmem:[#allocation2 + $0x78] sm:$0xff]
      %v4669 = vld [vmem:[%s5] sm:$0xff]
      %v4670 = vld [vmem:[%s5 + $0x8] sm:$0xff]
      %v4671 = vld [vmem:[%s5 + $0x10] sm:$0xff]
      %v4672 = vld [vmem:[%s5 + $0x18] sm:$0xff]
      %v4673 = vld [vmem:[%s5 + $0x20] sm:$0xff]
      %v4674 = vld [vmem:[%s5 + $0x28] sm:$0xff]
      %v4675 = vld [vmem:[%s5 + $0x30] sm:$0xff]
      %v4676 = vld [vmem:[%s5 + $0x38] sm:$0xff]
      %v4677 = vld [vmem:[%s5 + $0x40] sm:$0xff]
      %v4678 = vld [vmem:[%s5 + $0x48] sm:$0xff]
      %v4679 = vld [vmem:[%s5 + $0x50] sm:$0xff]
      %v4680 = vld [vmem:[%s5 + $0x58] sm:$0xff]
      %v4681 = vld [vmem:[%s5 + $0x60] sm:$0xff]
      %v4682 = vld [vmem:[%s5 + $0x68] sm:$0xff]
      %v4683 = vld [vmem:[%s5 + $0x70] sm:$0xff]
      %v4684 = vld [vmem:[%s5 + $0x78] sm:$0xff]
      %v4685 = vld [vmem:[%s5 + $0x80] sm:$0xff]
      %v4686 = vld [vmem:[%s5 + $0x88] sm:$0xff]
      %v4687 = vld [vmem:[%s5 + $0x90] sm:$0xff]
      %v4688 = vld [vmem:[%s5 + $0x98] sm:$0xff]
      %v4689 = vld [vmem:[%s5 + $0xa0] sm:$0xff]
      %v4690 = vld [vmem:[%s5 + $0xa8] sm:$0xff]
      %v4691 = vld [vmem:[%s5 + $0xb0] sm:$0xff]
      %v4692 = vld [vmem:[%s5 + $0xb8] sm:$0xff]
      %v4693 = vld [vmem:[%s5 + $0xc0] sm:$0xff]
      %v4694 = vld [vmem:[%s5 + $0xc8] sm:$0xff]
      %v4695 = vld [vmem:[%s5 + $0xd0] sm:$0xff]
      %v4696 = vld [vmem:[%s5 + $0xd8] sm:$0xff]
      %v4697 = vld [vmem:[%s5 + $0xe0] sm:$0xff]
      %v4698 = vld [vmem:[%s5 + $0xe8] sm:$0xff]
      %v4699 = vld [vmem:[%s5 + $0xf0] sm:$0xff]
      %v4700 = vld [vmem:[%s5 + $0xf8] sm:$0xff]
      %v4701 = vld [vmem:[%s5 + $0x100] sm:$0xff]
      %v4702 = vld [vmem:[%s5 + $0x108] sm:$0xff]
      %v4703 = vld [vmem:[%s5 + $0x110] sm:$0xff]
      %v4704 = vld [vmem:[%s5 + $0x118] sm:$0xff]
      %v4705 = vld [vmem:[%s5 + $0x120] sm:$0xff]
      %v4706 = vld [vmem:[%s5 + $0x128] sm:$0xff]
      %v4707 = vld [vmem:[%s5 + $0x130] sm:$0xff]
      %v4708 = vld [vmem:[%s5 + $0x138] sm:$0xff]
      %v4709 = vld [vmem:[%s5 + $0x140] sm:$0xff]
      %v4710 = vld [vmem:[%s5 + $0x148] sm:$0xff]
      %v4711 = vld [vmem:[%s5 + $0x150] sm:$0xff]
      %v4712 = vld [vmem:[%s5 + $0x158] sm:$0xff]
      %v4713 = vld [vmem:[%s5 + $0x160] sm:$0xff]
      %v4714 = vld [vmem:[%s5 + $0x168] sm:$0xff]
      %v4715 = vld [vmem:[%s5 + $0x170] sm:$0xff]
      %v4716 = vld [vmem:[%s5 + $0x178] sm:$0xff]
      %v4717 = vld [vmem:[%s5 + $0x180] sm:$0xff]
      %v4718 = vld [vmem:[%s5 + $0x188] sm:$0xff]
      %v4719 = vld [vmem:[%s5 + $0x190] sm:$0xff]
      %v4720 = vld [vmem:[%s5 + $0x198] sm:$0xff]
      %v4721 = vld [vmem:[%s5 + $0x1a0] sm:$0xff]
      %v4722 = vld [vmem:[%s5 + $0x1a8] sm:$0xff]
      %v4723 = vld [vmem:[%s5 + $0x1b0] sm:$0xff]
      %v4724 = vld [vmem:[%s5 + $0x1b8] sm:$0xff]
      %v4725 = vld [vmem:[%s5 + $0x1c0] sm:$0xff]
      %v4726 = vld [vmem:[%s5 + $0x1c8] sm:$0xff]
      %v4727 = vld [vmem:[%s5 + $0x1d0] sm:$0xff]
      %v4728 = vld [vmem:[%s5 + $0x1d8] sm:$0xff]
      %v4729 = vld [vmem:[%s5 + $0x1e0] sm:$0xff]
      %v4730 = vld [vmem:[%s5 + $0x1e8] sm:$0xff]
      %v4731 = vld [vmem:[%s5 + $0x1f0] sm:$0xff]
      %v4732 = vld [vmem:[%s5 + $0x1f8] sm:$0xff]
      %v4733 = vld [vmem:[%s5 + $0x200] sm:$0xff]
      %v4734 = vld [vmem:[%s5 + $0x208] sm:$0xff]
      %v4735 = vld [vmem:[%s5 + $0x210] sm:$0xff]
      %v4736 = vld [vmem:[%s5 + $0x218] sm:$0xff]
      %v4737 = vld [vmem:[%s5 + $0x220] sm:$0xff]
      %v4738 = vld [vmem:[%s5 + $0x228] sm:$0xff]
      %v4739 = vld [vmem:[%s5 + $0x230] sm:$0xff]
      %v4740 = vld [vmem:[%s5 + $0x238] sm:$0xff]
      %v4741 = vld [vmem:[%s5 + $0x240] sm:$0xff]
      %v4742 = vld [vmem:[%s5 + $0x248] sm:$0xff]
      %v4743 = vld [vmem:[%s5 + $0x250] sm:$0xff]
      %v4744 = vld [vmem:[%s5 + $0x258] sm:$0xff]
      %v4745 = vld [vmem:[%s5 + $0x260] sm:$0xff]
      %v4746 = vld [vmem:[%s5 + $0x268] sm:$0xff]
      %v4747 = vld [vmem:[%s5 + $0x270] sm:$0xff]
      %v4748 = vld [vmem:[%s5 + $0x278] sm:$0xff]
      %v4749 = vld [vmem:[%s5 + $0x280] sm:$0xff]
      %v4750 = vld [vmem:[%s5 + $0x288] sm:$0xff]
      %v4751 = vld [vmem:[%s5 + $0x290] sm:$0xff]
      %v4752 = vld [vmem:[%s5 + $0x298] sm:$0xff]
      %v4753 = vld [vmem:[%s5 + $0x2a0] sm:$0xff]
      %v4754 = vld [vmem:[%s5 + $0x2a8] sm:$0xff]
      %v4755 = vld [vmem:[%s5 + $0x2b0] sm:$0xff]
      %v4756 = vld [vmem:[%s5 + $0x2b8] sm:$0xff]
      %v4757 = vld [vmem:[%s5 + $0x2c0] sm:$0xff]
      %v4758 = vld [vmem:[%s5 + $0x2c8] sm:$0xff]
      %v4759 = vld [vmem:[%s5 + $0x2d0] sm:$0xff]
      %v4760 = vld [vmem:[%s5 + $0x2d8] sm:$0xff]
      %v4761 = vld [vmem:[%s5 + $0x2e0] sm:$0xff]
      %v4762 = vld [vmem:[%s5 + $0x2e8] sm:$0xff]
      %v4763 = vld [vmem:[%s5 + $0x2f0] sm:$0xff]
      %v4764 = vld [vmem:[%s5 + $0x2f8] sm:$0xff]
      %v4765 = vld [vmem:[%s8] sm:$0x7]
      %v4767 = vperm.slane %v4765, 0
      %v4768 = vperm.slane %v4765, 1
      %v4769 = vperm.slane %v4765, 2
      %4773 = vmatpush.msra.mxu0 %v4714
      %4774 = vmatpush.msra.mxu0 %v4711
      %4775 = vmatpush.msra.mxu0 %v4708
      %4776 = vmatpush.msra.mxu0 %v4705
      %4777 = vmatpush.msra.mxu0 %v4702
      %4778 = vmatpush.msra.mxu0 %v4699
      %4779 = vmatpush.msra.mxu0 %v4696
      %4780 = vmatpush.msra.mxu0 %v4693
      %4781 = vmatpush.msra.mxu0 %v4690
      %4782 = vmatpush.msra.mxu0 %v4687
      %4783 = vmatpush.msra.mxu0 %v4684
      %4784 = vmatpush.msra.mxu0 %v4681
      %4785 = vmatpush.msra.mxu0 %v4678
      %4786 = vmatpush.msra.mxu0 %v4675
      %4787 = vmatpush.msra.mxu0 %v4672
      %4788 = vmatpush.msra.mxu0 %v4669
      %4789 = vmatmul.f32.gmra.mxu0 %v4653
      %v4790 = vpop.f32.mrf.mxu0
      %v4791 = vadd.f32 %v4767, %v4790
      %4792 = vmatmul.f32.gmra.mxu0 %v4655
      %v4793 = vpop.f32.mrf.mxu0
      %v4794 = vadd.f32 %v4767, %v4793
      %4795 = vmatmul.f32.gmra.mxu0 %v4657
      %v4796 = vpop.f32.mrf.mxu0
      %v4797 = vadd.f32 %v4767, %v4796
      %4798 = vmatmul.f32.gmra.mxu0 %v4659
      %v4799 = vpop.f32.mrf.mxu0
      %v4800 = vadd.f32 %v4767, %v4799
      %4801 = vmatmul.f32.gmra.mxu0 %v4661
      %v4802 = vpop.f32.mrf.mxu0
      %v4803 = vadd.f32 %v4767, %v4802
      %4804 = vmatmul.f32.gmra.mxu0 %v4663
      %v4805 = vpop.f32.mrf.mxu0
      %v4806 = vadd.f32 %v4767, %v4805
      %4807 = vmatmul.f32.gmra.mxu0 %v4665
      %v4808 = vpop.f32.mrf.mxu0
      %v4809 = vadd.f32 %v4767, %v4808
      %4810 = vmatmul.f32.gmra.mxu0 %v4667
      %v4811 = vpop.f32.mrf.mxu0
      %v4812 = vadd.f32 %v4767, %v4811
      %4813 = vdwg.mxu0
      %4814 = vmatpush.msra.mxu0 %v4762
      %4815 = vmatpush.msra.mxu0 %v4759
      %4816 = vmatpush.msra.mxu0 %v4756
      %4817 = vmatpush.msra.mxu0 %v4753
      %4818 = vmatpush.msra.mxu0 %v4750
      %4819 = vmatpush.msra.mxu0 %v4747
      %4820 = vmatpush.msra.mxu0 %v4744
      %4821 = vmatpush.msra.mxu0 %v4741
      %4822 = vmatpush.msra.mxu0 %v4738
      %4823 = vmatpush.msra.mxu0 %v4735
      %4824 = vmatpush.msra.mxu0 %v4732
      %4825 = vmatpush.msra.mxu0 %v4729
      %4826 = vmatpush.msra.mxu0 %v4726
      %4827 = vmatpush.msra.mxu0 %v4723
      %4828 = vmatpush.msra.mxu0 %v4720
      %4829 = vmatpush.msra.mxu0 %v4717
      %4830 = vmatmul.f32.gmra.mxu0 %v4654
      %v4831 = vpop.f32.mrf.mxu0
      %v4832 = vadd.f32 %v4791, %v4831
      %4833 = vmatmul.f32.gmra.mxu0 %v4656
      %v4834 = vpop.f32.mrf.mxu0
      %v4835 = vadd.f32 %v4794, %v4834
      %4836 = vmatmul.f32.gmra.mxu0 %v4658
      %v4837 = vpop.f32.mrf.mxu0
      %v4838 = vadd.f32 %v4797, %v4837
      %4839 = vmatmul.f32.gmra.mxu0 %v4660
      %v4840 = vpop.f32.mrf.mxu0
      %v4841 = vadd.f32 %v4800, %v4840
      %4842 = vmatmul.f32.gmra.mxu0 %v4662
      %v4843 = vpop.f32.mrf.mxu0
      %v4844 = vadd.f32 %v4803, %v4843
      %4845 = vmatmul.f32.gmra.mxu0 %v4664
      %v4846 = vpop.f32.mrf.mxu0
      %v4847 = vadd.f32 %v4806, %v4846
      %4848 = vmatmul.f32.gmra.mxu0 %v4666
      %v4849 = vpop.f32.mrf.mxu0
      %v4850 = vadd.f32 %v4809, %v4849
      %4851 = vmatmul.f32.gmra.mxu0 %v4668
      %v4852 = vpop.f32.mrf.mxu0
      %v4853 = vadd.f32 %v4812, %v4852
      %4854 = vdwg.mxu0
      %4855 = vmatpush.msra.mxu0 %v4715
      %4856 = vmatpush.msra.mxu0 %v4712
      %4857 = vmatpush.msra.mxu0 %v4709
      %4858 = vmatpush.msra.mxu0 %v4706
      %4859 = vmatpush.msra.mxu0 %v4703
      %4860 = vmatpush.msra.mxu0 %v4700
      %4861 = vmatpush.msra.mxu0 %v4697
      %4862 = vmatpush.msra.mxu0 %v4694
      %4863 = vmatpush.msra.mxu0 %v4691
      %4864 = vmatpush.msra.mxu0 %v4688
      %4865 = vmatpush.msra.mxu0 %v4685
      %4866 = vmatpush.msra.mxu0 %v4682
      %4867 = vmatpush.msra.mxu0 %v4679
      %4868 = vmatpush.msra.mxu0 %v4676
      %4869 = vmatpush.msra.mxu0 %v4673
      %4870 = vmatpush.msra.mxu0 %v4670
      %4871 = vmatmul.f32.gmra.mxu0 %v4653
      %v4872 = vpop.f32.mrf.mxu0
      %v4873 = vadd.f32 %v4768, %v4872
      %4874 = vmatmul.f32.gmra.mxu0 %v4655
      %v4875 = vpop.f32.mrf.mxu0
      %v4876 = vadd.f32 %v4768, %v4875
      %4877 = vmatmul.f32.gmra.mxu0 %v4657
      %v4878 = vpop.f32.mrf.mxu0
      %v4879 = vadd.f32 %v4768, %v4878
      %4880 = vmatmul.f32.gmra.mxu0 %v4659
      %v4881 = vpop.f32.mrf.mxu0
      %v4882 = vadd.f32 %v4768, %v4881
      %4883 = vmatmul.f32.gmra.mxu0 %v4661
      %v4884 = vpop.f32.mrf.mxu0
      %v4885 = vadd.f32 %v4768, %v4884
      %4886 = vmatmul.f32.gmra.mxu0 %v4663
      %v4887 = vpop.f32.mrf.mxu0
      %v4888 = vadd.f32 %v4768, %v4887
      %4889 = vmatmul.f32.gmra.mxu0 %v4665
      %v4890 = vpop.f32.mrf.mxu0
      %v4891 = vadd.f32 %v4768, %v4890
      %4892 = vmatmul.f32.gmra.mxu0 %v4667
      %v4893 = vpop.f32.mrf.mxu0
      %v4894 = vadd.f32 %v4768, %v4893
      %4895 = vdwg.mxu0
      %4896 = vmatpush.msra.mxu0 %v4763
      %4897 = vmatpush.msra.mxu0 %v4760
      %4898 = vmatpush.msra.mxu0 %v4757
      %4899 = vmatpush.msra.mxu0 %v4754
      %4900 = vmatpush.msra.mxu0 %v4751
      %4901 = vmatpush.msra.mxu0 %v4748
      %4902 = vmatpush.msra.mxu0 %v4745
      %4903 = vmatpush.msra.mxu0 %v4742
      %4904 = vmatpush.msra.mxu0 %v4739
      %4905 = vmatpush.msra.mxu0 %v4736
      %4906 = vmatpush.msra.mxu0 %v4733
      %4907 = vmatpush.msra.mxu0 %v4730
      %4908 = vmatpush.msra.mxu0 %v4727
      %4909 = vmatpush.msra.mxu0 %v4724
      %4910 = vmatpush.msra.mxu0 %v4721
      %4911 = vmatpush.msra.mxu0 %v4718
      %4912 = vmatmul.f32.gmra.mxu0 %v4654
      %v4913 = vpop.f32.mrf.mxu0
      %v4914 = vadd.f32 %v4873, %v4913
      %4915 = vmatmul.f32.gmra.mxu0 %v4656
      %v4916 = vpop.f32.mrf.mxu0
      %v4917 = vadd.f32 %v4876, %v4916
      %4918 = vmatmul.f32.gmra.mxu0 %v4658
      %v4919 = vpop.f32.mrf.mxu0
      %v4920 = vadd.f32 %v4879, %v4919
      %4921 = vmatmul.f32.gmra.mxu0 %v4660
      %v4922 = vpop.f32.mrf.mxu0
      %v4923 = vadd.f32 %v4882, %v4922
      %4924 = vmatmul.f32.gmra.mxu0 %v4662
      %v4925 = vpop.f32.mrf.mxu0
      %v4926 = vadd.f32 %v4885, %v4925
      %4927 = vmatmul.f32.gmra.mxu0 %v4664
      %v4928 = vpop.f32.mrf.mxu0
      %v4929 = vadd.f32 %v4888, %v4928
      %4930 = vmatmul.f32.gmra.mxu0 %v4666
      %v4931 = vpop.f32.mrf.mxu0
      %v4932 = vadd.f32 %v4891, %v4931
      %4933 = vmatmul.f32.gmra.mxu0 %v4668
      %v4934 = vpop.f32.mrf.mxu0
      %v4935 = vadd.f32 %v4894, %v4934
      %4936 = vdwg.mxu0
      %4937 = vmatpush.msra.mxu0 %v4716
      %4938 = vmatpush.msra.mxu0 %v4713
      %4939 = vmatpush.msra.mxu0 %v4710
      %4940 = vmatpush.msra.mxu0 %v4707
      %4941 = vmatpush.msra.mxu0 %v4704
      %4942 = vmatpush.msra.mxu0 %v4701
      %4943 = vmatpush.msra.mxu0 %v4698
      %4944 = vmatpush.msra.mxu0 %v4695
      %4945 = vmatpush.msra.mxu0 %v4692
      %4946 = vmatpush.msra.mxu0 %v4689
      %4947 = vmatpush.msra.mxu0 %v4686
      %4948 = vmatpush.msra.mxu0 %v4683
      %4949 = vmatpush.msra.mxu0 %v4680
      %4950 = vmatpush.msra.mxu0 %v4677
      %4951 = vmatpush.msra.mxu0 %v4674
      %4952 = vmatpush.msra.mxu0 %v4671
      %4953 = vmatmul.f32.gmra.mxu0 %v4653
      %v4954 = vpop.f32.mrf.mxu0
      %v4955 = vadd.f32 %v4769, %v4954
      %4956 = vmatmul.f32.gmra.mxu0 %v4655
      %v4957 = vpop.f32.mrf.mxu0
      %v4958 = vadd.f32 %v4769, %v4957
      %4959 = vmatmul.f32.gmra.mxu0 %v4657
      %v4960 = vpop.f32.mrf.mxu0
      %v4961 = vadd.f32 %v4769, %v4960
      %4962 = vmatmul.f32.gmra.mxu0 %v4659
      %v4963 = vpop.f32.mrf.mxu0
      %v4964 = vadd.f32 %v4769, %v4963
      %4965 = vmatmul.f32.gmra.mxu0 %v4661
      %v4966 = vpop.f32.mrf.mxu0
      %v4967 = vadd.f32 %v4769, %v4966
      %4968 = vmatmul.f32.gmra.mxu0 %v4663
      %v4969 = vpop.f32.mrf.mxu0
      %v4970 = vadd.f32 %v4769, %v4969
      %4971 = vmatmul.f32.gmra.mxu0 %v4665
      %v4972 = vpop.f32.mrf.mxu0
      %v4973 = vadd.f32 %v4769, %v4972
      %4974 = vmatmul.f32.gmra.mxu0 %v4667
      %v4975 = vpop.f32.mrf.mxu0
      %v4976 = vadd.f32 %v4769, %v4975
      %4977 = vdwg.mxu0
      %4978 = vmatpush.msra.mxu0 %v4764
      %4979 = vmatpush.msra.mxu0 %v4761
      %4980 = vmatpush.msra.mxu0 %v4758
      %4981 = vmatpush.msra.mxu0 %v4755
      %4982 = vmatpush.msra.mxu0 %v4752
      %4983 = vmatpush.msra.mxu0 %v4749
      %4984 = vmatpush.msra.mxu0 %v4746
      %4985 = vmatpush.msra.mxu0 %v4743
      %4986 = vmatpush.msra.mxu0 %v4740
      %4987 = vmatpush.msra.mxu0 %v4737
      %4988 = vmatpush.msra.mxu0 %v4734
      %4989 = vmatpush.msra.mxu0 %v4731
      %4990 = vmatpush.msra.mxu0 %v4728
      %4991 = vmatpush.msra.mxu0 %v4725
      %4992 = vmatpush.msra.mxu0 %v4722
      %4993 = vmatpush.msra.mxu0 %v4719
      %4994 = vmatmul.f32.gmra.mxu0 %v4654
      %v4995 = vpop.f32.mrf.mxu0
      %v4996 = vadd.f32 %v4955, %v4995
      %4997 = vmatmul.f32.gmra.mxu0 %v4656
      %v4998 = vpop.f32.mrf.mxu0
      %v4999 = vadd.f32 %v4958, %v4998
      %5000 = vmatmul.f32.gmra.mxu0 %v4658
      %v5001 = vpop.f32.mrf.mxu0
      %v5002 = vadd.f32 %v4961, %v5001
      %5003 = vmatmul.f32.gmra.mxu0 %v4660
      %v5004 = vpop.f32.mrf.mxu0
      %v5005 = vadd.f32 %v4964, %v5004
      %5006 = vmatmul.f32.gmra.mxu0 %v4662
      %v5007 = vpop.f32.mrf.mxu0
      %v5008 = vadd.f32 %v4967, %v5007
      %5009 = vmatmul.f32.gmra.mxu0 %v4664
      %v5010 = vpop.f32.mrf.mxu0
      %v5011 = vadd.f32 %v4970, %v5010
      %5012 = vmatmul.f32.gmra.mxu0 %v4666
      %v5013 = vpop.f32.mrf.mxu0
      %v5014 = vadd.f32 %v4973, %v5013
      %5015 = vmatmul.f32.gmra.mxu0 %v4668
      %v5016 = vpop.f32.mrf.mxu0
      %v5017 = vadd.f32 %v4976, %v5016
      %5018 = vdwg.mxu0
      %5019 = vst [vmem:[#allocation12] sm:$0xff] %v4832
      %5020 = vst [vmem:[#allocation12 + $0x8] sm:$0xff] %v4914
      %5021 = vst [vmem:[#allocation12 + $0x10] sm:$0xff] %v4996
      %5022 = vst [vmem:[#allocation12 + $0x18] sm:$0xff] %v4835
      %5023 = vst [vmem:[#allocation12 + $0x20] sm:$0xff] %v4917
      %5024 = vst [vmem:[#allocation12 + $0x28] sm:$0xff] %v4999
      %5025 = vst [vmem:[#allocation12 + $0x30] sm:$0xff] %v4838
      %5026 = vst [vmem:[#allocation12 + $0x38] sm:$0xff] %v4920
      %5027 = vst [vmem:[#allocation12 + $0x40] sm:$0xff] %v5002
      %5028 = vst [vmem:[#allocation12 + $0x48] sm:$0xff] %v4841
      %5029 = vst [vmem:[#allocation12 + $0x50] sm:$0xff] %v4923
      %5030 = vst [vmem:[#allocation12 + $0x58] sm:$0xff] %v5005
      %5031 = vst [vmem:[#allocation12 + $0x60] sm:$0xff] %v4844
      %5032 = vst [vmem:[#allocation12 + $0x68] sm:$0xff] %v4926
      %5033 = vst [vmem:[#allocation12 + $0x70] sm:$0xff] %v5008
      %5034 = vst [vmem:[#allocation12 + $0x78] sm:$0xff] %v4847
      %5035 = vst [vmem:[#allocation12 + $0x80] sm:$0xff] %v4929
      %5036 = vst [vmem:[#allocation12 + $0x88] sm:$0xff] %v5011
      %5037 = vst [vmem:[#allocation12 + $0x90] sm:$0xff] %v4850
      %5038 = vst [vmem:[#allocation12 + $0x98] sm:$0xff] %v4932
      %5039 = vst [vmem:[#allocation12 + $0xa0] sm:$0xff] %v5014
      %5040 = vst [vmem:[#allocation12 + $0xa8] sm:$0xff] %v4853
      %5041 = vst [vmem:[#allocation12 + $0xb0] sm:$0xff] %v4935
      %5042 = vst [vmem:[#allocation12 + $0xb8] sm:$0xff] %v5017
      %v5043 = vld [vmem:[#allocation8] sm:$0xff]
      %v5044 = vld [vmem:[#allocation8 + $0x8] sm:$0xff]
      %v5045 = vld [vmem:[#allocation8 + $0x10] sm:$0xff]
      %v5046 = vld [vmem:[#allocation8 + $0x18] sm:$0xff]
      %v5047 = vld [vmem:[#allocation8 + $0x20] sm:$0xff]
      %v5048 = vld [vmem:[#allocation8 + $0x28] sm:$0xff]
      %v5049 = vld [vmem:[#allocation8 + $0x30] sm:$0xff]
      %v5050 = vld [vmem:[#allocation8 + $0x38] sm:$0xff]
      %v5051 = vld [vmem:[#allocation8 + $0x40] sm:$0xff]
      %v5052 = vld [vmem:[#allocation8 + $0x48] sm:$0xff]
      %v5053 = vld [vmem:[#allocation8 + $0x50] sm:$0xff]
      %v5054 = vld [vmem:[#allocation8 + $0x58] sm:$0xff]
      %v5055 = vld [vmem:[#allocation8 + $0x60] sm:$0xff]
      %v5056 = vld [vmem:[#allocation8 + $0x68] sm:$0xff]
      %v5057 = vld [vmem:[#allocation8 + $0x70] sm:$0xff]
      %v5058 = vld [vmem:[#allocation8 + $0x78] sm:$0xff]
      %v5059 = vld [vmem:[#allocation8 + $0x80] sm:$0xff]
      %v5060 = vld [vmem:[#allocation8 + $0x88] sm:$0xff]
      %v5061 = vld [vmem:[#allocation8 + $0x90] sm:$0xff]
      %v5062 = vld [vmem:[#allocation8 + $0x98] sm:$0xff]
      %v5063 = vld [vmem:[#allocation8 + $0xa0] sm:$0xff]
      %v5064 = vld [vmem:[#allocation8 + $0xa8] sm:$0xff]
      %v5065 = vld [vmem:[#allocation8 + $0xb0] sm:$0xff]
      %v5066 = vld [vmem:[#allocation8 + $0xb8] sm:$0xff]
      %v5067 = vld [vmem:[#allocation8 + $0xc0] sm:$0xff]
      %v5068 = vld [vmem:[#allocation8 + $0xc8] sm:$0xff]
      %v5069 = vld [vmem:[#allocation8 + $0xd0] sm:$0xff]
      %v5070 = vld [vmem:[#allocation8 + $0xd8] sm:$0xff]
      %v5071 = vld [vmem:[#allocation8 + $0xe0] sm:$0xff]
      %v5072 = vld [vmem:[#allocation8 + $0xe8] sm:$0xff]
      %v5073 = vld [vmem:[#allocation8 + $0xf0] sm:$0xff]
      %v5074 = vld [vmem:[#allocation8 + $0xf8] sm:$0xff]
      %v5075 = vld [vmem:[#allocation8 + $0x100] sm:$0xff]
      %v5076 = vld [vmem:[#allocation8 + $0x108] sm:$0xff]
      %v5077 = vld [vmem:[#allocation8 + $0x110] sm:$0xff]
      %v5078 = vld [vmem:[#allocation8 + $0x118] sm:$0xff]
      %v5079 = vld [vmem:[#allocation8 + $0x120] sm:$0xff]
      %v5080 = vld [vmem:[#allocation8 + $0x128] sm:$0xff]
      %v5081 = vld [vmem:[#allocation8 + $0x130] sm:$0xff]
      %v5082 = vld [vmem:[#allocation8 + $0x138] sm:$0xff]
      %v5083 = vld [vmem:[#allocation8 + $0x140] sm:$0xff]
      %v5084 = vld [vmem:[#allocation8 + $0x148] sm:$0xff]
      %v5085 = vld [vmem:[#allocation8 + $0x150] sm:$0xff]
      %v5086 = vld [vmem:[#allocation8 + $0x158] sm:$0xff]
      %v5087 = vld [vmem:[#allocation8 + $0x160] sm:$0xff]
      %v5088 = vld [vmem:[#allocation8 + $0x168] sm:$0xff]
      %v5089 = vld [vmem:[#allocation8 + $0x170] sm:$0xff]
      %v5090 = vld [vmem:[#allocation8 + $0x178] sm:$0xff]
      %v5091 = vld [vmem:[#allocation8 + $0x180] sm:$0xff]
      %v5092 = vld [vmem:[#allocation8 + $0x188] sm:$0xff]
      %v5093 = vld [vmem:[#allocation8 + $0x190] sm:$0xff]
      %v5094 = vld [vmem:[#allocation8 + $0x198] sm:$0xff]
      %v5095 = vld [vmem:[#allocation8 + $0x1a0] sm:$0xff]
      %v5096 = vld [vmem:[#allocation8 + $0x1a8] sm:$0xff]
      %v5097 = vld [vmem:[#allocation8 + $0x1b0] sm:$0xff]
      %v5098 = vld [vmem:[#allocation8 + $0x1b8] sm:$0xff]
      %v5099 = vld [vmem:[#allocation8 + $0x1c0] sm:$0xff]
      %v5100 = vld [vmem:[#allocation8 + $0x1c8] sm:$0xff]
      %v5101 = vld [vmem:[#allocation8 + $0x1d0] sm:$0xff]
      %v5102 = vld [vmem:[#allocation8 + $0x1d8] sm:$0xff]
      %v5103 = vld [vmem:[#allocation8 + $0x1e0] sm:$0xff]
      %v5104 = vld [vmem:[#allocation8 + $0x1e8] sm:$0xff]
      %v5105 = vld [vmem:[#allocation8 + $0x1f0] sm:$0xff]
      %v5106 = vld [vmem:[#allocation8 + $0x1f8] sm:$0xff]
      %v5107 = vld [vmem:[#allocation8 + $0x200] sm:$0xff]
      %v5108 = vld [vmem:[#allocation8 + $0x208] sm:$0xff]
      %v5109 = vld [vmem:[#allocation8 + $0x210] sm:$0xff]
      %v5110 = vld [vmem:[#allocation8 + $0x218] sm:$0xff]
      %v5111 = vld [vmem:[#allocation8 + $0x220] sm:$0xff]
      %v5112 = vld [vmem:[#allocation8 + $0x228] sm:$0xff]
      %v5113 = vld [vmem:[#allocation8 + $0x230] sm:$0xff]
      %v5114 = vld [vmem:[#allocation8 + $0x238] sm:$0xff]
      %v5115 = vld [vmem:[#allocation8 + $0x240] sm:$0xff]
      %v5116 = vld [vmem:[#allocation8 + $0x248] sm:$0xff]
      %v5117 = vld [vmem:[#allocation8 + $0x250] sm:$0xff]
      %v5118 = vld [vmem:[#allocation8 + $0x258] sm:$0xff]
      %v5119 = vld [vmem:[#allocation8 + $0x260] sm:$0xff]
      %v5120 = vld [vmem:[#allocation8 + $0x268] sm:$0xff]
      %v5121 = vld [vmem:[#allocation8 + $0x270] sm:$0xff]
      %v5122 = vld [vmem:[#allocation8 + $0x278] sm:$0xff]
      %v5123 = vld [vmem:[#allocation8 + $0x280] sm:$0xff]
      %v5124 = vld [vmem:[#allocation8 + $0x288] sm:$0xff]
      %v5125 = vld [vmem:[#allocation8 + $0x290] sm:$0xff]
      %v5126 = vld [vmem:[#allocation8 + $0x298] sm:$0xff]
      %v5127 = vld [vmem:[#allocation8 + $0x2a0] sm:$0xff]
      %v5128 = vld [vmem:[#allocation8 + $0x2a8] sm:$0xff]
      %v5129 = vld [vmem:[#allocation8 + $0x2b0] sm:$0xff]
      %v5130 = vld [vmem:[#allocation8 + $0x2b8] sm:$0xff]
      %v5131 = vld [vmem:[#allocation8 + $0x2c0] sm:$0xff]
      %v5132 = vld [vmem:[#allocation8 + $0x2c8] sm:$0xff]
      %v5133 = vld [vmem:[#allocation8 + $0x2d0] sm:$0xff]
      %v5134 = vld [vmem:[#allocation8 + $0x2d8] sm:$0xff]
      %v5135 = vld [vmem:[#allocation8 + $0x2e0] sm:$0xff]
      %v5136 = vld [vmem:[#allocation8 + $0x2e8] sm:$0xff]
      %v5137 = vld [vmem:[#allocation8 + $0x2f0] sm:$0xff]
      %v5138 = vld [vmem:[#allocation8 + $0x2f8] sm:$0xff]
      %v5139 = vld [vmem:[%s9] sm:$0x7]
      %v5141 = vperm.slane %v5139, 0
      %v5142 = vperm.slane %v5139, 1
      %v5143 = vperm.slane %v5139, 2
      %5147 = vmatpush.msra.mxu0 %v5088
      %5148 = vmatpush.msra.mxu0 %v5085
      %5149 = vmatpush.msra.mxu0 %v5082
      %5150 = vmatpush.msra.mxu0 %v5079
      %5151 = vmatpush.msra.mxu0 %v5076
      %5152 = vmatpush.msra.mxu0 %v5073
      %5153 = vmatpush.msra.mxu0 %v5070
      %5154 = vmatpush.msra.mxu0 %v5067
      %5155 = vmatpush.msra.mxu0 %v5064
      %5156 = vmatpush.msra.mxu0 %v5061
      %5157 = vmatpush.msra.mxu0 %v5058
      %5158 = vmatpush.msra.mxu0 %v5055
      %5159 = vmatpush.msra.mxu0 %v5052
      %5160 = vmatpush.msra.mxu0 %v5049
      %5161 = vmatpush.msra.mxu0 %v5046
      %5162 = vmatpush.msra.mxu0 %v5043
      %5163 = vmatmul.f32.gmra.mxu0 %v4653
      %v5164 = vpop.f32.mrf.mxu0
      %v5165 = vadd.f32 %v5141, %v5164
      %5166 = vmatmul.f32.gmra.mxu0 %v4655
      %v5167 = vpop.f32.mrf.mxu0
      %v5168 = vadd.f32 %v5141, %v5167
      %5169 = vmatmul.f32.gmra.mxu0 %v4657
      %v5170 = vpop.f32.mrf.mxu0
      %v5171 = vadd.f32 %v5141, %v5170
      %5172 = vmatmul.f32.gmra.mxu0 %v4659
      %v5173 = vpop.f32.mrf.mxu0
      %v5174 = vadd.f32 %v5141, %v5173
      %5175 = vmatmul.f32.gmra.mxu0 %v4661
      %v5176 = vpop.f32.mrf.mxu0
      %v5177 = vadd.f32 %v5141, %v5176
      %5178 = vmatmul.f32.gmra.mxu0 %v4663
      %v5179 = vpop.f32.mrf.mxu0
      %v5180 = vadd.f32 %v5141, %v5179
      %5181 = vmatmul.f32.gmra.mxu0 %v4665
      %v5182 = vpop.f32.mrf.mxu0
      %v5183 = vadd.f32 %v5141, %v5182
      %5184 = vmatmul.f32.gmra.mxu0 %v4667
      %v5185 = vpop.f32.mrf.mxu0
      %v5186 = vadd.f32 %v5141, %v5185
      %5187 = vdwg.mxu0
      %5188 = vmatpush.msra.mxu0 %v5136
      %5189 = vmatpush.msra.mxu0 %v5133
      %5190 = vmatpush.msra.mxu0 %v5130
      %5191 = vmatpush.msra.mxu0 %v5127
      %5192 = vmatpush.msra.mxu0 %v5124
      %5193 = vmatpush.msra.mxu0 %v5121
      %5194 = vmatpush.msra.mxu0 %v5118
      %5195 = vmatpush.msra.mxu0 %v5115
      %5196 = vmatpush.msra.mxu0 %v5112
      %5197 = vmatpush.msra.mxu0 %v5109
      %5198 = vmatpush.msra.mxu0 %v5106
      %5199 = vmatpush.msra.mxu0 %v5103
      %5200 = vmatpush.msra.mxu0 %v5100
      %5201 = vmatpush.msra.mxu0 %v5097
      %5202 = vmatpush.msra.mxu0 %v5094
      %5203 = vmatpush.msra.mxu0 %v5091
      %5204 = vmatmul.f32.gmra.mxu0 %v4654
      %v5205 = vpop.f32.mrf.mxu0
      %v5206 = vadd.f32 %v5165, %v5205
      %5207 = vmatmul.f32.gmra.mxu0 %v4656
      %v5208 = vpop.f32.mrf.mxu0
      %v5209 = vadd.f32 %v5168, %v5208
      %5210 = vmatmul.f32.gmra.mxu0 %v4658
      %v5211 = vpop.f32.mrf.mxu0
      %v5212 = vadd.f32 %v5171, %v5211
      %5213 = vmatmul.f32.gmra.mxu0 %v4660
      %v5214 = vpop.f32.mrf.mxu0
      %v5215 = vadd.f32 %v5174, %v5214
      %5216 = vmatmul.f32.gmra.mxu0 %v4662
      %v5217 = vpop.f32.mrf.mxu0
      %v5218 = vadd.f32 %v5177, %v5217
      %5219 = vmatmul.f32.gmra.mxu0 %v4664
      %v5220 = vpop.f32.mrf.mxu0
      %v5221 = vadd.f32 %v5180, %v5220
      %5222 = vmatmul.f32.gmra.mxu0 %v4666
      %v5223 = vpop.f32.mrf.mxu0
      %v5224 = vadd.f32 %v5183, %v5223
      %5225 = vmatmul.f32.gmra.mxu0 %v4668
      %v5226 = vpop.f32.mrf.mxu0
      %v5227 = vadd.f32 %v5186, %v5226
      %5228 = vdwg.mxu0
      %5229 = vmatpush.msra.mxu0 %v5089
      %5230 = vmatpush.msra.mxu0 %v5086
      %5231 = vmatpush.msra.mxu0 %v5083
      %5232 = vmatpush.msra.mxu0 %v5080
      %5233 = vmatpush.msra.mxu0 %v5077
      %5234 = vmatpush.msra.mxu0 %v5074
      %5235 = vmatpush.msra.mxu0 %v5071
      %5236 = vmatpush.msra.mxu0 %v5068
      %5237 = vmatpush.msra.mxu0 %v5065
      %5238 = vmatpush.msra.mxu0 %v5062
      %5239 = vmatpush.msra.mxu0 %v5059
      %5240 = vmatpush.msra.mxu0 %v5056
      %5241 = vmatpush.msra.mxu0 %v5053
      %5242 = vmatpush.msra.mxu0 %v5050
      %5243 = vmatpush.msra.mxu0 %v5047
      %5244 = vmatpush.msra.mxu0 %v5044
      %5245 = vmatmul.f32.gmra.mxu0 %v4653
      %v5246 = vpop.f32.mrf.mxu0
      %v5247 = vadd.f32 %v5142, %v5246
      %5248 = vmatmul.f32.gmra.mxu0 %v4655
      %v5249 = vpop.f32.mrf.mxu0
      %v5250 = vadd.f32 %v5142, %v5249
      %5251 = vmatmul.f32.gmra.mxu0 %v4657
      %v5252 = vpop.f32.mrf.mxu0
      %v5253 = vadd.f32 %v5142, %v5252
      %5254 = vmatmul.f32.gmra.mxu0 %v4659
      %v5255 = vpop.f32.mrf.mxu0
      %v5256 = vadd.f32 %v5142, %v5255
      %5257 = vmatmul.f32.gmra.mxu0 %v4661
      %v5258 = vpop.f32.mrf.mxu0
      %v5259 = vadd.f32 %v5142, %v5258
      %5260 = vmatmul.f32.gmra.mxu0 %v4663
      %v5261 = vpop.f32.mrf.mxu0
      %v5262 = vadd.f32 %v5142, %v5261
      %5263 = vmatmul.f32.gmra.mxu0 %v4665
      %v5264 = vpop.f32.mrf.mxu0
      %v5265 = vadd.f32 %v5142, %v5264
      %5266 = vmatmul.f32.gmra.mxu0 %v4667
      %v5267 = vpop.f32.mrf.mxu0
      %v5268 = vadd.f32 %v5142, %v5267
      %5269 = vdwg.mxu0
      %5270 = vmatpush.msra.mxu0 %v5137
      %5271 = vmatpush.msra.mxu0 %v5134
      %5272 = vmatpush.msra.mxu0 %v5131
      %5273 = vmatpush.msra.mxu0 %v5128
      %5274 = vmatpush.msra.mxu0 %v5125
      %5275 = vmatpush.msra.mxu0 %v5122
      %5276 = vmatpush.msra.mxu0 %v5119
      %5277 = vmatpush.msra.mxu0 %v5116
      %5278 = vmatpush.msra.mxu0 %v5113
      %5279 = vmatpush.msra.mxu0 %v5110
      %5280 = vmatpush.msra.mxu0 %v5107
      %5281 = vmatpush.msra.mxu0 %v5104
      %5282 = vmatpush.msra.mxu0 %v5101
      %5283 = vmatpush.msra.mxu0 %v5098
      %5284 = vmatpush.msra.mxu0 %v5095
      %5285 = vmatpush.msra.mxu0 %v5092
      %5286 = vmatmul.f32.gmra.mxu0 %v4654
      %v5287 = vpop.f32.mrf.mxu0
      %v5288 = vadd.f32 %v5247, %v5287
      %5289 = vmatmul.f32.gmra.mxu0 %v4656
      %v5290 = vpop.f32.mrf.mxu0
      %v5291 = vadd.f32 %v5250, %v5290
      %5292 = vmatmul.f32.gmra.mxu0 %v4658
      %v5293 = vpop.f32.mrf.mxu0
      %v5294 = vadd.f32 %v5253, %v5293
      %5295 = vmatmul.f32.gmra.mxu0 %v4660
      %v5296 = vpop.f32.mrf.mxu0
      %v5297 = vadd.f32 %v5256, %v5296
      %5298 = vmatmul.f32.gmra.mxu0 %v4662
      %v5299 = vpop.f32.mrf.mxu0
      %v5300 = vadd.f32 %v5259, %v5299
      %5301 = vmatmul.f32.gmra.mxu0 %v4664
      %v5302 = vpop.f32.mrf.mxu0
      %v5303 = vadd.f32 %v5262, %v5302
      %5304 = vmatmul.f32.gmra.mxu0 %v4666
      %v5305 = vpop.f32.mrf.mxu0
      %v5306 = vadd.f32 %v5265, %v5305
      %5307 = vmatmul.f32.gmra.mxu0 %v4668
      %v5308 = vpop.f32.mrf.mxu0
      %v5309 = vadd.f32 %v5268, %v5308
      %5310 = vdwg.mxu0
      %5311 = vmatpush.msra.mxu0 %v5090
      %5312 = vmatpush.msra.mxu0 %v5087
      %5313 = vmatpush.msra.mxu0 %v5084
      %5314 = vmatpush.msra.mxu0 %v5081
      %5315 = vmatpush.msra.mxu0 %v5078
      %5316 = vmatpush.msra.mxu0 %v5075
      %5317 = vmatpush.msra.mxu0 %v5072
      %5318 = vmatpush.msra.mxu0 %v5069
      %5319 = vmatpush.msra.mxu0 %v5066
      %5320 = vmatpush.msra.mxu0 %v5063
      %5321 = vmatpush.msra.mxu0 %v5060
      %5322 = vmatpush.msra.mxu0 %v5057
      %5323 = vmatpush.msra.mxu0 %v5054
      %5324 = vmatpush.msra.mxu0 %v5051
      %5325 = vmatpush.msra.mxu0 %v5048
      %5326 = vmatpush.msra.mxu0 %v5045
      %5327 = vmatmul.f32.gmra.mxu0 %v4653
      %v5328 = vpop.f32.mrf.mxu0
      %v5329 = vadd.f32 %v5143, %v5328
      %5330 = vmatmul.f32.gmra.mxu0 %v4655
      %v5331 = vpop.f32.mrf.mxu0
      %v5332 = vadd.f32 %v5143, %v5331
      %5333 = vmatmul.f32.gmra.mxu0 %v4657
      %v5334 = vpop.f32.mrf.mxu0
      %v5335 = vadd.f32 %v5143, %v5334
      %5336 = vmatmul.f32.gmra.mxu0 %v4659
      %v5337 = vpop.f32.mrf.mxu0
      %v5338 = vadd.f32 %v5143, %v5337
      %5339 = vmatmul.f32.gmra.mxu0 %v4661
      %v5340 = vpop.f32.mrf.mxu0
      %v5341 = vadd.f32 %v5143, %v5340
      %5342 = vmatmul.f32.gmra.mxu0 %v4663
      %v5343 = vpop.f32.mrf.mxu0
      %v5344 = vadd.f32 %v5143, %v5343
      %5345 = vmatmul.f32.gmra.mxu0 %v4665
      %v5346 = vpop.f32.mrf.mxu0
      %v5347 = vadd.f32 %v5143, %v5346
      %5348 = vmatmul.f32.gmra.mxu0 %v4667
      %v5349 = vpop.f32.mrf.mxu0
      %v5350 = vadd.f32 %v5143, %v5349
      %5351 = vdwg.mxu0
      %5352 = vmatpush.msra.mxu0 %v5138
      %5353 = vmatpush.msra.mxu0 %v5135
      %5354 = vmatpush.msra.mxu0 %v5132
      %5355 = vmatpush.msra.mxu0 %v5129
      %5356 = vmatpush.msra.mxu0 %v5126
      %5357 = vmatpush.msra.mxu0 %v5123
      %5358 = vmatpush.msra.mxu0 %v5120
      %5359 = vmatpush.msra.mxu0 %v5117
      %5360 = vmatpush.msra.mxu0 %v5114
      %5361 = vmatpush.msra.mxu0 %v5111
      %5362 = vmatpush.msra.mxu0 %v5108
      %5363 = vmatpush.msra.mxu0 %v5105
      %5364 = vmatpush.msra.mxu0 %v5102
      %5365 = vmatpush.msra.mxu0 %v5099
      %5366 = vmatpush.msra.mxu0 %v5096
      %5367 = vmatpush.msra.mxu0 %v5093
      %5368 = vmatmul.f32.gmra.mxu0 %v4654
      %v5369 = vpop.f32.mrf.mxu0
      %v5370 = vadd.f32 %v5329, %v5369
      %5371 = vmatmul.f32.gmra.mxu0 %v4656
      %v5372 = vpop.f32.mrf.mxu0
      %v5373 = vadd.f32 %v5332, %v5372
      %5374 = vmatmul.f32.gmra.mxu0 %v4658
      %v5375 = vpop.f32.mrf.mxu0
      %v5376 = vadd.f32 %v5335, %v5375
      %5377 = vmatmul.f32.gmra.mxu0 %v4660
      %v5378 = vpop.f32.mrf.mxu0
      %v5379 = vadd.f32 %v5338, %v5378
      %5380 = vmatmul.f32.gmra.mxu0 %v4662
      %v5381 = vpop.f32.mrf.mxu0
      %v5382 = vadd.f32 %v5341, %v5381
      %5383 = vmatmul.f32.gmra.mxu0 %v4664
      %v5384 = vpop.f32.mrf.mxu0
      %v5385 = vadd.f32 %v5344, %v5384
      %5386 = vmatmul.f32.gmra.mxu0 %v4666
      %v5387 = vpop.f32.mrf.mxu0
      %v5388 = vadd.f32 %v5347, %v5387
      %5389 = vmatmul.f32.gmra.mxu0 %v4668
      %v5390 = vpop.f32.mrf.mxu0
      %v5391 = vadd.f32 %v5350, %v5390
      %5392 = vdwg.mxu0
      %5393 = vst [vmem:[#allocation13] sm:$0xff] %v5206
      %5394 = vst [vmem:[#allocation13 + $0x8] sm:$0xff] %v5288
      %5395 = vst [vmem:[#allocation13 + $0x10] sm:$0xff] %v5370
      %5396 = vst [vmem:[#allocation13 + $0x18] sm:$0xff] %v5209
      %5397 = vst [vmem:[#allocation13 + $0x20] sm:$0xff] %v5291
      %5398 = vst [vmem:[#allocation13 + $0x28] sm:$0xff] %v5373
      %5399 = vst [vmem:[#allocation13 + $0x30] sm:$0xff] %v5212
      %5400 = vst [vmem:[#allocation13 + $0x38] sm:$0xff] %v5294
      %5401 = vst [vmem:[#allocation13 + $0x40] sm:$0xff] %v5376
      %5402 = vst [vmem:[#allocation13 + $0x48] sm:$0xff] %v5215
      %5403 = vst [vmem:[#allocation13 + $0x50] sm:$0xff] %v5297
      %5404 = vst [vmem:[#allocation13 + $0x58] sm:$0xff] %v5379
      %5405 = vst [vmem:[#allocation13 + $0x60] sm:$0xff] %v5218
      %5406 = vst [vmem:[#allocation13 + $0x68] sm:$0xff] %v5300
      %5407 = vst [vmem:[#allocation13 + $0x70] sm:$0xff] %v5382
      %5408 = vst [vmem:[#allocation13 + $0x78] sm:$0xff] %v5221
      %5409 = vst [vmem:[#allocation13 + $0x80] sm:$0xff] %v5303
      %5410 = vst [vmem:[#allocation13 + $0x88] sm:$0xff] %v5385
      %5411 = vst [vmem:[#allocation13 + $0x90] sm:$0xff] %v5224
      %5412 = vst [vmem:[#allocation13 + $0x98] sm:$0xff] %v5306
      %5413 = vst [vmem:[#allocation13 + $0xa0] sm:$0xff] %v5388
      %5414 = vst [vmem:[#allocation13 + $0xa8] sm:$0xff] %v5227
      %5415 = vst [vmem:[#allocation13 + $0xb0] sm:$0xff] %v5309
      %5416 = vst [vmem:[#allocation13 + $0xb8] sm:$0xff] %v5391
      %v5417 = vld [vmem:[#allocation9] sm:$0xff]
      %v5418 = vld [vmem:[#allocation9 + $0x8] sm:$0xff]
      %v5419 = vld [vmem:[#allocation9 + $0x10] sm:$0xff]
      %v5420 = vld [vmem:[#allocation9 + $0x18] sm:$0xff]
      %v5421 = vld [vmem:[#allocation9 + $0x20] sm:$0xff]
      %v5422 = vld [vmem:[#allocation9 + $0x28] sm:$0xff]
      %v5423 = vld [vmem:[#allocation9 + $0x30] sm:$0xff]
      %v5424 = vld [vmem:[#allocation9 + $0x38] sm:$0xff]
      %v5425 = vld [vmem:[#allocation9 + $0x40] sm:$0xff]
      %v5426 = vld [vmem:[#allocation9 + $0x48] sm:$0xff]
      %v5427 = vld [vmem:[#allocation9 + $0x50] sm:$0xff]
      %v5428 = vld [vmem:[#allocation9 + $0x58] sm:$0xff]
      %v5429 = vld [vmem:[#allocation9 + $0x60] sm:$0xff]
      %v5430 = vld [vmem:[#allocation9 + $0x68] sm:$0xff]
      %v5431 = vld [vmem:[#allocation9 + $0x70] sm:$0xff]
      %v5432 = vld [vmem:[#allocation9 + $0x78] sm:$0xff]
      %v5433 = vld [vmem:[#allocation9 + $0x80] sm:$0xff]
      %v5434 = vld [vmem:[#allocation9 + $0x88] sm:$0xff]
      %v5435 = vld [vmem:[#allocation9 + $0x90] sm:$0xff]
      %v5436 = vld [vmem:[#allocation9 + $0x98] sm:$0xff]
      %v5437 = vld [vmem:[#allocation9 + $0xa0] sm:$0xff]
      %v5438 = vld [vmem:[#allocation9 + $0xa8] sm:$0xff]
      %v5439 = vld [vmem:[#allocation9 + $0xb0] sm:$0xff]
      %v5440 = vld [vmem:[#allocation9 + $0xb8] sm:$0xff]
      %v5441 = vld [vmem:[#allocation9 + $0xc0] sm:$0xff]
      %v5442 = vld [vmem:[#allocation9 + $0xc8] sm:$0xff]
      %v5443 = vld [vmem:[#allocation9 + $0xd0] sm:$0xff]
      %v5444 = vld [vmem:[#allocation9 + $0xd8] sm:$0xff]
      %v5445 = vld [vmem:[#allocation9 + $0xe0] sm:$0xff]
      %v5446 = vld [vmem:[#allocation9 + $0xe8] sm:$0xff]
      %v5447 = vld [vmem:[#allocation9 + $0xf0] sm:$0xff]
      %v5448 = vld [vmem:[#allocation9 + $0xf8] sm:$0xff]
      %v5449 = vld [vmem:[#allocation9 + $0x100] sm:$0xff]
      %v5450 = vld [vmem:[#allocation9 + $0x108] sm:$0xff]
      %v5451 = vld [vmem:[#allocation9 + $0x110] sm:$0xff]
      %v5452 = vld [vmem:[#allocation9 + $0x118] sm:$0xff]
      %v5453 = vld [vmem:[#allocation9 + $0x120] sm:$0xff]
      %v5454 = vld [vmem:[#allocation9 + $0x128] sm:$0xff]
      %v5455 = vld [vmem:[#allocation9 + $0x130] sm:$0xff]
      %v5456 = vld [vmem:[#allocation9 + $0x138] sm:$0xff]
      %v5457 = vld [vmem:[#allocation9 + $0x140] sm:$0xff]
      %v5458 = vld [vmem:[#allocation9 + $0x148] sm:$0xff]
      %v5459 = vld [vmem:[#allocation9 + $0x150] sm:$0xff]
      %v5460 = vld [vmem:[#allocation9 + $0x158] sm:$0xff]
      %v5461 = vld [vmem:[#allocation9 + $0x160] sm:$0xff]
      %v5462 = vld [vmem:[#allocation9 + $0x168] sm:$0xff]
      %v5463 = vld [vmem:[#allocation9 + $0x170] sm:$0xff]
      %v5464 = vld [vmem:[#allocation9 + $0x178] sm:$0xff]
      %v5465 = vld [vmem:[%s10] sm:$0x7]
      %s5466 = smul.u32 0, 3
      %s5467 = smul.addr %s5466, 8
      %s5468 = scalar_lea.vmem [#allocation12], %s5467
      %v5469 = vld [vmem:[%s5468] sm:$0xff]
      %v5470 = vld [vmem:[%s5468 + $0x8] sm:$0xff]
      %v5471 = vld [vmem:[%s5468 + $0x10] sm:$0xff]
      %s5472 = smul.u32 7, 3
      %s5473 = smul.addr %s5472, 8
      %s5474 = scalar_lea.vmem [#allocation13], %s5473
      %v5475 = vld [vmem:[%s5474] sm:$0xff]
      %v5476 = vld [vmem:[%s5474 + $0x8] sm:$0xff]
      %v5477 = vld [vmem:[%s5474 + $0x10] sm:$0xff]
      %v5478 = vadd.f32 %v5469, %v5475
      %v5479 = vadd.f32 %v5470, %v5476
      %v5480 = vadd.f32 %v5471, %v5477
      %v5482 = vperm.slane %v5465, 0
      %v5483 = vperm.slane %v5465, 1
      %v5484 = vperm.slane %v5465, 2
      %5488 = vmatpush.msra.mxu0 %v5462
      %5489 = vmatpush.msra.mxu0 %v5459
      %5490 = vmatpush.msra.mxu0 %v5456
      %5491 = vmatpush.msra.mxu0 %v5453
      %5492 = vmatpush.msra.mxu0 %v5450
      %5493 = vmatpush.msra.mxu0 %v5447
      %5494 = vmatpush.msra.mxu0 %v5444
      %5495 = vmatpush.msra.mxu0 %v5441
      %5496 = vmatpush.msra.mxu0 %v5438
      %5497 = vmatpush.msra.mxu0 %v5435
      %5498 = vmatpush.msra.mxu0 %v5432
      %5499 = vmatpush.msra.mxu0 %v5429
      %5500 = vmatpush.msra.mxu0 %v5426
      %5501 = vmatpush.msra.mxu0 %v5423
      %5502 = vmatpush.msra.mxu0 %v5420
      %5503 = vmatpush.msra.mxu0 %v5417
      %5504 = vmatmul.f32.gmra.mxu0 0.0
      %v5505 = vpop.f32.mrf.mxu0
      %v5506 = vadd.f32 %v5482, %v5505
      %5507 = vdwg.mxu0
      %5508 = vmatpush.msra.mxu0 %v5463
      %5509 = vmatpush.msra.mxu0 %v5460
      %5510 = vmatpush.msra.mxu0 %v5457
      %5511 = vmatpush.msra.mxu0 %v5454
      %5512 = vmatpush.msra.mxu0 %v5451
      %5513 = vmatpush.msra.mxu0 %v5448
      %5514 = vmatpush.msra.mxu0 %v5445
      %5515 = vmatpush.msra.mxu0 %v5442
      %5516 = vmatpush.msra.mxu0 %v5439
      %5517 = vmatpush.msra.mxu0 %v5436
      %5518 = vmatpush.msra.mxu0 %v5433
      %5519 = vmatpush.msra.mxu0 %v5430
      %5520 = vmatpush.msra.mxu0 %v5427
      %5521 = vmatpush.msra.mxu0 %v5424
      %5522 = vmatpush.msra.mxu0 %v5421
      %5523 = vmatpush.msra.mxu0 %v5418
      %5524 = vmatmul.f32.gmra.mxu0 0.0
      %v5525 = vpop.f32.mrf.mxu0
      %v5526 = vadd.f32 %v5483, %v5525
      %5527 = vdwg.mxu0
      %5528 = vmatpush.msra.mxu0 %v5464
      %5529 = vmatpush.msra.mxu0 %v5461
      %5530 = vmatpush.msra.mxu0 %v5458
      %5531 = vmatpush.msra.mxu0 %v5455
      %5532 = vmatpush.msra.mxu0 %v5452
      %5533 = vmatpush.msra.mxu0 %v5449
      %5534 = vmatpush.msra.mxu0 %v5446
      %5535 = vmatpush.msra.mxu0 %v5443
      %5536 = vmatpush.msra.mxu0 %v5440
      %5537 = vmatpush.msra.mxu0 %v5437
      %5538 = vmatpush.msra.mxu0 %v5434
      %5539 = vmatpush.msra.mxu0 %v5431
      %5540 = vmatpush.msra.mxu0 %v5428
      %5541 = vmatpush.msra.mxu0 %v5425
      %5542 = vmatpush.msra.mxu0 %v5422
      %5543 = vmatpush.msra.mxu0 %v5419
      %5544 = vmatmul.f32.gmra.mxu0 0.0
      %v5545 = vpop.f32.mrf.mxu0
      %v5546 = vadd.f32 %v5484, %v5545
      %5547 = vdwg.mxu0
      %v5548 = vadd.f32 %v5478, %v5506
      %v5549 = vxor.u32 %v5548, 2147483648
      %v5550 = vmul.f32 %v5549, 1.442695
      %v5551 = vpow.pop %v5550
      %v5552 = vadd.f32 %v5551, 1.0
      %v5553 = vrcp.pop %v5552
      %v5554 = vmul.f32 %v5552, %v5553
      %v5555 = vsub.f32 1.0, %v5554
      %v5556 = vmul.f32 %v5553, %v5555
      %v5557 = vadd.f32 %v5553, %v5556
      %vm5558 = vweird.f32 %v5552
      %vm5559 = vweird.f32 %v5553
      %vm5560 = vmor %vm5558, %vm5559
      %v5561 = vsel %vm5560, %v5553, %v5557
      %v5562 = vand.u32 2147483647, %v5552
      %vm5563 = vcmp.eq.f32.partialorder %v5562, 8.507059e+37
      %v5564 = vand.u32 %v5552, 2147483648
      %v5565 = vor.u32 1.1754944e-38, %v5564
      %v5566 = vsel %vm5563, %v5565, %v5561
      %v5567 = vmul.f32 1.0, %v5566
      %v5568 = vadd.f32 %v5479, %v5526
      %v5569 = vxor.u32 %v5568, 2147483648
      %v5570 = vmul.f32 %v5569, 1.442695
      %v5571 = vpow.pop %v5570
      %v5572 = vadd.f32 %v5571, 1.0
      %v5573 = vrcp.pop %v5572
      %v5574 = vmul.f32 %v5572, %v5573
      %v5575 = vsub.f32 1.0, %v5574
      %v5576 = vmul.f32 %v5573, %v5575
      %v5577 = vadd.f32 %v5573, %v5576
      %vm5578 = vweird.f32 %v5572
      %vm5579 = vweird.f32 %v5573
      %vm5580 = vmor %vm5578, %vm5579
      %v5581 = vsel %vm5580, %v5573, %v5577
      %v5582 = vand.u32 2147483647, %v5572
      %vm5583 = vcmp.eq.f32.partialorder %v5582, 8.507059e+37
      %v5584 = vand.u32 %v5572, 2147483648
      %v5585 = vor.u32 1.1754944e-38, %v5584
      %v5586 = vsel %vm5583, %v5585, %v5581
      %v5587 = vmul.f32 1.0, %v5586
      %v5588 = vmul.f32 %v5567, %v5546
      %v5589 = vadd.f32 %v5480, %v5588
      %v5590 = vtanh.pop %v5589
      %v5591 = vsub.f32 1.0, %v5587
      %v5592 = vmul.f32 %v5591, %v5590
      %v5593 = vmul.f32 %v5587, 0.0
      %v5594 = vadd.f32 %v5592, %v5593
      %v5595 = vadd.f32 %v5594, 0.0
      %s5596 = smul.u32 1, 3
      %s5597 = smul.addr %s5596, 8
      %s5598 = scalar_lea.vmem [#allocation12], %s5597
      %v5599 = vld [vmem:[%s5598] sm:$0xff]
      %v5600 = vld [vmem:[%s5598 + $0x8] sm:$0xff]
      %v5601 = vld [vmem:[%s5598 + $0x10] sm:$0xff]
      %s5602 = smul.u32 6, 3
      %s5603 = smul.addr %s5602, 8
      %s5604 = scalar_lea.vmem [#allocation13], %s5603
      %v5605 = vld [vmem:[%s5604] sm:$0xff]
      %v5606 = vld [vmem:[%s5604 + $0x8] sm:$0xff]
      %v5607 = vld [vmem:[%s5604 + $0x10] sm:$0xff]
      %v5608 = vadd.f32 %v5599, %v5605
      %v5609 = vadd.f32 %v5600, %v5606
      %v5610 = vadd.f32 %v5601, %v5607
      %5611 = vmatpush.msra.mxu0 %v5462
      %5612 = vmatpush.msra.mxu0 %v5459
      %5613 = vmatpush.msra.mxu0 %v5456
      %5614 = vmatpush.msra.mxu0 %v5453
      %5615 = vmatpush.msra.mxu0 %v5450
      %5616 = vmatpush.msra.mxu0 %v5447
      %5617 = vmatpush.msra.mxu0 %v5444
      %5618 = vmatpush.msra.mxu0 %v5441
      %5619 = vmatpush.msra.mxu0 %v5438
      %5620 = vmatpush.msra.mxu0 %v5435
      %5621 = vmatpush.msra.mxu0 %v5432
      %5622 = vmatpush.msra.mxu0 %v5429
      %5623 = vmatpush.msra.mxu0 %v5426
      %5624 = vmatpush.msra.mxu0 %v5423
      %5625 = vmatpush.msra.mxu0 %v5420
      %5626 = vmatpush.msra.mxu0 %v5417
      %5627 = vmatmul.f32.gmra.mxu0 %v5594
      %v5628 = vpop.f32.mrf.mxu0
      %v5629 = vadd.f32 %v5482, %v5628
      %5630 = vdwg.mxu0
      %5631 = vmatpush.msra.mxu0 %v5463
      %5632 = vmatpush.msra.mxu0 %v5460
      %5633 = vmatpush.msra.mxu0 %v5457
      %5634 = vmatpush.msra.mxu0 %v5454
      %5635 = vmatpush.msra.mxu0 %v5451
      %5636 = vmatpush.msra.mxu0 %v5448
      %5637 = vmatpush.msra.mxu0 %v5445
      %5638 = vmatpush.msra.mxu0 %v5442
      %5639 = vmatpush.msra.mxu0 %v5439
      %5640 = vmatpush.msra.mxu0 %v5436
      %5641 = vmatpush.msra.mxu0 %v5433
      %5642 = vmatpush.msra.mxu0 %v5430
      %5643 = vmatpush.msra.mxu0 %v5427
      %5644 = vmatpush.msra.mxu0 %v5424
      %5645 = vmatpush.msra.mxu0 %v5421
      %5646 = vmatpush.msra.mxu0 %v5418
      %5647 = vmatmul.f32.gmra.mxu0 %v5594
      %v5648 = vpop.f32.mrf.mxu0
      %v5649 = vadd.f32 %v5483, %v5648
      %5650 = vdwg.mxu0
      %5651 = vmatpush.msra.mxu0 %v5464
      %5652 = vmatpush.msra.mxu0 %v5461
      %5653 = vmatpush.msra.mxu0 %v5458
      %5654 = vmatpush.msra.mxu0 %v5455
      %5655 = vmatpush.msra.mxu0 %v5452
      %5656 = vmatpush.msra.mxu0 %v5449
      %5657 = vmatpush.msra.mxu0 %v5446
      %5658 = vmatpush.msra.mxu0 %v5443
      %5659 = vmatpush.msra.mxu0 %v5440
      %5660 = vmatpush.msra.mxu0 %v5437
      %5661 = vmatpush.msra.mxu0 %v5434
      %5662 = vmatpush.msra.mxu0 %v5431
      %5663 = vmatpush.msra.mxu0 %v5428
      %5664 = vmatpush.msra.mxu0 %v5425
      %5665 = vmatpush.msra.mxu0 %v5422
      %5666 = vmatpush.msra.mxu0 %v5419
      %5667 = vmatmul.f32.gmra.mxu0 %v5594
      %v5668 = vpop.f32.mrf.mxu0
      %v5669 = vadd.f32 %v5484, %v5668
      %5670 = vdwg.mxu0
      %v5671 = vadd.f32 %v5608, %v5629
      %v5672 = vxor.u32 %v5671, 2147483648
      %v5673 = vmul.f32 %v5672, 1.442695
      %v5674 = vpow.pop %v5673
      %v5675 = vadd.f32 %v5674, 1.0
      %v5676 = vrcp.pop %v5675
      %v5677 = vmul.f32 %v5675, %v5676
      %v5678 = vsub.f32 1.0, %v5677
      %v5679 = vmul.f32 %v5676, %v5678
      %v5680 = vadd.f32 %v5676, %v5679
      %vm5681 = vweird.f32 %v5675
      %vm5682 = vweird.f32 %v5676
      %vm5683 = vmor %vm5681, %vm5682
      %v5684 = vsel %vm5683, %v5676, %v5680
      %v5685 = vand.u32 2147483647, %v5675
      %vm5686 = vcmp.eq.f32.partialorder %v5685, 8.507059e+37
      %v5687 = vand.u32 %v5675, 2147483648
      %v5688 = vor.u32 1.1754944e-38, %v5687
      %v5689 = vsel %vm5686, %v5688, %v5684
      %v5690 = vmul.f32 1.0, %v5689
      %v5691 = vadd.f32 %v5609, %v5649
      %v5692 = vxor.u32 %v5691, 2147483648
      %v5693 = vmul.f32 %v5692, 1.442695
      %v5694 = vpow.pop %v5693
      %v5695 = vadd.f32 %v5694, 1.0
      %v5696 = vrcp.pop %v5695
      %v5697 = vmul.f32 %v5695, %v5696
      %v5698 = vsub.f32 1.0, %v5697
      %v5699 = vmul.f32 %v5696, %v5698
      %v5700 = vadd.f32 %v5696, %v5699
      %vm5701 = vweird.f32 %v5695
      %vm5702 = vweird.f32 %v5696
      %vm5703 = vmor %vm5701, %vm5702
      %v5704 = vsel %vm5703, %v5696, %v5700
      %v5705 = vand.u32 2147483647, %v5695
      %vm5706 = vcmp.eq.f32.partialorder %v5705, 8.507059e+37
      %v5707 = vand.u32 %v5695, 2147483648
      %v5708 = vor.u32 1.1754944e-38, %v5707
      %v5709 = vsel %vm5706, %v5708, %v5704
      %v5710 = vmul.f32 1.0, %v5709
      %v5711 = vmul.f32 %v5690, %v5669
      %v5712 = vadd.f32 %v5610, %v5711
      %v5713 = vtanh.pop %v5712
      %v5714 = vsub.f32 1.0, %v5710
      %v5715 = vmul.f32 %v5714, %v5713
      %v5716 = vmul.f32 %v5710, %v5594
      %v5717 = vadd.f32 %v5715, %v5716
      %v5718 = vadd.f32 %v5595, %v5717
      %v5719 = vmax.f32 %v5594, %v5717
      %s5720 = smul.u32 2, 3
      %s5721 = smul.addr %s5720, 8
      %s5722 = scalar_lea.vmem [#allocation12], %s5721
      %v5723 = vld [vmem:[%s5722] sm:$0xff]
      %v5724 = vld [vmem:[%s5722 + $0x8] sm:$0xff]
      %v5725 = vld [vmem:[%s5722 + $0x10] sm:$0xff]
      %s5726 = smul.u32 5, 3
      %s5727 = smul.addr %s5726, 8
      %s5728 = scalar_lea.vmem [#allocation13], %s5727
      %v5729 = vld [vmem:[%s5728] sm:$0xff]
      %v5730 = vld [vmem:[%s5728 + $0x8] sm:$0xff]
      %v5731 = vld [vmem:[%s5728 + $0x10] sm:$0xff]
      %v5732 = vadd.f32 %v5723, %v5729
      %v5733 = vadd.f32 %v5724, %v5730
      %v5734 = vadd.f32 %v5725, %v5731
      %5735 = vmatpush.msra.mxu0 %v5462
      %5736 = vmatpush.msra.mxu0 %v5459
      %5737 = vmatpush.msra.mxu0 %v5456
      %5738 = vmatpush.msra.mxu0 %v5453
      %5739 = vmatpush.msra.mxu0 %v5450
      %5740 = vmatpush.msra.mxu0 %v5447
      %5741 = vmatpush.msra.mxu0 %v5444
      %5742 = vmatpush.msra.mxu0 %v5441
      %5743 = vmatpush.msra.mxu0 %v5438
      %5744 = vmatpush.msra.mxu0 %v5435
      %5745 = vmatpush.msra.mxu0 %v5432
      %5746 = vmatpush.msra.mxu0 %v5429
      %5747 = vmatpush.msra.mxu0 %v5426
      %5748 = vmatpush.msra.mxu0 %v5423
      %5749 = vmatpush.msra.mxu0 %v5420
      %5750 = vmatpush.msra.mxu0 %v5417
      %5751 = vmatmul.f32.gmra.mxu0 %v5717
      %v5752 = vpop.f32.mrf.mxu0
      %v5753 = vadd.f32 %v5482, %v5752
      %5754 = vdwg.mxu0
      %5755 = vmatpush.msra.mxu0 %v5463
      %5756 = vmatpush.msra.mxu0 %v5460
      %5757 = vmatpush.msra.mxu0 %v5457
      %5758 = vmatpush.msra.mxu0 %v5454
      %5759 = vmatpush.msra.mxu0 %v5451
      %5760 = vmatpush.msra.mxu0 %v5448
      %5761 = vmatpush.msra.mxu0 %v5445
      %5762 = vmatpush.msra.mxu0 %v5442
      %5763 = vmatpush.msra.mxu0 %v5439
      %5764 = vmatpush.msra.mxu0 %v5436
      %5765 = vmatpush.msra.mxu0 %v5433
      %5766 = vmatpush.msra.mxu0 %v5430
      %5767 = vmatpush.msra.mxu0 %v5427
      %5768 = vmatpush.msra.mxu0 %v5424
      %5769 = vmatpush.msra.mxu0 %v5421
      %5770 = vmatpush.msra.mxu0 %v5418
      %5771 = vmatmul.f32.gmra.mxu0 %v5717
      %v5772 = vpop.f32.mrf.mxu0
      %v5773 = vadd.f32 %v5483, %v5772
      %5774 = vdwg.mxu0
      %5775 = vmatpush.msra.mxu0 %v5464
      %5776 = vmatpush.msra.mxu0 %v5461
      %5777 = vmatpush.msra.mxu0 %v5458
      %5778 = vmatpush.msra.mxu0 %v5455
      %5779 = vmatpush.msra.mxu0 %v5452
      %5780 = vmatpush.msra.mxu0 %v5449
      %5781 = vmatpush.msra.mxu0 %v5446
      %5782 = vmatpush.msra.mxu0 %v5443
      %5783 = vmatpush.msra.mxu0 %v5440
      %5784 = vmatpush.msra.mxu0 %v5437
      %5785 = vmatpush.msra.mxu0 %v5434
      %5786 = vmatpush.msra.mxu0 %v5431
      %5787 = vmatpush.msra.mxu0 %v5428
      %5788 = vmatpush.msra.mxu0 %v5425
      %5789 = vmatpush.msra.mxu0 %v5422
      %5790 = vmatpush.msra.mxu0 %v5419
      %5791 = vmatmul.f32.gmra.mxu0 %v5717
      %v5792 = vpop.f32.mrf.mxu0
      %v5793 = vadd.f32 %v5484, %v5792
      %5794 = vdwg.mxu0
      %v5795 = vadd.f32 %v5732, %v5753
      %v5796 = vxor.u32 %v5795, 2147483648
      %v5797 = vmul.f32 %v5796, 1.442695
      %v5798 = vpow.pop %v5797
      %v5799 = vadd.f32 %v5798, 1.0
      %v5800 = vrcp.pop %v5799
      %v5801 = vmul.f32 %v5799, %v5800
      %v5802 = vsub.f32 1.0, %v5801
      %v5803 = vmul.f32 %v5800, %v5802
      %v5804 = vadd.f32 %v5800, %v5803
      %vm5805 = vweird.f32 %v5799
      %vm5806 = vweird.f32 %v5800
      %vm5807 = vmor %vm5805, %vm5806
      %v5808 = vsel %vm5807, %v5800, %v5804
      %v5809 = vand.u32 2147483647, %v5799
      %vm5810 = vcmp.eq.f32.partialorder %v5809, 8.507059e+37
      %v5811 = vand.u32 %v5799, 2147483648
      %v5812 = vor.u32 1.1754944e-38, %v5811
      %v5813 = vsel %vm5810, %v5812, %v5808
      %v5814 = vmul.f32 1.0, %v5813
      %v5815 = vadd.f32 %v5733, %v5773
      %v5816 = vxor.u32 %v5815, 2147483648
      %v5817 = vmul.f32 %v5816, 1.442695
      %v5818 = vpow.pop %v5817
      %v5819 = vadd.f32 %v5818, 1.0
      %v5820 = vrcp.pop %v5819
      %v5821 = vmul.f32 %v5819, %v5820
      %v5822 = vsub.f32 1.0, %v5821
      %v5823 = vmul.f32 %v5820, %v5822
      %v5824 = vadd.f32 %v5820, %v5823
      %vm5825 = vweird.f32 %v5819
      %vm5826 = vweird.f32 %v5820
      %vm5827 = vmor %vm5825, %vm5826
      %v5828 = vsel %vm5827, %v5820, %v5824
      %v5829 = vand.u32 2147483647, %v5819
      %vm5830 = vcmp.eq.f32.partialorder %v5829, 8.507059e+37
      %v5831 = vand.u32 %v5819, 2147483648
      %v5832 = vor.u32 1.1754944e-38, %v5831
      %v5833 = vsel %vm5830, %v5832, %v5828
      %v5834 = vmul.f32 1.0, %v5833
      %v5835 = vmul.f32 %v5814, %v5793
      %v5836 = vadd.f32 %v5734, %v5835
      %v5837 = vtanh.pop %v5836
      %v5838 = vsub.f32 1.0, %v5834
      %v5839 = vmul.f32 %v5838, %v5837
      %v5840 = vmul.f32 %v5834, %v5717
      %v5841 = vadd.f32 %v5839, %v5840
      %v5842 = vadd.f32 %v5718, %v5841
      %v5843 = vmax.f32 %v5719, %v5841
      %s5844 = smul.u32 3, 3
      %s5845 = smul.addr %s5844, 8
      %s5846 = scalar_lea.vmem [#allocation12], %s5845
      %v5847 = vld [vmem:[%s5846] sm:$0xff]
      %v5848 = vld [vmem:[%s5846 + $0x8] sm:$0xff]
      %v5849 = vld [vmem:[%s5846 + $0x10] sm:$0xff]
      %s5850 = smul.u32 4, 3
      %s5851 = smul.addr %s5850, 8
      %s5852 = scalar_lea.vmem [#allocation13], %s5851
      %v5853 = vld [vmem:[%s5852] sm:$0xff]
      %v5854 = vld [vmem:[%s5852 + $0x8] sm:$0xff]
      %v5855 = vld [vmem:[%s5852 + $0x10] sm:$0xff]
      %v5856 = vadd.f32 %v5847, %v5853
      %v5857 = vadd.f32 %v5848, %v5854
      %v5858 = vadd.f32 %v5849, %v5855
      %5859 = vmatpush.msra.mxu0 %v5462
      %5860 = vmatpush.msra.mxu0 %v5459
      %5861 = vmatpush.msra.mxu0 %v5456
      %5862 = vmatpush.msra.mxu0 %v5453
      %5863 = vmatpush.msra.mxu0 %v5450
      %5864 = vmatpush.msra.mxu0 %v5447
      %5865 = vmatpush.msra.mxu0 %v5444
      %5866 = vmatpush.msra.mxu0 %v5441
      %5867 = vmatpush.msra.mxu0 %v5438
      %5868 = vmatpush.msra.mxu0 %v5435
      %5869 = vmatpush.msra.mxu0 %v5432
      %5870 = vmatpush.msra.mxu0 %v5429
      %5871 = vmatpush.msra.mxu0 %v5426
      %5872 = vmatpush.msra.mxu0 %v5423
      %5873 = vmatpush.msra.mxu0 %v5420
      %5874 = vmatpush.msra.mxu0 %v5417
      %5875 = vmatmul.f32.gmra.mxu0 %v5841
      %v5876 = vpop.f32.mrf.mxu0
      %v5877 = vadd.f32 %v5482, %v5876
      %5878 = vdwg.mxu0
      %5879 = vmatpush.msra.mxu0 %v5463
      %5880 = vmatpush.msra.mxu0 %v5460
      %5881 = vmatpush.msra.mxu0 %v5457
      %5882 = vmatpush.msra.mxu0 %v5454
      %5883 = vmatpush.msra.mxu0 %v5451
      %5884 = vmatpush.msra.mxu0 %v5448
      %5885 = vmatpush.msra.mxu0 %v5445
      %5886 = vmatpush.msra.mxu0 %v5442
      %5887 = vmatpush.msra.mxu0 %v5439
      %5888 = vmatpush.msra.mxu0 %v5436
      %5889 = vmatpush.msra.mxu0 %v5433
      %5890 = vmatpush.msra.mxu0 %v5430
      %5891 = vmatpush.msra.mxu0 %v5427
      %5892 = vmatpush.msra.mxu0 %v5424
      %5893 = vmatpush.msra.mxu0 %v5421
      %5894 = vmatpush.msra.mxu0 %v5418
      %5895 = vmatmul.f32.gmra.mxu0 %v5841
      %v5896 = vpop.f32.mrf.mxu0
      %v5897 = vadd.f32 %v5483, %v5896
      %5898 = vdwg.mxu0
      %5899 = vmatpush.msra.mxu0 %v5464
      %5900 = vmatpush.msra.mxu0 %v5461
      %5901 = vmatpush.msra.mxu0 %v5458
      %5902 = vmatpush.msra.mxu0 %v5455
      %5903 = vmatpush.msra.mxu0 %v5452
      %5904 = vmatpush.msra.mxu0 %v5449
      %5905 = vmatpush.msra.mxu0 %v5446
      %5906 = vmatpush.msra.mxu0 %v5443
      %5907 = vmatpush.msra.mxu0 %v5440
      %5908 = vmatpush.msra.mxu0 %v5437
      %5909 = vmatpush.msra.mxu0 %v5434
      %5910 = vmatpush.msra.mxu0 %v5431
      %5911 = vmatpush.msra.mxu0 %v5428
      %5912 = vmatpush.msra.mxu0 %v5425
      %5913 = vmatpush.msra.mxu0 %v5422
      %5914 = vmatpush.msra.mxu0 %v5419
      %5915 = vmatmul.f32.gmra.mxu0 %v5841
      %v5916 = vpop.f32.mrf.mxu0
      %v5917 = vadd.f32 %v5484, %v5916
      %5918 = vdwg.mxu0
      %v5919 = vadd.f32 %v5856, %v5877
      %v5920 = vxor.u32 %v5919, 2147483648
      %v5921 = vmul.f32 %v5920, 1.442695
      %v5922 = vpow.pop %v5921
      %v5923 = vadd.f32 %v5922, 1.0
      %v5924 = vrcp.pop %v5923
      %v5925 = vmul.f32 %v5923, %v5924
      %v5926 = vsub.f32 1.0, %v5925
      %v5927 = vmul.f32 %v5924, %v5926
      %v5928 = vadd.f32 %v5924, %v5927
      %vm5929 = vweird.f32 %v5923
      %vm5930 = vweird.f32 %v5924
      %vm5931 = vmor %vm5929, %vm5930
      %v5932 = vsel %vm5931, %v5924, %v5928
      %v5933 = vand.u32 2147483647, %v5923
      %vm5934 = vcmp.eq.f32.partialorder %v5933, 8.507059e+37
      %v5935 = vand.u32 %v5923, 2147483648
      %v5936 = vor.u32 1.1754944e-38, %v5935
      %v5937 = vsel %vm5934, %v5936, %v5932
      %v5938 = vmul.f32 1.0, %v5937
      %v5939 = vadd.f32 %v5857, %v5897
      %v5940 = vxor.u32 %v5939, 2147483648
      %v5941 = vmul.f32 %v5940, 1.442695
      %v5942 = vpow.pop %v5941
      %v5943 = vadd.f32 %v5942, 1.0
      %v5944 = vrcp.pop %v5943
      %v5945 = vmul.f32 %v5943, %v5944
      %v5946 = vsub.f32 1.0, %v5945
      %v5947 = vmul.f32 %v5944, %v5946
      %v5948 = vadd.f32 %v5944, %v5947
      %vm5949 = vweird.f32 %v5943
      %vm5950 = vweird.f32 %v5944
      %vm5951 = vmor %vm5949, %vm5950
      %v5952 = vsel %vm5951, %v5944, %v5948
      %v5953 = vand.u32 2147483647, %v5943
      %vm5954 = vcmp.eq.f32.partialorder %v5953, 8.507059e+37
      %v5955 = vand.u32 %v5943, 2147483648
      %v5956 = vor.u32 1.1754944e-38, %v5955
      %v5957 = vsel %vm5954, %v5956, %v5952
      %v5958 = vmul.f32 1.0, %v5957
      %v5959 = vmul.f32 %v5938, %v5917
      %v5960 = vadd.f32 %v5858, %v5959
      %v5961 = vtanh.pop %v5960
      %v5962 = vsub.f32 1.0, %v5958
      %v5963 = vmul.f32 %v5962, %v5961
      %v5964 = vmul.f32 %v5958, %v5841
      %v5965 = vadd.f32 %v5963, %v5964
      %v5966 = vadd.f32 %v5842, %v5965
      %v5967 = vmax.f32 %v5843, %v5965
      %s5968 = smul.addr %s5850, 8
      %s5969 = scalar_lea.vmem [#allocation12], %s5968
      %v5970 = vld [vmem:[%s5969] sm:$0xff]
      %v5971 = vld [vmem:[%s5969 + $0x8] sm:$0xff]
      %v5972 = vld [vmem:[%s5969 + $0x10] sm:$0xff]
      %s5973 = smul.addr %s5844, 8
      %s5974 = scalar_lea.vmem [#allocation13], %s5973
      %v5975 = vld [vmem:[%s5974] sm:$0xff]
      %v5976 = vld [vmem:[%s5974 + $0x8] sm:$0xff]
      %v5977 = vld [vmem:[%s5974 + $0x10] sm:$0xff]
      %v5978 = vadd.f32 %v5970, %v5975
      %v5979 = vadd.f32 %v5971, %v5976
      %v5980 = vadd.f32 %v5972, %v5977
      %5981 = vmatpush.msra.mxu0 %v5462
      %5982 = vmatpush.msra.mxu0 %v5459
      %5983 = vmatpush.msra.mxu0 %v5456
      %5984 = vmatpush.msra.mxu0 %v5453
      %5985 = vmatpush.msra.mxu0 %v5450
      %5986 = vmatpush.msra.mxu0 %v5447
      %5987 = vmatpush.msra.mxu0 %v5444
      %5988 = vmatpush.msra.mxu0 %v5441
      %5989 = vmatpush.msra.mxu0 %v5438
      %5990 = vmatpush.msra.mxu0 %v5435
      %5991 = vmatpush.msra.mxu0 %v5432
      %5992 = vmatpush.msra.mxu0 %v5429
      %5993 = vmatpush.msra.mxu0 %v5426
      %5994 = vmatpush.msra.mxu0 %v5423
      %5995 = vmatpush.msra.mxu0 %v5420
      %5996 = vmatpush.msra.mxu0 %v5417
      %5997 = vmatmul.f32.gmra.mxu0 %v5965
      %v5998 = vpop.f32.mrf.mxu0
      %v5999 = vadd.f32 %v5482, %v5998
      %6000 = vdwg.mxu0
      %6001 = vmatpush.msra.mxu0 %v5463
      %6002 = vmatpush.msra.mxu0 %v5460
      %6003 = vmatpush.msra.mxu0 %v5457
      %6004 = vmatpush.msra.mxu0 %v5454
      %6005 = vmatpush.msra.mxu0 %v5451
      %6006 = vmatpush.msra.mxu0 %v5448
      %6007 = vmatpush.msra.mxu0 %v5445
      %6008 = vmatpush.msra.mxu0 %v5442
      %6009 = vmatpush.msra.mxu0 %v5439
      %6010 = vmatpush.msra.mxu0 %v5436
      %6011 = vmatpush.msra.mxu0 %v5433
      %6012 = vmatpush.msra.mxu0 %v5430
      %6013 = vmatpush.msra.mxu0 %v5427
      %6014 = vmatpush.msra.mxu0 %v5424
      %6015 = vmatpush.msra.mxu0 %v5421
      %6016 = vmatpush.msra.mxu0 %v5418
      %6017 = vmatmul.f32.gmra.mxu0 %v5965
      %v6018 = vpop.f32.mrf.mxu0
      %v6019 = vadd.f32 %v5483, %v6018
      %6020 = vdwg.mxu0
      %6021 = vmatpush.msra.mxu0 %v5464
      %6022 = vmatpush.msra.mxu0 %v5461
      %6023 = vmatpush.msra.mxu0 %v5458
      %6024 = vmatpush.msra.mxu0 %v5455
      %6025 = vmatpush.msra.mxu0 %v5452
      %6026 = vmatpush.msra.mxu0 %v5449
      %6027 = vmatpush.msra.mxu0 %v5446
      %6028 = vmatpush.msra.mxu0 %v5443
      %6029 = vmatpush.msra.mxu0 %v5440
      %6030 = vmatpush.msra.mxu0 %v5437
      %6031 = vmatpush.msra.mxu0 %v5434
      %6032 = vmatpush.msra.mxu0 %v5431
      %6033 = vmatpush.msra.mxu0 %v5428
      %6034 = vmatpush.msra.mxu0 %v5425
      %6035 = vmatpush.msra.mxu0 %v5422
      %6036 = vmatpush.msra.mxu0 %v5419
      %6037 = vmatmul.f32.gmra.mxu0 %v5965
      %v6038 = vpop.f32.mrf.mxu0
      %v6039 = vadd.f32 %v5484, %v6038
      %6040 = vdwg.mxu0
      %v6041 = vadd.f32 %v5978, %v5999
      %v6042 = vxor.u32 %v6041, 2147483648
      %v6043 = vmul.f32 %v6042, 1.442695
      %v6044 = vpow.pop %v6043
      %v6045 = vadd.f32 %v6044, 1.0
      %v6046 = vrcp.pop %v6045
      %v6047 = vmul.f32 %v6045, %v6046
      %v6048 = vsub.f32 1.0, %v6047
      %v6049 = vmul.f32 %v6046, %v6048
      %v6050 = vadd.f32 %v6046, %v6049
      %vm6051 = vweird.f32 %v6045
      %vm6052 = vweird.f32 %v6046
      %vm6053 = vmor %vm6051, %vm6052
      %v6054 = vsel %vm6053, %v6046, %v6050
      %v6055 = vand.u32 2147483647, %v6045
      %vm6056 = vcmp.eq.f32.partialorder %v6055, 8.507059e+37
      %v6057 = vand.u32 %v6045, 2147483648
      %v6058 = vor.u32 1.1754944e-38, %v6057
      %v6059 = vsel %vm6056, %v6058, %v6054
      %v6060 = vmul.f32 1.0, %v6059
      %v6061 = vadd.f32 %v5979, %v6019
      %v6062 = vxor.u32 %v6061, 2147483648
      %v6063 = vmul.f32 %v6062, 1.442695
      %v6064 = vpow.pop %v6063
      %v6065 = vadd.f32 %v6064, 1.0
      %v6066 = vrcp.pop %v6065
      %v6067 = vmul.f32 %v6065, %v6066
      %v6068 = vsub.f32 1.0, %v6067
      %v6069 = vmul.f32 %v6066, %v6068
      %v6070 = vadd.f32 %v6066, %v6069
      %vm6071 = vweird.f32 %v6065
      %vm6072 = vweird.f32 %v6066
      %vm6073 = vmor %vm6071, %vm6072
      %v6074 = vsel %vm6073, %v6066, %v6070
      %v6075 = vand.u32 2147483647, %v6065
      %vm6076 = vcmp.eq.f32.partialorder %v6075, 8.507059e+37
      %v6077 = vand.u32 %v6065, 2147483648
      %v6078 = vor.u32 1.1754944e-38, %v6077
      %v6079 = vsel %vm6076, %v6078, %v6074
      %v6080 = vmul.f32 1.0, %v6079
      %v6081 = vmul.f32 %v6060, %v6039
      %v6082 = vadd.f32 %v5980, %v6081
      %v6083 = vtanh.pop %v6082
      %v6084 = vsub.f32 1.0, %v6080
      %v6085 = vmul.f32 %v6084, %v6083
      %v6086 = vmul.f32 %v6080, %v5965
      %v6087 = vadd.f32 %v6085, %v6086
      %v6088 = vadd.f32 %v5966, %v6087
      %v6089 = vmax.f32 %v5967, %v6087
      %s6090 = smul.addr %s5726, 8
      %s6091 = scalar_lea.vmem [#allocation12], %s6090
      %v6092 = vld [vmem:[%s6091] sm:$0xff]
      %v6093 = vld [vmem:[%s6091 + $0x8] sm:$0xff]
      %v6094 = vld [vmem:[%s6091 + $0x10] sm:$0xff]
      %s6095 = smul.addr %s5720, 8
      %s6096 = scalar_lea.vmem [#allocation13], %s6095
      %v6097 = vld [vmem:[%s6096] sm:$0xff]
      %v6098 = vld [vmem:[%s6096 + $0x8] sm:$0xff]
      %v6099 = vld [vmem:[%s6096 + $0x10] sm:$0xff]
      %v6100 = vadd.f32 %v6092, %v6097
      %v6101 = vadd.f32 %v6093, %v6098
      %v6102 = vadd.f32 %v6094, %v6099
      %6103 = vmatpush.msra.mxu0 %v5462
      %6104 = vmatpush.msra.mxu0 %v5459
      %6105 = vmatpush.msra.mxu0 %v5456
      %6106 = vmatpush.msra.mxu0 %v5453
      %6107 = vmatpush.msra.mxu0 %v5450
      %6108 = vmatpush.msra.mxu0 %v5447
      %6109 = vmatpush.msra.mxu0 %v5444
      %6110 = vmatpush.msra.mxu0 %v5441
      %6111 = vmatpush.msra.mxu0 %v5438
      %6112 = vmatpush.msra.mxu0 %v5435
      %6113 = vmatpush.msra.mxu0 %v5432
      %6114 = vmatpush.msra.mxu0 %v5429
      %6115 = vmatpush.msra.mxu0 %v5426
      %6116 = vmatpush.msra.mxu0 %v5423
      %6117 = vmatpush.msra.mxu0 %v5420
      %6118 = vmatpush.msra.mxu0 %v5417
      %6119 = vmatmul.f32.gmra.mxu0 %v6087
      %v6120 = vpop.f32.mrf.mxu0
      %v6121 = vadd.f32 %v5482, %v6120
      %6122 = vdwg.mxu0
      %6123 = vmatpush.msra.mxu0 %v5463
      %6124 = vmatpush.msra.mxu0 %v5460
      %6125 = vmatpush.msra.mxu0 %v5457
      %6126 = vmatpush.msra.mxu0 %v5454
      %6127 = vmatpush.msra.mxu0 %v5451
      %6128 = vmatpush.msra.mxu0 %v5448
      %6129 = vmatpush.msra.mxu0 %v5445
      %6130 = vmatpush.msra.mxu0 %v5442
      %6131 = vmatpush.msra.mxu0 %v5439
      %6132 = vmatpush.msra.mxu0 %v5436
      %6133 = vmatpush.msra.mxu0 %v5433
      %6134 = vmatpush.msra.mxu0 %v5430
      %6135 = vmatpush.msra.mxu0 %v5427
      %6136 = vmatpush.msra.mxu0 %v5424
      %6137 = vmatpush.msra.mxu0 %v5421
      %6138 = vmatpush.msra.mxu0 %v5418
      %6139 = vmatmul.f32.gmra.mxu0 %v6087
      %v6140 = vpop.f32.mrf.mxu0
      %v6141 = vadd.f32 %v5483, %v6140
      %6142 = vdwg.mxu0
      %6143 = vmatpush.msra.mxu0 %v5464
      %6144 = vmatpush.msra.mxu0 %v5461
      %6145 = vmatpush.msra.mxu0 %v5458
      %6146 = vmatpush.msra.mxu0 %v5455
      %6147 = vmatpush.msra.mxu0 %v5452
      %6148 = vmatpush.msra.mxu0 %v5449
      %6149 = vmatpush.msra.mxu0 %v5446
      %6150 = vmatpush.msra.mxu0 %v5443
      %6151 = vmatpush.msra.mxu0 %v5440
      %6152 = vmatpush.msra.mxu0 %v5437
      %6153 = vmatpush.msra.mxu0 %v5434
      %6154 = vmatpush.msra.mxu0 %v5431
      %6155 = vmatpush.msra.mxu0 %v5428
      %6156 = vmatpush.msra.mxu0 %v5425
      %6157 = vmatpush.msra.mxu0 %v5422
      %6158 = vmatpush.msra.mxu0 %v5419
      %6159 = vmatmul.f32.gmra.mxu0 %v6087
      %v6160 = vpop.f32.mrf.mxu0
      %v6161 = vadd.f32 %v5484, %v6160
      %6162 = vdwg.mxu0
      %v6163 = vadd.f32 %v6100, %v6121
      %v6164 = vxor.u32 %v6163, 2147483648
      %v6165 = vmul.f32 %v6164, 1.442695
      %v6166 = vpow.pop %v6165
      %v6167 = vadd.f32 %v6166, 1.0
      %v6168 = vrcp.pop %v6167
      %v6169 = vmul.f32 %v6167, %v6168
      %v6170 = vsub.f32 1.0, %v6169
      %v6171 = vmul.f32 %v6168, %v6170
      %v6172 = vadd.f32 %v6168, %v6171
      %vm6173 = vweird.f32 %v6167
      %vm6174 = vweird.f32 %v6168
      %vm6175 = vmor %vm6173, %vm6174
      %v6176 = vsel %vm6175, %v6168, %v6172
      %v6177 = vand.u32 2147483647, %v6167
      %vm6178 = vcmp.eq.f32.partialorder %v6177, 8.507059e+37
      %v6179 = vand.u32 %v6167, 2147483648
      %v6180 = vor.u32 1.1754944e-38, %v6179
      %v6181 = vsel %vm6178, %v6180, %v6176
      %v6182 = vmul.f32 1.0, %v6181
      %v6183 = vadd.f32 %v6101, %v6141
      %v6184 = vxor.u32 %v6183, 2147483648
      %v6185 = vmul.f32 %v6184, 1.442695
      %v6186 = vpow.pop %v6185
      %v6187 = vadd.f32 %v6186, 1.0
      %v6188 = vrcp.pop %v6187
      %v6189 = vmul.f32 %v6187, %v6188
      %v6190 = vsub.f32 1.0, %v6189
      %v6191 = vmul.f32 %v6188, %v6190
      %v6192 = vadd.f32 %v6188, %v6191
      %vm6193 = vweird.f32 %v6187
      %vm6194 = vweird.f32 %v6188
      %vm6195 = vmor %vm6193, %vm6194
      %v6196 = vsel %vm6195, %v6188, %v6192
      %v6197 = vand.u32 2147483647, %v6187
      %vm6198 = vcmp.eq.f32.partialorder %v6197, 8.507059e+37
      %v6199 = vand.u32 %v6187, 2147483648
      %v6200 = vor.u32 1.1754944e-38, %v6199
      %v6201 = vsel %vm6198, %v6200, %v6196
      %v6202 = vmul.f32 1.0, %v6201
      %v6203 = vmul.f32 %v6182, %v6161
      %v6204 = vadd.f32 %v6102, %v6203
      %v6205 = vtanh.pop %v6204
      %v6206 = vsub.f32 1.0, %v6202
      %v6207 = vmul.f32 %v6206, %v6205
      %v6208 = vmul.f32 %v6202, %v6087
      %v6209 = vadd.f32 %v6207, %v6208
      %v6210 = vadd.f32 %v6088, %v6209
      %v6211 = vmax.f32 %v6089, %v6209
      %s6212 = smul.addr %s5602, 8
      %s6213 = scalar_lea.vmem [#allocation12], %s6212
      %v6214 = vld [vmem:[%s6213] sm:$0xff]
      %v6215 = vld [vmem:[%s6213 + $0x8] sm:$0xff]
      %v6216 = vld [vmem:[%s6213 + $0x10] sm:$0xff]
      %s6217 = smul.addr %s5596, 8
      %s6218 = scalar_lea.vmem [#allocation13], %s6217
      %v6219 = vld [vmem:[%s6218] sm:$0xff]
      %v6220 = vld [vmem:[%s6218 + $0x8] sm:$0xff]
      %v6221 = vld [vmem:[%s6218 + $0x10] sm:$0xff]
      %v6222 = vadd.f32 %v6214, %v6219
      %v6223 = vadd.f32 %v6215, %v6220
      %v6224 = vadd.f32 %v6216, %v6221
      %6225 = vmatpush.msra.mxu0 %v5462
      %6226 = vmatpush.msra.mxu0 %v5459
      %6227 = vmatpush.msra.mxu0 %v5456
      %6228 = vmatpush.msra.mxu0 %v5453
      %6229 = vmatpush.msra.mxu0 %v5450
      %6230 = vmatpush.msra.mxu0 %v5447
      %6231 = vmatpush.msra.mxu0 %v5444
      %6232 = vmatpush.msra.mxu0 %v5441
      %6233 = vmatpush.msra.mxu0 %v5438
      %6234 = vmatpush.msra.mxu0 %v5435
      %6235 = vmatpush.msra.mxu0 %v5432
      %6236 = vmatpush.msra.mxu0 %v5429
      %6237 = vmatpush.msra.mxu0 %v5426
      %6238 = vmatpush.msra.mxu0 %v5423
      %6239 = vmatpush.msra.mxu0 %v5420
      %6240 = vmatpush.msra.mxu0 %v5417
      %6241 = vmatmul.f32.gmra.mxu0 %v6209
      %v6242 = vpop.f32.mrf.mxu0
      %v6243 = vadd.f32 %v5482, %v6242
      %6244 = vdwg.mxu0
      %6245 = vmatpush.msra.mxu0 %v5463
      %6246 = vmatpush.msra.mxu0 %v5460
      %6247 = vmatpush.msra.mxu0 %v5457
      %6248 = vmatpush.msra.mxu0 %v5454
      %6249 = vmatpush.msra.mxu0 %v5451
      %6250 = vmatpush.msra.mxu0 %v5448
      %6251 = vmatpush.msra.mxu0 %v5445
      %6252 = vmatpush.msra.mxu0 %v5442
      %6253 = vmatpush.msra.mxu0 %v5439
      %6254 = vmatpush.msra.mxu0 %v5436
      %6255 = vmatpush.msra.mxu0 %v5433
      %6256 = vmatpush.msra.mxu0 %v5430
      %6257 = vmatpush.msra.mxu0 %v5427
      %6258 = vmatpush.msra.mxu0 %v5424
      %6259 = vmatpush.msra.mxu0 %v5421
      %6260 = vmatpush.msra.mxu0 %v5418
      %6261 = vmatmul.f32.gmra.mxu0 %v6209
      %v6262 = vpop.f32.mrf.mxu0
      %v6263 = vadd.f32 %v5483, %v6262
      %6264 = vdwg.mxu0
      %6265 = vmatpush.msra.mxu0 %v5464
      %6266 = vmatpush.msra.mxu0 %v5461
      %6267 = vmatpush.msra.mxu0 %v5458
      %6268 = vmatpush.msra.mxu0 %v5455
      %6269 = vmatpush.msra.mxu0 %v5452
      %6270 = vmatpush.msra.mxu0 %v5449
      %6271 = vmatpush.msra.mxu0 %v5446
      %6272 = vmatpush.msra.mxu0 %v5443
      %6273 = vmatpush.msra.mxu0 %v5440
      %6274 = vmatpush.msra.mxu0 %v5437
      %6275 = vmatpush.msra.mxu0 %v5434
      %6276 = vmatpush.msra.mxu0 %v5431
      %6277 = vmatpush.msra.mxu0 %v5428
      %6278 = vmatpush.msra.mxu0 %v5425
      %6279 = vmatpush.msra.mxu0 %v5422
      %6280 = vmatpush.msra.mxu0 %v5419
      %6281 = vmatmul.f32.gmra.mxu0 %v6209
      %v6282 = vpop.f32.mrf.mxu0
      %v6283 = vadd.f32 %v5484, %v6282
      %6284 = vdwg.mxu0
      %v6285 = vadd.f32 %v6222, %v6243
      %v6286 = vxor.u32 %v6285, 2147483648
      %v6287 = vmul.f32 %v6286, 1.442695
      %v6288 = vpow.pop %v6287
      %v6289 = vadd.f32 %v6288, 1.0
      %v6290 = vrcp.pop %v6289
      %v6291 = vmul.f32 %v6289, %v6290
      %v6292 = vsub.f32 1.0, %v6291
      %v6293 = vmul.f32 %v6290, %v6292
      %v6294 = vadd.f32 %v6290, %v6293
      %vm6295 = vweird.f32 %v6289
      %vm6296 = vweird.f32 %v6290
      %vm6297 = vmor %vm6295, %vm6296
      %v6298 = vsel %vm6297, %v6290, %v6294
      %v6299 = vand.u32 2147483647, %v6289
      %vm6300 = vcmp.eq.f32.partialorder %v6299, 8.507059e+37
      %v6301 = vand.u32 %v6289, 2147483648
      %v6302 = vor.u32 1.1754944e-38, %v6301
      %v6303 = vsel %vm6300, %v6302, %v6298
      %v6304 = vmul.f32 1.0, %v6303
      %v6305 = vadd.f32 %v6223, %v6263
      %v6306 = vxor.u32 %v6305, 2147483648
      %v6307 = vmul.f32 %v6306, 1.442695
      %v6308 = vpow.pop %v6307
      %v6309 = vadd.f32 %v6308, 1.0
      %v6310 = vrcp.pop %v6309
      %v6311 = vmul.f32 %v6309, %v6310
      %v6312 = vsub.f32 1.0, %v6311
      %v6313 = vmul.f32 %v6310, %v6312
      %v6314 = vadd.f32 %v6310, %v6313
      %vm6315 = vweird.f32 %v6309
      %vm6316 = vweird.f32 %v6310
      %vm6317 = vmor %vm6315, %vm6316
      %v6318 = vsel %vm6317, %v6310, %v6314
      %v6319 = vand.u32 2147483647, %v6309
      %vm6320 = vcmp.eq.f32.partialorder %v6319, 8.507059e+37
      %v6321 = vand.u32 %v6309, 2147483648
      %v6322 = vor.u32 1.1754944e-38, %v6321
      %v6323 = vsel %vm6320, %v6322, %v6318
      %v6324 = vmul.f32 1.0, %v6323
      %v6325 = vmul.f32 %v6304, %v6283
      %v6326 = vadd.f32 %v6224, %v6325
      %v6327 = vtanh.pop %v6326
      %v6328 = vsub.f32 1.0, %v6324
      %v6329 = vmul.f32 %v6328, %v6327
      %v6330 = vmul.f32 %v6324, %v6209
      %v6331 = vadd.f32 %v6329, %v6330
      %v6332 = vadd.f32 %v6210, %v6331
      %v6333 = vmax.f32 %v6211, %v6331
      %s6334 = smul.addr %s5472, 8
      %s6335 = scalar_lea.vmem [#allocation12], %s6334
      %v6336 = vld [vmem:[%s6335] sm:$0xff]
      %v6337 = vld [vmem:[%s6335 + $0x8] sm:$0xff]
      %v6338 = vld [vmem:[%s6335 + $0x10] sm:$0xff]
      %s6339 = smul.addr %s5466, 8
      %s6340 = scalar_lea.vmem [#allocation13], %s6339
      %v6341 = vld [vmem:[%s6340] sm:$0xff]
      %v6342 = vld [vmem:[%s6340 + $0x8] sm:$0xff]
      %v6343 = vld [vmem:[%s6340 + $0x10] sm:$0xff]
      %v6344 = vadd.f32 %v6336, %v6341
      %v6345 = vadd.f32 %v6337, %v6342
      %v6346 = vadd.f32 %v6338, %v6343
      %6347 = vmatpush.msra.mxu0 %v5462
      %6348 = vmatpush.msra.mxu0 %v5459
      %6349 = vmatpush.msra.mxu0 %v5456
      %6350 = vmatpush.msra.mxu0 %v5453
      %6351 = vmatpush.msra.mxu0 %v5450
      %6352 = vmatpush.msra.mxu0 %v5447
      %6353 = vmatpush.msra.mxu0 %v5444
      %6354 = vmatpush.msra.mxu0 %v5441
      %6355 = vmatpush.msra.mxu0 %v5438
      %6356 = vmatpush.msra.mxu0 %v5435
      %6357 = vmatpush.msra.mxu0 %v5432
      %6358 = vmatpush.msra.mxu0 %v5429
      %6359 = vmatpush.msra.mxu0 %v5426
      %6360 = vmatpush.msra.mxu0 %v5423
      %6361 = vmatpush.msra.mxu0 %v5420
      %6362 = vmatpush.msra.mxu0 %v5417
      %6363 = vmatmul.f32.gmra.mxu0 %v6331
      %v6364 = vpop.f32.mrf.mxu0
      %v6365 = vadd.f32 %v5482, %v6364
      %6366 = vdwg.mxu0
      %6367 = vmatpush.msra.mxu0 %v5463
      %6368 = vmatpush.msra.mxu0 %v5460
      %6369 = vmatpush.msra.mxu0 %v5457
      %6370 = vmatpush.msra.mxu0 %v5454
      %6371 = vmatpush.msra.mxu0 %v5451
      %6372 = vmatpush.msra.mxu0 %v5448
      %6373 = vmatpush.msra.mxu0 %v5445
      %6374 = vmatpush.msra.mxu0 %v5442
      %6375 = vmatpush.msra.mxu0 %v5439
      %6376 = vmatpush.msra.mxu0 %v5436
      %6377 = vmatpush.msra.mxu0 %v5433
      %6378 = vmatpush.msra.mxu0 %v5430
      %6379 = vmatpush.msra.mxu0 %v5427
      %6380 = vmatpush.msra.mxu0 %v5424
      %6381 = vmatpush.msra.mxu0 %v5421
      %6382 = vmatpush.msra.mxu0 %v5418
      %6383 = vmatmul.f32.gmra.mxu0 %v6331
      %v6384 = vpop.f32.mrf.mxu0
      %v6385 = vadd.f32 %v5483, %v6384
      %6386 = vdwg.mxu0
      %6387 = vmatpush.msra.mxu0 %v5464
      %6388 = vmatpush.msra.mxu0 %v5461
      %6389 = vmatpush.msra.mxu0 %v5458
      %6390 = vmatpush.msra.mxu0 %v5455
      %6391 = vmatpush.msra.mxu0 %v5452
      %6392 = vmatpush.msra.mxu0 %v5449
      %6393 = vmatpush.msra.mxu0 %v5446
      %6394 = vmatpush.msra.mxu0 %v5443
      %6395 = vmatpush.msra.mxu0 %v5440
      %6396 = vmatpush.msra.mxu0 %v5437
      %6397 = vmatpush.msra.mxu0 %v5434
      %6398 = vmatpush.msra.mxu0 %v5431
      %6399 = vmatpush.msra.mxu0 %v5428
      %6400 = vmatpush.msra.mxu0 %v5425
      %6401 = vmatpush.msra.mxu0 %v5422
      %6402 = vmatpush.msra.mxu0 %v5419
      %6403 = vmatmul.f32.gmra.mxu0 %v6331
      %v6404 = vpop.f32.mrf.mxu0
      %v6405 = vadd.f32 %v5484, %v6404
      %6406 = vdwg.mxu0
      %v6407 = vadd.f32 %v6344, %v6365
      %v6408 = vxor.u32 %v6407, 2147483648
      %v6409 = vmul.f32 %v6408, 1.442695
      %v6410 = vpow.pop %v6409
      %v6411 = vadd.f32 %v6410, 1.0
      %v6412 = vrcp.pop %v6411
      %v6413 = vmul.f32 %v6411, %v6412
      %v6414 = vsub.f32 1.0, %v6413
      %v6415 = vmul.f32 %v6412, %v6414
      %v6416 = vadd.f32 %v6412, %v6415
      %vm6417 = vweird.f32 %v6411
      %vm6418 = vweird.f32 %v6412
      %vm6419 = vmor %vm6417, %vm6418
      %v6420 = vsel %vm6419, %v6412, %v6416
      %v6421 = vand.u32 2147483647, %v6411
      %vm6422 = vcmp.eq.f32.partialorder %v6421, 8.507059e+37
      %v6423 = vand.u32 %v6411, 2147483648
      %v6424 = vor.u32 1.1754944e-38, %v6423
      %v6425 = vsel %vm6422, %v6424, %v6420
      %v6426 = vmul.f32 1.0, %v6425
      %v6427 = vadd.f32 %v6345, %v6385
      %v6428 = vxor.u32 %v6427, 2147483648
      %v6429 = vmul.f32 %v6428, 1.442695
      %v6430 = vpow.pop %v6429
      %v6431 = vadd.f32 %v6430, 1.0
      %v6432 = vrcp.pop %v6431
      %v6433 = vmul.f32 %v6431, %v6432
      %v6434 = vsub.f32 1.0, %v6433
      %v6435 = vmul.f32 %v6432, %v6434
      %v6436 = vadd.f32 %v6432, %v6435
      %vm6437 = vweird.f32 %v6431
      %vm6438 = vweird.f32 %v6432
      %vm6439 = vmor %vm6437, %vm6438
      %v6440 = vsel %vm6439, %v6432, %v6436
      %v6441 = vand.u32 2147483647, %v6431
      %vm6442 = vcmp.eq.f32.partialorder %v6441, 8.507059e+37
      %v6443 = vand.u32 %v6431, 2147483648
      %v6444 = vor.u32 1.1754944e-38, %v6443
      %v6445 = vsel %vm6442, %v6444, %v6440
      %v6446 = vmul.f32 1.0, %v6445
      %v6447 = vmul.f32 %v6426, %v6405
      %v6448 = vadd.f32 %v6346, %v6447
      %v6449 = vtanh.pop %v6448
      %v6450 = vsub.f32 1.0, %v6446
      %v6451 = vmul.f32 %v6450, %v6449
      %v6452 = vmul.f32 %v6446, %v6331
      %v6453 = vadd.f32 %v6451, %v6452
      %v6454 = vadd.f32 %v6332, %v6453
      %v6455 = vmax.f32 %v6333, %v6453
      %v6456 = vmul.f32 %v6454, 0.125
      %v6457 = vld [vmem:[%s11] sm:$0xff]
      %v6458 = vld [vmem:[%s11 + $0x8] sm:$0xff]
      %v6459 = vld [vmem:[%s11 + $0x10] sm:$0xff]
      %v6460 = vld [vmem:[%s11 + $0x18] sm:$0xff]
      %v6461 = vld [vmem:[%s11 + $0x20] sm:$0xff]
      %v6462 = vld [vmem:[%s11 + $0x28] sm:$0xff]
      %v6463 = vld [vmem:[%s11 + $0x30] sm:$0xff]
      %v6464 = vld [vmem:[%s11 + $0x38] sm:$0xff]
      %v6465 = vld [vmem:[%s11 + $0x40] sm:$0xff]
      %v6466 = vld [vmem:[%s11 + $0x48] sm:$0xff]
      %v6467 = vld [vmem:[%s11 + $0x50] sm:$0xff]
      %v6468 = vld [vmem:[%s11 + $0x58] sm:$0xff]
      %v6469 = vld [vmem:[%s11 + $0x60] sm:$0xff]
      %v6470 = vld [vmem:[%s11 + $0x68] sm:$0xff]
      %v6471 = vld [vmem:[%s11 + $0x70] sm:$0xff]
      %v6472 = vld [vmem:[%s11 + $0x78] sm:$0xff]
      %v6473 = vld [vmem:[%s12] sm:$0xff]
      %v6474 = vld [vmem:[%s12 + $0x8] sm:$0xff]
      %v6475 = vld [vmem:[%s12 + $0x10] sm:$0xff]
      %v6476 = vld [vmem:[%s12 + $0x18] sm:$0xff]
      %v6477 = vld [vmem:[%s12 + $0x20] sm:$0xff]
      %v6478 = vld [vmem:[%s12 + $0x28] sm:$0xff]
      %v6479 = vld [vmem:[%s12 + $0x30] sm:$0xff]
      %v6480 = vld [vmem:[%s12 + $0x38] sm:$0xff]
      %v6481 = vld [vmem:[%s12 + $0x40] sm:$0xff]
      %v6482 = vld [vmem:[%s12 + $0x48] sm:$0xff]
      %v6483 = vld [vmem:[%s12 + $0x50] sm:$0xff]
      %v6484 = vld [vmem:[%s12 + $0x58] sm:$0xff]
      %v6485 = vld [vmem:[%s12 + $0x60] sm:$0xff]
      %v6486 = vld [vmem:[%s12 + $0x68] sm:$0xff]
      %v6487 = vld [vmem:[%s12 + $0x70] sm:$0xff]
      %v6488 = vld [vmem:[%s12 + $0x78] sm:$0xff]
      %6489 = vmatpush.msra.mxu0 %v6488
      %6490 = vmatpush.msra.mxu0 %v6487
      %6491 = vmatpush.msra.mxu0 %v6486
      %6492 = vmatpush.msra.mxu0 %v6485
      %6493 = vmatpush.msra.mxu0 %v6484
      %6494 = vmatpush.msra.mxu0 %v6483
      %6495 = vmatpush.msra.mxu0 %v6482
      %6496 = vmatpush.msra.mxu0 %v6481
      %6497 = vmatpush.msra.mxu0 %v6480
      %6498 = vmatpush.msra.mxu0 %v6479
      %6499 = vmatpush.msra.mxu0 %v6478
      %6500 = vmatpush.msra.mxu0 %v6477
      %6501 = vmatpush.msra.mxu0 %v6476
      %6502 = vmatpush.msra.mxu0 %v6475
      %6503 = vmatpush.msra.mxu0 %v6474
      %6504 = vmatpush.msra.mxu0 %v6473
      %6505 = vmatmul.f32.gmra.mxu0 %v6456
      %v6506 = vpop.f32.mrf.mxu0
      %v6507 = vadd.f32 0.0, %v6506
      %6508 = vdwg.mxu0
      %6509 = vmatpush.msra.mxu0 %v6472
      %6510 = vmatpush.msra.mxu0 %v6471
      %6511 = vmatpush.msra.mxu0 %v6470
      %6512 = vmatpush.msra.mxu0 %v6469
      %6513 = vmatpush.msra.mxu0 %v6468
      %6514 = vmatpush.msra.mxu0 %v6467
      %6515 = vmatpush.msra.mxu0 %v6466
      %6516 = vmatpush.msra.mxu0 %v6465
      %6517 = vmatpush.msra.mxu0 %v6464
      %6518 = vmatpush.msra.mxu0 %v6463
      %6519 = vmatpush.msra.mxu0 %v6462
      %6520 = vmatpush.msra.mxu0 %v6461
      %6521 = vmatpush.msra.mxu0 %v6460
      %6522 = vmatpush.msra.mxu0 %v6459
      %6523 = vmatpush.msra.mxu0 %v6458
      %6524 = vmatpush.msra.mxu0 %v6457
      %6525 = vmatmul.f32.gmra.mxu0 %v6453
      %v6526 = vpop.f32.mrf.mxu0
      %v6527 = vadd.f32 %v6507, %v6526
      %6528 = vdwg.mxu0
      %v6529 = vld [vmem:[%s13] sm:$0xff]
      %v6530 = vld [vmem:[%s13 + $0x8] sm:$0xff]
      %v6531 = vld [vmem:[%s13 + $0x10] sm:$0xff]
      %v6532 = vld [vmem:[%s13 + $0x18] sm:$0xff]
      %v6533 = vld [vmem:[%s13 + $0x20] sm:$0xff]
      %v6534 = vld [vmem:[%s13 + $0x28] sm:$0xff]
      %v6535 = vld [vmem:[%s13 + $0x30] sm:$0xff]
      %v6536 = vld [vmem:[%s13 + $0x38] sm:$0xff]
      %v6537 = vld [vmem:[%s13 + $0x40] sm:$0xff]
      %v6538 = vld [vmem:[%s13 + $0x48] sm:$0xff]
      %v6539 = vld [vmem:[%s13 + $0x50] sm:$0xff]
      %v6540 = vld [vmem:[%s13 + $0x58] sm:$0xff]
      %v6541 = vld [vmem:[%s13 + $0x60] sm:$0xff]
      %v6542 = vld [vmem:[%s13 + $0x68] sm:$0xff]
      %v6543 = vld [vmem:[%s13 + $0x70] sm:$0xff]
      %v6544 = vld [vmem:[%s13 + $0x78] sm:$0xff]
      %6545 = vmatpush.msra.mxu0 %v6544
      %6546 = vmatpush.msra.mxu0 %v6543
      %6547 = vmatpush.msra.mxu0 %v6542
      %6548 = vmatpush.msra.mxu0 %v6541
      %6549 = vmatpush.msra.mxu0 %v6540
      %6550 = vmatpush.msra.mxu0 %v6539
      %6551 = vmatpush.msra.mxu0 %v6538
      %6552 = vmatpush.msra.mxu0 %v6537
      %6553 = vmatpush.msra.mxu0 %v6536
      %6554 = vmatpush.msra.mxu0 %v6535
      %6555 = vmatpush.msra.mxu0 %v6534
      %6556 = vmatpush.msra.mxu0 %v6533
      %6557 = vmatpush.msra.mxu0 %v6532
      %6558 = vmatpush.msra.mxu0 %v6531
      %6559 = vmatpush.msra.mxu0 %v6530
      %6560 = vmatpush.msra.mxu0 %v6529
      %6561 = vmatmul.f32.gmra.mxu0 %v6455
      %v6562 = vpop.f32.mrf.mxu0
      %v6563 = vadd.f32 0.0, %v6562
      %6564 = vdwg.mxu0
      %v6565 = vadd.f32 %v6527, %v6563
      %v6566 = vld [vmem:[%s1] sm:$0xff]
      %v6567 = vld [vmem:[%s14] sm:$0x1]
      %6569 = vset.pattern.permute.xlu0 0
      %6570 = vperm.xlu0 %6569, %v6566
      %v6571 = vpop.permute.xlu0 %6570
      %v6574 = vperm.slane %v6567, 0
      %v6576 = vmul.f32 %v6571, %v6574
      %v6577 = vadd.f32 %v6565, %v6576
      %v6578 = vld [vmem:[%s15] sm:$0x1]
      %v6580 = vperm.slane %v6578, 0
      %v6582 = vadd.f32 %v6577, %v6580
      %v6583 = vmax.f32 %v6582, 0.0
      %v6584 = vld [vmem:[%s16] sm:$0x1]
      %v6586 = vperm.slane %v6584, 0
      %v6588 = vmul.f32 %v6583, %v6586
      %v6589 = vld [vmem:[%s17] sm:$0x1]
      %v6591 = vperm.slane %v6589, 0
      %v6593 = vadd.f32 %v6588, %v6591
      %v6594 = vld [vmem:[%s18] sm:$0xff]
      %v6595 = vld [vmem:[%s18 + $0x8] sm:$0xff]
      %v6596 = vld [vmem:[#allocation3] sm:$0x1]
      %v6598 = vperm.slane %v6596, 0
      %vm6600 = vcmask 130048
      %v6602 = vsel %vm6600, %v6593, 0
      %6604 = vmatpush.msra.mxu0 0.0
      %6605 = vmatpush.msra.mxu0 0.0
      %6606 = vmatpush.msra.mxu0 0.0
      %6607 = vmatpush.msra.mxu0 0.0
      %6608 = vmatpush.msra.mxu0 0.0
      %6609 = vmatpush.msra.mxu0 0.0
      %6610 = vmatpush.msra.mxu0 0.0
      %6611 = vmatpush.msra.mxu0 0.0
      %6612 = vmatpush.msra.mxu0 0.0
      %6613 = vmatpush.msra.mxu0 0.0
      %6614 = vmatpush.msra.mxu0 0.0
      %6615 = vmatpush.msra.mxu0 0.0
      %6616 = vmatpush.msra.mxu0 0.0
      %6617 = vmatpush.msra.mxu0 0.0
      %6618 = vmatpush.msra.mxu0 %v6595
      %6619 = vmatpush.msra.mxu0 %v6594
      %6620 = vmatmul.f32.gmra.mxu0 %v6602
      %v6621 = vpop.f32.mrf.mxu0
      %v6622 = vadd.f32 %v6598, %v6621
      %6623 = vdwg.mxu0
      %vm6624 = vcmask 7168
      %6625 = vst.msk [vmem:[%s20] sm:$0xff] %vm6624, %v6622
    // Predicated region
    $region100: #{lstm_forward_backward.1} parent=1 // pred_check
      _
    $region101: #{lstm_forward_backward.1} parent=1 // pred_check_branch
      %6627 = sbr.rel (0) target = $region103
    $region102: #{lstm_forward_backward.1} parent=1 // pred_region
      _
    $region103: #{lstm_forward_backward.1} parent=1 // pred_fallthru
      _
    // Predicated region
    $region104: #{lstm_forward_backward.1} parent=1 // pred_check
      _
    $region105: #{lstm_forward_backward.1} parent=1 // pred_check_branch
      %6629 = sbr.rel (0) target = $region107
    $region106: #{lstm_forward_backward.1} parent=1 // pred_region
      _
    $region107: #{lstm_forward_backward.1} parent=1 // pred_fallthru
      _
    %6630 = vsyncpa [#allocation5], 1
    %6631 = vsyncpa [#allocation7], 1
    %6632 = vsyncpa [#allocation10], 1

</llo_original>
